<compile_context>
chip_gen: v6e
topology: v6e:2x2x1
jax: 0.10.0
libtpu: 0.0.40
codegen_flags: <defaults>
</compile_context>

<pallas_src>
import functools

import jax
import jax.numpy as jnp
from jax import lax
from jax.experimental import pallas as pl
from jax.experimental.pallas import tpu as pltpu


def _prelu(x, a):
    return jnp.maximum(x, 0.0) + a * jnp.minimum(x, 0.0)


def eesp_kernel(x_ref, hh_ref, ww_ref,
                wproj_ref, bn1b_ref, a1_ref,
                wdw_ref, bn2s_ref, bn2b_ref, a2_ref,
                wexp_ref, bn3b_ref, a3_ref,
                out_ref, merged_ref,
                *, n, H, W, dilations):
    x = x_ref[...].astype(jnp.float32)             # (cin, L) lane slab, L = bb*HWp
    L = x.shape[-1]

    # ---- proj_1x1: block-diagonal (grouped) 1x1 conv on the MXU.
    # bn1 scale pre-folded into the weight rows (host side).  Weights may be
    # bf16 (v6e/v7x MXU-native); cast the activation operand to match and
    # accumulate in f32.  Only bias + PReLU remain in-kernel.
    wp = wproj_ref[...]
    o1 = jnp.dot(wp, x.astype(wp.dtype), preferred_element_type=jnp.float32)
    o1 = _prelu(o1 + bn1b_ref[...], a1_ref[...])   # (n, L)

    # ---- dilated 3x3 depthwise branches: XLU lane rolls + boundary masks ----
    hh = hh_ref[...]                               # (1, L) per-image pixel row
    ww = ww_ref[...]                               # (1, L) per-image pixel col

    tap_cache = {}                                 # masked taps, reused across equal dilations
    hmask_cache = {}                               # per-offset row masks (computed once)
    wmask_cache = {}                               # per-offset col masks (computed once)

    def row_mask(off_h):
        if off_h == 0:
            return None
        if off_h not in hmask_cache:
            hmask_cache[off_h] = (hh < H - off_h) if off_h > 0 else (hh >= -off_h)
        return hmask_cache[off_h]

    def col_mask(off_w):
        if off_w == 0:
            return None
        if off_w not in wmask_cache:
            wmask_cache[off_w] = (ww < W - off_w) if off_w > 0 else (ww >= -off_w)
        return wmask_cache[off_w]

    def masked_tap(off_h, off_w):
        key = (off_h, off_w)
        if key in tap_cache:
            return tap_cache[key]
        off = off_h * W + off_w
        t = o1 if off == 0 else pltpu.roll(o1, shift=(-off) % L, axis=1)
        rm, cm = row_mask(off_h), col_mask(off_w)
        if rm is None:
            valid = cm
        elif cm is None:
            valid = rm
        else:
            valid = jnp.logical_and(rm, cm)
        if valid is not None:
            t = jnp.where(valid, t, 0.0)
        tap_cache[key] = t
        return t

    prev = None
    for i, d in enumerate(dilations):
        # One (9, n, 1) weight load per branch, hoisted out of the tap loop
        # (kept per-branch so the weight vregs have a short live range).
        w_i = wdw_ref[i]
        # Center tap (no roll, no mask) seeds the accumulator: no zero-fill.
        acc = o1 * w_i[4]
        for t in range(9):
            if t == 4:
                continue
            dh, dw = divmod(t, 3)
            acc = acc + masked_tap((dh - 1) * d, (dw - 1) * d) * w_i[t]
        if prev is not None:
            acc = acc + prev                        # hierarchical feature fusion
        prev = acc
        # br_after_cat (BN + PReLU), applied per branch, stored at aligned rows.
        sl = slice(i * n, (i + 1) * n)
        merged_ref[sl, :] = _prelu(acc * bn2s_ref[sl, :] + bn2b_ref[sl, :],
                                   a2_ref[sl, :])

    merged = merged_ref[...]                        # (cout, L)

    # ---- conv_1x1_exp: block-diagonal 1x1 conv on the MXU (bn3 scale folded),
    # bias, residual add, module PReLU.
    we = wexp_ref[...]
    expanded = jnp.dot(we, merged.astype(we.dtype),
                       preferred_element_type=jnp.float32)
    expanded = expanded + bn3b_ref[...] + x
    out_ref[...] = _prelu(expanded, a3_ref[...]).astype(out_ref.dtype)


def _block_diag(blocks):
    k = len(blocks)
    r, c = blocks[0].shape
    out = jnp.zeros((k * r, k * c), blocks[0].dtype)
    for g, b in enumerate(blocks):
        out = out.at[g * r:(g + 1) * r, g * c:(g + 1) * c].set(b)
    return out


def _pick_images_per_step(B, HWp, cin, cout, n, x_itemsize, n_tap_bound,
                          max_lanes=2048, vmem_budget=40 << 20):
    """Largest divisor of B whose lane slab stays within lane/VMEM targets."""
    best = 1
    for bb in range(1, B + 1):
        if B % bb:
            continue
        L = bb * HWp
        live = (2 * cin * L * x_itemsize            # x block (double-buffered)
                + 2 * cout * L * x_itemsize         # out block (double-buffered)
                + cout * L * 4                      # merged scratch
                + (3 + n_tap_bound) * n * L * 4)    # o1/acc/prev + tap cache
        if L <= max_lanes and live <= vmem_budget:
            best = bb
    return best


def eesp_forward(x, tp, *, k, dilations, mxu_dtype=jnp.bfloat16, bb=None):
    """x: (B, Cin, H, W). tp: torch-layout params (see init_params).

    stride=1 / down_method='esp' path.  mxu_dtype controls the operand dtype
    of the two grouped-1x1 matmuls (bf16 default, f32 accumulation).
    """
    B, cin, H, W = x.shape
    n = tp["wproj"].shape[0]
    cout = tp["bn3_scale"].shape[0]
    assert cin == cout, "stride=1 EESP requires nIn == nOut for the residual add"
    assert n % 8 == 0, "n (=nOut/k) must be a multiple of 8 (f32 sublane tile)"
    assert cout % 8 == 0, "nOut must be a multiple of 8 (f32 sublane tile)"
    HW = H * W
    HWp = ((HW + 127) // 128) * 128                 # lane-align each image slab
    ipg, epg = cin // k, cout // k
    opg = n // k

    n_tap_bound = 9 * len(set(dilations))
    if bb is None:
        bb = _pick_images_per_step(B, HWp, cin, cout, n, x.dtype.itemsize,
                                   n_tap_bound)
    assert B % bb == 0
    L = bb * HWp

    # ---- host-side parameter glue ----
    # proj_1x1: fold bn1 scale into the weight, expand groups to block-diagonal.
    wproj = tp["wproj"].reshape(n, ipg) * tp["bn1_scale"][:, None]
    wproj_bd = _block_diag([wproj.reshape(k, opg, ipg)[g] for g in range(k)])   # (n, cin)
    # conv_1x1_exp: fold bn3 scale into the weight, block-diagonal.
    wexp = tp["wexp"].reshape(cout, epg) * tp["bn3_scale"][:, None]
    wexp_bd = _block_diag([wexp.reshape(k, epg, epg)[g] for g in range(k)])     # (cout, cout)
    wproj_bd = wproj_bd.astype(mxu_dtype)
    wexp_bd = wexp_bd.astype(mxu_dtype)
    # depthwise weights: (k, n, 1, 3, 3) -> (k, 9, n, 1) so one tap slice
    # broadcasts over the lane slab.
    wdw = jnp.transpose(tp["wdw"].reshape(k, n, 9), (0, 2, 1))[..., None]

    col = lambda v: v[:, None]                      # (C,) -> (C, 1)

    # Per-image pixel row/col indices, tiled bb times so boundary masks are
    # evaluated per image even though bb images share one lane slab; padded
    # lanes are tagged out-of-image (hh=H, ww=W) and discarded on the host.
    pos = jnp.arange(HWp, dtype=jnp.int32)
    hh1 = jnp.where(pos < HW, pos // W, H)
    ww1 = jnp.where(pos < HW, pos % W, W)
    hh = jnp.tile(hh1, bb).reshape(1, L)
    ww = jnp.tile(ww1, bb).reshape(1, L)

    # Pack bb images into one lane slab: (B, cin, HW) -> pad -> (B//bb, cin, L).
    x_flat = jnp.pad(x.reshape(B, cin, HW), ((0, 0), (0, 0), (0, HWp - HW)))
    x_slab = (x_flat.reshape(B // bb, bb, cin, HWp)
              .transpose(0, 2, 1, 3)
              .reshape(B // bb, cin, L))

    args = (x_slab, hh, ww,
            wproj_bd, col(tp["bn1_bias"]), col(tp["a1"]),
            wdw, col(tp["bn2_scale"]), col(tp["bn2_bias"]), col(tp["a2"]),
            wexp_bd, col(tp["bn3_bias"]), col(tp["a3"]))

    def full_spec(arr):
        nd = arr.ndim
        return pl.BlockSpec(arr.shape, lambda b, _nd=nd: (0,) * _nd)

    in_specs = [pl.BlockSpec((pl.Squeezed(), cin, L), lambda b: (b, 0, 0))]
    in_specs += [full_spec(a) for a in args[1:]]
    out_spec = pl.BlockSpec((pl.Squeezed(), cout, L), lambda b: (b, 0, 0))

    # VMEM limit derived from the actual block shapes (double-buffered x/out
    # blocks, merged scratch, o1/acc/tap-cache working set, params) with 2x
    # headroom; capped at 56 MiB to stay under v7x's 64 MiB physical VMEM.
    itm = x.dtype.itemsize
    block_bytes = 2 * cin * L * itm + 2 * cout * L * itm + cout * L * 4
    work_bytes = (3 + n_tap_bound) * n * L * 4
    param_bytes = sum(int(a.size) * a.dtype.itemsize for a in args[1:])
    vmem_limit = int(min(56 << 20,
                         max(16 << 20,
                             2 * (block_bytes + work_bytes)
                             + 2 * param_bytes + (4 << 20))))

    kernel = functools.partial(eesp_kernel, n=n, H=H, W=W,
                               dilations=tuple(dilations))

    out = pl.pallas_call(
        kernel,
        out_shape=jax.ShapeDtypeStruct((B // bb, cout, L), x.dtype),
        grid_spec=pltpu.PrefetchScalarGridSpec(
            num_scalar_prefetch=0,
            grid=(B // bb,),
            in_specs=in_specs,
            out_specs=out_spec,
            scratch_shapes=[pltpu.VMEM((cout, L), jnp.float32)],
        ),
        compiler_params=pltpu.CompilerParams(
            dimension_semantics=("parallel",),
            vmem_limit_bytes=vmem_limit,
        ),
    )(*args)

    # Unpack: (B//bb, cout, bb*HWp) -> (B, cout, H, W), dropping lane padding.
    out = (out.reshape(B // bb, cout, bb, HWp)
           .transpose(0, 2, 1, 3)
           .reshape(B, cout, HWp)[:, :, :HW]
           .reshape(B, cout, H, W))
    return out


def init_params(key, nin, nout, k, r_lim=7):
    """Deterministic synthetic parameters, torch layouts, BN folded (eval mode)."""
    n = nout // k
    map_rk = {3: 1, 5: 2, 7: 3, 9: 4, 11: 5, 13: 6, 15: 7, 17: 8}
    ksizes = sorted([(3 + 2 * i) if (3 + 2 * i) <= r_lim else 3 for i in range(k)])
    dilations = [map_rk[ks] for ks in ksizes]

    keys = jax.random.split(key, 20)

    def bn_fold(k0, k1, k2, k3, c, eps=1e-3):
        gamma = 1.0 + 0.1 * jax.random.normal(k0, (c,), jnp.float32)
        beta = 0.1 * jax.random.normal(k1, (c,), jnp.float32)
        mean = 0.1 * jax.random.normal(k2, (c,), jnp.float32)
        var = jnp.abs(1.0 + 0.1 * jax.random.normal(k3, (c,), jnp.float32))
        scale = gamma / jnp.sqrt(var + eps)
        bias = beta - mean * scale
        return scale, bias

    bn1s, bn1b = bn_fold(keys[1], keys[2], keys[3], keys[4], n)
    bn2s, bn2b = bn_fold(keys[6], keys[7], keys[8], keys[9], nout)
    bn3s, bn3b = bn_fold(keys[11], keys[12], keys[13], keys[14], nout)

    tp = {
        "wproj": 0.2 * jax.random.normal(keys[0], (n, nin // k, 1, 1), jnp.float32),
        "bn1_scale": bn1s, "bn1_bias": bn1b,
        "a1": jnp.full((n,), 0.25, jnp.float32),               # PReLU default init
        "wdw": 0.2 * jax.random.normal(keys[5], (k, n, 1, 3, 3), jnp.float32),
        "bn2_scale": bn2s, "bn2_bias": bn2b,
        "a2": jnp.full((nout,), 0.25, jnp.float32),
        "wexp": 0.2 * jax.random.normal(keys[10], (nout, nout // k, 1, 1), jnp.float32),
        "bn3_scale": bn3s, "bn3_bias": bn3b,
        "a3": jnp.full((nout,), 0.25, jnp.float32),
    }
    return tp, dilations


def eesp_reference(x, tp, k, dilations):
    """Pure-JAX reference (lax convs), mirrors the PyTorch forward (stride=1, esp)."""
    dn = ("NCHW", "OIHW", "NCHW")
    hp = lax.Precision.HIGHEST

    def affine(y, s, b):
        return y * s[None, :, None, None] + b[None, :, None, None]

    def prelu(y, a):
        return jnp.maximum(y, 0.0) + a[None, :, None, None] * jnp.minimum(y, 0.0)

    proj = lax.conv_general_dilated(x, tp["wproj"], (1, 1), "SAME",
                                    feature_group_count=k, dimension_numbers=dn,
                                    precision=hp)
    proj = prelu(affine(proj, tp["bn1_scale"], tp["bn1_bias"]), tp["a1"])
    n = proj.shape[1]

    outs, prev = [], None
    for i, d in enumerate(dilations):
        o = lax.conv_general_dilated(proj, tp["wdw"][i], (1, 1), [(d, d), (d, d)],
                                     rhs_dilation=(d, d), feature_group_count=n,
                                     dimension_numbers=dn, precision=hp)
        if prev is not None:
            o = o + prev
        prev = o
        outs.append(o)
    merged = jnp.concatenate(outs, axis=1)
    merged = prelu(affine(merged, tp["bn2_scale"], tp["bn2_bias"]), tp["a2"])

    exp = lax.conv_general_dilated(merged, tp["wexp"], (1, 1), "SAME",
                                   feature_group_count=k, dimension_numbers=dn,
                                   precision=hp)
    exp = affine(exp, tp["bn3_scale"], tp["bn3_bias"]) + x
    return prelu(exp, tp["a3"])


if __name__ == "__main__":
    key = jax.random.PRNGKey(0)
    B, C, H, W = 16, 32, 16, 16     # nIn == nOut == 32, k == 4 -> n == 8
    k = 4

    kx, kp = jax.random.split(key)
    x = jax.random.normal(kx, (B, C, H, W), jnp.float32)
    tp, dilations = init_params(kp, C, C, k, r_lim=7)

    ref = jax.block_until_ready(eesp_reference(x, tp, k, dilations))

    # f32-MXU path: tight structural check against the lax reference.
    out_f32 = jax.block_until_ready(
        eesp_forward(x, tp, k=k, dilations=dilations, mxu_dtype=jnp.float32))
    assert out_f32.shape == (B, C, H, W)
    err_f32 = float(jnp.max(jnp.abs(out_f32 - ref)))
    assert err_f32 < 1e-3, f"f32 path mismatch vs reference: {err_f32}"

    # Default path: bf16 MXU operands (v6e/v7x native rate), f32 accumulation.
    out = jax.block_until_ready(eesp_forward(x, tp, k=k, dilations=dilations))
    assert out.shape == (B, C, H, W)
    err_bf16 = float(jnp.max(jnp.abs(out - ref)))
    assert err_bf16 < 5e-2, f"bf16-MXU path mismatch vs reference: {err_bf16}"

    print("KERNEL_OK")
</pallas_src>

<mosaic_0001>
module attributes {stable_mosaic.version = 11 : i64} {
  func.func @eesp_kernel(%arg0: i32, %arg1: memref<1x32x2048xf32, #tpu.memory_space<vmem>>, %arg2: memref<1x2048xi32, #tpu.memory_space<vmem>>, %arg3: memref<1x2048xi32, #tpu.memory_space<vmem>>, %arg4: memref<8x32xf32, #tpu.memory_space<vmem>>, %arg5: memref<8x1xf32, #tpu.memory_space<vmem>>, %arg6: memref<8x1xf32, #tpu.memory_space<vmem>>, %arg7: memref<4x9x8x1xf32, #tpu.memory_space<vmem>>, %arg8: memref<32x1xf32, #tpu.memory_space<vmem>>, %arg9: memref<32x1xf32, #tpu.memory_space<vmem>>, %arg10: memref<32x1xf32, #tpu.memory_space<vmem>>, %arg11: memref<32x32xf32, #tpu.memory_space<vmem>>, %arg12: memref<32x1xf32, #tpu.memory_space<vmem>>, %arg13: memref<32x1xf32, #tpu.memory_space<vmem>>, %arg14: memref<1x32x2048xf32, #tpu.memory_space<vmem>>, %arg15: memref<32x2048xf32, #tpu.memory_space<vmem>>) attributes {dimension_semantics = [#tpu.dimension_semantics<parallel>], iteration_bounds = array<i64: 2>, scalar_prefetch = 0 : i64, scratch_operands = 1 : i64, tpu.core_type = #tpu.core_type<tc>, window_params = [{transform_indices = @transform_0, window_bounds = array<i64: 1, 32, 2048>}, {pipeline_mode = #tpu.pipeline_mode<synchronous>, transform_indices = @transform_1, window_bounds = array<i64: 1, 2048>}, {pipeline_mode = #tpu.pipeline_mode<synchronous>, transform_indices = @transform_2, window_bounds = array<i64: 1, 2048>}, {pipeline_mode = #tpu.pipeline_mode<synchronous>, transform_indices = @transform_3, window_bounds = array<i64: 8, 32>}, {pipeline_mode = #tpu.pipeline_mode<synchronous>, transform_indices = @transform_4, window_bounds = array<i64: 8, 1>}, {pipeline_mode = #tpu.pipeline_mode<synchronous>, transform_indices = @transform_5, window_bounds = array<i64: 8, 1>}, {pipeline_mode = #tpu.pipeline_mode<synchronous>, transform_indices = @transform_6, window_bounds = array<i64: 4, 9, 8, 1>}, {pipeline_mode = #tpu.pipeline_mode<synchronous>, transform_indices = @transform_7, window_bounds = array<i64: 32, 1>}, {pipeline_mode = #tpu.pipeline_mode<synchronous>, transform_indices = @transform_8, window_bounds = array<i64: 32, 1>}, {pipeline_mode = #tpu.pipeline_mode<synchronous>, transform_indices = @transform_9, window_bounds = array<i64: 32, 1>}, {pipeline_mode = #tpu.pipeline_mode<synchronous>, transform_indices = @transform_10, window_bounds = array<i64: 32, 32>}, {pipeline_mode = #tpu.pipeline_mode<synchronous>, transform_indices = @transform_11, window_bounds = array<i64: 32, 1>}, {pipeline_mode = #tpu.pipeline_mode<synchronous>, transform_indices = @transform_12, window_bounds = array<i64: 32, 1>}, {transform_indices = @transform_13, window_bounds = array<i64: 1, 32, 2048>}]} {
    %c0 = arith.constant 0 : index
    %c0_0 = arith.constant 0 : index
    %c0_1 = arith.constant 0 : index
    %0 = vector.load %arg1[%c0, %c0_0, %c0_1] : memref<1x32x2048xf32, #tpu.memory_space<vmem>>, vector<1x32x2048xf32>
    %1 = vector.shape_cast %0 : vector<1x32x2048xf32> to vector<32x2048xf32>
    %c0_2 = arith.constant 0 : index
    %c0_3 = arith.constant 0 : index
    %2 = vector.load %arg4[%c0_2, %c0_3] : memref<8x32xf32, #tpu.memory_space<vmem>>, vector<8x32xf32>
    %cst = arith.constant dense<0.000000e+00> : vector<8x2048xf32>
    %3 = tpu.matmul %2, %1, %cst {dimension_numbers = #tpu.dot_dimension_numbers<[1], [0], [0], [1], [0, 0, 1, 1], [], []>} : vector<8x32xf32>, vector<32x2048xf32>, vector<8x2048xf32> -> vector<8x2048xf32>
    %c0_4 = arith.constant 0 : index
    %c0_5 = arith.constant 0 : index
    %4 = vector.load %arg5[%c0_4, %c0_5] : memref<8x1xf32, #tpu.memory_space<vmem>>, vector<8x1xf32>
    %5 = vector.broadcast %4 : vector<8x1xf32> to vector<8x2048xf32>
    %6 = arith.addf %3, %5 : vector<8x2048xf32>
    %c0_6 = arith.constant 0 : index
    %c0_7 = arith.constant 0 : index
    %7 = vector.load %arg6[%c0_6, %c0_7] : memref<8x1xf32, #tpu.memory_space<vmem>>, vector<8x1xf32>
    %cst_8 = arith.constant 0.000000e+00 : f32
    %8 = vector.broadcast %cst_8 : f32 to vector<8x2048xf32>
    %9 = arith.maximumf %6, %8 : vector<8x2048xf32>
    %cst_9 = arith.constant 0.000000e+00 : f32
    %10 = vector.broadcast %cst_9 : f32 to vector<8x2048xf32>
    %11 = arith.minimumf %6, %10 : vector<8x2048xf32>
    %12 = vector.broadcast %7 : vector<8x1xf32> to vector<8x2048xf32>
    %13 = arith.mulf %12, %11 : vector<8x2048xf32>
    %14 = arith.addf %9, %13 : vector<8x2048xf32>
    %c0_10 = arith.constant 0 : index
    %c0_11 = arith.constant 0 : index
    %15 = vector.load %arg2[%c0_10, %c0_11] : memref<1x2048xi32, #tpu.memory_space<vmem>>, vector<1x2048xi32>
    %c0_12 = arith.constant 0 : index
    %c0_13 = arith.constant 0 : index
    %16 = vector.load %arg3[%c0_12, %c0_13] : memref<1x2048xi32, #tpu.memory_space<vmem>>, vector<1x2048xi32>
    %c0_14 = arith.constant 0 : index
    %c0_15 = arith.constant 0 : index
    %c0_16 = arith.constant 0 : index
    %c0_17 = arith.constant 0 : index
    %17 = vector.load %arg7[%c0_14, %c0_15, %c0_16, %c0_17] : memref<4x9x8x1xf32, #tpu.memory_space<vmem>>, vector<1x9x8x1xf32>
    %18 = vector.shape_cast %17 : vector<1x9x8x1xf32> to vector<9x8x1xf32>
    %19 = vector.extract_strided_slice %18 {offsets = [4, 0, 0], sizes = [1, 8, 1], strides = [1, 1, 1]} : vector<9x8x1xf32> to vector<1x8x1xf32>
    %20 = vector.shape_cast %19 : vector<1x8x1xf32> to vector<8x1xf32>
    %21 = vector.broadcast %20 : vector<8x1xf32> to vector<8x2048xf32>
    %22 = arith.mulf %14, %21 : vector<8x2048xf32>
    %c17_i32 = arith.constant 17 : i32
    %23 = tpu.dynamic_rotate %14 by %c17_i32 dim 1 : vector<8x2048xf32>, i32 -> vector<8x2048xf32>
    %c1_i32 = arith.constant 1 : i32
    %24 = vector.broadcast %c1_i32 : i32 to vector<1x2048xi32>
    %25 = arith.cmpi sge, %15, %24 : vector<1x2048xi32>
    %c1_i32_18 = arith.constant 1 : i32
    %26 = vector.broadcast %c1_i32_18 : i32 to vector<1x2048xi32>
    %27 = arith.cmpi sge, %16, %26 : vector<1x2048xi32>
    %28 = arith.andi %25, %27 : vector<1x2048xi1>
    %cst_19 = arith.constant 0.000000e+00 : f32
    %29 = vector.shape_cast %28 : vector<1x2048xi1> to vector<1x2048xi1>
    %30 = vector.broadcast %29 : vector<1x2048xi1> to vector<8x2048xi1>
    %31 = vector.broadcast %cst_19 : f32 to vector<8x2048xf32>
    %32 = arith.select %30, %23, %31 : vector<8x2048xi1>, vector<8x2048xf32>
    %33 = vector.extract_strided_slice %18 {offsets = [0, 0, 0], sizes = [1, 8, 1], strides = [1, 1, 1]} : vector<9x8x1xf32> to vector<1x8x1xf32>
    %34 = vector.shape_cast %33 : vector<1x8x1xf32> to vector<8x1xf32>
    %35 = vector.broadcast %34 : vector<8x1xf32> to vector<8x2048xf32>
    %36 = arith.mulf %32, %35 : vector<8x2048xf32>
    %37 = arith.addf %22, %36 : vector<8x2048xf32>
    %c16_i32 = arith.constant 16 : i32
    %38 = tpu.dynamic_rotate %14 by %c16_i32 dim 1 : vector<8x2048xf32>, i32 -> vector<8x2048xf32>
    %cst_20 = arith.constant 0.000000e+00 : f32
    %39 = vector.shape_cast %25 : vector<1x2048xi1> to vector<1x2048xi1>
    %40 = vector.broadcast %39 : vector<1x2048xi1> to vector<8x2048xi1>
    %41 = vector.broadcast %cst_20 : f32 to vector<8x2048xf32>
    %42 = arith.select %40, %38, %41 : vector<8x2048xi1>, vector<8x2048xf32>
    %43 = vector.extract_strided_slice %18 {offsets = [1, 0, 0], sizes = [1, 8, 1], strides = [1, 1, 1]} : vector<9x8x1xf32> to vector<1x8x1xf32>
    %44 = vector.shape_cast %43 : vector<1x8x1xf32> to vector<8x1xf32>
    %45 = vector.broadcast %44 : vector<8x1xf32> to vector<8x2048xf32>
    %46 = arith.mulf %42, %45 : vector<8x2048xf32>
    %47 = arith.addf %37, %46 : vector<8x2048xf32>
    %c15_i32 = arith.constant 15 : i32
    %48 = tpu.dynamic_rotate %14 by %c15_i32 dim 1 : vector<8x2048xf32>, i32 -> vector<8x2048xf32>
    %c15_i32_21 = arith.constant 15 : i32
    %49 = vector.broadcast %c15_i32_21 : i32 to vector<1x2048xi32>
    %50 = arith.cmpi slt, %16, %49 : vector<1x2048xi32>
    %51 = arith.andi %25, %50 : vector<1x2048xi1>
    %cst_22 = arith.constant 0.000000e+00 : f32
    %52 = vector.shape_cast %51 : vector<1x2048xi1> to vector<1x2048xi1>
    %53 = vector.broadcast %52 : vector<1x2048xi1> to vector<8x2048xi1>
    %54 = vector.broadcast %cst_22 : f32 to vector<8x2048xf32>
    %55 = arith.select %53, %48, %54 : vector<8x2048xi1>, vector<8x2048xf32>
    %56 = vector.extract_strided_slice %18 {offsets = [2, 0, 0], sizes = [1, 8, 1], strides = [1, 1, 1]} : vector<9x8x1xf32> to vector<1x8x1xf32>
    %57 = vector.shape_cast %56 : vector<1x8x1xf32> to vector<8x1xf32>
    %58 = vector.broadcast %57 : vector<8x1xf32> to vector<8x2048xf32>
    %59 = arith.mulf %55, %58 : vector<8x2048xf32>
    %60 = arith.addf %47, %59 : vector<8x2048xf32>
    %c1_i32_23 = arith.constant 1 : i32
    %61 = tpu.dynamic_rotate %14 by %c1_i32_23 dim 1 : vector<8x2048xf32>, i32 -> vector<8x2048xf32>
    %cst_24 = arith.constant 0.000000e+00 : f32
    %62 = vector.shape_cast %27 : vector<1x2048xi1> to vector<1x2048xi1>
    %63 = vector.broadcast %62 : vector<1x2048xi1> to vector<8x2048xi1>
    %64 = vector.broadcast %cst_24 : f32 to vector<8x2048xf32>
    %65 = arith.select %63, %61, %64 : vector<8x2048xi1>, vector<8x2048xf32>
    %66 = vector.extract_strided_slice %18 {offsets = [3, 0, 0], sizes = [1, 8, 1], strides = [1, 1, 1]} : vector<9x8x1xf32> to vector<1x8x1xf32>
    %67 = vector.shape_cast %66 : vector<1x8x1xf32> to vector<8x1xf32>
    %68 = vector.broadcast %67 : vector<8x1xf32> to vector<8x2048xf32>
    %69 = arith.mulf %65, %68 : vector<8x2048xf32>
    %70 = arith.addf %60, %69 : vector<8x2048xf32>
    %c2047_i32 = arith.constant 2047 : i32
    %71 = tpu.dynamic_rotate %14 by %c2047_i32 dim 1 : vector<8x2048xf32>, i32 -> vector<8x2048xf32>
    %cst_25 = arith.constant 0.000000e+00 : f32
    %72 = vector.shape_cast %50 : vector<1x2048xi1> to vector<1x2048xi1>
    %73 = vector.broadcast %72 : vector<1x2048xi1> to vector<8x2048xi1>
    %74 = vector.broadcast %cst_25 : f32 to vector<8x2048xf32>
    %75 = arith.select %73, %71, %74 : vector<8x2048xi1>, vector<8x2048xf32>
    %76 = vector.extract_strided_slice %18 {offsets = [5, 0, 0], sizes = [1, 8, 1], strides = [1, 1, 1]} : vector<9x8x1xf32> to vector<1x8x1xf32>
    %77 = vector.shape_cast %76 : vector<1x8x1xf32> to vector<8x1xf32>
    %78 = vector.broadcast %77 : vector<8x1xf32> to vector<8x2048xf32>
    %79 = arith.mulf %75, %78 : vector<8x2048xf32>
    %80 = arith.addf %70, %79 : vector<8x2048xf32>
    %c2033_i32 = arith.constant 2033 : i32
    %81 = tpu.dynamic_rotate %14 by %c2033_i32 dim 1 : vector<8x2048xf32>, i32 -> vector<8x2048xf32>
    %c15_i32_26 = arith.constant 15 : i32
    %82 = vector.broadcast %c15_i32_26 : i32 to vector<1x2048xi32>
    %83 = arith.cmpi slt, %15, %82 : vector<1x2048xi32>
    %84 = arith.andi %83, %27 : vector<1x2048xi1>
    %cst_27 = arith.constant 0.000000e+00 : f32
    %85 = vector.shape_cast %84 : vector<1x2048xi1> to vector<1x2048xi1>
    %86 = vector.broadcast %85 : vector<1x2048xi1> to vector<8x2048xi1>
    %87 = vector.broadcast %cst_27 : f32 to vector<8x2048xf32>
    %88 = arith.select %86, %81, %87 : vector<8x2048xi1>, vector<8x2048xf32>
    %89 = vector.extract_strided_slice %18 {offsets = [6, 0, 0], sizes = [1, 8, 1], strides = [1, 1, 1]} : vector<9x8x1xf32> to vector<1x8x1xf32>
    %90 = vector.shape_cast %89 : vector<1x8x1xf32> to vector<8x1xf32>
    %91 = vector.broadcast %90 : vector<8x1xf32> to vector<8x2048xf32>
    %92 = arith.mulf %88, %91 : vector<8x2048xf32>
    %93 = arith.addf %80, %92 : vector<8x2048xf32>
    %c2032_i32 = arith.constant 2032 : i32
    %94 = tpu.dynamic_rotate %14 by %c2032_i32 dim 1 : vector<8x2048xf32>, i32 -> vector<8x2048xf32>
    %cst_28 = arith.constant 0.000000e+00 : f32
    %95 = vector.shape_cast %83 : vector<1x2048xi1> to vector<1x2048xi1>
    %96 = vector.broadcast %95 : vector<1x2048xi1> to vector<8x2048xi1>
    %97 = vector.broadcast %cst_28 : f32 to vector<8x2048xf32>
    %98 = arith.select %96, %94, %97 : vector<8x2048xi1>, vector<8x2048xf32>
    %99 = vector.extract_strided_slice %18 {offsets = [7, 0, 0], sizes = [1, 8, 1], strides = [1, 1, 1]} : vector<9x8x1xf32> to vector<1x8x1xf32>
    %100 = vector.shape_cast %99 : vector<1x8x1xf32> to vector<8x1xf32>
    %101 = vector.broadcast %100 : vector<8x1xf32> to vector<8x2048xf32>
    %102 = arith.mulf %98, %101 : vector<8x2048xf32>
    %103 = arith.addf %93, %102 : vector<8x2048xf32>
    %c2031_i32 = arith.constant 2031 : i32
    %104 = tpu.dynamic_rotate %14 by %c2031_i32 dim 1 : vector<8x2048xf32>, i32 -> vector<8x2048xf32>
    %105 = arith.andi %83, %50 : vector<1x2048xi1>
    %cst_29 = arith.constant 0.000000e+00 : f32
    %106 = vector.shape_cast %105 : vector<1x2048xi1> to vector<1x2048xi1>
    %107 = vector.broadcast %106 : vector<1x2048xi1> to vector<8x2048xi1>
    %108 = vector.broadcast %cst_29 : f32 to vector<8x2048xf32>
    %109 = arith.select %107, %104, %108 : vector<8x2048xi1>, vector<8x2048xf32>
    %110 = vector.extract_strided_slice %18 {offsets = [8, 0, 0], sizes = [1, 8, 1], strides = [1, 1, 1]} : vector<9x8x1xf32> to vector<1x8x1xf32>
    %111 = vector.shape_cast %110 : vector<1x8x1xf32> to vector<8x1xf32>
    %112 = vector.broadcast %111 : vector<8x1xf32> to vector<8x2048xf32>
    %113 = arith.mulf %109, %112 : vector<8x2048xf32>
    %114 = arith.addf %103, %113 : vector<8x2048xf32>
    %c0_30 = arith.constant 0 : index
    %c0_31 = arith.constant 0 : index
    %115 = vector.load %arg8[%c0_30, %c0_31] : memref<32x1xf32, #tpu.memory_space<vmem>>, vector<8x1xf32>
    %116 = vector.broadcast %115 : vector<8x1xf32> to vector<8x2048xf32>
    %117 = arith.mulf %114, %116 : vector<8x2048xf32>
    %c0_32 = arith.constant 0 : index
    %c0_33 = arith.constant 0 : index
    %118 = vector.load %arg9[%c0_32, %c0_33] : memref<32x1xf32, #tpu.memory_space<vmem>>, vector<8x1xf32>
    %119 = vector.broadcast %118 : vector<8x1xf32> to vector<8x2048xf32>
    %120 = arith.addf %117, %119 : vector<8x2048xf32>
    %c0_34 = arith.constant 0 : index
    %c0_35 = arith.constant 0 : index
    %121 = vector.load %arg10[%c0_34, %c0_35] : memref<32x1xf32, #tpu.memory_space<vmem>>, vector<8x1xf32>
    %cst_36 = arith.constant 0.000000e+00 : f32
    %122 = vector.broadcast %cst_36 : f32 to vector<8x2048xf32>
    %123 = arith.maximumf %120, %122 : vector<8x2048xf32>
    %cst_37 = arith.constant 0.000000e+00 : f32
    %124 = vector.broadcast %cst_37 : f32 to vector<8x2048xf32>
    %125 = arith.minimumf %120, %124 : vector<8x2048xf32>
    %126 = vector.broadcast %121 : vector<8x1xf32> to vector<8x2048xf32>
    %127 = arith.mulf %126, %125 : vector<8x2048xf32>
    %128 = arith.addf %123, %127 : vector<8x2048xf32>
    %c0_38 = arith.constant 0 : index
    %c0_39 = arith.constant 0 : index
    %129 = vector.load %arg15[%c0_38, %c0_39] : memref<32x2048xf32, #tpu.memory_space<vmem>>, vector<8x2048xf32>
    tpu.vector_store %arg15[%c0_38, %c0_39], %128 {strides = array<i32>} : memref<32x2048xf32, #tpu.memory_space<vmem>>, vector<8x2048xf32>,
    %c1 = arith.constant 1 : index
    %c0_40 = arith.constant 0 : index
    %c0_41 = arith.constant 0 : index
    %c0_42 = arith.constant 0 : index
    %130 = vector.load %arg7[%c1, %c0_40, %c0_41, %c0_42] : memref<4x9x8x1xf32, #tpu.memory_space<vmem>>, vector<1x9x8x1xf32>
    %131 = vector.shape_cast %130 : vector<1x9x8x1xf32> to vector<9x8x1xf32>
    %132 = vector.extract_strided_slice %131 {offsets = [4, 0, 0], sizes = [1, 8, 1], strides = [1, 1, 1]} : vector<9x8x1xf32> to vector<1x8x1xf32>
    %133 = vector.shape_cast %132 : vector<1x8x1xf32> to vector<8x1xf32>
    %134 = vector.broadcast %133 : vector<8x1xf32> to vector<8x2048xf32>
    %135 = arith.mulf %14, %134 : vector<8x2048xf32>
    %136 = vector.extract_strided_slice %131 {offsets = [0, 0, 0], sizes = [1, 8, 1], strides = [1, 1, 1]} : vector<9x8x1xf32> to vector<1x8x1xf32>
    %137 = vector.shape_cast %136 : vector<1x8x1xf32> to vector<8x1xf32>
    %138 = vector.broadcast %137 : vector<8x1xf32> to vector<8x2048xf32>
    %139 = arith.mulf %32, %138 : vector<8x2048xf32>
    %140 = arith.addf %135, %139 : vector<8x2048xf32>
    %141 = vector.extract_strided_slice %131 {offsets = [1, 0, 0], sizes = [1, 8, 1], strides = [1, 1, 1]} : vector<9x8x1xf32> to vector<1x8x1xf32>
    %142 = vector.shape_cast %141 : vector<1x8x1xf32> to vector<8x1xf32>
    %143 = vector.broadcast %142 : vector<8x1xf32> to vector<8x2048xf32>
    %144 = arith.mulf %42, %143 : vector<8x2048xf32>
    %145 = arith.addf %140, %144 : vector<8x2048xf32>
    %146 = vector.extract_strided_slice %131 {offsets = [2, 0, 0], sizes = [1, 8, 1], strides = [1, 1, 1]} : vector<9x8x1xf32> to vector<1x8x1xf32>
    %147 = vector.shape_cast %146 : vector<1x8x1xf32> to vector<8x1xf32>
    %148 = vector.broadcast %147 : vector<8x1xf32> to vector<8x2048xf32>
    %149 = arith.mulf %55, %148 : vector<8x2048xf32>
    %150 = arith.addf %145, %149 : vector<8x2048xf32>
    %151 = vector.extract_strided_slice %131 {offsets = [3, 0, 0], sizes = [1, 8, 1], strides = [1, 1, 1]} : vector<9x8x1xf32> to vector<1x8x1xf32>
    %152 = vector.shape_cast %151 : vector<1x8x1xf32> to vector<8x1xf32>
    %153 = vector.broadcast %152 : vector<8x1xf32> to vector<8x2048xf32>
    %154 = arith.mulf %65, %153 : vector<8x2048xf32>
    %155 = arith.addf %150, %154 : vector<8x2048xf32>
    %156 = vector.extract_strided_slice %131 {offsets = [5, 0, 0], sizes = [1, 8, 1], strides = [1, 1, 1]} : vector<9x8x1xf32> to vector<1x8x1xf32>
    %157 = vector.shape_cast %156 : vector<1x8x1xf32> to vector<8x1xf32>
    %158 = vector.broadcast %157 : vector<8x1xf32> to vector<8x2048xf32>
    %159 = arith.mulf %75, %158 : vector<8x2048xf32>
    %160 = arith.addf %155, %159 : vector<8x2048xf32>
    %161 = vector.extract_strided_slice %131 {offsets = [6, 0, 0], sizes = [1, 8, 1], strides = [1, 1, 1]} : vector<9x8x1xf32> to vector<1x8x1xf32>
    %162 = vector.shape_cast %161 : vector<1x8x1xf32> to vector<8x1xf32>
    %163 = vector.broadcast %162 : vector<8x1xf32> to vector<8x2048xf32>
    %164 = arith.mulf %88, %163 : vector<8x2048xf32>
    %165 = arith.addf %160, %164 : vector<8x2048xf32>
    %166 = vector.extract_strided_slice %131 {offsets = [7, 0, 0], sizes = [1, 8, 1], strides = [1, 1, 1]} : vector<9x8x1xf32> to vector<1x8x1xf32>
    %167 = vector.shape_cast %166 : vector<1x8x1xf32> to vector<8x1xf32>
    %168 = vector.broadcast %167 : vector<8x1xf32> to vector<8x2048xf32>
    %169 = arith.mulf %98, %168 : vector<8x2048xf32>
    %170 = arith.addf %165, %169 : vector<8x2048xf32>
    %171 = vector.extract_strided_slice %131 {offsets = [8, 0, 0], sizes = [1, 8, 1], strides = [1, 1, 1]} : vector<9x8x1xf32> to vector<1x8x1xf32>
    %172 = vector.shape_cast %171 : vector<1x8x1xf32> to vector<8x1xf32>
    %173 = vector.broadcast %172 : vector<8x1xf32> to vector<8x2048xf32>
    %174 = arith.mulf %109, %173 : vector<8x2048xf32>
    %175 = arith.addf %170, %174 : vector<8x2048xf32>
    %176 = arith.addf %175, %114 : vector<8x2048xf32>
    %c8 = arith.constant 8 : index
    %c0_43 = arith.constant 0 : index
    %177 = vector.load %arg8[%c8, %c0_43] : memref<32x1xf32, #tpu.memory_space<vmem>>, vector<8x1xf32>
    %178 = vector.broadcast %177 : vector<8x1xf32> to vector<8x2048xf32>
    %179 = arith.mulf %176, %178 : vector<8x2048xf32>
    %c8_44 = arith.constant 8 : index
    %c0_45 = arith.constant 0 : index
    %180 = vector.load %arg9[%c8_44, %c0_45] : memref<32x1xf32, #tpu.memory_space<vmem>>, vector<8x1xf32>
    %181 = vector.broadcast %180 : vector<8x1xf32> to vector<8x2048xf32>
    %182 = arith.addf %179, %181 : vector<8x2048xf32>
    %c8_46 = arith.constant 8 : index
    %c0_47 = arith.constant 0 : index
    %183 = vector.load %arg10[%c8_46, %c0_47] : memref<32x1xf32, #tpu.memory_space<vmem>>, vector<8x1xf32>
    %cst_48 = arith.constant 0.000000e+00 : f32
    %184 = vector.broadcast %cst_48 : f32 to vector<8x2048xf32>
    %185 = arith.maximumf %182, %184 : vector<8x2048xf32>
    %cst_49 = arith.constant 0.000000e+00 : f32
    %186 = vector.broadcast %cst_49 : f32 to vector<8x2048xf32>
    %187 = arith.minimumf %182, %186 : vector<8x2048xf32>
    %188 = vector.broadcast %183 : vector<8x1xf32> to vector<8x2048xf32>
    %189 = arith.mulf %188, %187 : vector<8x2048xf32>
    %190 = arith.addf %185, %189 : vector<8x2048xf32>
    %c8_50 = arith.constant 8 : index
    %c0_51 = arith.constant 0 : index
    %191 = vector.load %arg15[%c8_50, %c0_51] : memref<32x2048xf32, #tpu.memory_space<vmem>>, vector<8x2048xf32>
    tpu.vector_store %arg15[%c8_50, %c0_51], %190 {strides = array<i32>} : memref<32x2048xf32, #tpu.memory_space<vmem>>, vector<8x2048xf32>,
    %c2 = arith.constant 2 : index
    %c0_52 = arith.constant 0 : index
    %c0_53 = arith.constant 0 : index
    %c0_54 = arith.constant 0 : index
    %192 = vector.load %arg7[%c2, %c0_52, %c0_53, %c0_54] : memref<4x9x8x1xf32, #tpu.memory_space<vmem>>, vector<1x9x8x1xf32>
    %193 = vector.shape_cast %192 : vector<1x9x8x1xf32> to vector<9x8x1xf32>
    %194 = vector.extract_strided_slice %193 {offsets = [4, 0, 0], sizes = [1, 8, 1], strides = [1, 1, 1]} : vector<9x8x1xf32> to vector<1x8x1xf32>
    %195 = vector.shape_cast %194 : vector<1x8x1xf32> to vector<8x1xf32>
    %196 = vector.broadcast %195 : vector<8x1xf32> to vector<8x2048xf32>
    %197 = arith.mulf %14, %196 : vector<8x2048xf32>
    %c34_i32 = arith.constant 34 : i32
    %198 = tpu.dynamic_rotate %14 by %c34_i32 dim 1 : vector<8x2048xf32>, i32 -> vector<8x2048xf32>
    %c2_i32 = arith.constant 2 : i32
    %199 = vector.broadcast %c2_i32 : i32 to vector<1x2048xi32>
    %200 = arith.cmpi sge, %15, %199 : vector<1x2048xi32>
    %c2_i32_55 = arith.constant 2 : i32
    %201 = vector.broadcast %c2_i32_55 : i32 to vector<1x2048xi32>
    %202 = arith.cmpi sge, %16, %201 : vector<1x2048xi32>
    %203 = arith.andi %200, %202 : vector<1x2048xi1>
    %cst_56 = arith.constant 0.000000e+00 : f32
    %204 = vector.shape_cast %203 : vector<1x2048xi1> to vector<1x2048xi1>
    %205 = vector.broadcast %204 : vector<1x2048xi1> to vector<8x2048xi1>
    %206 = vector.broadcast %cst_56 : f32 to vector<8x2048xf32>
    %207 = arith.select %205, %198, %206 : vector<8x2048xi1>, vector<8x2048xf32>
    %208 = vector.extract_strided_slice %193 {offsets = [0, 0, 0], sizes = [1, 8, 1], strides = [1, 1, 1]} : vector<9x8x1xf32> to vector<1x8x1xf32>
    %209 = vector.shape_cast %208 : vector<1x8x1xf32> to vector<8x1xf32>
    %210 = vector.broadcast %209 : vector<8x1xf32> to vector<8x2048xf32>
    %211 = arith.mulf %207, %210 : vector<8x2048xf32>
    %212 = arith.addf %197, %211 : vector<8x2048xf32>
    %c32_i32 = arith.constant 32 : i32
    %213 = tpu.dynamic_rotate %14 by %c32_i32 dim 1 : vector<8x2048xf32>, i32 -> vector<8x2048xf32>
    %cst_57 = arith.constant 0.000000e+00 : f32
    %214 = vector.shape_cast %200 : vector<1x2048xi1> to vector<1x2048xi1>
    %215 = vector.broadcast %214 : vector<1x2048xi1> to vector<8x2048xi1>
    %216 = vector.broadcast %cst_57 : f32 to vector<8x2048xf32>
    %217 = arith.select %215, %213, %216 : vector<8x2048xi1>, vector<8x2048xf32>
    %218 = vector.extract_strided_slice %193 {offsets = [1, 0, 0], sizes = [1, 8, 1], strides = [1, 1, 1]} : vector<9x8x1xf32> to vector<1x8x1xf32>
    %219 = vector.shape_cast %218 : vector<1x8x1xf32> to vector<8x1xf32>
    %220 = vector.broadcast %219 : vector<8x1xf32> to vector<8x2048xf32>
    %221 = arith.mulf %217, %220 : vector<8x2048xf32>
    %222 = arith.addf %212, %221 : vector<8x2048xf32>
    %c30_i32 = arith.constant 30 : i32
    %223 = tpu.dynamic_rotate %14 by %c30_i32 dim 1 : vector<8x2048xf32>, i32 -> vector<8x2048xf32>
    %c14_i32 = arith.constant 14 : i32
    %224 = vector.broadcast %c14_i32 : i32 to vector<1x2048xi32>
    %225 = arith.cmpi slt, %16, %224 : vector<1x2048xi32>
    %226 = arith.andi %200, %225 : vector<1x2048xi1>
    %cst_58 = arith.constant 0.000000e+00 : f32
    %227 = vector.shape_cast %226 : vector<1x2048xi1> to vector<1x2048xi1>
    %228 = vector.broadcast %227 : vector<1x2048xi1> to vector<8x2048xi1>
    %229 = vector.broadcast %cst_58 : f32 to vector<8x2048xf32>
    %230 = arith.select %228, %223, %229 : vector<8x2048xi1>, vector<8x2048xf32>
    %231 = vector.extract_strided_slice %193 {offsets = [2, 0, 0], sizes = [1, 8, 1], strides = [1, 1, 1]} : vector<9x8x1xf32> to vector<1x8x1xf32>
    %232 = vector.shape_cast %231 : vector<1x8x1xf32> to vector<8x1xf32>
    %233 = vector.broadcast %232 : vector<8x1xf32> to vector<8x2048xf32>
    %234 = arith.mulf %230, %233 : vector<8x2048xf32>
    %235 = arith.addf %222, %234 : vector<8x2048xf32>
    %c2_i32_59 = arith.constant 2 : i32
    %236 = tpu.dynamic_rotate %14 by %c2_i32_59 dim 1 : vector<8x2048xf32>, i32 -> vector<8x2048xf32>
    %cst_60 = arith.constant 0.000000e+00 : f32
    %237 = vector.shape_cast %202 : vector<1x2048xi1> to vector<1x2048xi1>
    %238 = vector.broadcast %237 : vector<1x2048xi1> to vector<8x2048xi1>
    %239 = vector.broadcast %cst_60 : f32 to vector<8x2048xf32>
    %240 = arith.select %238, %236, %239 : vector<8x2048xi1>, vector<8x2048xf32>
    %241 = vector.extract_strided_slice %193 {offsets = [3, 0, 0], sizes = [1, 8, 1], strides = [1, 1, 1]} : vector<9x8x1xf32> to vector<1x8x1xf32>
    %242 = vector.shape_cast %241 : vector<1x8x1xf32> to vector<8x1xf32>
    %243 = vector.broadcast %242 : vector<8x1xf32> to vector<8x2048xf32>
    %244 = arith.mulf %240, %243 : vector<8x2048xf32>
    %245 = arith.addf %235, %244 : vector<8x2048xf32>
    %c2046_i32 = arith.constant 2046 : i32
    %246 = tpu.dynamic_rotate %14 by %c2046_i32 dim 1 : vector<8x2048xf32>, i32 -> vector<8x2048xf32>
    %cst_61 = arith.constant 0.000000e+00 : f32
    %247 = vector.shape_cast %225 : vector<1x2048xi1> to vector<1x2048xi1>
    %248 = vector.broadcast %247 : vector<1x2048xi1> to vector<8x2048xi1>
    %249 = vector.broadcast %cst_61 : f32 to vector<8x2048xf32>
    %250 = arith.select %248, %246, %249 : vector<8x2048xi1>, vector<8x2048xf32>
    %251 = vector.extract_strided_slice %193 {offsets = [5, 0, 0], sizes = [1, 8, 1], strides = [1, 1, 1]} : vector<9x8x1xf32> to vector<1x8x1xf32>
    %252 = vector.shape_cast %251 : vector<1x8x1xf32> to vector<8x1xf32>
    %253 = vector.broadcast %252 : vector<8x1xf32> to vector<8x2048xf32>
    %254 = arith.mulf %250, %253 : vector<8x2048xf32>
    %255 = arith.addf %245, %254 : vector<8x2048xf32>
    %c2018_i32 = arith.constant 2018 : i32
    %256 = tpu.dynamic_rotate %14 by %c2018_i32 dim 1 : vector<8x2048xf32>, i32 -> vector<8x2048xf32>
    %c14_i32_62 = arith.constant 14 : i32
    %257 = vector.broadcast %c14_i32_62 : i32 to vector<1x2048xi32>
    %258 = arith.cmpi slt, %15, %257 : vector<1x2048xi32>
    %259 = arith.andi %258, %202 : vector<1x2048xi1>
    %cst_63 = arith.constant 0.000000e+00 : f32
    %260 = vector.shape_cast %259 : vector<1x2048xi1> to vector<1x2048xi1>
    %261 = vector.broadcast %260 : vector<1x2048xi1> to vector<8x2048xi1>
    %262 = vector.broadcast %cst_63 : f32 to vector<8x2048xf32>
    %263 = arith.select %261, %256, %262 : vector<8x2048xi1>, vector<8x2048xf32>
    %264 = vector.extract_strided_slice %193 {offsets = [6, 0, 0], sizes = [1, 8, 1], strides = [1, 1, 1]} : vector<9x8x1xf32> to vector<1x8x1xf32>
    %265 = vector.shape_cast %264 : vector<1x8x1xf32> to vector<8x1xf32>
    %266 = vector.broadcast %265 : vector<8x1xf32> to vector<8x2048xf32>
    %267 = arith.mulf %263, %266 : vector<8x2048xf32>
    %268 = arith.addf %255, %267 : vector<8x2048xf32>
    %c2016_i32 = arith.constant 2016 : i32
    %269 = tpu.dynamic_rotate %14 by %c2016_i32 dim 1 : vector<8x2048xf32>, i32 -> vector<8x2048xf32>
    %cst_64 = arith.constant 0.000000e+00 : f32
    %270 = vector.shape_cast %258 : vector<1x2048xi1> to vector<1x2048xi1>
    %271 = vector.broadcast %270 : vector<1x2048xi1> to vector<8x2048xi1>
    %272 = vector.broadcast %cst_64 : f32 to vector<8x2048xf32>
    %273 = arith.select %271, %269, %272 : vector<8x2048xi1>, vector<8x2048xf32>
    %274 = vector.extract_strided_slice %193 {offsets = [7, 0, 0], sizes = [1, 8, 1], strides = [1, 1, 1]} : vector<9x8x1xf32> to vector<1x8x1xf32>
    %275 = vector.shape_cast %274 : vector<1x8x1xf32> to vector<8x1xf32>
    %276 = vector.broadcast %275 : vector<8x1xf32> to vector<8x2048xf32>
    %277 = arith.mulf %273, %276 : vector<8x2048xf32>
    %278 = arith.addf %268, %277 : vector<8x2048xf32>
    %c2014_i32 = arith.constant 2014 : i32
    %279 = tpu.dynamic_rotate %14 by %c2014_i32 dim 1 : vector<8x2048xf32>, i32 -> vector<8x2048xf32>
    %280 = arith.andi %258, %225 : vector<1x2048xi1>
    %cst_65 = arith.constant 0.000000e+00 : f32
    %281 = vector.shape_cast %280 : vector<1x2048xi1> to vector<1x2048xi1>
    %282 = vector.broadcast %281 : vector<1x2048xi1> to vector<8x2048xi1>
    %283 = vector.broadcast %cst_65 : f32 to vector<8x2048xf32>
    %284 = arith.select %282, %279, %283 : vector<8x2048xi1>, vector<8x2048xf32>
    %285 = vector.extract_strided_slice %193 {offsets = [8, 0, 0], sizes = [1, 8, 1], strides = [1, 1, 1]} : vector<9x8x1xf32> to vector<1x8x1xf32>
    %286 = vector.shape_cast %285 : vector<1x8x1xf32> to vector<8x1xf32>
    %287 = vector.broadcast %286 : vector<8x1xf32> to vector<8x2048xf32>
    %288 = arith.mulf %284, %287 : vector<8x2048xf32>
    %289 = arith.addf %278, %288 : vector<8x2048xf32>
    %290 = arith.addf %289, %176 : vector<8x2048xf32>
    %c16 = arith.constant 16 : index
    %c0_66 = arith.constant 0 : index
    %291 = vector.load %arg8[%c16, %c0_66] : memref<32x1xf32, #tpu.memory_space<vmem>>, vector<8x1xf32>
    %292 = vector.broadcast %291 : vector<8x1xf32> to vector<8x2048xf32>
    %293 = arith.mulf %290, %292 : vector<8x2048xf32>
    %c16_67 = arith.constant 16 : index
    %c0_68 = arith.constant 0 : index
    %294 = vector.load %arg9[%c16_67, %c0_68] : memref<32x1xf32, #tpu.memory_space<vmem>>, vector<8x1xf32>
    %295 = vector.broadcast %294 : vector<8x1xf32> to vector<8x2048xf32>
    %296 = arith.addf %293, %295 : vector<8x2048xf32>
    %c16_69 = arith.constant 16 : index
    %c0_70 = arith.constant 0 : index
    %297 = vector.load %arg10[%c16_69, %c0_70] : memref<32x1xf32, #tpu.memory_space<vmem>>, vector<8x1xf32>
    %cst_71 = arith.constant 0.000000e+00 : f32
    %298 = vector.broadcast %cst_71 : f32 to vector<8x2048xf32>
    %299 = arith.maximumf %296, %298 : vector<8x2048xf32>
    %cst_72 = arith.constant 0.000000e+00 : f32
    %300 = vector.broadcast %cst_72 : f32 to vector<8x2048xf32>
    %301 = arith.minimumf %296, %300 : vector<8x2048xf32>
    %302 = vector.broadcast %297 : vector<8x1xf32> to vector<8x2048xf32>
    %303 = arith.mulf %302, %301 : vector<8x2048xf32>
    %304 = arith.addf %299, %303 : vector<8x2048xf32>
    %c16_73 = arith.constant 16 : index
    %c0_74 = arith.constant 0 : index
    %305 = vector.load %arg15[%c16_73, %c0_74] : memref<32x2048xf32, #tpu.memory_space<vmem>>, vector<8x2048xf32>
    tpu.vector_store %arg15[%c16_73, %c0_74], %304 {strides = array<i32>} : memref<32x2048xf32, #tpu.memory_space<vmem>>, vector<8x2048xf32>,
    %c3 = arith.constant 3 : index
    %c0_75 = arith.constant 0 : index
    %c0_76 = arith.constant 0 : index
    %c0_77 = arith.constant 0 : index
    %306 = vector.load %arg7[%c3, %c0_75, %c0_76, %c0_77] : memref<4x9x8x1xf32, #tpu.memory_space<vmem>>, vector<1x9x8x1xf32>
    %307 = vector.shape_cast %306 : vector<1x9x8x1xf32> to vector<9x8x1xf32>
    %308 = vector.extract_strided_slice %307 {offsets = [4, 0, 0], sizes = [1, 8, 1], strides = [1, 1, 1]} : vector<9x8x1xf32> to vector<1x8x1xf32>
    %309 = vector.shape_cast %308 : vector<1x8x1xf32> to vector<8x1xf32>
    %310 = vector.broadcast %309 : vector<8x1xf32> to vector<8x2048xf32>
    %311 = arith.mulf %14, %310 : vector<8x2048xf32>
    %c51_i32 = arith.constant 51 : i32
    %312 = tpu.dynamic_rotate %14 by %c51_i32 dim 1 : vector<8x2048xf32>, i32 -> vector<8x2048xf32>
    %c3_i32 = arith.constant 3 : i32
    %313 = vector.broadcast %c3_i32 : i32 to vector<1x2048xi32>
    %314 = arith.cmpi sge, %15, %313 : vector<1x2048xi32>
    %c3_i32_78 = arith.constant 3 : i32
    %315 = vector.broadcast %c3_i32_78 : i32 to vector<1x2048xi32>
    %316 = arith.cmpi sge, %16, %315 : vector<1x2048xi32>
    %317 = arith.andi %314, %316 : vector<1x2048xi1>
    %cst_79 = arith.constant 0.000000e+00 : f32
    %318 = vector.shape_cast %317 : vector<1x2048xi1> to vector<1x2048xi1>
    %319 = vector.broadcast %318 : vector<1x2048xi1> to vector<8x2048xi1>
    %320 = vector.broadcast %cst_79 : f32 to vector<8x2048xf32>
    %321 = arith.select %319, %312, %320 : vector<8x2048xi1>, vector<8x2048xf32>
    %322 = vector.extract_strided_slice %307 {offsets = [0, 0, 0], sizes = [1, 8, 1], strides = [1, 1, 1]} : vector<9x8x1xf32> to vector<1x8x1xf32>
    %323 = vector.shape_cast %322 : vector<1x8x1xf32> to vector<8x1xf32>
    %324 = vector.broadcast %323 : vector<8x1xf32> to vector<8x2048xf32>
    %325 = arith.mulf %321, %324 : vector<8x2048xf32>
    %326 = arith.addf %311, %325 : vector<8x2048xf32>
    %c48_i32 = arith.constant 48 : i32
    %327 = tpu.dynamic_rotate %14 by %c48_i32 dim 1 : vector<8x2048xf32>, i32 -> vector<8x2048xf32>
    %cst_80 = arith.constant 0.000000e+00 : f32
    %328 = vector.shape_cast %314 : vector<1x2048xi1> to vector<1x2048xi1>
    %329 = vector.broadcast %328 : vector<1x2048xi1> to vector<8x2048xi1>
    %330 = vector.broadcast %cst_80 : f32 to vector<8x2048xf32>
    %331 = arith.select %329, %327, %330 : vector<8x2048xi1>, vector<8x2048xf32>
    %332 = vector.extract_strided_slice %307 {offsets = [1, 0, 0], sizes = [1, 8, 1], strides = [1, 1, 1]} : vector<9x8x1xf32> to vector<1x8x1xf32>
    %333 = vector.shape_cast %332 : vector<1x8x1xf32> to vector<8x1xf32>
    %334 = vector.broadcast %333 : vector<8x1xf32> to vector<8x2048xf32>
    %335 = arith.mulf %331, %334 : vector<8x2048xf32>
    %336 = arith.addf %326, %335 : vector<8x2048xf32>
    %c45_i32 = arith.constant 45 : i32
    %337 = tpu.dynamic_rotate %14 by %c45_i32 dim 1 : vector<8x2048xf32>, i32 -> vector<8x2048xf32>
    %c13_i32 = arith.constant 13 : i32
    %338 = vector.broadcast %c13_i32 : i32 to vector<1x2048xi32>
    %339 = arith.cmpi slt, %16, %338 : vector<1x2048xi32>
    %340 = arith.andi %314, %339 : vector<1x2048xi1>
    %cst_81 = arith.constant 0.000000e+00 : f32
    %341 = vector.shape_cast %340 : vector<1x2048xi1> to vector<1x2048xi1>
    %342 = vector.broadcast %341 : vector<1x2048xi1> to vector<8x2048xi1>
    %343 = vector.broadcast %cst_81 : f32 to vector<8x2048xf32>
    %344 = arith.select %342, %337, %343 : vector<8x2048xi1>, vector<8x2048xf32>
    %345 = vector.extract_strided_slice %307 {offsets = [2, 0, 0], sizes = [1, 8, 1], strides = [1, 1, 1]} : vector<9x8x1xf32> to vector<1x8x1xf32>
    %346 = vector.shape_cast %345 : vector<1x8x1xf32> to vector<8x1xf32>
    %347 = vector.broadcast %346 : vector<8x1xf32> to vector<8x2048xf32>
    %348 = arith.mulf %344, %347 : vector<8x2048xf32>
    %349 = arith.addf %336, %348 : vector<8x2048xf32>
    %c3_i32_82 = arith.constant 3 : i32
    %350 = tpu.dynamic_rotate %14 by %c3_i32_82 dim 1 : vector<8x2048xf32>, i32 -> vector<8x2048xf32>
    %cst_83 = arith.constant 0.000000e+00 : f32
    %351 = vector.shape_cast %316 : vector<1x2048xi1> to vector<1x2048xi1>
    %352 = vector.broadcast %351 : vector<1x2048xi1> to vector<8x2048xi1>
    %353 = vector.broadcast %cst_83 : f32 to vector<8x2048xf32>
    %354 = arith.select %352, %350, %353 : vector<8x2048xi1>, vector<8x2048xf32>
    %355 = vector.extract_strided_slice %307 {offsets = [3, 0, 0], sizes = [1, 8, 1], strides = [1, 1, 1]} : vector<9x8x1xf32> to vector<1x8x1xf32>
    %356 = vector.shape_cast %355 : vector<1x8x1xf32> to vector<8x1xf32>
    %357 = vector.broadcast %356 : vector<8x1xf32> to vector<8x2048xf32>
    %358 = arith.mulf %354, %357 : vector<8x2048xf32>
    %359 = arith.addf %349, %358 : vector<8x2048xf32>
    %c2045_i32 = arith.constant 2045 : i32
    %360 = tpu.dynamic_rotate %14 by %c2045_i32 dim 1 : vector<8x2048xf32>, i32 -> vector<8x2048xf32>
    %cst_84 = arith.constant 0.000000e+00 : f32
    %361 = vector.shape_cast %339 : vector<1x2048xi1> to vector<1x2048xi1>
    %362 = vector.broadcast %361 : vector<1x2048xi1> to vector<8x2048xi1>
    %363 = vector.broadcast %cst_84 : f32 to vector<8x2048xf32>
    %364 = arith.select %362, %360, %363 : vector<8x2048xi1>, vector<8x2048xf32>
    %365 = vector.extract_strided_slice %307 {offsets = [5, 0, 0], sizes = [1, 8, 1], strides = [1, 1, 1]} : vector<9x8x1xf32> to vector<1x8x1xf32>
    %366 = vector.shape_cast %365 : vector<1x8x1xf32> to vector<8x1xf32>
    %367 = vector.broadcast %366 : vector<8x1xf32> to vector<8x2048xf32>
    %368 = arith.mulf %364, %367 : vector<8x2048xf32>
    %369 = arith.addf %359, %368 : vector<8x2048xf32>
    %c2003_i32 = arith.constant 2003 : i32
    %370 = tpu.dynamic_rotate %14 by %c2003_i32 dim 1 : vector<8x2048xf32>, i32 -> vector<8x2048xf32>
    %c13_i32_85 = arith.constant 13 : i32
    %371 = vector.broadcast %c13_i32_85 : i32 to vector<1x2048xi32>
    %372 = arith.cmpi slt, %15, %371 : vector<1x2048xi32>
    %373 = arith.andi %372, %316 : vector<1x2048xi1>
    %cst_86 = arith.constant 0.000000e+00 : f32
    %374 = vector.shape_cast %373 : vector<1x2048xi1> to vector<1x2048xi1>
    %375 = vector.broadcast %374 : vector<1x2048xi1> to vector<8x2048xi1>
    %376 = vector.broadcast %cst_86 : f32 to vector<8x2048xf32>
    %377 = arith.select %375, %370, %376 : vector<8x2048xi1>, vector<8x2048xf32>
    %378 = vector.extract_strided_slice %307 {offsets = [6, 0, 0], sizes = [1, 8, 1], strides = [1, 1, 1]} : vector<9x8x1xf32> to vector<1x8x1xf32>
    %379 = vector.shape_cast %378 : vector<1x8x1xf32> to vector<8x1xf32>
    %380 = vector.broadcast %379 : vector<8x1xf32> to vector<8x2048xf32>
    %381 = arith.mulf %377, %380 : vector<8x2048xf32>
    %382 = arith.addf %369, %381 : vector<8x2048xf32>
    %c2000_i32 = arith.constant 2000 : i32
    %383 = tpu.dynamic_rotate %14 by %c2000_i32 dim 1 : vector<8x2048xf32>, i32 -> vector<8x2048xf32>
    %cst_87 = arith.constant 0.000000e+00 : f32
    %384 = vector.shape_cast %372 : vector<1x2048xi1> to vector<1x2048xi1>
    %385 = vector.broadcast %384 : vector<1x2048xi1> to vector<8x2048xi1>
    %386 = vector.broadcast %cst_87 : f32 to vector<8x2048xf32>
    %387 = arith.select %385, %383, %386 : vector<8x2048xi1>, vector<8x2048xf32>
    %388 = vector.extract_strided_slice %307 {offsets = [7, 0, 0], sizes = [1, 8, 1], strides = [1, 1, 1]} : vector<9x8x1xf32> to vector<1x8x1xf32>
    %389 = vector.shape_cast %388 : vector<1x8x1xf32> to vector<8x1xf32>
    %390 = vector.broadcast %389 : vector<8x1xf32> to vector<8x2048xf32>
    %391 = arith.mulf %387, %390 : vector<8x2048xf32>
    %392 = arith.addf %382, %391 : vector<8x2048xf32>
    %c1997_i32 = arith.constant 1997 : i32
    %393 = tpu.dynamic_rotate %14 by %c1997_i32 dim 1 : vector<8x2048xf32>, i32 -> vector<8x2048xf32>
    %394 = arith.andi %372, %339 : vector<1x2048xi1>
    %cst_88 = arith.constant 0.000000e+00 : f32
    %395 = vector.shape_cast %394 : vector<1x2048xi1> to vector<1x2048xi1>
    %396 = vector.broadcast %395 : vector<1x2048xi1> to vector<8x2048xi1>
    %397 = vector.broadcast %cst_88 : f32 to vector<8x2048xf32>
    %398 = arith.select %396, %393, %397 : vector<8x2048xi1>, vector<8x2048xf32>
    %399 = vector.extract_strided_slice %307 {offsets = [8, 0, 0], sizes = [1, 8, 1], strides = [1, 1, 1]} : vector<9x8x1xf32> to vector<1x8x1xf32>
    %400 = vector.shape_cast %399 : vector<1x8x1xf32> to vector<8x1xf32>
    %401 = vector.broadcast %400 : vector<8x1xf32> to vector<8x2048xf32>
    %402 = arith.mulf %398, %401 : vector<8x2048xf32>
    %403 = arith.addf %392, %402 : vector<8x2048xf32>
    %404 = arith.addf %403, %290 : vector<8x2048xf32>
    %c24 = arith.constant 24 : index
    %c0_89 = arith.constant 0 : index
    %405 = vector.load %arg8[%c24, %c0_89] : memref<32x1xf32, #tpu.memory_space<vmem>>, vector<8x1xf32>
    %406 = vector.broadcast %405 : vector<8x1xf32> to vector<8x2048xf32>
    %407 = arith.mulf %404, %406 : vector<8x2048xf32>
    %c24_90 = arith.constant 24 : index
    %c0_91 = arith.constant 0 : index
    %408 = vector.load %arg9[%c24_90, %c0_91] : memref<32x1xf32, #tpu.memory_space<vmem>>, vector<8x1xf32>
    %409 = vector.broadcast %408 : vector<8x1xf32> to vector<8x2048xf32>
    %410 = arith.addf %407, %409 : vector<8x2048xf32>
    %c24_92 = arith.constant 24 : index
    %c0_93 = arith.constant 0 : index
    %411 = vector.load %arg10[%c24_92, %c0_93] : memref<32x1xf32, #tpu.memory_space<vmem>>, vector<8x1xf32>
    %cst_94 = arith.constant 0.000000e+00 : f32
    %412 = vector.broadcast %cst_94 : f32 to vector<8x2048xf32>
    %413 = arith.maximumf %410, %412 : vector<8x2048xf32>
    %cst_95 = arith.constant 0.000000e+00 : f32
    %414 = vector.broadcast %cst_95 : f32 to vector<8x2048xf32>
    %415 = arith.minimumf %410, %414 : vector<8x2048xf32>
    %416 = vector.broadcast %411 : vector<8x1xf32> to vector<8x2048xf32>
    %417 = arith.mulf %416, %415 : vector<8x2048xf32>
    %418 = arith.addf %413, %417 : vector<8x2048xf32>
    %c24_96 = arith.constant 24 : index
    %c0_97 = arith.constant 0 : index
    %419 = vector.load %arg15[%c24_96, %c0_97] : memref<32x2048xf32, #tpu.memory_space<vmem>>, vector<8x2048xf32>
    tpu.vector_store %arg15[%c24_96, %c0_97], %418 {strides = array<i32>} : memref<32x2048xf32, #tpu.memory_space<vmem>>, vector<8x2048xf32>,
    %c0_98 = arith.constant 0 : index
    %c0_99 = arith.constant 0 : index
    %420 = vector.load %arg15[%c0_98, %c0_99] : memref<32x2048xf32, #tpu.memory_space<vmem>>, vector<32x2048xf32>
    %c0_100 = arith.constant 0 : index
    %c0_101 = arith.constant 0 : index
    %421 = vector.load %arg11[%c0_100, %c0_101] : memref<32x32xf32, #tpu.memory_space<vmem>>, vector<32x32xf32>
    %cst_102 = arith.constant dense<0.000000e+00> : vector<32x2048xf32>
    %422 = tpu.matmul %421, %420, %cst_102 {dimension_numbers = #tpu.dot_dimension_numbers<[1], [0], [0], [1], [0, 0, 1, 1], [], []>} : vector<32x32xf32>, vector<32x2048xf32>, vector<32x2048xf32> -> vector<32x2048xf32>
    %c0_103 = arith.constant 0 : index
    %c0_104 = arith.constant 0 : index
    %423 = vector.load %arg12[%c0_103, %c0_104] : memref<32x1xf32, #tpu.memory_space<vmem>>, vector<32x1xf32>
    %424 = vector.broadcast %423 : vector<32x1xf32> to vector<32x2048xf32>
    %425 = arith.addf %422, %424 : vector<32x2048xf32>
    %426 = arith.addf %425, %1 : vector<32x2048xf32>
    %c0_105 = arith.constant 0 : index
    %c0_106 = arith.constant 0 : index
    %427 = vector.load %arg13[%c0_105, %c0_106] : memref<32x1xf32, #tpu.memory_space<vmem>>, vector<32x1xf32>
    %cst_107 = arith.constant 0.000000e+00 : f32
    %428 = vector.broadcast %cst_107 : f32 to vector<32x2048xf32>
    %429 = arith.maximumf %426, %428 : vector<32x2048xf32>
    %cst_108 = arith.constant 0.000000e+00 : f32
    %430 = vector.broadcast %cst_108 : f32 to vector<32x2048xf32>
    %431 = arith.minimumf %426, %430 : vector<32x2048xf32>
    %432 = vector.broadcast %427 : vector<32x1xf32> to vector<32x2048xf32>
    %433 = arith.mulf %432, %431 : vector<32x2048xf32>
    %434 = arith.addf %429, %433 : vector<32x2048xf32>
    %c0_109 = arith.constant 0 : index
    %c0_110 = arith.constant 0 : index
    %c0_111 = arith.constant 0 : index
    %435 = vector.load %arg14[%c0_109, %c0_110, %c0_111] : memref<1x32x2048xf32, #tpu.memory_space<vmem>>, vector<1x32x2048xf32>
    %436 = vector.shape_cast %435 : vector<1x32x2048xf32> to vector<32x2048xf32>
    %437 = vector.shape_cast %434 : vector<32x2048xf32> to vector<1x32x2048xf32>
    tpu.vector_store %arg14[%c0_109, %c0_110, %c0_111], %437 {strides = array<i32>} : memref<1x32x2048xf32, #tpu.memory_space<vmem>>, vector<1x32x2048xf32>,
    return
  }
  func.func @transform_0(%arg0: i32) -> (i32, i32, i32) {
    %c0_i32 = arith.constant 0 : i32
    %c0_i32_0 = arith.constant 0 : i32
    %c0_i32_1 = arith.constant 0 : i32
    return %arg0, %c0_i32, %c0_i32_0 : i32, i32, i32
  }
  func.func @transform_1(%arg0: i32) -> (i32, i32) {
    %c0_i32 = arith.constant 0 : i32
    %c0_i32_0 = arith.constant 0 : i32
    %c0_i32_1 = arith.constant 0 : i32
    return %c0_i32, %c0_i32_0 : i32, i32
  }
  func.func @transform_2(%arg0: i32) -> (i32, i32) {
    %c0_i32 = arith.constant 0 : i32
    %c0_i32_0 = arith.constant 0 : i32
    %c0_i32_1 = arith.constant 0 : i32
    return %c0_i32, %c0_i32_0 : i32, i32
  }
  func.func @transform_3(%arg0: i32) -> (i32, i32) {
    %c0_i32 = arith.constant 0 : i32
    %c0_i32_0 = arith.constant 0 : i32
    %c0_i32_1 = arith.constant 0 : i32
    return %c0_i32, %c0_i32_0 : i32, i32
  }
  func.func @transform_4(%arg0: i32) -> (i32, i32) {
    %c0_i32 = arith.constant 0 : i32
    %c0_i32_0 = arith.constant 0 : i32
    %c0_i32_1 = arith.constant 0 : i32
    return %c0_i32, %c0_i32_0 : i32, i32
  }
  func.func @transform_5(%arg0: i32) -> (i32, i32) {
    %c0_i32 = arith.constant 0 : i32
    %c0_i32_0 = arith.constant 0 : i32
    %c0_i32_1 = arith.constant 0 : i32
    return %c0_i32, %c0_i32_0 : i32, i32
  }
  func.func @transform_6(%arg0: i32) -> (i32, i32, i32, i32) {
    %c0_i32 = arith.constant 0 : i32
    %c0_i32_0 = arith.constant 0 : i32
    %c0_i32_1 = arith.constant 0 : i32
    %c0_i32_2 = arith.constant 0 : i32
    %c0_i32_3 = arith.constant 0 : i32
    return %c0_i32, %c0_i32_0, %c0_i32_1, %c0_i32_2 : i32, i32, i32, i32
  }
  func.func @transform_7(%arg0: i32) -> (i32, i32) {
    %c0_i32 = arith.constant 0 : i32
    %c0_i32_0 = arith.constant 0 : i32
    %c0_i32_1 = arith.constant 0 : i32
    return %c0_i32, %c0_i32_0 : i32, i32
  }
  func.func @transform_8(%arg0: i32) -> (i32, i32) {
    %c0_i32 = arith.constant 0 : i32
    %c0_i32_0 = arith.constant 0 : i32
    %c0_i32_1 = arith.constant 0 : i32
    return %c0_i32, %c0_i32_0 : i32, i32
  }
  func.func @transform_9(%arg0: i32) -> (i32, i32) {
    %c0_i32 = arith.constant 0 : i32
    %c0_i32_0 = arith.constant 0 : i32
    %c0_i32_1 = arith.constant 0 : i32
    return %c0_i32, %c0_i32_0 : i32, i32
  }
  func.func @transform_10(%arg0: i32) -> (i32, i32) {
    %c0_i32 = arith.constant 0 : i32
    %c0_i32_0 = arith.constant 0 : i32
    %c0_i32_1 = arith.constant 0 : i32
    return %c0_i32, %c0_i32_0 : i32, i32
  }
  func.func @transform_11(%arg0: i32) -> (i32, i32) {
    %c0_i32 = arith.constant 0 : i32
    %c0_i32_0 = arith.constant 0 : i32
    %c0_i32_1 = arith.constant 0 : i32
    return %c0_i32, %c0_i32_0 : i32, i32
  }
  func.func @transform_12(%arg0: i32) -> (i32, i32) {
    %c0_i32 = arith.constant 0 : i32
    %c0_i32_0 = arith.constant 0 : i32
    %c0_i32_1 = arith.constant 0 : i32
    return %c0_i32, %c0_i32_0 : i32, i32
  }
  func.func @transform_13(%arg0: i32) -> (i32, i32, i32) {
    %c0_i32 = arith.constant 0 : i32
    %c0_i32_0 = arith.constant 0 : i32
    %c0_i32_1 = arith.constant 0 : i32
    return %arg0, %c0_i32, %c0_i32_0 : i32, i32, i32
  }
}

</mosaic_0001>

<llo_original>
// kernel: tpu_custom_call.1
$region0: #{tpu_custom_call.1}
  #allocation0 [shape = 'u32[]', space=smem, size = 0x4, offset = 0x4, fixed_abs, tag = 'smem constant byte address 0x4 - core index']
  #allocation1 [shape = 'u32[144,128]{1,0:T(1,128)}', space=vmem, size = 0x12000, scoped, tag = 'internal scratch']
  #allocation2 [shape = 'f32[32,2048]{1,0:T(8,128)}', space=vmem, size = 0x40000, scoped, tag = 'scratch operand']
  %s0 = inlined_call_operand.hbm [shape: f32[2,32,2048], index: 0, kind: input, shape index: {}]
  %s1 = inlined_call_operand.vmem [shape: s32[1,2048], index: 1, kind: input, shape index: {}]
  %s2 = inlined_call_operand.vmem [shape: s32[1,2048], index: 2, kind: input, shape index: {}]
  %s3 = inlined_call_operand.vmem [shape: f32[8,32], index: 3, kind: input, shape index: {}]
  %s4 = inlined_call_operand.vmem [shape: f32[8,1], index: 4, kind: input, shape index: {}]
  %s5 = inlined_call_operand.vmem [shape: f32[8,1], index: 5, kind: input, shape index: {}]
  %s6 = inlined_call_operand.vmem [shape: f32[4,9,8,1], index: 6, kind: input, shape index: {}]
  %s7 = inlined_call_operand.vmem [shape: f32[32,1], index: 7, kind: input, shape index: {}]
  %s8 = inlined_call_operand.vmem [shape: f32[32,1], index: 8, kind: input, shape index: {}]
  %s9 = inlined_call_operand.vmem [shape: f32[32,1], index: 9, kind: input, shape index: {}]
  %s10 = inlined_call_operand.vmem [shape: f32[32,32], index: 10, kind: input, shape index: {}]
  %s11 = inlined_call_operand.vmem [shape: f32[32,1], index: 11, kind: input, shape index: {}]
  %s12 = inlined_call_operand.vmem [shape: f32[32,1], index: 12, kind: input, shape index: {}]
  %s13 = inlined_call_operand.hbm [shape: f32[2,32,2048], index: 13, kind: output, shape index: {}]
  %s14 = sld [smem:[#allocation0]]
  $region89: #{tpu_custom_call.1} parent=0
    _
  %s16 = ssub.s32 1, %s14
  %s17 = scalar_select 0, %s16, %s14
  $region1: #{tpu_custom_call.1} parent=0
    #allocation3 [shape = 'u8[524288]{0}', space=vmem, size = 0x80000, scoped, tag = 'input window, operand 0']
    #allocation4 [shape = 's32[2]{0}', space=sflag, size = 0x8, scoped, tag = 'scoped memory for tpu_custom_call.1']
    #allocation5 [shape = 's32[2]{0}', space=sflag, size = 0x8, scoped, tag = 'scoped memory for tpu_custom_call.1']
    #allocation6 [shape = 'u8[524288]{0}', space=vmem, size = 0x80000, scoped, tag = 'output window, operand 0']
    %18 = vsyncpa [#allocation4], 0
    %s19 = scalar_lea.sflag [#allocation4], 1
    %20 = vsyncpa %s19, 0
    %21 = vsyncpa [#allocation5], 0
    %s22 = scalar_lea.sflag [#allocation5], 1
    %23 = vsyncpa %s22, 0
    loop: start=0, step=1, limit=4
    $region2: #{tpu_custom_call.1} parent=1 // loop_pre_header
      _
    $region3: #{tpu_custom_call.1} parent=1 // loop_header
      %s25 = sphi 0, %s29
      %p26 = scmp.ge.s32.totalorder %s25, 4
      %s35 = sphi 0, %s37
      %s38 = sphi 0, %s35
      %s39 = sphi 0, %s38
      %s55 = sphi 0, %s39
      %s59 = sphi 0, %s59
      %s61 = sphi 0, %s59
      %s62 = sphi 0, %s61
      %s76 = sphi 0, %s62
      %s80 = sphi 0, %s80
      %s82 = sphi 0, %s80
      %s83 = sphi 0, %s82
      %s97 = sphi 0, %s83
      %s101 = sphi 0, %s101
      %s103 = sphi 0, %s101
      %s104 = sphi 0, %s103
      %s118 = sphi 0, %s104
      %s122 = sphi 0, %s122
      %s124 = sphi 0, %s122
      %s125 = sphi 0, %s124
      %s139 = sphi 0, %s125
      %s143 = sphi 0, %s143
      %s145 = sphi 0, %s143
      %s146 = sphi 0, %s145
      %s160 = sphi 0, %s146
      %s164 = sphi 0, %s164
      %s166 = sphi 0, %s164
      %s167 = sphi 0, %s166
      %s181 = sphi 0, %s167
      %s185 = sphi 0, %s185
      %s187 = sphi 0, %s185
      %s188 = sphi 0, %s187
      %s202 = sphi 0, %s188
      %s206 = sphi 0, %s206
      %s208 = sphi 0, %s206
      %s209 = sphi 0, %s208
      %s223 = sphi 0, %s209
      %s227 = sphi 0, %s227
      %s229 = sphi 0, %s227
      %s230 = sphi 0, %s229
      %s244 = sphi 0, %s230
      %s248 = sphi 0, %s248
      %s250 = sphi 0, %s248
      %s251 = sphi 0, %s250
      %s265 = sphi 0, %s251
      %s269 = sphi 0, %s269
      %s271 = sphi 0, %s269
      %s272 = sphi 0, %s271
      %s286 = sphi 0, %s272
      %s290 = sphi 0, %s290
      %s292 = sphi 0, %s290
      %s293 = sphi 0, %s292
      %s307 = sphi 0, %s293
      %s313 = sphi 0, %s315
      %s316 = sphi 0, %s313
      %s317 = sphi 0, %s316
      %s333 = sphi 0, %s317
    $region4: #{tpu_custom_call.1} parent=1 // loop_header_branch
      %28 = sbr.rel (%p26) target = $region8
    $region5: #{tpu_custom_call.1} parent=1 // loop_body
      %s30 = ssub.s32 %s25, 1
      %s31 = ssub.s32 %s25, 2
      %s32 = sadd.s32 %s25, 1
      %s33 = ssub.s32 %s25, %s32
      %p34 = scmp.eq.s32.totalorder %s33, 0
      %s36 = sadd.s32 %s35, 1
      %s37 = scalar_select %p34, %s35, %s36
      %p40 = pneg %p34
      %p41 = scmp.eq.s32.totalorder %s25, 1
      %p42 = por %p40, %p41
      %p43 = scmp.ne.s32.totalorder %s35, %s38
      %p44 = scmp.eq.s32.totalorder %s25, 0
      %p45 = por %p43, %p44
      %p46 = scmp.ne.s32.totalorder %s35, %s38
      %p47 = scmp.eq.s32.totalorder %s30, 1
      %p48 = por %p46, %p47
      %p49 = scmp.ne.s32.totalorder %s38, %s39
      %p50 = scmp.eq.s32.totalorder %s30, 0
      %p51 = por %p49, %p50
      %p52 = scmp.ne.s32.totalorder %s38, %s39
      %p53 = scmp.eq.s32.totalorder %s31, 1
      %p54 = por %p52, %p53
      %p56 = scmp.ne.s32.totalorder %s39, %s55
      %p57 = scmp.eq.s32.totalorder %s31, 0
      %p58 = por %p56, %p57
      %s60 = sadd.s32 %s59, 1
      %p63 = scmp.eq.s32.totalorder %s25, 1
      %p64 = scmp.ne.s32.totalorder %s59, %s61
      %p65 = scmp.eq.s32.totalorder %s25, 0
      %p66 = por %p64, %p65
      %p67 = scmp.ne.s32.totalorder %s59, %s61
      %p68 = scmp.eq.s32.totalorder %s30, 1
      %p69 = por %p67, %p68
      %p70 = scmp.ne.s32.totalorder %s61, %s62
      %p71 = scmp.eq.s32.totalorder %s30, 0
      %p72 = por %p70, %p71
      %p73 = scmp.ne.s32.totalorder %s61, %s62
      %p74 = scmp.eq.s32.totalorder %s31, 1
      %p75 = por %p73, %p74
      %p77 = scmp.ne.s32.totalorder %s62, %s76
      %p78 = scmp.eq.s32.totalorder %s31, 0
      %p79 = por %p77, %p78
      %s81 = sadd.s32 %s80, 1
      %p84 = scmp.eq.s32.totalorder %s25, 1
      %p85 = scmp.ne.s32.totalorder %s80, %s82
      %p86 = scmp.eq.s32.totalorder %s25, 0
      %p87 = por %p85, %p86
      %p88 = scmp.ne.s32.totalorder %s80, %s82
      %p89 = scmp.eq.s32.totalorder %s30, 1
      %p90 = por %p88, %p89
      %p91 = scmp.ne.s32.totalorder %s82, %s83
      %p92 = scmp.eq.s32.totalorder %s30, 0
      %p93 = por %p91, %p92
      %p94 = scmp.ne.s32.totalorder %s82, %s83
      %p95 = scmp.eq.s32.totalorder %s31, 1
      %p96 = por %p94, %p95
      %p98 = scmp.ne.s32.totalorder %s83, %s97
      %p99 = scmp.eq.s32.totalorder %s31, 0
      %p100 = por %p98, %p99
      %s102 = sadd.s32 %s101, 1
      %p105 = scmp.eq.s32.totalorder %s25, 1
      %p106 = scmp.ne.s32.totalorder %s101, %s103
      %p107 = scmp.eq.s32.totalorder %s25, 0
      %p108 = por %p106, %p107
      %p109 = scmp.ne.s32.totalorder %s101, %s103
      %p110 = scmp.eq.s32.totalorder %s30, 1
      %p111 = por %p109, %p110
      %p112 = scmp.ne.s32.totalorder %s103, %s104
      %p113 = scmp.eq.s32.totalorder %s30, 0
      %p114 = por %p112, %p113
      %p115 = scmp.ne.s32.totalorder %s103, %s104
      %p116 = scmp.eq.s32.totalorder %s31, 1
      %p117 = por %p115, %p116
      %p119 = scmp.ne.s32.totalorder %s104, %s118
      %p120 = scmp.eq.s32.totalorder %s31, 0
      %p121 = por %p119, %p120
      %s123 = sadd.s32 %s122, 1
      %p126 = scmp.eq.s32.totalorder %s25, 1
      %p127 = scmp.ne.s32.totalorder %s122, %s124
      %p128 = scmp.eq.s32.totalorder %s25, 0
      %p129 = por %p127, %p128
      %p130 = scmp.ne.s32.totalorder %s122, %s124
      %p131 = scmp.eq.s32.totalorder %s30, 1
      %p132 = por %p130, %p131
      %p133 = scmp.ne.s32.totalorder %s124, %s125
      %p134 = scmp.eq.s32.totalorder %s30, 0
      %p135 = por %p133, %p134
      %p136 = scmp.ne.s32.totalorder %s124, %s125
      %p137 = scmp.eq.s32.totalorder %s31, 1
      %p138 = por %p136, %p137
      %p140 = scmp.ne.s32.totalorder %s125, %s139
      %p141 = scmp.eq.s32.totalorder %s31, 0
      %p142 = por %p140, %p141
      %s144 = sadd.s32 %s143, 1
      %p147 = scmp.eq.s32.totalorder %s25, 1
      %p148 = scmp.ne.s32.totalorder %s143, %s145
      %p149 = scmp.eq.s32.totalorder %s25, 0
      %p150 = por %p148, %p149
      %p151 = scmp.ne.s32.totalorder %s143, %s145
      %p152 = scmp.eq.s32.totalorder %s30, 1
      %p153 = por %p151, %p152
      %p154 = scmp.ne.s32.totalorder %s145, %s146
      %p155 = scmp.eq.s32.totalorder %s30, 0
      %p156 = por %p154, %p155
      %p157 = scmp.ne.s32.totalorder %s145, %s146
      %p158 = scmp.eq.s32.totalorder %s31, 1
      %p159 = por %p157, %p158
      %p161 = scmp.ne.s32.totalorder %s146, %s160
      %p162 = scmp.eq.s32.totalorder %s31, 0
      %p163 = por %p161, %p162
      %s165 = sadd.s32 %s164, 1
      %p168 = scmp.eq.s32.totalorder %s25, 1
      %p169 = scmp.ne.s32.totalorder %s164, %s166
      %p170 = scmp.eq.s32.totalorder %s25, 0
      %p171 = por %p169, %p170
      %p172 = scmp.ne.s32.totalorder %s164, %s166
      %p173 = scmp.eq.s32.totalorder %s30, 1
      %p174 = por %p172, %p173
      %p175 = scmp.ne.s32.totalorder %s166, %s167
      %p176 = scmp.eq.s32.totalorder %s30, 0
      %p177 = por %p175, %p176
      %p178 = scmp.ne.s32.totalorder %s166, %s167
      %p179 = scmp.eq.s32.totalorder %s31, 1
      %p180 = por %p178, %p179
      %p182 = scmp.ne.s32.totalorder %s167, %s181
      %p183 = scmp.eq.s32.totalorder %s31, 0
      %p184 = por %p182, %p183
      %s186 = sadd.s32 %s185, 1
      %p189 = scmp.eq.s32.totalorder %s25, 1
      %p190 = scmp.ne.s32.totalorder %s185, %s187
      %p191 = scmp.eq.s32.totalorder %s25, 0
      %p192 = por %p190, %p191
      %p193 = scmp.ne.s32.totalorder %s185, %s187
      %p194 = scmp.eq.s32.totalorder %s30, 1
      %p195 = por %p193, %p194
      %p196 = scmp.ne.s32.totalorder %s187, %s188
      %p197 = scmp.eq.s32.totalorder %s30, 0
      %p198 = por %p196, %p197
      %p199 = scmp.ne.s32.totalorder %s187, %s188
      %p200 = scmp.eq.s32.totalorder %s31, 1
      %p201 = por %p199, %p200
      %p203 = scmp.ne.s32.totalorder %s188, %s202
      %p204 = scmp.eq.s32.totalorder %s31, 0
      %p205 = por %p203, %p204
      %s207 = sadd.s32 %s206, 1
      %p210 = scmp.eq.s32.totalorder %s25, 1
      %p211 = scmp.ne.s32.totalorder %s206, %s208
      %p212 = scmp.eq.s32.totalorder %s25, 0
      %p213 = por %p211, %p212
      %p214 = scmp.ne.s32.totalorder %s206, %s208
      %p215 = scmp.eq.s32.totalorder %s30, 1
      %p216 = por %p214, %p215
      %p217 = scmp.ne.s32.totalorder %s208, %s209
      %p218 = scmp.eq.s32.totalorder %s30, 0
      %p219 = por %p217, %p218
      %p220 = scmp.ne.s32.totalorder %s208, %s209
      %p221 = scmp.eq.s32.totalorder %s31, 1
      %p222 = por %p220, %p221
      %p224 = scmp.ne.s32.totalorder %s209, %s223
      %p225 = scmp.eq.s32.totalorder %s31, 0
      %p226 = por %p224, %p225
      %s228 = sadd.s32 %s227, 1
      %p231 = scmp.eq.s32.totalorder %s25, 1
      %p232 = scmp.ne.s32.totalorder %s227, %s229
      %p233 = scmp.eq.s32.totalorder %s25, 0
      %p234 = por %p232, %p233
      %p235 = scmp.ne.s32.totalorder %s227, %s229
      %p236 = scmp.eq.s32.totalorder %s30, 1
      %p237 = por %p235, %p236
      %p238 = scmp.ne.s32.totalorder %s229, %s230
      %p239 = scmp.eq.s32.totalorder %s30, 0
      %p240 = por %p238, %p239
      %p241 = scmp.ne.s32.totalorder %s229, %s230
      %p242 = scmp.eq.s32.totalorder %s31, 1
      %p243 = por %p241, %p242
      %p245 = scmp.ne.s32.totalorder %s230, %s244
      %p246 = scmp.eq.s32.totalorder %s31, 0
      %p247 = por %p245, %p246
      %s249 = sadd.s32 %s248, 1
      %p252 = scmp.eq.s32.totalorder %s25, 1
      %p253 = scmp.ne.s32.totalorder %s248, %s250
      %p254 = scmp.eq.s32.totalorder %s25, 0
      %p255 = por %p253, %p254
      %p256 = scmp.ne.s32.totalorder %s248, %s250
      %p257 = scmp.eq.s32.totalorder %s30, 1
      %p258 = por %p256, %p257
      %p259 = scmp.ne.s32.totalorder %s250, %s251
      %p260 = scmp.eq.s32.totalorder %s30, 0
      %p261 = por %p259, %p260
      %p262 = scmp.ne.s32.totalorder %s250, %s251
      %p263 = scmp.eq.s32.totalorder %s31, 1
      %p264 = por %p262, %p263
      %p266 = scmp.ne.s32.totalorder %s251, %s265
      %p267 = scmp.eq.s32.totalorder %s31, 0
      %p268 = por %p266, %p267
      %s270 = sadd.s32 %s269, 1
      %p273 = scmp.eq.s32.totalorder %s25, 1
      %p274 = scmp.ne.s32.totalorder %s269, %s271
      %p275 = scmp.eq.s32.totalorder %s25, 0
      %p276 = por %p274, %p275
      %p277 = scmp.ne.s32.totalorder %s269, %s271
      %p278 = scmp.eq.s32.totalorder %s30, 1
      %p279 = por %p277, %p278
      %p280 = scmp.ne.s32.totalorder %s271, %s272
      %p281 = scmp.eq.s32.totalorder %s30, 0
      %p282 = por %p280, %p281
      %p283 = scmp.ne.s32.totalorder %s271, %s272
      %p284 = scmp.eq.s32.totalorder %s31, 1
      %p285 = por %p283, %p284
      %p287 = scmp.ne.s32.totalorder %s272, %s286
      %p288 = scmp.eq.s32.totalorder %s31, 0
      %p289 = por %p287, %p288
      %s291 = sadd.s32 %s290, 1
      %p294 = scmp.eq.s32.totalorder %s25, 1
      %p295 = scmp.ne.s32.totalorder %s290, %s292
      %p296 = scmp.eq.s32.totalorder %s25, 0
      %p297 = por %p295, %p296
      %p298 = scmp.ne.s32.totalorder %s290, %s292
      %p299 = scmp.eq.s32.totalorder %s30, 1
      %p300 = por %p298, %p299
      %p301 = scmp.ne.s32.totalorder %s292, %s293
      %p302 = scmp.eq.s32.totalorder %s30, 0
      %p303 = por %p301, %p302
      %p304 = scmp.ne.s32.totalorder %s292, %s293
      %p305 = scmp.eq.s32.totalorder %s31, 1
      %p306 = por %p304, %p305
      %p308 = scmp.ne.s32.totalorder %s293, %s307
      %p309 = scmp.eq.s32.totalorder %s31, 0
      %p310 = por %p308, %p309
      %s311 = ssub.s32 %s25, %s32
      %p312 = scmp.eq.s32.totalorder %s311, 0
      %s314 = sadd.s32 %s313, 1
      %s315 = scalar_select %p312, %s313, %s314
      %p318 = pneg %p312
      %p319 = scmp.eq.s32.totalorder %s25, 1
      %p320 = por %p318, %p319
      %p321 = scmp.ne.s32.totalorder %s313, %s316
      %p322 = scmp.eq.s32.totalorder %s25, 0
      %p323 = por %p321, %p322
      %p324 = scmp.ne.s32.totalorder %s313, %s316
      %p325 = scmp.eq.s32.totalorder %s30, 1
      %p326 = por %p324, %p325
      %p327 = scmp.ne.s32.totalorder %s316, %s317
      %p328 = scmp.eq.s32.totalorder %s30, 0
      %p329 = por %p327, %p328
      %p330 = scmp.ne.s32.totalorder %s316, %s317
      %p331 = scmp.eq.s32.totalorder %s31, 1
      %p332 = por %p330, %p331
      %p334 = scmp.ne.s32.totalorder %s317, %s333
      %p335 = scmp.eq.s32.totalorder %s31, 0
      %p336 = por %p334, %p335
      %p337 = scmp.le.s32.totalorder 1, %s25
      %p338 = scmp.lt.s32.totalorder %s25, 3
      %p339 = pnand %p337, %p338
      %p340 = pneg %p339
      // Predicated region
      $region9: #{tpu_custom_call.1} parent=5 // pred_check
        _
      $region10: #{tpu_custom_call.1} parent=5 // pred_check_branch
        %342 = sbr.rel (%p339) target = $region12
      $region11: #{tpu_custom_call.1} parent=5 // pred_region
        %s343 = ssub.s32 %s25, 1
        // Predicated region
        $region13: #{tpu_custom_call.1} parent=11 // pred_check
          %p344 = pneg %p72
        $region14: #{tpu_custom_call.1} parent=11 // pred_check_branch
          %346 = sbr.rel (%p344) target = $region16
        $region15: #{tpu_custom_call.1} parent=11 // pred_region
          _
        $region16: #{tpu_custom_call.1} parent=11 // pred_fallthru
          _
        // Predicated region
        $region17: #{tpu_custom_call.1} parent=11 // pred_check
          %p347 = pneg %p93
        $region18: #{tpu_custom_call.1} parent=11 // pred_check_branch
          %349 = sbr.rel (%p347) target = $region20
        $region19: #{tpu_custom_call.1} parent=11 // pred_region
          _
        $region20: #{tpu_custom_call.1} parent=11 // pred_fallthru
          _
        // Predicated region
        $region21: #{tpu_custom_call.1} parent=11 // pred_check
          %p350 = pneg %p114
        $region22: #{tpu_custom_call.1} parent=11 // pred_check_branch
          %352 = sbr.rel (%p350) target = $region24
        $region23: #{tpu_custom_call.1} parent=11 // pred_region
          _
        $region24: #{tpu_custom_call.1} parent=11 // pred_fallthru
          _
        // Predicated region
        $region25: #{tpu_custom_call.1} parent=11 // pred_check
          %p353 = pneg %p135
        $region26: #{tpu_custom_call.1} parent=11 // pred_check_branch
          %355 = sbr.rel (%p353) target = $region28
        $region27: #{tpu_custom_call.1} parent=11 // pred_region
          _
        $region28: #{tpu_custom_call.1} parent=11 // pred_fallthru
          _
        // Predicated region
        $region29: #{tpu_custom_call.1} parent=11 // pred_check
          %p356 = pneg %p156
        $region30: #{tpu_custom_call.1} parent=11 // pred_check_branch
          %358 = sbr.rel (%p356) target = $region32
        $region31: #{tpu_custom_call.1} parent=11 // pred_region
          _
        $region32: #{tpu_custom_call.1} parent=11 // pred_fallthru
          _
        // Predicated region
        $region33: #{tpu_custom_call.1} parent=11 // pred_check
          %p359 = pneg %p177
        $region34: #{tpu_custom_call.1} parent=11 // pred_check_branch
          %361 = sbr.rel (%p359) target = $region36
        $region35: #{tpu_custom_call.1} parent=11 // pred_region
          _
        $region36: #{tpu_custom_call.1} parent=11 // pred_fallthru
          _
        // Predicated region
        $region37: #{tpu_custom_call.1} parent=11 // pred_check
          %p362 = pneg %p198
        $region38: #{tpu_custom_call.1} parent=11 // pred_check_branch
          %364 = sbr.rel (%p362) target = $region40
        $region39: #{tpu_custom_call.1} parent=11 // pred_region
          _
        $region40: #{tpu_custom_call.1} parent=11 // pred_fallthru
          _
        // Predicated region
        $region41: #{tpu_custom_call.1} parent=11 // pred_check
          %p365 = pneg %p219
        $region42: #{tpu_custom_call.1} parent=11 // pred_check_branch
          %367 = sbr.rel (%p365) target = $region44
        $region43: #{tpu_custom_call.1} parent=11 // pred_region
          _
        $region44: #{tpu_custom_call.1} parent=11 // pred_fallthru
          _
        // Predicated region
        $region45: #{tpu_custom_call.1} parent=11 // pred_check
          %p368 = pneg %p240
        $region46: #{tpu_custom_call.1} parent=11 // pred_check_branch
          %370 = sbr.rel (%p368) target = $region48
        $region47: #{tpu_custom_call.1} parent=11 // pred_region
          _
        $region48: #{tpu_custom_call.1} parent=11 // pred_fallthru
          _
        // Predicated region
        $region49: #{tpu_custom_call.1} parent=11 // pred_check
          %p371 = pneg %p261
        $region50: #{tpu_custom_call.1} parent=11 // pred_check_branch
          %373 = sbr.rel (%p371) target = $region52
        $region51: #{tpu_custom_call.1} parent=11 // pred_region
          _
        $region52: #{tpu_custom_call.1} parent=11 // pred_fallthru
          _
        // Predicated region
        $region53: #{tpu_custom_call.1} parent=11 // pred_check
          %p374 = pneg %p282
        $region54: #{tpu_custom_call.1} parent=11 // pred_check_branch
          %376 = sbr.rel (%p374) target = $region56
        $region55: #{tpu_custom_call.1} parent=11 // pred_region
          _
        $region56: #{tpu_custom_call.1} parent=11 // pred_fallthru
          _
        // Predicated region
        $region57: #{tpu_custom_call.1} parent=11 // pred_check
          %p377 = pneg %p303
        $region58: #{tpu_custom_call.1} parent=11 // pred_check_branch
          %379 = sbr.rel (%p377) target = $region60
        $region59: #{tpu_custom_call.1} parent=11 // pred_region
          _
        $region60: #{tpu_custom_call.1} parent=11 // pred_fallthru
          _
      $region12: #{tpu_custom_call.1} parent=5 // pred_fallthru
        _
      %p380 = scmp.lt.s32.totalorder %s25, 2
      // Predicated region
      $region61: #{tpu_custom_call.1} parent=5 // pred_check
        %p381 = pneg %p380
      $region62: #{tpu_custom_call.1} parent=5 // pred_check_branch
        %383 = sbr.rel (%p381) target = $region64
      $region63: #{tpu_custom_call.1} parent=5 // pred_region
        // Predicated region
        $region65: #{tpu_custom_call.1} parent=63 // pred_check
          %p384 = pneg %p45
        $region66: #{tpu_custom_call.1} parent=63 // pred_check_branch
          %386 = sbr.rel (%p384) target = $region68
        $region67: #{tpu_custom_call.1} parent=63 // pred_region
          %s387 = sand.u32 %s35, 1
          %s388 = scalar_lea.sflag [#allocation4], %s387
          %s389 = sand.u32 %s35, 1
          %s390 = smul.addr %s389, 512
          %s391 = scalar_lea.vmem [#allocation3], %s390
          %s393 = ssub.s32 8192, 8192
          %394 = vsyncadd %s388, %s393
          %s395 = smul.addr %s25, 64
          %s396 = smul.addr %s395, 128
          %s397 = scalar_lea.hbm %s0, %s396
          %s398 = sshll.u32 %s391, 4
          %s399 = int_to_ptr.vmem [resolvable:$true] %s398
          %404 = dma.hbm_to_vmem [thread:$0]  %s397, 8192, %s399, %s388, 2048, 2048, 128
        $region68: #{tpu_custom_call.1} parent=63 // pred_fallthru
          _
      $region64: #{tpu_custom_call.1} parent=5 // pred_fallthru
        _
      %p405 = scmp.le.s32.totalorder 1, %s25
      %p406 = scmp.lt.s32.totalorder %s25, 3
      %p407 = pnand %p405, %p406
      %p408 = pneg %p407
      // Predicated region
      $region69: #{tpu_custom_call.1} parent=5 // pred_check
        _
      $region70: #{tpu_custom_call.1} parent=5 // pred_check_branch
        %410 = sbr.rel (%p407) target = $region72
      $region71: #{tpu_custom_call.1} parent=5 // pred_region
        %s411 = ssub.s32 %s25, 1
        %s412 = sand.u32 %s38, 1
        %s413 = scalar_lea.sflag [#allocation4], %s412
        %s414 = sand.u32 %s38, 1
        %s415 = smul.addr %s414, 512
        %s416 = scalar_lea.vmem [#allocation3], %s415
        // Predicated region
        $region73: #{tpu_custom_call.1} parent=71 // pred_check
          %p417 = pneg %p51
        $region74: #{tpu_custom_call.1} parent=71 // pred_check_branch
          %419 = sbr.rel (%p417) target = $region76
        $region75: #{tpu_custom_call.1} parent=71 // pred_region
          %420 = dma.done %s413, 8192
        $region76: #{tpu_custom_call.1} parent=71 // pred_fallthru
          _
        %s421 = sand.u32 %s38, 1
        %s422 = scalar_lea.sflag [#allocation4], %s421
        %s423 = sand.u32 %s38, 1
        %s424 = smul.addr %s423, 512
        %s425 = scalar_lea.vmem [#allocation3], %s424
        %p426 = pneg %p51
        %p427 = pneg %p48
        %p428 = pneg %p72
        %p429 = pneg %p69
        %p430 = pneg %p93
        %p431 = pneg %p90
        %p432 = pneg %p114
        %p433 = pneg %p111
        %p434 = pneg %p135
        %p435 = pneg %p132
        %p436 = pneg %p156
        %p437 = pneg %p153
        %p438 = pneg %p177
        %p439 = pneg %p174
        %p440 = pneg %p198
        %p441 = pneg %p195
        %p442 = pneg %p219
        %p443 = pneg %p216
        %p444 = pneg %p240
        %p445 = pneg %p237
        %p446 = pneg %p261
        %p447 = pneg %p258
        %p448 = pneg %p282
        %p449 = pneg %p279
        %p450 = pneg %p303
        %p451 = pneg %p300
        %p452 = pneg %p329
        %p453 = pneg %p326
        %s454 = sand.u32 %s316, 1
        %s455 = scalar_lea.sflag [#allocation5], %s454
        %s456 = sand.u32 %s316, 1
        %s457 = smul.addr %s456, 512
        %s458 = scalar_lea.vmem [#allocation6], %s457
        %v459 = vld [vmem:[%s416] sm:$0xff]
        %v460 = vld [vmem:[%s416 + $0x8] sm:$0xff]
        %v461 = vld [vmem:[%s416 + $0x10] sm:$0xff]
        %v462 = vld [vmem:[%s416 + $0x18] sm:$0xff]
        %v463 = vld [vmem:[%s416 + $0x20] sm:$0xff]
        %v464 = vld [vmem:[%s416 + $0x28] sm:$0xff]
        %v465 = vld [vmem:[%s416 + $0x30] sm:$0xff]
        %v466 = vld [vmem:[%s416 + $0x38] sm:$0xff]
        %v467 = vld [vmem:[%s416 + $0x40] sm:$0xff]
        %v468 = vld [vmem:[%s416 + $0x48] sm:$0xff]
        %v469 = vld [vmem:[%s416 + $0x50] sm:$0xff]
        %v470 = vld [vmem:[%s416 + $0x58] sm:$0xff]
        %v471 = vld [vmem:[%s416 + $0x60] sm:$0xff]
        %v472 = vld [vmem:[%s416 + $0x68] sm:$0xff]
        %v473 = vld [vmem:[%s416 + $0x70] sm:$0xff]
        %v474 = vld [vmem:[%s416 + $0x78] sm:$0xff]
        %v475 = vld [vmem:[%s416 + $0x80] sm:$0xff]
        %v476 = vld [vmem:[%s416 + $0x88] sm:$0xff]
        %v477 = vld [vmem:[%s416 + $0x90] sm:$0xff]
        %v478 = vld [vmem:[%s416 + $0x98] sm:$0xff]
        %v479 = vld [vmem:[%s416 + $0xa0] sm:$0xff]
        %v480 = vld [vmem:[%s416 + $0xa8] sm:$0xff]
        %v481 = vld [vmem:[%s416 + $0xb0] sm:$0xff]
        %v482 = vld [vmem:[%s416 + $0xb8] sm:$0xff]
        %v483 = vld [vmem:[%s416 + $0xc0] sm:$0xff]
        %v484 = vld [vmem:[%s416 + $0xc8] sm:$0xff]
        %v485 = vld [vmem:[%s416 + $0xd0] sm:$0xff]
        %v486 = vld [vmem:[%s416 + $0xd8] sm:$0xff]
        %v487 = vld [vmem:[%s416 + $0xe0] sm:$0xff]
        %v488 = vld [vmem:[%s416 + $0xe8] sm:$0xff]
        %v489 = vld [vmem:[%s416 + $0xf0] sm:$0xff]
        %v490 = vld [vmem:[%s416 + $0xf8] sm:$0xff]
        %v491 = vld [vmem:[%s416 + $0x100] sm:$0xff]
        %v492 = vld [vmem:[%s416 + $0x108] sm:$0xff]
        %v493 = vld [vmem:[%s416 + $0x110] sm:$0xff]
        %v494 = vld [vmem:[%s416 + $0x118] sm:$0xff]
        %v495 = vld [vmem:[%s416 + $0x120] sm:$0xff]
        %v496 = vld [vmem:[%s416 + $0x128] sm:$0xff]
        %v497 = vld [vmem:[%s416 + $0x130] sm:$0xff]
        %v498 = vld [vmem:[%s416 + $0x138] sm:$0xff]
        %v499 = vld [vmem:[%s416 + $0x140] sm:$0xff]
        %v500 = vld [vmem:[%s416 + $0x148] sm:$0xff]
        %v501 = vld [vmem:[%s416 + $0x150] sm:$0xff]
        %v502 = vld [vmem:[%s416 + $0x158] sm:$0xff]
        %v503 = vld [vmem:[%s416 + $0x160] sm:$0xff]
        %v504 = vld [vmem:[%s416 + $0x168] sm:$0xff]
        %v505 = vld [vmem:[%s416 + $0x170] sm:$0xff]
        %v506 = vld [vmem:[%s416 + $0x178] sm:$0xff]
        %v507 = vld [vmem:[%s416 + $0x180] sm:$0xff]
        %v508 = vld [vmem:[%s416 + $0x188] sm:$0xff]
        %v509 = vld [vmem:[%s416 + $0x190] sm:$0xff]
        %v510 = vld [vmem:[%s416 + $0x198] sm:$0xff]
        %v511 = vld [vmem:[%s416 + $0x1a0] sm:$0xff]
        %v512 = vld [vmem:[%s416 + $0x1a8] sm:$0xff]
        %v513 = vld [vmem:[%s416 + $0x1b0] sm:$0xff]
        %v514 = vld [vmem:[%s416 + $0x1b8] sm:$0xff]
        %v515 = vld [vmem:[%s416 + $0x1c0] sm:$0xff]
        %v516 = vld [vmem:[%s416 + $0x1c8] sm:$0xff]
        %v517 = vld [vmem:[%s416 + $0x1d0] sm:$0xff]
        %v518 = vld [vmem:[%s416 + $0x1d8] sm:$0xff]
        %v519 = vld [vmem:[%s416 + $0x1e0] sm:$0xff]
        %v520 = vld [vmem:[%s416 + $0x1e8] sm:$0xff]
        %v521 = vld [vmem:[%s416 + $0x1f0] sm:$0xff]
        %v522 = vld [vmem:[%s416 + $0x1f8] sm:$0xff]
        %v523 = vld [vmem:[%s3] sm:$0xff]
        %v524 = vld [vmem:[%s4] sm:$0xff]
        %526 = vset.pattern.permute.xlu0 0
        %527 = vperm.xlu0 %526, %v524
        %v528 = vpop.permute.xlu0 %527
        %vm530 = vcmask 261120
        %v532 = vsel %vm530, %v523, 0
        %534 = vmatprep.subr.mxu0 0.0
        %535 = vmatpush1.msra.mxu0 0.0
        %536 = vmatprep.subr.mxu0 0.0
        %537 = vmatpush1.msra.mxu0 0.0
        %538 = vmatprep.subr.mxu0 0.0
        %539 = vmatpush1.msra.mxu0 0.0
        %540 = vmatprep.subr.mxu0 0.0
        %541 = vmatpush1.msra.mxu0 0.0
        %542 = vmatprep.subr.mxu0 0.0
        %543 = vmatpush1.msra.mxu0 0.0
        %544 = vmatprep.subr.mxu0 0.0
        %545 = vmatpush1.msra.mxu0 0.0
        %546 = vmatprep.subr.mxu0 0.0
        %547 = vmatpush1.msra.mxu0 0.0
        %548 = vmatprep.subr.mxu0 0.0
        %549 = vmatpush1.msra.mxu0 0.0
        %550 = vmatprep.subr.mxu0 0.0
        %551 = vmatpush1.msra.mxu0 0.0
        %552 = vmatprep.subr.mxu0 0.0
        %553 = vmatpush1.msra.mxu0 0.0
        %554 = vmatprep.subr.mxu0 0.0
        %555 = vmatpush1.msra.mxu0 0.0
        %556 = vmatprep.subr.mxu0 0.0
        %557 = vmatpush1.msra.mxu0 0.0
        %558 = vmatprep.subr.mxu0 %v508
        %559 = vmatpush1.msra.mxu0 %v507
        %560 = vmatprep.subr.mxu0 %v492
        %561 = vmatpush1.msra.mxu0 %v491
        %562 = vmatprep.subr.mxu0 %v476
        %563 = vmatpush1.msra.mxu0 %v475
        %564 = vmatprep.subr.mxu0 %v460
        %565 = vmatpush1.msra.mxu0 %v459
        %566 = vmatprep.subr.mxu0 0.0
        %567 = vmatpush2.msra.mxu0 0.0
        %568 = vmatprep.subr.mxu0 0.0
        %569 = vmatpush2.msra.mxu0 0.0
        %570 = vmatprep.subr.mxu0 0.0
        %571 = vmatpush2.msra.mxu0 0.0
        %572 = vmatprep.subr.mxu0 0.0
        %573 = vmatpush2.msra.mxu0 0.0
        %574 = vmatprep.subr.mxu0 0.0
        %575 = vmatpush2.msra.mxu0 0.0
        %576 = vmatprep.subr.mxu0 0.0
        %577 = vmatpush2.msra.mxu0 0.0
        %578 = vmatprep.subr.mxu0 0.0
        %579 = vmatpush2.msra.mxu0 0.0
        %580 = vmatprep.subr.mxu0 0.0
        %581 = vmatpush2.msra.mxu0 0.0
        %582 = vmatprep.subr.mxu0 0.0
        %583 = vmatpush2.msra.mxu0 0.0
        %584 = vmatprep.subr.mxu0 0.0
        %585 = vmatpush2.msra.mxu0 0.0
        %586 = vmatprep.subr.mxu0 0.0
        %587 = vmatpush2.msra.mxu0 0.0
        %588 = vmatprep.subr.mxu0 0.0
        %589 = vmatpush2.msra.mxu0 0.0
        %590 = vmatprep.subr.mxu0 0.0
        %591 = vmatpush2.msra.mxu0 0.0
        %592 = vmatprep.subr.mxu0 0.0
        %593 = vmatpush2.msra.mxu0 0.0
        %594 = vmatprep.subr.mxu0 0.0
        %595 = vmatpush2.msra.mxu0 0.0
        %596 = vmatprep.subr.mxu0 0.0
        %597 = vmatpush2.msra.mxu0 0.0
        %598 = vmatprep.mubr.f32.mxu0 0.0
        %599 = vmatmul.mubr.f32.gmra.mxu0 %v532
        %v600 = vpop.f32.mrf.mxu0
        %v601 = vadd.f32 %v528, %v600
        %v602 = vpop.f32.mrf.mxu0
        %v603 = vadd.f32 %v528, %v602
        %604 = vdwg.mxu0
        %605 = vmatprep.subr.mxu0 0.0
        %606 = vmatpush1.msra.mxu0 0.0
        %607 = vmatprep.subr.mxu0 0.0
        %608 = vmatpush1.msra.mxu0 0.0
        %609 = vmatprep.subr.mxu0 0.0
        %610 = vmatpush1.msra.mxu0 0.0
        %611 = vmatprep.subr.mxu0 0.0
        %612 = vmatpush1.msra.mxu0 0.0
        %613 = vmatprep.subr.mxu0 0.0
        %614 = vmatpush1.msra.mxu0 0.0
        %615 = vmatprep.subr.mxu0 0.0
        %616 = vmatpush1.msra.mxu0 0.0
        %617 = vmatprep.subr.mxu0 0.0
        %618 = vmatpush1.msra.mxu0 0.0
        %619 = vmatprep.subr.mxu0 0.0
        %620 = vmatpush1.msra.mxu0 0.0
        %621 = vmatprep.subr.mxu0 0.0
        %622 = vmatpush1.msra.mxu0 0.0
        %623 = vmatprep.subr.mxu0 0.0
        %624 = vmatpush1.msra.mxu0 0.0
        %625 = vmatprep.subr.mxu0 0.0
        %626 = vmatpush1.msra.mxu0 0.0
        %627 = vmatprep.subr.mxu0 0.0
        %628 = vmatpush1.msra.mxu0 0.0
        %629 = vmatprep.subr.mxu0 %v510
        %630 = vmatpush1.msra.mxu0 %v509
        %631 = vmatprep.subr.mxu0 %v494
        %632 = vmatpush1.msra.mxu0 %v493
        %633 = vmatprep.subr.mxu0 %v478
        %634 = vmatpush1.msra.mxu0 %v477
        %635 = vmatprep.subr.mxu0 %v462
        %636 = vmatpush1.msra.mxu0 %v461
        %637 = vmatprep.subr.mxu0 0.0
        %638 = vmatpush2.msra.mxu0 0.0
        %639 = vmatprep.subr.mxu0 0.0
        %640 = vmatpush2.msra.mxu0 0.0
        %641 = vmatprep.subr.mxu0 0.0
        %642 = vmatpush2.msra.mxu0 0.0
        %643 = vmatprep.subr.mxu0 0.0
        %644 = vmatpush2.msra.mxu0 0.0
        %645 = vmatprep.subr.mxu0 0.0
        %646 = vmatpush2.msra.mxu0 0.0
        %647 = vmatprep.subr.mxu0 0.0
        %648 = vmatpush2.msra.mxu0 0.0
        %649 = vmatprep.subr.mxu0 0.0
        %650 = vmatpush2.msra.mxu0 0.0
        %651 = vmatprep.subr.mxu0 0.0
        %652 = vmatpush2.msra.mxu0 0.0
        %653 = vmatprep.subr.mxu0 0.0
        %654 = vmatpush2.msra.mxu0 0.0
        %655 = vmatprep.subr.mxu0 0.0
        %656 = vmatpush2.msra.mxu0 0.0
        %657 = vmatprep.subr.mxu0 0.0
        %658 = vmatpush2.msra.mxu0 0.0
        %659 = vmatprep.subr.mxu0 0.0
        %660 = vmatpush2.msra.mxu0 0.0
        %661 = vmatprep.subr.mxu0 0.0
        %662 = vmatpush2.msra.mxu0 0.0
        %663 = vmatprep.subr.mxu0 0.0
        %664 = vmatpush2.msra.mxu0 0.0
        %665 = vmatprep.subr.mxu0 0.0
        %666 = vmatpush2.msra.mxu0 0.0
        %667 = vmatprep.subr.mxu0 0.0
        %668 = vmatpush2.msra.mxu0 0.0
        %669 = vmatprep.mubr.f32.mxu0 0.0
        %670 = vmatmul.mubr.f32.gmra.mxu0 %v532
        %v671 = vpop.f32.mrf.mxu0
        %v672 = vadd.f32 %v528, %v671
        %v673 = vpop.f32.mrf.mxu0
        %v674 = vadd.f32 %v528, %v673
        %675 = vdwg.mxu0
        %676 = vmatprep.subr.mxu0 0.0
        %677 = vmatpush1.msra.mxu0 0.0
        %678 = vmatprep.subr.mxu0 0.0
        %679 = vmatpush1.msra.mxu0 0.0
        %680 = vmatprep.subr.mxu0 0.0
        %681 = vmatpush1.msra.mxu0 0.0
        %682 = vmatprep.subr.mxu0 0.0
        %683 = vmatpush1.msra.mxu0 0.0
        %684 = vmatprep.subr.mxu0 0.0
        %685 = vmatpush1.msra.mxu0 0.0
        %686 = vmatprep.subr.mxu0 0.0
        %687 = vmatpush1.msra.mxu0 0.0
        %688 = vmatprep.subr.mxu0 0.0
        %689 = vmatpush1.msra.mxu0 0.0
        %690 = vmatprep.subr.mxu0 0.0
        %691 = vmatpush1.msra.mxu0 0.0
        %692 = vmatprep.subr.mxu0 0.0
        %693 = vmatpush1.msra.mxu0 0.0
        %694 = vmatprep.subr.mxu0 0.0
        %695 = vmatpush1.msra.mxu0 0.0
        %696 = vmatprep.subr.mxu0 0.0
        %697 = vmatpush1.msra.mxu0 0.0
        %698 = vmatprep.subr.mxu0 0.0
        %699 = vmatpush1.msra.mxu0 0.0
        %700 = vmatprep.subr.mxu0 %v512
        %701 = vmatpush1.msra.mxu0 %v511
        %702 = vmatprep.subr.mxu0 %v496
        %703 = vmatpush1.msra.mxu0 %v495
        %704 = vmatprep.subr.mxu0 %v480
        %705 = vmatpush1.msra.mxu0 %v479
        %706 = vmatprep.subr.mxu0 %v464
        %707 = vmatpush1.msra.mxu0 %v463
        %708 = vmatprep.subr.mxu0 0.0
        %709 = vmatpush2.msra.mxu0 0.0
        %710 = vmatprep.subr.mxu0 0.0
        %711 = vmatpush2.msra.mxu0 0.0
        %712 = vmatprep.subr.mxu0 0.0
        %713 = vmatpush2.msra.mxu0 0.0
        %714 = vmatprep.subr.mxu0 0.0
        %715 = vmatpush2.msra.mxu0 0.0
        %716 = vmatprep.subr.mxu0 0.0
        %717 = vmatpush2.msra.mxu0 0.0
        %718 = vmatprep.subr.mxu0 0.0
        %719 = vmatpush2.msra.mxu0 0.0
        %720 = vmatprep.subr.mxu0 0.0
        %721 = vmatpush2.msra.mxu0 0.0
        %722 = vmatprep.subr.mxu0 0.0
        %723 = vmatpush2.msra.mxu0 0.0
        %724 = vmatprep.subr.mxu0 0.0
        %725 = vmatpush2.msra.mxu0 0.0
        %726 = vmatprep.subr.mxu0 0.0
        %727 = vmatpush2.msra.mxu0 0.0
        %728 = vmatprep.subr.mxu0 0.0
        %729 = vmatpush2.msra.mxu0 0.0
        %730 = vmatprep.subr.mxu0 0.0
        %731 = vmatpush2.msra.mxu0 0.0
        %732 = vmatprep.subr.mxu0 0.0
        %733 = vmatpush2.msra.mxu0 0.0
        %734 = vmatprep.subr.mxu0 0.0
        %735 = vmatpush2.msra.mxu0 0.0
        %736 = vmatprep.subr.mxu0 0.0
        %737 = vmatpush2.msra.mxu0 0.0
        %738 = vmatprep.subr.mxu0 0.0
        %739 = vmatpush2.msra.mxu0 0.0
        %740 = vmatprep.mubr.f32.mxu0 0.0
        %741 = vmatmul.mubr.f32.gmra.mxu0 %v532
        %v742 = vpop.f32.mrf.mxu0
        %v743 = vadd.f32 %v528, %v742
        %v744 = vpop.f32.mrf.mxu0
        %v745 = vadd.f32 %v528, %v744
        %746 = vdwg.mxu0
        %747 = vmatprep.subr.mxu0 0.0
        %748 = vmatpush1.msra.mxu0 0.0
        %749 = vmatprep.subr.mxu0 0.0
        %750 = vmatpush1.msra.mxu0 0.0
        %751 = vmatprep.subr.mxu0 0.0
        %752 = vmatpush1.msra.mxu0 0.0
        %753 = vmatprep.subr.mxu0 0.0
        %754 = vmatpush1.msra.mxu0 0.0
        %755 = vmatprep.subr.mxu0 0.0
        %756 = vmatpush1.msra.mxu0 0.0
        %757 = vmatprep.subr.mxu0 0.0
        %758 = vmatpush1.msra.mxu0 0.0
        %759 = vmatprep.subr.mxu0 0.0
        %760 = vmatpush1.msra.mxu0 0.0
        %761 = vmatprep.subr.mxu0 0.0
        %762 = vmatpush1.msra.mxu0 0.0
        %763 = vmatprep.subr.mxu0 0.0
        %764 = vmatpush1.msra.mxu0 0.0
        %765 = vmatprep.subr.mxu0 0.0
        %766 = vmatpush1.msra.mxu0 0.0
        %767 = vmatprep.subr.mxu0 0.0
        %768 = vmatpush1.msra.mxu0 0.0
        %769 = vmatprep.subr.mxu0 0.0
        %770 = vmatpush1.msra.mxu0 0.0
        %771 = vmatprep.subr.mxu0 %v514
        %772 = vmatpush1.msra.mxu0 %v513
        %773 = vmatprep.subr.mxu0 %v498
        %774 = vmatpush1.msra.mxu0 %v497
        %775 = vmatprep.subr.mxu0 %v482
        %776 = vmatpush1.msra.mxu0 %v481
        %777 = vmatprep.subr.mxu0 %v466
        %778 = vmatpush1.msra.mxu0 %v465
        %779 = vmatprep.subr.mxu0 0.0
        %780 = vmatpush2.msra.mxu0 0.0
        %781 = vmatprep.subr.mxu0 0.0
        %782 = vmatpush2.msra.mxu0 0.0
        %783 = vmatprep.subr.mxu0 0.0
        %784 = vmatpush2.msra.mxu0 0.0
        %785 = vmatprep.subr.mxu0 0.0
        %786 = vmatpush2.msra.mxu0 0.0
        %787 = vmatprep.subr.mxu0 0.0
        %788 = vmatpush2.msra.mxu0 0.0
        %789 = vmatprep.subr.mxu0 0.0
        %790 = vmatpush2.msra.mxu0 0.0
        %791 = vmatprep.subr.mxu0 0.0
        %792 = vmatpush2.msra.mxu0 0.0
        %793 = vmatprep.subr.mxu0 0.0
        %794 = vmatpush2.msra.mxu0 0.0
        %795 = vmatprep.subr.mxu0 0.0
        %796 = vmatpush2.msra.mxu0 0.0
        %797 = vmatprep.subr.mxu0 0.0
        %798 = vmatpush2.msra.mxu0 0.0
        %799 = vmatprep.subr.mxu0 0.0
        %800 = vmatpush2.msra.mxu0 0.0
        %801 = vmatprep.subr.mxu0 0.0
        %802 = vmatpush2.msra.mxu0 0.0
        %803 = vmatprep.subr.mxu0 0.0
        %804 = vmatpush2.msra.mxu0 0.0
        %805 = vmatprep.subr.mxu0 0.0
        %806 = vmatpush2.msra.mxu0 0.0
        %807 = vmatprep.subr.mxu0 0.0
        %808 = vmatpush2.msra.mxu0 0.0
        %809 = vmatprep.subr.mxu0 0.0
        %810 = vmatpush2.msra.mxu0 0.0
        %811 = vmatprep.mubr.f32.mxu0 0.0
        %812 = vmatmul.mubr.f32.gmra.mxu0 %v532
        %v813 = vpop.f32.mrf.mxu0
        %v814 = vadd.f32 %v528, %v813
        %v815 = vpop.f32.mrf.mxu0
        %v816 = vadd.f32 %v528, %v815
        %817 = vdwg.mxu0
        %818 = vmatprep.subr.mxu0 0.0
        %819 = vmatpush1.msra.mxu0 0.0
        %820 = vmatprep.subr.mxu0 0.0
        %821 = vmatpush1.msra.mxu0 0.0
        %822 = vmatprep.subr.mxu0 0.0
        %823 = vmatpush1.msra.mxu0 0.0
        %824 = vmatprep.subr.mxu0 0.0
        %825 = vmatpush1.msra.mxu0 0.0
        %826 = vmatprep.subr.mxu0 0.0
        %827 = vmatpush1.msra.mxu0 0.0
        %828 = vmatprep.subr.mxu0 0.0
        %829 = vmatpush1.msra.mxu0 0.0
        %830 = vmatprep.subr.mxu0 0.0
        %831 = vmatpush1.msra.mxu0 0.0
        %832 = vmatprep.subr.mxu0 0.0
        %833 = vmatpush1.msra.mxu0 0.0
        %834 = vmatprep.subr.mxu0 0.0
        %835 = vmatpush1.msra.mxu0 0.0
        %836 = vmatprep.subr.mxu0 0.0
        %837 = vmatpush1.msra.mxu0 0.0
        %838 = vmatprep.subr.mxu0 0.0
        %839 = vmatpush1.msra.mxu0 0.0
        %840 = vmatprep.subr.mxu0 0.0
        %841 = vmatpush1.msra.mxu0 0.0
        %842 = vmatprep.subr.mxu0 %v516
        %843 = vmatpush1.msra.mxu0 %v515
        %844 = vmatprep.subr.mxu0 %v500
        %845 = vmatpush1.msra.mxu0 %v499
        %846 = vmatprep.subr.mxu0 %v484
        %847 = vmatpush1.msra.mxu0 %v483
        %848 = vmatprep.subr.mxu0 %v468
        %849 = vmatpush1.msra.mxu0 %v467
        %850 = vmatprep.subr.mxu0 0.0
        %851 = vmatpush2.msra.mxu0 0.0
        %852 = vmatprep.subr.mxu0 0.0
        %853 = vmatpush2.msra.mxu0 0.0
        %854 = vmatprep.subr.mxu0 0.0
        %855 = vmatpush2.msra.mxu0 0.0
        %856 = vmatprep.subr.mxu0 0.0
        %857 = vmatpush2.msra.mxu0 0.0
        %858 = vmatprep.subr.mxu0 0.0
        %859 = vmatpush2.msra.mxu0 0.0
        %860 = vmatprep.subr.mxu0 0.0
        %861 = vmatpush2.msra.mxu0 0.0
        %862 = vmatprep.subr.mxu0 0.0
        %863 = vmatpush2.msra.mxu0 0.0
        %864 = vmatprep.subr.mxu0 0.0
        %865 = vmatpush2.msra.mxu0 0.0
        %866 = vmatprep.subr.mxu0 0.0
        %867 = vmatpush2.msra.mxu0 0.0
        %868 = vmatprep.subr.mxu0 0.0
        %869 = vmatpush2.msra.mxu0 0.0
        %870 = vmatprep.subr.mxu0 0.0
        %871 = vmatpush2.msra.mxu0 0.0
        %872 = vmatprep.subr.mxu0 0.0
        %873 = vmatpush2.msra.mxu0 0.0
        %874 = vmatprep.subr.mxu0 0.0
        %875 = vmatpush2.msra.mxu0 0.0
        %876 = vmatprep.subr.mxu0 0.0
        %877 = vmatpush2.msra.mxu0 0.0
        %878 = vmatprep.subr.mxu0 0.0
        %879 = vmatpush2.msra.mxu0 0.0
        %880 = vmatprep.subr.mxu0 0.0
        %881 = vmatpush2.msra.mxu0 0.0
        %882 = vmatprep.mubr.f32.mxu0 0.0
        %883 = vmatmul.mubr.f32.gmra.mxu0 %v532
        %v884 = vpop.f32.mrf.mxu0
        %v885 = vadd.f32 %v528, %v884
        %v886 = vpop.f32.mrf.mxu0
        %v887 = vadd.f32 %v528, %v886
        %888 = vdwg.mxu0
        %889 = vmatprep.subr.mxu0 0.0
        %890 = vmatpush1.msra.mxu0 0.0
        %891 = vmatprep.subr.mxu0 0.0
        %892 = vmatpush1.msra.mxu0 0.0
        %893 = vmatprep.subr.mxu0 0.0
        %894 = vmatpush1.msra.mxu0 0.0
        %895 = vmatprep.subr.mxu0 0.0
        %896 = vmatpush1.msra.mxu0 0.0
        %897 = vmatprep.subr.mxu0 0.0
        %898 = vmatpush1.msra.mxu0 0.0
        %899 = vmatprep.subr.mxu0 0.0
        %900 = vmatpush1.msra.mxu0 0.0
        %901 = vmatprep.subr.mxu0 0.0
        %902 = vmatpush1.msra.mxu0 0.0
        %903 = vmatprep.subr.mxu0 0.0
        %904 = vmatpush1.msra.mxu0 0.0
        %905 = vmatprep.subr.mxu0 0.0
        %906 = vmatpush1.msra.mxu0 0.0
        %907 = vmatprep.subr.mxu0 0.0
        %908 = vmatpush1.msra.mxu0 0.0
        %909 = vmatprep.subr.mxu0 0.0
        %910 = vmatpush1.msra.mxu0 0.0
        %911 = vmatprep.subr.mxu0 0.0
        %912 = vmatpush1.msra.mxu0 0.0
        %913 = vmatprep.subr.mxu0 %v518
        %914 = vmatpush1.msra.mxu0 %v517
        %915 = vmatprep.subr.mxu0 %v502
        %916 = vmatpush1.msra.mxu0 %v501
        %917 = vmatprep.subr.mxu0 %v486
        %918 = vmatpush1.msra.mxu0 %v485
        %919 = vmatprep.subr.mxu0 %v470
        %920 = vmatpush1.msra.mxu0 %v469
        %921 = vmatprep.subr.mxu0 0.0
        %922 = vmatpush2.msra.mxu0 0.0
        %923 = vmatprep.subr.mxu0 0.0
        %924 = vmatpush2.msra.mxu0 0.0
        %925 = vmatprep.subr.mxu0 0.0
        %926 = vmatpush2.msra.mxu0 0.0
        %927 = vmatprep.subr.mxu0 0.0
        %928 = vmatpush2.msra.mxu0 0.0
        %929 = vmatprep.subr.mxu0 0.0
        %930 = vmatpush2.msra.mxu0 0.0
        %931 = vmatprep.subr.mxu0 0.0
        %932 = vmatpush2.msra.mxu0 0.0
        %933 = vmatprep.subr.mxu0 0.0
        %934 = vmatpush2.msra.mxu0 0.0
        %935 = vmatprep.subr.mxu0 0.0
        %936 = vmatpush2.msra.mxu0 0.0
        %937 = vmatprep.subr.mxu0 0.0
        %938 = vmatpush2.msra.mxu0 0.0
        %939 = vmatprep.subr.mxu0 0.0
        %940 = vmatpush2.msra.mxu0 0.0
        %941 = vmatprep.subr.mxu0 0.0
        %942 = vmatpush2.msra.mxu0 0.0
        %943 = vmatprep.subr.mxu0 0.0
        %944 = vmatpush2.msra.mxu0 0.0
        %945 = vmatprep.subr.mxu0 0.0
        %946 = vmatpush2.msra.mxu0 0.0
        %947 = vmatprep.subr.mxu0 0.0
        %948 = vmatpush2.msra.mxu0 0.0
        %949 = vmatprep.subr.mxu0 0.0
        %950 = vmatpush2.msra.mxu0 0.0
        %951 = vmatprep.subr.mxu0 0.0
        %952 = vmatpush2.msra.mxu0 0.0
        %953 = vmatprep.mubr.f32.mxu0 0.0
        %954 = vmatmul.mubr.f32.gmra.mxu0 %v532
        %v955 = vpop.f32.mrf.mxu0
        %v956 = vadd.f32 %v528, %v955
        %v957 = vpop.f32.mrf.mxu0
        %v958 = vadd.f32 %v528, %v957
        %959 = vdwg.mxu0
        %960 = vmatprep.subr.mxu0 0.0
        %961 = vmatpush1.msra.mxu0 0.0
        %962 = vmatprep.subr.mxu0 0.0
        %963 = vmatpush1.msra.mxu0 0.0
        %964 = vmatprep.subr.mxu0 0.0
        %965 = vmatpush1.msra.mxu0 0.0
        %966 = vmatprep.subr.mxu0 0.0
        %967 = vmatpush1.msra.mxu0 0.0
        %968 = vmatprep.subr.mxu0 0.0
        %969 = vmatpush1.msra.mxu0 0.0
        %970 = vmatprep.subr.mxu0 0.0
        %971 = vmatpush1.msra.mxu0 0.0
        %972 = vmatprep.subr.mxu0 0.0
        %973 = vmatpush1.msra.mxu0 0.0
        %974 = vmatprep.subr.mxu0 0.0
        %975 = vmatpush1.msra.mxu0 0.0
        %976 = vmatprep.subr.mxu0 0.0
        %977 = vmatpush1.msra.mxu0 0.0
        %978 = vmatprep.subr.mxu0 0.0
        %979 = vmatpush1.msra.mxu0 0.0
        %980 = vmatprep.subr.mxu0 0.0
        %981 = vmatpush1.msra.mxu0 0.0
        %982 = vmatprep.subr.mxu0 0.0
        %983 = vmatpush1.msra.mxu0 0.0
        %984 = vmatprep.subr.mxu0 %v520
        %985 = vmatpush1.msra.mxu0 %v519
        %986 = vmatprep.subr.mxu0 %v504
        %987 = vmatpush1.msra.mxu0 %v503
        %988 = vmatprep.subr.mxu0 %v488
        %989 = vmatpush1.msra.mxu0 %v487
        %990 = vmatprep.subr.mxu0 %v472
        %991 = vmatpush1.msra.mxu0 %v471
        %992 = vmatprep.subr.mxu0 0.0
        %993 = vmatpush2.msra.mxu0 0.0
        %994 = vmatprep.subr.mxu0 0.0
        %995 = vmatpush2.msra.mxu0 0.0
        %996 = vmatprep.subr.mxu0 0.0
        %997 = vmatpush2.msra.mxu0 0.0
        %998 = vmatprep.subr.mxu0 0.0
        %999 = vmatpush2.msra.mxu0 0.0
        %1000 = vmatprep.subr.mxu0 0.0
        %1001 = vmatpush2.msra.mxu0 0.0
        %1002 = vmatprep.subr.mxu0 0.0
        %1003 = vmatpush2.msra.mxu0 0.0
        %1004 = vmatprep.subr.mxu0 0.0
        %1005 = vmatpush2.msra.mxu0 0.0
        %1006 = vmatprep.subr.mxu0 0.0
        %1007 = vmatpush2.msra.mxu0 0.0
        %1008 = vmatprep.subr.mxu0 0.0
        %1009 = vmatpush2.msra.mxu0 0.0
        %1010 = vmatprep.subr.mxu0 0.0
        %1011 = vmatpush2.msra.mxu0 0.0
        %1012 = vmatprep.subr.mxu0 0.0
        %1013 = vmatpush2.msra.mxu0 0.0
        %1014 = vmatprep.subr.mxu0 0.0
        %1015 = vmatpush2.msra.mxu0 0.0
        %1016 = vmatprep.subr.mxu0 0.0
        %1017 = vmatpush2.msra.mxu0 0.0
        %1018 = vmatprep.subr.mxu0 0.0
        %1019 = vmatpush2.msra.mxu0 0.0
        %1020 = vmatprep.subr.mxu0 0.0
        %1021 = vmatpush2.msra.mxu0 0.0
        %1022 = vmatprep.subr.mxu0 0.0
        %1023 = vmatpush2.msra.mxu0 0.0
        %1024 = vmatprep.mubr.f32.mxu0 0.0
        %1025 = vmatmul.mubr.f32.gmra.mxu0 %v532
        %v1026 = vpop.f32.mrf.mxu0
        %v1027 = vadd.f32 %v528, %v1026
        %v1028 = vpop.f32.mrf.mxu0
        %v1029 = vadd.f32 %v528, %v1028
        %1030 = vdwg.mxu0
        %1031 = vmatprep.subr.mxu0 0.0
        %1032 = vmatpush1.msra.mxu0 0.0
        %1033 = vmatprep.subr.mxu0 0.0
        %1034 = vmatpush1.msra.mxu0 0.0
        %1035 = vmatprep.subr.mxu0 0.0
        %1036 = vmatpush1.msra.mxu0 0.0
        %1037 = vmatprep.subr.mxu0 0.0
        %1038 = vmatpush1.msra.mxu0 0.0
        %1039 = vmatprep.subr.mxu0 0.0
        %1040 = vmatpush1.msra.mxu0 0.0
        %1041 = vmatprep.subr.mxu0 0.0
        %1042 = vmatpush1.msra.mxu0 0.0
        %1043 = vmatprep.subr.mxu0 0.0
        %1044 = vmatpush1.msra.mxu0 0.0
        %1045 = vmatprep.subr.mxu0 0.0
        %1046 = vmatpush1.msra.mxu0 0.0
        %1047 = vmatprep.subr.mxu0 0.0
        %1048 = vmatpush1.msra.mxu0 0.0
        %1049 = vmatprep.subr.mxu0 0.0
        %1050 = vmatpush1.msra.mxu0 0.0
        %1051 = vmatprep.subr.mxu0 0.0
        %1052 = vmatpush1.msra.mxu0 0.0
        %1053 = vmatprep.subr.mxu0 0.0
        %1054 = vmatpush1.msra.mxu0 0.0
        %1055 = vmatprep.subr.mxu0 %v522
        %1056 = vmatpush1.msra.mxu0 %v521
        %1057 = vmatprep.subr.mxu0 %v506
        %1058 = vmatpush1.msra.mxu0 %v505
        %1059 = vmatprep.subr.mxu0 %v490
        %1060 = vmatpush1.msra.mxu0 %v489
        %1061 = vmatprep.subr.mxu0 %v474
        %1062 = vmatpush1.msra.mxu0 %v473
        %1063 = vmatprep.subr.mxu0 0.0
        %1064 = vmatpush2.msra.mxu0 0.0
        %1065 = vmatprep.subr.mxu0 0.0
        %1066 = vmatpush2.msra.mxu0 0.0
        %1067 = vmatprep.subr.mxu0 0.0
        %1068 = vmatpush2.msra.mxu0 0.0
        %1069 = vmatprep.subr.mxu0 0.0
        %1070 = vmatpush2.msra.mxu0 0.0
        %1071 = vmatprep.subr.mxu0 0.0
        %1072 = vmatpush2.msra.mxu0 0.0
        %1073 = vmatprep.subr.mxu0 0.0
        %1074 = vmatpush2.msra.mxu0 0.0
        %1075 = vmatprep.subr.mxu0 0.0
        %1076 = vmatpush2.msra.mxu0 0.0
        %1077 = vmatprep.subr.mxu0 0.0
        %1078 = vmatpush2.msra.mxu0 0.0
        %1079 = vmatprep.subr.mxu0 0.0
        %1080 = vmatpush2.msra.mxu0 0.0
        %1081 = vmatprep.subr.mxu0 0.0
        %1082 = vmatpush2.msra.mxu0 0.0
        %1083 = vmatprep.subr.mxu0 0.0
        %1084 = vmatpush2.msra.mxu0 0.0
        %1085 = vmatprep.subr.mxu0 0.0
        %1086 = vmatpush2.msra.mxu0 0.0
        %1087 = vmatprep.subr.mxu0 0.0
        %1088 = vmatpush2.msra.mxu0 0.0
        %1089 = vmatprep.subr.mxu0 0.0
        %1090 = vmatpush2.msra.mxu0 0.0
        %1091 = vmatprep.subr.mxu0 0.0
        %1092 = vmatpush2.msra.mxu0 0.0
        %1093 = vmatprep.subr.mxu0 0.0
        %1094 = vmatpush2.msra.mxu0 0.0
        %1095 = vmatprep.mubr.f32.mxu0 0.0
        %1096 = vmatmul.mubr.f32.gmra.mxu0 %v532
        %v1097 = vpop.f32.mrf.mxu0
        %v1098 = vadd.f32 %v528, %v1097
        %v1099 = vpop.f32.mrf.mxu0
        %v1100 = vadd.f32 %v528, %v1099
        %1101 = vdwg.mxu0
        %v1102 = vld [vmem:[%s5] sm:$0xff]
        %v1103 = vmax.f32 %v601, 0.0
        %v1104 = vmax.f32 %v603, 0.0
        %v1105 = vmax.f32 %v672, 0.0
        %v1106 = vmax.f32 %v674, 0.0
        %v1107 = vmax.f32 %v743, 0.0
        %v1108 = vmax.f32 %v745, 0.0
        %v1109 = vmax.f32 %v814, 0.0
        %v1110 = vmax.f32 %v816, 0.0
        %v1111 = vmax.f32 %v885, 0.0
        %v1112 = vmax.f32 %v887, 0.0
        %v1113 = vmax.f32 %v956, 0.0
        %v1114 = vmax.f32 %v958, 0.0
        %v1115 = vmax.f32 %v1027, 0.0
        %v1116 = vmax.f32 %v1029, 0.0
        %v1117 = vmax.f32 %v1098, 0.0
        %v1118 = vmax.f32 %v1100, 0.0
        %v1119 = vmin.f32 %v601, 0.0
        %v1120 = vmin.f32 %v603, 0.0
        %v1121 = vmin.f32 %v672, 0.0
        %v1122 = vmin.f32 %v674, 0.0
        %v1123 = vmin.f32 %v743, 0.0
        %v1124 = vmin.f32 %v745, 0.0
        %v1125 = vmin.f32 %v814, 0.0
        %v1126 = vmin.f32 %v816, 0.0
        %v1127 = vmin.f32 %v885, 0.0
        %v1128 = vmin.f32 %v887, 0.0
        %v1129 = vmin.f32 %v956, 0.0
        %v1130 = vmin.f32 %v958, 0.0
        %v1131 = vmin.f32 %v1027, 0.0
        %v1132 = vmin.f32 %v1029, 0.0
        %v1133 = vmin.f32 %v1098, 0.0
        %v1134 = vmin.f32 %v1100, 0.0
        %1136 = vset.pattern.permute.xlu0 0
        %1137 = vperm.xlu0 %1136, %v1102
        %v1138 = vpop.permute.xlu0 %1137
        %v1140 = vmul.f32 %v1138, %v1119
        %v1141 = vmul.f32 %v1138, %v1120
        %v1142 = vmul.f32 %v1138, %v1121
        %v1143 = vmul.f32 %v1138, %v1122
        %v1144 = vmul.f32 %v1138, %v1123
        %v1145 = vmul.f32 %v1138, %v1124
        %v1146 = vmul.f32 %v1138, %v1125
        %v1147 = vmul.f32 %v1138, %v1126
        %v1148 = vmul.f32 %v1138, %v1127
        %v1149 = vmul.f32 %v1138, %v1128
        %v1150 = vmul.f32 %v1138, %v1129
        %v1151 = vmul.f32 %v1138, %v1130
        %v1152 = vmul.f32 %v1138, %v1131
        %v1153 = vmul.f32 %v1138, %v1132
        %v1154 = vmul.f32 %v1138, %v1133
        %v1155 = vmul.f32 %v1138, %v1134
        %v1156 = vadd.f32 %v1103, %v1140
        %v1157 = vadd.f32 %v1104, %v1141
        %v1158 = vadd.f32 %v1105, %v1142
        %v1159 = vadd.f32 %v1106, %v1143
        %v1160 = vadd.f32 %v1107, %v1144
        %v1161 = vadd.f32 %v1108, %v1145
        %v1162 = vadd.f32 %v1109, %v1146
        %v1163 = vadd.f32 %v1110, %v1147
        %v1164 = vadd.f32 %v1111, %v1148
        %v1165 = vadd.f32 %v1112, %v1149
        %v1166 = vadd.f32 %v1113, %v1150
        %v1167 = vadd.f32 %v1114, %v1151
        %v1168 = vadd.f32 %v1115, %v1152
        %v1169 = vadd.f32 %v1116, %v1153
        %v1170 = vadd.f32 %v1117, %v1154
        %v1171 = vadd.f32 %v1118, %v1155
        %v1172 = vld [vmem:[%s1] sm:$0xff]
        %v1173 = vld [vmem:[%s1 + $0x8] sm:$0xff]
        %v1174 = vld [vmem:[%s2] sm:$0xff]
        %v1175 = vld [vmem:[%s2 + $0x8] sm:$0xff]
        %v1176 = vld [vmem:[%s6] sm:$0xff]
        %v1177 = vld [vmem:[%s6 + $0x8] sm:$0xff]
        %v1178 = vld [vmem:[%s6 + $0x10] sm:$0xff]
        %v1179 = vld [vmem:[%s6 + $0x18] sm:$0xff]
        %v1180 = vld [vmem:[%s6 + $0x20] sm:$0xff]
        %v1181 = vld [vmem:[%s6 + $0x28] sm:$0xff]
        %v1182 = vld [vmem:[%s6 + $0x30] sm:$0xff]
        %v1183 = vld [vmem:[%s6 + $0x38] sm:$0xff]
        %v1184 = vld [vmem:[%s6 + $0x40] sm:$0xff]
        %1186 = vset.pattern.permute.xlu0 0
        %1187 = vperm.xlu0 %1186, %v1180
        %v1188 = vpop.permute.xlu0 %1187
        %v1190 = vmul.f32 %v1156, %v1188
        %v1191 = vmul.f32 %v1157, %v1188
        %v1192 = vmul.f32 %v1158, %v1188
        %v1193 = vmul.f32 %v1159, %v1188
        %v1194 = vmul.f32 %v1160, %v1188
        %v1195 = vmul.f32 %v1161, %v1188
        %v1196 = vmul.f32 %v1162, %v1188
        %v1197 = vmul.f32 %v1163, %v1188
        %v1198 = vmul.f32 %v1164, %v1188
        %v1199 = vmul.f32 %v1165, %v1188
        %v1200 = vmul.f32 %v1166, %v1188
        %v1201 = vmul.f32 %v1167, %v1188
        %v1202 = vmul.f32 %v1168, %v1188
        %v1203 = vmul.f32 %v1169, %v1188
        %v1204 = vmul.f32 %v1170, %v1188
        %v1205 = vmul.f32 %v1171, %v1188
        %1206 = vrot.lane.b32.xlu0 %v1156, 17
        %v1207 = vpop.permute.xlu0 %1206
        %1208 = vrot.lane.b32.xlu0 %v1157, 17
        %v1209 = vpop.permute.xlu0 %1208
        %1210 = vrot.lane.b32.xlu0 %v1158, 17
        %v1211 = vpop.permute.xlu0 %1210
        %1212 = vrot.lane.b32.xlu0 %v1159, 17
        %v1213 = vpop.permute.xlu0 %1212
        %1214 = vrot.lane.b32.xlu0 %v1160, 17
        %v1215 = vpop.permute.xlu0 %1214
        %1216 = vrot.lane.b32.xlu0 %v1161, 17
        %v1217 = vpop.permute.xlu0 %1216
        %1218 = vrot.lane.b32.xlu0 %v1162, 17
        %v1219 = vpop.permute.xlu0 %1218
        %1220 = vrot.lane.b32.xlu0 %v1163, 17
        %v1221 = vpop.permute.xlu0 %1220
        %1222 = vrot.lane.b32.xlu0 %v1164, 17
        %v1223 = vpop.permute.xlu0 %1222
        %1224 = vrot.lane.b32.xlu0 %v1165, 17
        %v1225 = vpop.permute.xlu0 %1224
        %1226 = vrot.lane.b32.xlu0 %v1166, 17
        %v1227 = vpop.permute.xlu0 %1226
        %1228 = vrot.lane.b32.xlu0 %v1167, 17
        %v1229 = vpop.permute.xlu0 %1228
        %1230 = vrot.lane.b32.xlu0 %v1168, 17
        %v1231 = vpop.permute.xlu0 %1230
        %1232 = vrot.lane.b32.xlu0 %v1169, 17
        %v1233 = vpop.permute.xlu0 %1232
        %1234 = vrot.lane.b32.xlu0 %v1170, 17
        %v1235 = vpop.permute.xlu0 %1234
        %1236 = vrot.lane.b32.xlu0 %v1171, 17
        %v1237 = vpop.permute.xlu0 %1236
        %v1238 = vlaneseq
        %v1239 = vand.u32 %v1238, 127
        %vm1240 = vcmp.lt.s32.totalorder %v1239, 17
        %v1241 = vsel %vm1240, %v1235, %v1237
        %v1242 = vsel %vm1240, %v1233, %v1235
        %v1243 = vsel %vm1240, %v1231, %v1233
        %v1244 = vsel %vm1240, %v1229, %v1231
        %v1245 = vsel %vm1240, %v1227, %v1229
        %v1246 = vsel %vm1240, %v1225, %v1227
        %v1247 = vsel %vm1240, %v1223, %v1225
        %v1248 = vsel %vm1240, %v1221, %v1223
        %v1249 = vsel %vm1240, %v1219, %v1221
        %v1250 = vsel %vm1240, %v1217, %v1219
        %v1251 = vsel %vm1240, %v1215, %v1217
        %v1252 = vsel %vm1240, %v1213, %v1215
        %v1253 = vsel %vm1240, %v1211, %v1213
        %v1254 = vsel %vm1240, %v1209, %v1211
        %v1255 = vsel %vm1240, %v1207, %v1209
        %v1256 = vsel %vm1240, %v1237, %v1207
        %vm1257 = vcmp.ge.s32.totalorder %v1172, 1
        %vm1258 = vcmp.ge.s32.totalorder %v1173, 1
        %vm1259 = vcmp.ge.s32.totalorder %v1174, 1
        %vm1260 = vcmp.ge.s32.totalorder %v1175, 1
        %vm1261 = vmand %vm1257, %vm1259
        %vm1262 = vmand %vm1258, %vm1260
        %v1263 = vsel %vm1261, 1, 0
        %v1264 = vsel %vm1262, 1, 0
        %v1265 = vlaneseq
        %v1266 = vshrl.u32 %v1265, 7
        %v1267 = vsub.s32 0, %v1266
        %v1268 = vrot.slane %v1263, %v1267
        %v1269 = vlaneseq
        %v1270 = vshrl.u32 %v1269, 7
        %v1271 = vsub.s32 1, %v1270
        %v1272 = vrot.slane %v1263, %v1271
        %v1273 = vlaneseq
        %v1274 = vshrl.u32 %v1273, 7
        %v1275 = vsub.s32 2, %v1274
        %v1276 = vrot.slane %v1263, %v1275
        %v1277 = vlaneseq
        %v1278 = vshrl.u32 %v1277, 7
        %v1279 = vsub.s32 3, %v1278
        %v1280 = vrot.slane %v1263, %v1279
        %v1281 = vlaneseq
        %v1282 = vshrl.u32 %v1281, 7
        %v1283 = vsub.s32 4, %v1282
        %v1284 = vrot.slane %v1263, %v1283
        %v1285 = vlaneseq
        %v1286 = vshrl.u32 %v1285, 7
        %v1287 = vsub.s32 5, %v1286
        %v1288 = vrot.slane %v1263, %v1287
        %v1289 = vlaneseq
        %v1290 = vshrl.u32 %v1289, 7
        %v1291 = vsub.s32 6, %v1290
        %v1292 = vrot.slane %v1263, %v1291
        %v1293 = vlaneseq
        %v1294 = vshrl.u32 %v1293, 7
        %v1295 = vsub.s32 7, %v1294
        %v1296 = vrot.slane %v1263, %v1295
        %v1297 = vlaneseq
        %v1298 = vshrl.u32 %v1297, 7
        %v1299 = vsub.s32 0, %v1298
        %v1300 = vrot.slane %v1264, %v1299
        %v1301 = vlaneseq
        %v1302 = vshrl.u32 %v1301, 7
        %v1303 = vsub.s32 1, %v1302
        %v1304 = vrot.slane %v1264, %v1303
        %v1305 = vlaneseq
        %v1306 = vshrl.u32 %v1305, 7
        %v1307 = vsub.s32 2, %v1306
        %v1308 = vrot.slane %v1264, %v1307
        %v1309 = vlaneseq
        %v1310 = vshrl.u32 %v1309, 7
        %v1311 = vsub.s32 3, %v1310
        %v1312 = vrot.slane %v1264, %v1311
        %v1313 = vlaneseq
        %v1314 = vshrl.u32 %v1313, 7
        %v1315 = vsub.s32 4, %v1314
        %v1316 = vrot.slane %v1264, %v1315
        %v1317 = vlaneseq
        %v1318 = vshrl.u32 %v1317, 7
        %v1319 = vsub.s32 5, %v1318
        %v1320 = vrot.slane %v1264, %v1319
        %v1321 = vlaneseq
        %v1322 = vshrl.u32 %v1321, 7
        %v1323 = vsub.s32 6, %v1322
        %v1324 = vrot.slane %v1264, %v1323
        %v1325 = vlaneseq
        %v1326 = vshrl.u32 %v1325, 7
        %v1327 = vsub.s32 7, %v1326
        %v1328 = vrot.slane %v1264, %v1327
        %vm1329 = vcmp.eq.s32.totalorder %v1268, 1
        %vm1330 = vcmp.eq.s32.totalorder %v1272, 1
        %vm1331 = vcmp.eq.s32.totalorder %v1276, 1
        %vm1332 = vcmp.eq.s32.totalorder %v1280, 1
        %vm1333 = vcmp.eq.s32.totalorder %v1284, 1
        %vm1334 = vcmp.eq.s32.totalorder %v1288, 1
        %vm1335 = vcmp.eq.s32.totalorder %v1292, 1
        %vm1336 = vcmp.eq.s32.totalorder %v1296, 1
        %vm1337 = vcmp.eq.s32.totalorder %v1300, 1
        %vm1338 = vcmp.eq.s32.totalorder %v1304, 1
        %vm1339 = vcmp.eq.s32.totalorder %v1308, 1
        %vm1340 = vcmp.eq.s32.totalorder %v1312, 1
        %vm1341 = vcmp.eq.s32.totalorder %v1316, 1
        %vm1342 = vcmp.eq.s32.totalorder %v1320, 1
        %vm1343 = vcmp.eq.s32.totalorder %v1324, 1
        %vm1344 = vcmp.eq.s32.totalorder %v1328, 1
        %v1345 = vsel %vm1329, %v1256, 0.0
        %v1346 = vsel %vm1330, %v1255, 0.0
        %v1347 = vsel %vm1331, %v1254, 0.0
        %v1348 = vsel %vm1332, %v1253, 0.0
        %v1349 = vsel %vm1333, %v1252, 0.0
        %v1350 = vsel %vm1334, %v1251, 0.0
        %v1351 = vsel %vm1335, %v1250, 0.0
        %v1352 = vsel %vm1336, %v1249, 0.0
        %v1353 = vsel %vm1337, %v1248, 0.0
        %v1354 = vsel %vm1338, %v1247, 0.0
        %v1355 = vsel %vm1339, %v1246, 0.0
        %v1356 = vsel %vm1340, %v1245, 0.0
        %v1357 = vsel %vm1341, %v1244, 0.0
        %v1358 = vsel %vm1342, %v1243, 0.0
        %v1359 = vsel %vm1343, %v1242, 0.0
        %v1360 = vsel %vm1344, %v1241, 0.0
        %1362 = vset.pattern.permute.xlu0 0
        %1363 = vperm.xlu0 %1362, %v1176
        %v1364 = vpop.permute.xlu0 %1363
        %v1366 = vmul.f32 %v1345, %v1364
        %v1367 = vmul.f32 %v1346, %v1364
        %v1368 = vmul.f32 %v1347, %v1364
        %v1369 = vmul.f32 %v1348, %v1364
        %v1370 = vmul.f32 %v1349, %v1364
        %v1371 = vmul.f32 %v1350, %v1364
        %v1372 = vmul.f32 %v1351, %v1364
        %v1373 = vmul.f32 %v1352, %v1364
        %v1374 = vmul.f32 %v1353, %v1364
        %v1375 = vmul.f32 %v1354, %v1364
        %v1376 = vmul.f32 %v1355, %v1364
        %v1377 = vmul.f32 %v1356, %v1364
        %v1378 = vmul.f32 %v1357, %v1364
        %v1379 = vmul.f32 %v1358, %v1364
        %v1380 = vmul.f32 %v1359, %v1364
        %v1381 = vmul.f32 %v1360, %v1364
        %v1382 = vadd.f32 %v1190, %v1366
        %v1383 = vadd.f32 %v1191, %v1367
        %v1384 = vadd.f32 %v1192, %v1368
        %v1385 = vadd.f32 %v1193, %v1369
        %v1386 = vadd.f32 %v1194, %v1370
        %v1387 = vadd.f32 %v1195, %v1371
        %v1388 = vadd.f32 %v1196, %v1372
        %v1389 = vadd.f32 %v1197, %v1373
        %v1390 = vadd.f32 %v1198, %v1374
        %v1391 = vadd.f32 %v1199, %v1375
        %v1392 = vadd.f32 %v1200, %v1376
        %v1393 = vadd.f32 %v1201, %v1377
        %v1394 = vadd.f32 %v1202, %v1378
        %v1395 = vadd.f32 %v1203, %v1379
        %v1396 = vadd.f32 %v1204, %v1380
        %v1397 = vadd.f32 %v1205, %v1381
        %1398 = vrot.lane.b32.xlu0 %v1156, 16
        %v1399 = vpop.permute.xlu0 %1398
        %1400 = vrot.lane.b32.xlu0 %v1157, 16
        %v1401 = vpop.permute.xlu0 %1400
        %1402 = vrot.lane.b32.xlu0 %v1158, 16
        %v1403 = vpop.permute.xlu0 %1402
        %1404 = vrot.lane.b32.xlu0 %v1159, 16
        %v1405 = vpop.permute.xlu0 %1404
        %1406 = vrot.lane.b32.xlu0 %v1160, 16
        %v1407 = vpop.permute.xlu0 %1406
        %1408 = vrot.lane.b32.xlu0 %v1161, 16
        %v1409 = vpop.permute.xlu0 %1408
        %1410 = vrot.lane.b32.xlu0 %v1162, 16
        %v1411 = vpop.permute.xlu0 %1410
        %1412 = vrot.lane.b32.xlu0 %v1163, 16
        %v1413 = vpop.permute.xlu0 %1412
        %1414 = vrot.lane.b32.xlu0 %v1164, 16
        %v1415 = vpop.permute.xlu0 %1414
        %1416 = vrot.lane.b32.xlu0 %v1165, 16
        %v1417 = vpop.permute.xlu0 %1416
        %1418 = vrot.lane.b32.xlu0 %v1166, 16
        %v1419 = vpop.permute.xlu0 %1418
        %1420 = vrot.lane.b32.xlu0 %v1167, 16
        %v1421 = vpop.permute.xlu0 %1420
        %1422 = vrot.lane.b32.xlu0 %v1168, 16
        %v1423 = vpop.permute.xlu0 %1422
        %1424 = vrot.lane.b32.xlu0 %v1169, 16
        %v1425 = vpop.permute.xlu0 %1424
        %1426 = vrot.lane.b32.xlu0 %v1170, 16
        %v1427 = vpop.permute.xlu0 %1426
        %1428 = vrot.lane.b32.xlu0 %v1171, 16
        %v1429 = vpop.permute.xlu0 %1428
        %vm1430 = vcmp.lt.s32.totalorder %v1239, 16
        %v1431 = vsel %vm1430, %v1427, %v1429
        %v1432 = vsel %vm1430, %v1425, %v1427
        %v1433 = vsel %vm1430, %v1423, %v1425
        %v1434 = vsel %vm1430, %v1421, %v1423
        %v1435 = vsel %vm1430, %v1419, %v1421
        %v1436 = vsel %vm1430, %v1417, %v1419
        %v1437 = vsel %vm1430, %v1415, %v1417
        %v1438 = vsel %vm1430, %v1413, %v1415
        %v1439 = vsel %vm1430, %v1411, %v1413
        %v1440 = vsel %vm1430, %v1409, %v1411
        %v1441 = vsel %vm1430, %v1407, %v1409
        %v1442 = vsel %vm1430, %v1405, %v1407
        %v1443 = vsel %vm1430, %v1403, %v1405
        %v1444 = vsel %vm1430, %v1401, %v1403
        %v1445 = vsel %vm1430, %v1399, %v1401
        %v1446 = vsel %vm1430, %v1429, %v1399
        %v1447 = vsel %vm1257, 1, 0
        %v1448 = vsel %vm1258, 1, 0
        %v1449 = vlaneseq
        %v1450 = vshrl.u32 %v1449, 7
        %v1451 = vsub.s32 0, %v1450
        %v1452 = vrot.slane %v1447, %v1451
        %v1453 = vlaneseq
        %v1454 = vshrl.u32 %v1453, 7
        %v1455 = vsub.s32 1, %v1454
        %v1456 = vrot.slane %v1447, %v1455
        %v1457 = vlaneseq
        %v1458 = vshrl.u32 %v1457, 7
        %v1459 = vsub.s32 2, %v1458
        %v1460 = vrot.slane %v1447, %v1459
        %v1461 = vlaneseq
        %v1462 = vshrl.u32 %v1461, 7
        %v1463 = vsub.s32 3, %v1462
        %v1464 = vrot.slane %v1447, %v1463
        %v1465 = vlaneseq
        %v1466 = vshrl.u32 %v1465, 7
        %v1467 = vsub.s32 4, %v1466
        %v1468 = vrot.slane %v1447, %v1467
        %v1469 = vlaneseq
        %v1470 = vshrl.u32 %v1469, 7
        %v1471 = vsub.s32 5, %v1470
        %v1472 = vrot.slane %v1447, %v1471
        %v1473 = vlaneseq
        %v1474 = vshrl.u32 %v1473, 7
        %v1475 = vsub.s32 6, %v1474
        %v1476 = vrot.slane %v1447, %v1475
        %v1477 = vlaneseq
        %v1478 = vshrl.u32 %v1477, 7
        %v1479 = vsub.s32 7, %v1478
        %v1480 = vrot.slane %v1447, %v1479
        %v1481 = vlaneseq
        %v1482 = vshrl.u32 %v1481, 7
        %v1483 = vsub.s32 0, %v1482
        %v1484 = vrot.slane %v1448, %v1483
        %v1485 = vlaneseq
        %v1486 = vshrl.u32 %v1485, 7
        %v1487 = vsub.s32 1, %v1486
        %v1488 = vrot.slane %v1448, %v1487
        %v1489 = vlaneseq
        %v1490 = vshrl.u32 %v1489, 7
        %v1491 = vsub.s32 2, %v1490
        %v1492 = vrot.slane %v1448, %v1491
        %v1493 = vlaneseq
        %v1494 = vshrl.u32 %v1493, 7
        %v1495 = vsub.s32 3, %v1494
        %v1496 = vrot.slane %v1448, %v1495
        %v1497 = vlaneseq
        %v1498 = vshrl.u32 %v1497, 7
        %v1499 = vsub.s32 4, %v1498
        %v1500 = vrot.slane %v1448, %v1499
        %v1501 = vlaneseq
        %v1502 = vshrl.u32 %v1501, 7
        %v1503 = vsub.s32 5, %v1502
        %v1504 = vrot.slane %v1448, %v1503
        %v1505 = vlaneseq
        %v1506 = vshrl.u32 %v1505, 7
        %v1507 = vsub.s32 6, %v1506
        %v1508 = vrot.slane %v1448, %v1507
        %v1509 = vlaneseq
        %v1510 = vshrl.u32 %v1509, 7
        %v1511 = vsub.s32 7, %v1510
        %v1512 = vrot.slane %v1448, %v1511
        %vm1513 = vcmp.eq.s32.totalorder %v1452, 1
        %vm1514 = vcmp.eq.s32.totalorder %v1456, 1
        %vm1515 = vcmp.eq.s32.totalorder %v1460, 1
        %vm1516 = vcmp.eq.s32.totalorder %v1464, 1
        %vm1517 = vcmp.eq.s32.totalorder %v1468, 1
        %vm1518 = vcmp.eq.s32.totalorder %v1472, 1
        %vm1519 = vcmp.eq.s32.totalorder %v1476, 1
        %vm1520 = vcmp.eq.s32.totalorder %v1480, 1
        %vm1521 = vcmp.eq.s32.totalorder %v1484, 1
        %vm1522 = vcmp.eq.s32.totalorder %v1488, 1
        %vm1523 = vcmp.eq.s32.totalorder %v1492, 1
        %vm1524 = vcmp.eq.s32.totalorder %v1496, 1
        %vm1525 = vcmp.eq.s32.totalorder %v1500, 1
        %vm1526 = vcmp.eq.s32.totalorder %v1504, 1
        %vm1527 = vcmp.eq.s32.totalorder %v1508, 1
        %vm1528 = vcmp.eq.s32.totalorder %v1512, 1
        %v1529 = vsel %vm1513, %v1446, 0.0
        %v1530 = vsel %vm1514, %v1445, 0.0
        %v1531 = vsel %vm1515, %v1444, 0.0
        %v1532 = vsel %vm1516, %v1443, 0.0
        %v1533 = vsel %vm1517, %v1442, 0.0
        %v1534 = vsel %vm1518, %v1441, 0.0
        %v1535 = vsel %vm1519, %v1440, 0.0
        %v1536 = vsel %vm1520, %v1439, 0.0
        %v1537 = vsel %vm1521, %v1438, 0.0
        %v1538 = vsel %vm1522, %v1437, 0.0
        %v1539 = vsel %vm1523, %v1436, 0.0
        %v1540 = vsel %vm1524, %v1435, 0.0
        %v1541 = vsel %vm1525, %v1434, 0.0
        %v1542 = vsel %vm1526, %v1433, 0.0
        %v1543 = vsel %vm1527, %v1432, 0.0
        %v1544 = vsel %vm1528, %v1431, 0.0
        %1546 = vset.pattern.permute.xlu0 0
        %1547 = vperm.xlu0 %1546, %v1177
        %v1548 = vpop.permute.xlu0 %1547
        %v1550 = vmul.f32 %v1529, %v1548
        %v1551 = vmul.f32 %v1530, %v1548
        %v1552 = vmul.f32 %v1531, %v1548
        %v1553 = vmul.f32 %v1532, %v1548
        %v1554 = vmul.f32 %v1533, %v1548
        %v1555 = vmul.f32 %v1534, %v1548
        %v1556 = vmul.f32 %v1535, %v1548
        %v1557 = vmul.f32 %v1536, %v1548
        %v1558 = vmul.f32 %v1537, %v1548
        %v1559 = vmul.f32 %v1538, %v1548
        %v1560 = vmul.f32 %v1539, %v1548
        %v1561 = vmul.f32 %v1540, %v1548
        %v1562 = vmul.f32 %v1541, %v1548
        %v1563 = vmul.f32 %v1542, %v1548
        %v1564 = vmul.f32 %v1543, %v1548
        %v1565 = vmul.f32 %v1544, %v1548
        %v1566 = vadd.f32 %v1382, %v1550
        %v1567 = vadd.f32 %v1383, %v1551
        %v1568 = vadd.f32 %v1384, %v1552
        %v1569 = vadd.f32 %v1385, %v1553
        %v1570 = vadd.f32 %v1386, %v1554
        %v1571 = vadd.f32 %v1387, %v1555
        %v1572 = vadd.f32 %v1388, %v1556
        %v1573 = vadd.f32 %v1389, %v1557
        %v1574 = vadd.f32 %v1390, %v1558
        %v1575 = vadd.f32 %v1391, %v1559
        %v1576 = vadd.f32 %v1392, %v1560
        %v1577 = vadd.f32 %v1393, %v1561
        %v1578 = vadd.f32 %v1394, %v1562
        %v1579 = vadd.f32 %v1395, %v1563
        %v1580 = vadd.f32 %v1396, %v1564
        %v1581 = vadd.f32 %v1397, %v1565
        %1582 = vrot.lane.b32.xlu0 %v1156, 15
        %v1583 = vpop.permute.xlu0 %1582
        %1584 = vrot.lane.b32.xlu0 %v1157, 15
        %v1585 = vpop.permute.xlu0 %1584
        %1586 = vrot.lane.b32.xlu0 %v1158, 15
        %v1587 = vpop.permute.xlu0 %1586
        %1588 = vrot.lane.b32.xlu0 %v1159, 15
        %v1589 = vpop.permute.xlu0 %1588
        %1590 = vrot.lane.b32.xlu0 %v1160, 15
        %v1591 = vpop.permute.xlu0 %1590
        %1592 = vrot.lane.b32.xlu0 %v1161, 15
        %v1593 = vpop.permute.xlu0 %1592
        %1594 = vrot.lane.b32.xlu0 %v1162, 15
        %v1595 = vpop.permute.xlu0 %1594
        %1596 = vrot.lane.b32.xlu0 %v1163, 15
        %v1597 = vpop.permute.xlu0 %1596
        %1598 = vrot.lane.b32.xlu0 %v1164, 15
        %v1599 = vpop.permute.xlu0 %1598
        %1600 = vrot.lane.b32.xlu0 %v1165, 15
        %v1601 = vpop.permute.xlu0 %1600
        %1602 = vrot.lane.b32.xlu0 %v1166, 15
        %v1603 = vpop.permute.xlu0 %1602
        %1604 = vrot.lane.b32.xlu0 %v1167, 15
        %v1605 = vpop.permute.xlu0 %1604
        %1606 = vrot.lane.b32.xlu0 %v1168, 15
        %v1607 = vpop.permute.xlu0 %1606
        %1608 = vrot.lane.b32.xlu0 %v1169, 15
        %v1609 = vpop.permute.xlu0 %1608
        %1610 = vrot.lane.b32.xlu0 %v1170, 15
        %v1611 = vpop.permute.xlu0 %1610
        %1612 = vrot.lane.b32.xlu0 %v1171, 15
        %v1613 = vpop.permute.xlu0 %1612
        %vm1614 = vcmp.lt.s32.totalorder %v1239, 15
        %v1615 = vsel %vm1614, %v1611, %v1613
        %v1616 = vsel %vm1614, %v1609, %v1611
        %v1617 = vsel %vm1614, %v1607, %v1609
        %v1618 = vsel %vm1614, %v1605, %v1607
        %v1619 = vsel %vm1614, %v1603, %v1605
        %v1620 = vsel %vm1614, %v1601, %v1603
        %v1621 = vsel %vm1614, %v1599, %v1601
        %v1622 = vsel %vm1614, %v1597, %v1599
        %v1623 = vsel %vm1614, %v1595, %v1597
        %v1624 = vsel %vm1614, %v1593, %v1595
        %v1625 = vsel %vm1614, %v1591, %v1593
        %v1626 = vsel %vm1614, %v1589, %v1591
        %v1627 = vsel %vm1614, %v1587, %v1589
        %v1628 = vsel %vm1614, %v1585, %v1587
        %v1629 = vsel %vm1614, %v1583, %v1585
        %v1630 = vsel %vm1614, %v1613, %v1583
        %vm1631 = vcmp.lt.s32.totalorder %v1174, 15
        %vm1632 = vcmp.lt.s32.totalorder %v1175, 15
        %vm1633 = vmand %vm1257, %vm1631
        %vm1634 = vmand %vm1258, %vm1632
        %v1635 = vsel %vm1633, 1, 0
        %v1636 = vsel %vm1634, 1, 0
        %v1637 = vlaneseq
        %v1638 = vshrl.u32 %v1637, 7
        %v1639 = vsub.s32 0, %v1638
        %v1640 = vrot.slane %v1635, %v1639
        %v1641 = vlaneseq
        %v1642 = vshrl.u32 %v1641, 7
        %v1643 = vsub.s32 1, %v1642
        %v1644 = vrot.slane %v1635, %v1643
        %v1645 = vlaneseq
        %v1646 = vshrl.u32 %v1645, 7
        %v1647 = vsub.s32 2, %v1646
        %v1648 = vrot.slane %v1635, %v1647
        %v1649 = vlaneseq
        %v1650 = vshrl.u32 %v1649, 7
        %v1651 = vsub.s32 3, %v1650
        %v1652 = vrot.slane %v1635, %v1651
        %v1653 = vlaneseq
        %v1654 = vshrl.u32 %v1653, 7
        %v1655 = vsub.s32 4, %v1654
        %v1656 = vrot.slane %v1635, %v1655
        %v1657 = vlaneseq
        %v1658 = vshrl.u32 %v1657, 7
        %v1659 = vsub.s32 5, %v1658
        %v1660 = vrot.slane %v1635, %v1659
        %v1661 = vlaneseq
        %v1662 = vshrl.u32 %v1661, 7
        %v1663 = vsub.s32 6, %v1662
        %v1664 = vrot.slane %v1635, %v1663
        %v1665 = vlaneseq
        %v1666 = vshrl.u32 %v1665, 7
        %v1667 = vsub.s32 7, %v1666
        %v1668 = vrot.slane %v1635, %v1667
        %v1669 = vlaneseq
        %v1670 = vshrl.u32 %v1669, 7
        %v1671 = vsub.s32 0, %v1670
        %v1672 = vrot.slane %v1636, %v1671
        %v1673 = vlaneseq
        %v1674 = vshrl.u32 %v1673, 7
        %v1675 = vsub.s32 1, %v1674
        %v1676 = vrot.slane %v1636, %v1675
        %v1677 = vlaneseq
        %v1678 = vshrl.u32 %v1677, 7
        %v1679 = vsub.s32 2, %v1678
        %v1680 = vrot.slane %v1636, %v1679
        %v1681 = vlaneseq
        %v1682 = vshrl.u32 %v1681, 7
        %v1683 = vsub.s32 3, %v1682
        %v1684 = vrot.slane %v1636, %v1683
        %v1685 = vlaneseq
        %v1686 = vshrl.u32 %v1685, 7
        %v1687 = vsub.s32 4, %v1686
        %v1688 = vrot.slane %v1636, %v1687
        %v1689 = vlaneseq
        %v1690 = vshrl.u32 %v1689, 7
        %v1691 = vsub.s32 5, %v1690
        %v1692 = vrot.slane %v1636, %v1691
        %v1693 = vlaneseq
        %v1694 = vshrl.u32 %v1693, 7
        %v1695 = vsub.s32 6, %v1694
        %v1696 = vrot.slane %v1636, %v1695
        %v1697 = vlaneseq
        %v1698 = vshrl.u32 %v1697, 7
        %v1699 = vsub.s32 7, %v1698
        %v1700 = vrot.slane %v1636, %v1699
        %vm1701 = vcmp.eq.s32.totalorder %v1640, 1
        %vm1702 = vcmp.eq.s32.totalorder %v1644, 1
        %vm1703 = vcmp.eq.s32.totalorder %v1648, 1
        %vm1704 = vcmp.eq.s32.totalorder %v1652, 1
        %vm1705 = vcmp.eq.s32.totalorder %v1656, 1
        %vm1706 = vcmp.eq.s32.totalorder %v1660, 1
        %vm1707 = vcmp.eq.s32.totalorder %v1664, 1
        %vm1708 = vcmp.eq.s32.totalorder %v1668, 1
        %vm1709 = vcmp.eq.s32.totalorder %v1672, 1
        %vm1710 = vcmp.eq.s32.totalorder %v1676, 1
        %vm1711 = vcmp.eq.s32.totalorder %v1680, 1
        %vm1712 = vcmp.eq.s32.totalorder %v1684, 1
        %vm1713 = vcmp.eq.s32.totalorder %v1688, 1
        %vm1714 = vcmp.eq.s32.totalorder %v1692, 1
        %vm1715 = vcmp.eq.s32.totalorder %v1696, 1
        %vm1716 = vcmp.eq.s32.totalorder %v1700, 1
        %v1717 = vsel %vm1701, %v1630, 0.0
        %v1718 = vsel %vm1702, %v1629, 0.0
        %v1719 = vsel %vm1703, %v1628, 0.0
        %v1720 = vsel %vm1704, %v1627, 0.0
        %v1721 = vsel %vm1705, %v1626, 0.0
        %v1722 = vsel %vm1706, %v1625, 0.0
        %v1723 = vsel %vm1707, %v1624, 0.0
        %v1724 = vsel %vm1708, %v1623, 0.0
        %v1725 = vsel %vm1709, %v1622, 0.0
        %v1726 = vsel %vm1710, %v1621, 0.0
        %v1727 = vsel %vm1711, %v1620, 0.0
        %v1728 = vsel %vm1712, %v1619, 0.0
        %v1729 = vsel %vm1713, %v1618, 0.0
        %v1730 = vsel %vm1714, %v1617, 0.0
        %v1731 = vsel %vm1715, %v1616, 0.0
        %v1732 = vsel %vm1716, %v1615, 0.0
        %1734 = vset.pattern.permute.xlu0 0
        %1735 = vperm.xlu0 %1734, %v1178
        %v1736 = vpop.permute.xlu0 %1735
        %v1738 = vmul.f32 %v1717, %v1736
        %v1739 = vmul.f32 %v1718, %v1736
        %v1740 = vmul.f32 %v1719, %v1736
        %v1741 = vmul.f32 %v1720, %v1736
        %v1742 = vmul.f32 %v1721, %v1736
        %v1743 = vmul.f32 %v1722, %v1736
        %v1744 = vmul.f32 %v1723, %v1736
        %v1745 = vmul.f32 %v1724, %v1736
        %v1746 = vmul.f32 %v1725, %v1736
        %v1747 = vmul.f32 %v1726, %v1736
        %v1748 = vmul.f32 %v1727, %v1736
        %v1749 = vmul.f32 %v1728, %v1736
        %v1750 = vmul.f32 %v1729, %v1736
        %v1751 = vmul.f32 %v1730, %v1736
        %v1752 = vmul.f32 %v1731, %v1736
        %v1753 = vmul.f32 %v1732, %v1736
        %v1754 = vadd.f32 %v1566, %v1738
        %v1755 = vadd.f32 %v1567, %v1739
        %v1756 = vadd.f32 %v1568, %v1740
        %v1757 = vadd.f32 %v1569, %v1741
        %v1758 = vadd.f32 %v1570, %v1742
        %v1759 = vadd.f32 %v1571, %v1743
        %v1760 = vadd.f32 %v1572, %v1744
        %v1761 = vadd.f32 %v1573, %v1745
        %v1762 = vadd.f32 %v1574, %v1746
        %v1763 = vadd.f32 %v1575, %v1747
        %v1764 = vadd.f32 %v1576, %v1748
        %v1765 = vadd.f32 %v1577, %v1749
        %v1766 = vadd.f32 %v1578, %v1750
        %v1767 = vadd.f32 %v1579, %v1751
        %v1768 = vadd.f32 %v1580, %v1752
        %v1769 = vadd.f32 %v1581, %v1753
        %1770 = vrot.lane.b32.xlu0 %v1156, 1
        %v1771 = vpop.permute.xlu0 %1770
        %1772 = vrot.lane.b32.xlu0 %v1157, 1
        %v1773 = vpop.permute.xlu0 %1772
        %1774 = vrot.lane.b32.xlu0 %v1158, 1
        %v1775 = vpop.permute.xlu0 %1774
        %1776 = vrot.lane.b32.xlu0 %v1159, 1
        %v1777 = vpop.permute.xlu0 %1776
        %1778 = vrot.lane.b32.xlu0 %v1160, 1
        %v1779 = vpop.permute.xlu0 %1778
        %1780 = vrot.lane.b32.xlu0 %v1161, 1
        %v1781 = vpop.permute.xlu0 %1780
        %1782 = vrot.lane.b32.xlu0 %v1162, 1
        %v1783 = vpop.permute.xlu0 %1782
        %1784 = vrot.lane.b32.xlu0 %v1163, 1
        %v1785 = vpop.permute.xlu0 %1784
        %1786 = vrot.lane.b32.xlu0 %v1164, 1
        %v1787 = vpop.permute.xlu0 %1786
        %1788 = vrot.lane.b32.xlu0 %v1165, 1
        %v1789 = vpop.permute.xlu0 %1788
        %1790 = vrot.lane.b32.xlu0 %v1166, 1
        %v1791 = vpop.permute.xlu0 %1790
        %1792 = vrot.lane.b32.xlu0 %v1167, 1
        %v1793 = vpop.permute.xlu0 %1792
        %1794 = vrot.lane.b32.xlu0 %v1168, 1
        %v1795 = vpop.permute.xlu0 %1794
        %1796 = vrot.lane.b32.xlu0 %v1169, 1
        %v1797 = vpop.permute.xlu0 %1796
        %1798 = vrot.lane.b32.xlu0 %v1170, 1
        %v1799 = vpop.permute.xlu0 %1798
        %1800 = vrot.lane.b32.xlu0 %v1171, 1
        %v1801 = vpop.permute.xlu0 %1800
        %vm1802 = vcmp.lt.s32.totalorder %v1239, 1
        %v1803 = vsel %vm1802, %v1799, %v1801
        %v1804 = vsel %vm1802, %v1797, %v1799
        %v1805 = vsel %vm1802, %v1795, %v1797
        %v1806 = vsel %vm1802, %v1793, %v1795
        %v1807 = vsel %vm1802, %v1791, %v1793
        %v1808 = vsel %vm1802, %v1789, %v1791
        %v1809 = vsel %vm1802, %v1787, %v1789
        %v1810 = vsel %vm1802, %v1785, %v1787
        %v1811 = vsel %vm1802, %v1783, %v1785
        %v1812 = vsel %vm1802, %v1781, %v1783
        %v1813 = vsel %vm1802, %v1779, %v1781
        %v1814 = vsel %vm1802, %v1777, %v1779
        %v1815 = vsel %vm1802, %v1775, %v1777
        %v1816 = vsel %vm1802, %v1773, %v1775
        %v1817 = vsel %vm1802, %v1771, %v1773
        %v1818 = vsel %vm1802, %v1801, %v1771
        %v1819 = vsel %vm1259, 1, 0
        %v1820 = vsel %vm1260, 1, 0
        %v1821 = vlaneseq
        %v1822 = vshrl.u32 %v1821, 7
        %v1823 = vsub.s32 0, %v1822
        %v1824 = vrot.slane %v1819, %v1823
        %v1825 = vlaneseq
        %v1826 = vshrl.u32 %v1825, 7
        %v1827 = vsub.s32 1, %v1826
        %v1828 = vrot.slane %v1819, %v1827
        %v1829 = vlaneseq
        %v1830 = vshrl.u32 %v1829, 7
        %v1831 = vsub.s32 2, %v1830
        %v1832 = vrot.slane %v1819, %v1831
        %v1833 = vlaneseq
        %v1834 = vshrl.u32 %v1833, 7
        %v1835 = vsub.s32 3, %v1834
        %v1836 = vrot.slane %v1819, %v1835
        %v1837 = vlaneseq
        %v1838 = vshrl.u32 %v1837, 7
        %v1839 = vsub.s32 4, %v1838
        %v1840 = vrot.slane %v1819, %v1839
        %v1841 = vlaneseq
        %v1842 = vshrl.u32 %v1841, 7
        %v1843 = vsub.s32 5, %v1842
        %v1844 = vrot.slane %v1819, %v1843
        %v1845 = vlaneseq
        %v1846 = vshrl.u32 %v1845, 7
        %v1847 = vsub.s32 6, %v1846
        %v1848 = vrot.slane %v1819, %v1847
        %v1849 = vlaneseq
        %v1850 = vshrl.u32 %v1849, 7
        %v1851 = vsub.s32 7, %v1850
        %v1852 = vrot.slane %v1819, %v1851
        %v1853 = vlaneseq
        %v1854 = vshrl.u32 %v1853, 7
        %v1855 = vsub.s32 0, %v1854
        %v1856 = vrot.slane %v1820, %v1855
        %v1857 = vlaneseq
        %v1858 = vshrl.u32 %v1857, 7
        %v1859 = vsub.s32 1, %v1858
        %v1860 = vrot.slane %v1820, %v1859
        %v1861 = vlaneseq
        %v1862 = vshrl.u32 %v1861, 7
        %v1863 = vsub.s32 2, %v1862
        %v1864 = vrot.slane %v1820, %v1863
        %v1865 = vlaneseq
        %v1866 = vshrl.u32 %v1865, 7
        %v1867 = vsub.s32 3, %v1866
        %v1868 = vrot.slane %v1820, %v1867
        %v1869 = vlaneseq
        %v1870 = vshrl.u32 %v1869, 7
        %v1871 = vsub.s32 4, %v1870
        %v1872 = vrot.slane %v1820, %v1871
        %v1873 = vlaneseq
        %v1874 = vshrl.u32 %v1873, 7
        %v1875 = vsub.s32 5, %v1874
        %v1876 = vrot.slane %v1820, %v1875
        %v1877 = vlaneseq
        %v1878 = vshrl.u32 %v1877, 7
        %v1879 = vsub.s32 6, %v1878
        %v1880 = vrot.slane %v1820, %v1879
        %v1881 = vlaneseq
        %v1882 = vshrl.u32 %v1881, 7
        %v1883 = vsub.s32 7, %v1882
        %v1884 = vrot.slane %v1820, %v1883
        %vm1885 = vcmp.eq.s32.totalorder %v1824, 1
        %vm1886 = vcmp.eq.s32.totalorder %v1828, 1
        %vm1887 = vcmp.eq.s32.totalorder %v1832, 1
        %vm1888 = vcmp.eq.s32.totalorder %v1836, 1
        %vm1889 = vcmp.eq.s32.totalorder %v1840, 1
        %vm1890 = vcmp.eq.s32.totalorder %v1844, 1
        %vm1891 = vcmp.eq.s32.totalorder %v1848, 1
        %vm1892 = vcmp.eq.s32.totalorder %v1852, 1
        %vm1893 = vcmp.eq.s32.totalorder %v1856, 1
        %vm1894 = vcmp.eq.s32.totalorder %v1860, 1
        %vm1895 = vcmp.eq.s32.totalorder %v1864, 1
        %vm1896 = vcmp.eq.s32.totalorder %v1868, 1
        %vm1897 = vcmp.eq.s32.totalorder %v1872, 1
        %vm1898 = vcmp.eq.s32.totalorder %v1876, 1
        %vm1899 = vcmp.eq.s32.totalorder %v1880, 1
        %vm1900 = vcmp.eq.s32.totalorder %v1884, 1
        %v1901 = vsel %vm1885, %v1818, 0.0
        %v1902 = vsel %vm1886, %v1817, 0.0
        %v1903 = vsel %vm1887, %v1816, 0.0
        %v1904 = vsel %vm1888, %v1815, 0.0
        %v1905 = vsel %vm1889, %v1814, 0.0
        %v1906 = vsel %vm1890, %v1813, 0.0
        %v1907 = vsel %vm1891, %v1812, 0.0
        %v1908 = vsel %vm1892, %v1811, 0.0
        %v1909 = vsel %vm1893, %v1810, 0.0
        %v1910 = vsel %vm1894, %v1809, 0.0
        %v1911 = vsel %vm1895, %v1808, 0.0
        %v1912 = vsel %vm1896, %v1807, 0.0
        %v1913 = vsel %vm1897, %v1806, 0.0
        %v1914 = vsel %vm1898, %v1805, 0.0
        %v1915 = vsel %vm1899, %v1804, 0.0
        %v1916 = vsel %vm1900, %v1803, 0.0
        %1918 = vset.pattern.permute.xlu0 0
        %1919 = vperm.xlu0 %1918, %v1179
        %v1920 = vpop.permute.xlu0 %1919
        %v1922 = vmul.f32 %v1901, %v1920
        %v1923 = vmul.f32 %v1902, %v1920
        %v1924 = vmul.f32 %v1903, %v1920
        %v1925 = vmul.f32 %v1904, %v1920
        %v1926 = vmul.f32 %v1905, %v1920
        %v1927 = vmul.f32 %v1906, %v1920
        %v1928 = vmul.f32 %v1907, %v1920
        %v1929 = vmul.f32 %v1908, %v1920
        %v1930 = vmul.f32 %v1909, %v1920
        %v1931 = vmul.f32 %v1910, %v1920
        %v1932 = vmul.f32 %v1911, %v1920
        %v1933 = vmul.f32 %v1912, %v1920
        %v1934 = vmul.f32 %v1913, %v1920
        %v1935 = vmul.f32 %v1914, %v1920
        %v1936 = vmul.f32 %v1915, %v1920
        %v1937 = vmul.f32 %v1916, %v1920
        %v1938 = vadd.f32 %v1754, %v1922
        %v1939 = vadd.f32 %v1755, %v1923
        %v1940 = vadd.f32 %v1756, %v1924
        %v1941 = vadd.f32 %v1757, %v1925
        %v1942 = vadd.f32 %v1758, %v1926
        %v1943 = vadd.f32 %v1759, %v1927
        %v1944 = vadd.f32 %v1760, %v1928
        %v1945 = vadd.f32 %v1761, %v1929
        %v1946 = vadd.f32 %v1762, %v1930
        %v1947 = vadd.f32 %v1763, %v1931
        %v1948 = vadd.f32 %v1764, %v1932
        %v1949 = vadd.f32 %v1765, %v1933
        %v1950 = vadd.f32 %v1766, %v1934
        %v1951 = vadd.f32 %v1767, %v1935
        %v1952 = vadd.f32 %v1768, %v1936
        %v1953 = vadd.f32 %v1769, %v1937
        %1954 = vrot.lane.b32.xlu0 %v1156, 127
        %v1955 = vpop.permute.xlu0 %1954
        %1956 = vrot.lane.b32.xlu0 %v1157, 127
        %v1957 = vpop.permute.xlu0 %1956
        %1958 = vrot.lane.b32.xlu0 %v1158, 127
        %v1959 = vpop.permute.xlu0 %1958
        %1960 = vrot.lane.b32.xlu0 %v1159, 127
        %v1961 = vpop.permute.xlu0 %1960
        %1962 = vrot.lane.b32.xlu0 %v1160, 127
        %v1963 = vpop.permute.xlu0 %1962
        %1964 = vrot.lane.b32.xlu0 %v1161, 127
        %v1965 = vpop.permute.xlu0 %1964
        %1966 = vrot.lane.b32.xlu0 %v1162, 127
        %v1967 = vpop.permute.xlu0 %1966
        %1968 = vrot.lane.b32.xlu0 %v1163, 127
        %v1969 = vpop.permute.xlu0 %1968
        %1970 = vrot.lane.b32.xlu0 %v1164, 127
        %v1971 = vpop.permute.xlu0 %1970
        %1972 = vrot.lane.b32.xlu0 %v1165, 127
        %v1973 = vpop.permute.xlu0 %1972
        %1974 = vrot.lane.b32.xlu0 %v1166, 127
        %v1975 = vpop.permute.xlu0 %1974
        %1976 = vrot.lane.b32.xlu0 %v1167, 127
        %v1977 = vpop.permute.xlu0 %1976
        %1978 = vrot.lane.b32.xlu0 %v1168, 127
        %v1979 = vpop.permute.xlu0 %1978
        %1980 = vrot.lane.b32.xlu0 %v1169, 127
        %v1981 = vpop.permute.xlu0 %1980
        %1982 = vrot.lane.b32.xlu0 %v1170, 127
        %v1983 = vpop.permute.xlu0 %1982
        %1984 = vrot.lane.b32.xlu0 %v1171, 127
        %v1985 = vpop.permute.xlu0 %1984
        %vm1986 = vcmp.lt.s32.totalorder %v1239, 127
        %v1987 = vsel %vm1986, %v1983, %v1985
        %v1988 = vsel %vm1986, %v1981, %v1983
        %v1989 = vsel %vm1986, %v1979, %v1981
        %v1990 = vsel %vm1986, %v1977, %v1979
        %v1991 = vsel %vm1986, %v1975, %v1977
        %v1992 = vsel %vm1986, %v1973, %v1975
        %v1993 = vsel %vm1986, %v1971, %v1973
        %v1994 = vsel %vm1986, %v1969, %v1971
        %v1995 = vsel %vm1986, %v1967, %v1969
        %v1996 = vsel %vm1986, %v1965, %v1967
        %v1997 = vsel %vm1986, %v1963, %v1965
        %v1998 = vsel %vm1986, %v1961, %v1963
        %v1999 = vsel %vm1986, %v1959, %v1961
        %v2000 = vsel %vm1986, %v1957, %v1959
        %v2001 = vsel %vm1986, %v1955, %v1957
        %v2002 = vsel %vm1986, %v1985, %v1955
        %v2003 = vsel %vm1631, 1, 0
        %v2004 = vsel %vm1632, 1, 0
        %v2005 = vlaneseq
        %v2006 = vshrl.u32 %v2005, 7
        %v2007 = vsub.s32 0, %v2006
        %v2008 = vrot.slane %v2003, %v2007
        %v2009 = vlaneseq
        %v2010 = vshrl.u32 %v2009, 7
        %v2011 = vsub.s32 1, %v2010
        %v2012 = vrot.slane %v2003, %v2011
        %v2013 = vlaneseq
        %v2014 = vshrl.u32 %v2013, 7
        %v2015 = vsub.s32 2, %v2014
        %v2016 = vrot.slane %v2003, %v2015
        %v2017 = vlaneseq
        %v2018 = vshrl.u32 %v2017, 7
        %v2019 = vsub.s32 3, %v2018
        %v2020 = vrot.slane %v2003, %v2019
        %v2021 = vlaneseq
        %v2022 = vshrl.u32 %v2021, 7
        %v2023 = vsub.s32 4, %v2022
        %v2024 = vrot.slane %v2003, %v2023
        %v2025 = vlaneseq
        %v2026 = vshrl.u32 %v2025, 7
        %v2027 = vsub.s32 5, %v2026
        %v2028 = vrot.slane %v2003, %v2027
        %v2029 = vlaneseq
        %v2030 = vshrl.u32 %v2029, 7
        %v2031 = vsub.s32 6, %v2030
        %v2032 = vrot.slane %v2003, %v2031
        %v2033 = vlaneseq
        %v2034 = vshrl.u32 %v2033, 7
        %v2035 = vsub.s32 7, %v2034
        %v2036 = vrot.slane %v2003, %v2035
        %v2037 = vlaneseq
        %v2038 = vshrl.u32 %v2037, 7
        %v2039 = vsub.s32 0, %v2038
        %v2040 = vrot.slane %v2004, %v2039
        %v2041 = vlaneseq
        %v2042 = vshrl.u32 %v2041, 7
        %v2043 = vsub.s32 1, %v2042
        %v2044 = vrot.slane %v2004, %v2043
        %v2045 = vlaneseq
        %v2046 = vshrl.u32 %v2045, 7
        %v2047 = vsub.s32 2, %v2046
        %v2048 = vrot.slane %v2004, %v2047
        %v2049 = vlaneseq
        %v2050 = vshrl.u32 %v2049, 7
        %v2051 = vsub.s32 3, %v2050
        %v2052 = vrot.slane %v2004, %v2051
        %v2053 = vlaneseq
        %v2054 = vshrl.u32 %v2053, 7
        %v2055 = vsub.s32 4, %v2054
        %v2056 = vrot.slane %v2004, %v2055
        %v2057 = vlaneseq
        %v2058 = vshrl.u32 %v2057, 7
        %v2059 = vsub.s32 5, %v2058
        %v2060 = vrot.slane %v2004, %v2059
        %v2061 = vlaneseq
        %v2062 = vshrl.u32 %v2061, 7
        %v2063 = vsub.s32 6, %v2062
        %v2064 = vrot.slane %v2004, %v2063
        %v2065 = vlaneseq
        %v2066 = vshrl.u32 %v2065, 7
        %v2067 = vsub.s32 7, %v2066
        %v2068 = vrot.slane %v2004, %v2067
        %vm2069 = vcmp.eq.s32.totalorder %v2008, 1
        %vm2070 = vcmp.eq.s32.totalorder %v2012, 1
        %vm2071 = vcmp.eq.s32.totalorder %v2016, 1
        %vm2072 = vcmp.eq.s32.totalorder %v2020, 1
        %vm2073 = vcmp.eq.s32.totalorder %v2024, 1
        %vm2074 = vcmp.eq.s32.totalorder %v2028, 1
        %vm2075 = vcmp.eq.s32.totalorder %v2032, 1
        %vm2076 = vcmp.eq.s32.totalorder %v2036, 1
        %vm2077 = vcmp.eq.s32.totalorder %v2040, 1
        %vm2078 = vcmp.eq.s32.totalorder %v2044, 1
        %vm2079 = vcmp.eq.s32.totalorder %v2048, 1
        %vm2080 = vcmp.eq.s32.totalorder %v2052, 1
        %vm2081 = vcmp.eq.s32.totalorder %v2056, 1
        %vm2082 = vcmp.eq.s32.totalorder %v2060, 1
        %vm2083 = vcmp.eq.s32.totalorder %v2064, 1
        %vm2084 = vcmp.eq.s32.totalorder %v2068, 1
        %v2085 = vsel %vm2069, %v2001, 0.0
        %v2086 = vsel %vm2070, %v2000, 0.0
        %v2087 = vsel %vm2071, %v1999, 0.0
        %v2088 = vsel %vm2072, %v1998, 0.0
        %v2089 = vsel %vm2073, %v1997, 0.0
        %v2090 = vsel %vm2074, %v1996, 0.0
        %v2091 = vsel %vm2075, %v1995, 0.0
        %v2092 = vsel %vm2076, %v1994, 0.0
        %v2093 = vsel %vm2077, %v1993, 0.0
        %v2094 = vsel %vm2078, %v1992, 0.0
        %v2095 = vsel %vm2079, %v1991, 0.0
        %v2096 = vsel %vm2080, %v1990, 0.0
        %v2097 = vsel %vm2081, %v1989, 0.0
        %v2098 = vsel %vm2082, %v1988, 0.0
        %v2099 = vsel %vm2083, %v1987, 0.0
        %v2100 = vsel %vm2084, %v2002, 0.0
        %2102 = vset.pattern.permute.xlu0 0
        %2103 = vperm.xlu0 %2102, %v1181
        %v2104 = vpop.permute.xlu0 %2103
        %v2106 = vmul.f32 %v2085, %v2104
        %v2107 = vmul.f32 %v2086, %v2104
        %v2108 = vmul.f32 %v2087, %v2104
        %v2109 = vmul.f32 %v2088, %v2104
        %v2110 = vmul.f32 %v2089, %v2104
        %v2111 = vmul.f32 %v2090, %v2104
        %v2112 = vmul.f32 %v2091, %v2104
        %v2113 = vmul.f32 %v2092, %v2104
        %v2114 = vmul.f32 %v2093, %v2104
        %v2115 = vmul.f32 %v2094, %v2104
        %v2116 = vmul.f32 %v2095, %v2104
        %v2117 = vmul.f32 %v2096, %v2104
        %v2118 = vmul.f32 %v2097, %v2104
        %v2119 = vmul.f32 %v2098, %v2104
        %v2120 = vmul.f32 %v2099, %v2104
        %v2121 = vmul.f32 %v2100, %v2104
        %v2122 = vadd.f32 %v1938, %v2106
        %v2123 = vadd.f32 %v1939, %v2107
        %v2124 = vadd.f32 %v1940, %v2108
        %v2125 = vadd.f32 %v1941, %v2109
        %v2126 = vadd.f32 %v1942, %v2110
        %v2127 = vadd.f32 %v1943, %v2111
        %v2128 = vadd.f32 %v1944, %v2112
        %v2129 = vadd.f32 %v1945, %v2113
        %v2130 = vadd.f32 %v1946, %v2114
        %v2131 = vadd.f32 %v1947, %v2115
        %v2132 = vadd.f32 %v1948, %v2116
        %v2133 = vadd.f32 %v1949, %v2117
        %v2134 = vadd.f32 %v1950, %v2118
        %v2135 = vadd.f32 %v1951, %v2119
        %v2136 = vadd.f32 %v1952, %v2120
        %v2137 = vadd.f32 %v1953, %v2121
        %2138 = vrot.lane.b32.xlu0 %v1156, 113
        %v2139 = vpop.permute.xlu0 %2138
        %2140 = vrot.lane.b32.xlu0 %v1157, 113
        %v2141 = vpop.permute.xlu0 %2140
        %2142 = vrot.lane.b32.xlu0 %v1158, 113
        %v2143 = vpop.permute.xlu0 %2142
        %2144 = vrot.lane.b32.xlu0 %v1159, 113
        %v2145 = vpop.permute.xlu0 %2144
        %2146 = vrot.lane.b32.xlu0 %v1160, 113
        %v2147 = vpop.permute.xlu0 %2146
        %2148 = vrot.lane.b32.xlu0 %v1161, 113
        %v2149 = vpop.permute.xlu0 %2148
        %2150 = vrot.lane.b32.xlu0 %v1162, 113
        %v2151 = vpop.permute.xlu0 %2150
        %2152 = vrot.lane.b32.xlu0 %v1163, 113
        %v2153 = vpop.permute.xlu0 %2152
        %2154 = vrot.lane.b32.xlu0 %v1164, 113
        %v2155 = vpop.permute.xlu0 %2154
        %2156 = vrot.lane.b32.xlu0 %v1165, 113
        %v2157 = vpop.permute.xlu0 %2156
        %2158 = vrot.lane.b32.xlu0 %v1166, 113
        %v2159 = vpop.permute.xlu0 %2158
        %2160 = vrot.lane.b32.xlu0 %v1167, 113
        %v2161 = vpop.permute.xlu0 %2160
        %2162 = vrot.lane.b32.xlu0 %v1168, 113
        %v2163 = vpop.permute.xlu0 %2162
        %2164 = vrot.lane.b32.xlu0 %v1169, 113
        %v2165 = vpop.permute.xlu0 %2164
        %2166 = vrot.lane.b32.xlu0 %v1170, 113
        %v2167 = vpop.permute.xlu0 %2166
        %2168 = vrot.lane.b32.xlu0 %v1171, 113
        %v2169 = vpop.permute.xlu0 %2168
        %vm2170 = vcmp.lt.s32.totalorder %v1239, 113
        %v2171 = vsel %vm2170, %v2167, %v2169
        %v2172 = vsel %vm2170, %v2165, %v2167
        %v2173 = vsel %vm2170, %v2163, %v2165
        %v2174 = vsel %vm2170, %v2161, %v2163
        %v2175 = vsel %vm2170, %v2159, %v2161
        %v2176 = vsel %vm2170, %v2157, %v2159
        %v2177 = vsel %vm2170, %v2155, %v2157
        %v2178 = vsel %vm2170, %v2153, %v2155
        %v2179 = vsel %vm2170, %v2151, %v2153
        %v2180 = vsel %vm2170, %v2149, %v2151
        %v2181 = vsel %vm2170, %v2147, %v2149
        %v2182 = vsel %vm2170, %v2145, %v2147
        %v2183 = vsel %vm2170, %v2143, %v2145
        %v2184 = vsel %vm2170, %v2141, %v2143
        %v2185 = vsel %vm2170, %v2139, %v2141
        %v2186 = vsel %vm2170, %v2169, %v2139
        %vm2187 = vcmp.lt.s32.totalorder %v1172, 15
        %vm2188 = vcmp.lt.s32.totalorder %v1173, 15
        %vm2189 = vmand %vm2187, %vm1259
        %vm2190 = vmand %vm2188, %vm1260
        %v2191 = vsel %vm2189, 1, 0
        %v2192 = vsel %vm2190, 1, 0
        %v2193 = vlaneseq
        %v2194 = vshrl.u32 %v2193, 7
        %v2195 = vsub.s32 0, %v2194
        %v2196 = vrot.slane %v2191, %v2195
        %v2197 = vlaneseq
        %v2198 = vshrl.u32 %v2197, 7
        %v2199 = vsub.s32 1, %v2198
        %v2200 = vrot.slane %v2191, %v2199
        %v2201 = vlaneseq
        %v2202 = vshrl.u32 %v2201, 7
        %v2203 = vsub.s32 2, %v2202
        %v2204 = vrot.slane %v2191, %v2203
        %v2205 = vlaneseq
        %v2206 = vshrl.u32 %v2205, 7
        %v2207 = vsub.s32 3, %v2206
        %v2208 = vrot.slane %v2191, %v2207
        %v2209 = vlaneseq
        %v2210 = vshrl.u32 %v2209, 7
        %v2211 = vsub.s32 4, %v2210
        %v2212 = vrot.slane %v2191, %v2211
        %v2213 = vlaneseq
        %v2214 = vshrl.u32 %v2213, 7
        %v2215 = vsub.s32 5, %v2214
        %v2216 = vrot.slane %v2191, %v2215
        %v2217 = vlaneseq
        %v2218 = vshrl.u32 %v2217, 7
        %v2219 = vsub.s32 6, %v2218
        %v2220 = vrot.slane %v2191, %v2219
        %v2221 = vlaneseq
        %v2222 = vshrl.u32 %v2221, 7
        %v2223 = vsub.s32 7, %v2222
        %v2224 = vrot.slane %v2191, %v2223
        %v2225 = vlaneseq
        %v2226 = vshrl.u32 %v2225, 7
        %v2227 = vsub.s32 0, %v2226
        %v2228 = vrot.slane %v2192, %v2227
        %v2229 = vlaneseq
        %v2230 = vshrl.u32 %v2229, 7
        %v2231 = vsub.s32 1, %v2230
        %v2232 = vrot.slane %v2192, %v2231
        %v2233 = vlaneseq
        %v2234 = vshrl.u32 %v2233, 7
        %v2235 = vsub.s32 2, %v2234
        %v2236 = vrot.slane %v2192, %v2235
        %v2237 = vlaneseq
        %v2238 = vshrl.u32 %v2237, 7
        %v2239 = vsub.s32 3, %v2238
        %v2240 = vrot.slane %v2192, %v2239
        %v2241 = vlaneseq
        %v2242 = vshrl.u32 %v2241, 7
        %v2243 = vsub.s32 4, %v2242
        %v2244 = vrot.slane %v2192, %v2243
        %v2245 = vlaneseq
        %v2246 = vshrl.u32 %v2245, 7
        %v2247 = vsub.s32 5, %v2246
        %v2248 = vrot.slane %v2192, %v2247
        %v2249 = vlaneseq
        %v2250 = vshrl.u32 %v2249, 7
        %v2251 = vsub.s32 6, %v2250
        %v2252 = vrot.slane %v2192, %v2251
        %v2253 = vlaneseq
        %v2254 = vshrl.u32 %v2253, 7
        %v2255 = vsub.s32 7, %v2254
        %v2256 = vrot.slane %v2192, %v2255
        %vm2257 = vcmp.eq.s32.totalorder %v2196, 1
        %vm2258 = vcmp.eq.s32.totalorder %v2200, 1
        %vm2259 = vcmp.eq.s32.totalorder %v2204, 1
        %vm2260 = vcmp.eq.s32.totalorder %v2208, 1
        %vm2261 = vcmp.eq.s32.totalorder %v2212, 1
        %vm2262 = vcmp.eq.s32.totalorder %v2216, 1
        %vm2263 = vcmp.eq.s32.totalorder %v2220, 1
        %vm2264 = vcmp.eq.s32.totalorder %v2224, 1
        %vm2265 = vcmp.eq.s32.totalorder %v2228, 1
        %vm2266 = vcmp.eq.s32.totalorder %v2232, 1
        %vm2267 = vcmp.eq.s32.totalorder %v2236, 1
        %vm2268 = vcmp.eq.s32.totalorder %v2240, 1
        %vm2269 = vcmp.eq.s32.totalorder %v2244, 1
        %vm2270 = vcmp.eq.s32.totalorder %v2248, 1
        %vm2271 = vcmp.eq.s32.totalorder %v2252, 1
        %vm2272 = vcmp.eq.s32.totalorder %v2256, 1
        %v2273 = vsel %vm2257, %v2185, 0.0
        %v2274 = vsel %vm2258, %v2184, 0.0
        %v2275 = vsel %vm2259, %v2183, 0.0
        %v2276 = vsel %vm2260, %v2182, 0.0
        %v2277 = vsel %vm2261, %v2181, 0.0
        %v2278 = vsel %vm2262, %v2180, 0.0
        %v2279 = vsel %vm2263, %v2179, 0.0
        %v2280 = vsel %vm2264, %v2178, 0.0
        %v2281 = vsel %vm2265, %v2177, 0.0
        %v2282 = vsel %vm2266, %v2176, 0.0
        %v2283 = vsel %vm2267, %v2175, 0.0
        %v2284 = vsel %vm2268, %v2174, 0.0
        %v2285 = vsel %vm2269, %v2173, 0.0
        %v2286 = vsel %vm2270, %v2172, 0.0
        %v2287 = vsel %vm2271, %v2171, 0.0
        %v2288 = vsel %vm2272, %v2186, 0.0
        %2290 = vset.pattern.permute.xlu0 0
        %2291 = vperm.xlu0 %2290, %v1182
        %v2292 = vpop.permute.xlu0 %2291
        %v2294 = vmul.f32 %v2273, %v2292
        %v2295 = vmul.f32 %v2274, %v2292
        %v2296 = vmul.f32 %v2275, %v2292
        %v2297 = vmul.f32 %v2276, %v2292
        %v2298 = vmul.f32 %v2277, %v2292
        %v2299 = vmul.f32 %v2278, %v2292
        %v2300 = vmul.f32 %v2279, %v2292
        %v2301 = vmul.f32 %v2280, %v2292
        %v2302 = vmul.f32 %v2281, %v2292
        %v2303 = vmul.f32 %v2282, %v2292
        %v2304 = vmul.f32 %v2283, %v2292
        %v2305 = vmul.f32 %v2284, %v2292
        %v2306 = vmul.f32 %v2285, %v2292
        %v2307 = vmul.f32 %v2286, %v2292
        %v2308 = vmul.f32 %v2287, %v2292
        %v2309 = vmul.f32 %v2288, %v2292
        %v2310 = vadd.f32 %v2122, %v2294
        %v2311 = vadd.f32 %v2123, %v2295
        %v2312 = vadd.f32 %v2124, %v2296
        %v2313 = vadd.f32 %v2125, %v2297
        %v2314 = vadd.f32 %v2126, %v2298
        %v2315 = vadd.f32 %v2127, %v2299
        %v2316 = vadd.f32 %v2128, %v2300
        %v2317 = vadd.f32 %v2129, %v2301
        %v2318 = vadd.f32 %v2130, %v2302
        %v2319 = vadd.f32 %v2131, %v2303
        %v2320 = vadd.f32 %v2132, %v2304
        %v2321 = vadd.f32 %v2133, %v2305
        %v2322 = vadd.f32 %v2134, %v2306
        %v2323 = vadd.f32 %v2135, %v2307
        %v2324 = vadd.f32 %v2136, %v2308
        %v2325 = vadd.f32 %v2137, %v2309
        %2326 = vrot.lane.b32.xlu0 %v1156, 112
        %v2327 = vpop.permute.xlu0 %2326
        %2328 = vrot.lane.b32.xlu0 %v1157, 112
        %v2329 = vpop.permute.xlu0 %2328
        %2330 = vrot.lane.b32.xlu0 %v1158, 112
        %v2331 = vpop.permute.xlu0 %2330
        %2332 = vrot.lane.b32.xlu0 %v1159, 112
        %v2333 = vpop.permute.xlu0 %2332
        %2334 = vrot.lane.b32.xlu0 %v1160, 112
        %v2335 = vpop.permute.xlu0 %2334
        %2336 = vrot.lane.b32.xlu0 %v1161, 112
        %v2337 = vpop.permute.xlu0 %2336
        %2338 = vrot.lane.b32.xlu0 %v1162, 112
        %v2339 = vpop.permute.xlu0 %2338
        %2340 = vrot.lane.b32.xlu0 %v1163, 112
        %v2341 = vpop.permute.xlu0 %2340
        %2342 = vrot.lane.b32.xlu0 %v1164, 112
        %v2343 = vpop.permute.xlu0 %2342
        %2344 = vrot.lane.b32.xlu0 %v1165, 112
        %v2345 = vpop.permute.xlu0 %2344
        %2346 = vrot.lane.b32.xlu0 %v1166, 112
        %v2347 = vpop.permute.xlu0 %2346
        %2348 = vrot.lane.b32.xlu0 %v1167, 112
        %v2349 = vpop.permute.xlu0 %2348
        %2350 = vrot.lane.b32.xlu0 %v1168, 112
        %v2351 = vpop.permute.xlu0 %2350
        %2352 = vrot.lane.b32.xlu0 %v1169, 112
        %v2353 = vpop.permute.xlu0 %2352
        %2354 = vrot.lane.b32.xlu0 %v1170, 112
        %v2355 = vpop.permute.xlu0 %2354
        %2356 = vrot.lane.b32.xlu0 %v1171, 112
        %v2357 = vpop.permute.xlu0 %2356
        %vm2358 = vcmp.lt.s32.totalorder %v1239, 112
        %v2359 = vsel %vm2358, %v2355, %v2357
        %v2360 = vsel %vm2358, %v2353, %v2355
        %v2361 = vsel %vm2358, %v2351, %v2353
        %v2362 = vsel %vm2358, %v2349, %v2351
        %v2363 = vsel %vm2358, %v2347, %v2349
        %v2364 = vsel %vm2358, %v2345, %v2347
        %v2365 = vsel %vm2358, %v2343, %v2345
        %v2366 = vsel %vm2358, %v2341, %v2343
        %v2367 = vsel %vm2358, %v2339, %v2341
        %v2368 = vsel %vm2358, %v2337, %v2339
        %v2369 = vsel %vm2358, %v2335, %v2337
        %v2370 = vsel %vm2358, %v2333, %v2335
        %v2371 = vsel %vm2358, %v2331, %v2333
        %v2372 = vsel %vm2358, %v2329, %v2331
        %v2373 = vsel %vm2358, %v2327, %v2329
        %v2374 = vsel %vm2358, %v2357, %v2327
        %v2375 = vsel %vm2187, 1, 0
        %v2376 = vsel %vm2188, 1, 0
        %v2377 = vlaneseq
        %v2378 = vshrl.u32 %v2377, 7
        %v2379 = vsub.s32 0, %v2378
        %v2380 = vrot.slane %v2375, %v2379
        %v2381 = vlaneseq
        %v2382 = vshrl.u32 %v2381, 7
        %v2383 = vsub.s32 1, %v2382
        %v2384 = vrot.slane %v2375, %v2383
        %v2385 = vlaneseq
        %v2386 = vshrl.u32 %v2385, 7
        %v2387 = vsub.s32 2, %v2386
        %v2388 = vrot.slane %v2375, %v2387
        %v2389 = vlaneseq
        %v2390 = vshrl.u32 %v2389, 7
        %v2391 = vsub.s32 3, %v2390
        %v2392 = vrot.slane %v2375, %v2391
        %v2393 = vlaneseq
        %v2394 = vshrl.u32 %v2393, 7
        %v2395 = vsub.s32 4, %v2394
        %v2396 = vrot.slane %v2375, %v2395
        %v2397 = vlaneseq
        %v2398 = vshrl.u32 %v2397, 7
        %v2399 = vsub.s32 5, %v2398
        %v2400 = vrot.slane %v2375, %v2399
        %v2401 = vlaneseq
        %v2402 = vshrl.u32 %v2401, 7
        %v2403 = vsub.s32 6, %v2402
        %v2404 = vrot.slane %v2375, %v2403
        %v2405 = vlaneseq
        %v2406 = vshrl.u32 %v2405, 7
        %v2407 = vsub.s32 7, %v2406
        %v2408 = vrot.slane %v2375, %v2407
        %v2409 = vlaneseq
        %v2410 = vshrl.u32 %v2409, 7
        %v2411 = vsub.s32 0, %v2410
        %v2412 = vrot.slane %v2376, %v2411
        %v2413 = vlaneseq
        %v2414 = vshrl.u32 %v2413, 7
        %v2415 = vsub.s32 1, %v2414
        %v2416 = vrot.slane %v2376, %v2415
        %v2417 = vlaneseq
        %v2418 = vshrl.u32 %v2417, 7
        %v2419 = vsub.s32 2, %v2418
        %v2420 = vrot.slane %v2376, %v2419
        %v2421 = vlaneseq
        %v2422 = vshrl.u32 %v2421, 7
        %v2423 = vsub.s32 3, %v2422
        %v2424 = vrot.slane %v2376, %v2423
        %v2425 = vlaneseq
        %v2426 = vshrl.u32 %v2425, 7
        %v2427 = vsub.s32 4, %v2426
        %v2428 = vrot.slane %v2376, %v2427
        %v2429 = vlaneseq
        %v2430 = vshrl.u32 %v2429, 7
        %v2431 = vsub.s32 5, %v2430
        %v2432 = vrot.slane %v2376, %v2431
        %v2433 = vlaneseq
        %v2434 = vshrl.u32 %v2433, 7
        %v2435 = vsub.s32 6, %v2434
        %v2436 = vrot.slane %v2376, %v2435
        %v2437 = vlaneseq
        %v2438 = vshrl.u32 %v2437, 7
        %v2439 = vsub.s32 7, %v2438
        %v2440 = vrot.slane %v2376, %v2439
        %vm2441 = vcmp.eq.s32.totalorder %v2380, 1
        %vm2442 = vcmp.eq.s32.totalorder %v2384, 1
        %vm2443 = vcmp.eq.s32.totalorder %v2388, 1
        %vm2444 = vcmp.eq.s32.totalorder %v2392, 1
        %vm2445 = vcmp.eq.s32.totalorder %v2396, 1
        %vm2446 = vcmp.eq.s32.totalorder %v2400, 1
        %vm2447 = vcmp.eq.s32.totalorder %v2404, 1
        %vm2448 = vcmp.eq.s32.totalorder %v2408, 1
        %vm2449 = vcmp.eq.s32.totalorder %v2412, 1
        %vm2450 = vcmp.eq.s32.totalorder %v2416, 1
        %vm2451 = vcmp.eq.s32.totalorder %v2420, 1
        %vm2452 = vcmp.eq.s32.totalorder %v2424, 1
        %vm2453 = vcmp.eq.s32.totalorder %v2428, 1
        %vm2454 = vcmp.eq.s32.totalorder %v2432, 1
        %vm2455 = vcmp.eq.s32.totalorder %v2436, 1
        %vm2456 = vcmp.eq.s32.totalorder %v2440, 1
        %v2457 = vsel %vm2441, %v2373, 0.0
        %v2458 = vsel %vm2442, %v2372, 0.0
        %v2459 = vsel %vm2443, %v2371, 0.0
        %v2460 = vsel %vm2444, %v2370, 0.0
        %v2461 = vsel %vm2445, %v2369, 0.0
        %v2462 = vsel %vm2446, %v2368, 0.0
        %v2463 = vsel %vm2447, %v2367, 0.0
        %v2464 = vsel %vm2448, %v2366, 0.0
        %v2465 = vsel %vm2449, %v2365, 0.0
        %v2466 = vsel %vm2450, %v2364, 0.0
        %v2467 = vsel %vm2451, %v2363, 0.0
        %v2468 = vsel %vm2452, %v2362, 0.0
        %v2469 = vsel %vm2453, %v2361, 0.0
        %v2470 = vsel %vm2454, %v2360, 0.0
        %v2471 = vsel %vm2455, %v2359, 0.0
        %v2472 = vsel %vm2456, %v2374, 0.0
        %2474 = vset.pattern.permute.xlu0 0
        %2475 = vperm.xlu0 %2474, %v1183
        %v2476 = vpop.permute.xlu0 %2475
        %v2478 = vmul.f32 %v2457, %v2476
        %v2479 = vmul.f32 %v2458, %v2476
        %v2480 = vmul.f32 %v2459, %v2476
        %v2481 = vmul.f32 %v2460, %v2476
        %v2482 = vmul.f32 %v2461, %v2476
        %v2483 = vmul.f32 %v2462, %v2476
        %v2484 = vmul.f32 %v2463, %v2476
        %v2485 = vmul.f32 %v2464, %v2476
        %v2486 = vmul.f32 %v2465, %v2476
        %v2487 = vmul.f32 %v2466, %v2476
        %v2488 = vmul.f32 %v2467, %v2476
        %v2489 = vmul.f32 %v2468, %v2476
        %v2490 = vmul.f32 %v2469, %v2476
        %v2491 = vmul.f32 %v2470, %v2476
        %v2492 = vmul.f32 %v2471, %v2476
        %v2493 = vmul.f32 %v2472, %v2476
        %v2494 = vadd.f32 %v2310, %v2478
        %v2495 = vadd.f32 %v2311, %v2479
        %v2496 = vadd.f32 %v2312, %v2480
        %v2497 = vadd.f32 %v2313, %v2481
        %v2498 = vadd.f32 %v2314, %v2482
        %v2499 = vadd.f32 %v2315, %v2483
        %v2500 = vadd.f32 %v2316, %v2484
        %v2501 = vadd.f32 %v2317, %v2485
        %v2502 = vadd.f32 %v2318, %v2486
        %v2503 = vadd.f32 %v2319, %v2487
        %v2504 = vadd.f32 %v2320, %v2488
        %v2505 = vadd.f32 %v2321, %v2489
        %v2506 = vadd.f32 %v2322, %v2490
        %v2507 = vadd.f32 %v2323, %v2491
        %v2508 = vadd.f32 %v2324, %v2492
        %v2509 = vadd.f32 %v2325, %v2493
        %2510 = vrot.lane.b32.xlu0 %v1156, 111
        %v2511 = vpop.permute.xlu0 %2510
        %2512 = vrot.lane.b32.xlu0 %v1157, 111
        %v2513 = vpop.permute.xlu0 %2512
        %2514 = vrot.lane.b32.xlu0 %v1158, 111
        %v2515 = vpop.permute.xlu0 %2514
        %2516 = vrot.lane.b32.xlu0 %v1159, 111
        %v2517 = vpop.permute.xlu0 %2516
        %2518 = vrot.lane.b32.xlu0 %v1160, 111
        %v2519 = vpop.permute.xlu0 %2518
        %2520 = vrot.lane.b32.xlu0 %v1161, 111
        %v2521 = vpop.permute.xlu0 %2520
        %2522 = vrot.lane.b32.xlu0 %v1162, 111
        %v2523 = vpop.permute.xlu0 %2522
        %2524 = vrot.lane.b32.xlu0 %v1163, 111
        %v2525 = vpop.permute.xlu0 %2524
        %2526 = vrot.lane.b32.xlu0 %v1164, 111
        %v2527 = vpop.permute.xlu0 %2526
        %2528 = vrot.lane.b32.xlu0 %v1165, 111
        %v2529 = vpop.permute.xlu0 %2528
        %2530 = vrot.lane.b32.xlu0 %v1166, 111
        %v2531 = vpop.permute.xlu0 %2530
        %2532 = vrot.lane.b32.xlu0 %v1167, 111
        %v2533 = vpop.permute.xlu0 %2532
        %2534 = vrot.lane.b32.xlu0 %v1168, 111
        %v2535 = vpop.permute.xlu0 %2534
        %2536 = vrot.lane.b32.xlu0 %v1169, 111
        %v2537 = vpop.permute.xlu0 %2536
        %2538 = vrot.lane.b32.xlu0 %v1170, 111
        %v2539 = vpop.permute.xlu0 %2538
        %2540 = vrot.lane.b32.xlu0 %v1171, 111
        %v2541 = vpop.permute.xlu0 %2540
        %vm2542 = vcmp.lt.s32.totalorder %v1239, 111
        %v2543 = vsel %vm2542, %v2539, %v2541
        %v2544 = vsel %vm2542, %v2537, %v2539
        %v2545 = vsel %vm2542, %v2535, %v2537
        %v2546 = vsel %vm2542, %v2533, %v2535
        %v2547 = vsel %vm2542, %v2531, %v2533
        %v2548 = vsel %vm2542, %v2529, %v2531
        %v2549 = vsel %vm2542, %v2527, %v2529
        %v2550 = vsel %vm2542, %v2525, %v2527
        %v2551 = vsel %vm2542, %v2523, %v2525
        %v2552 = vsel %vm2542, %v2521, %v2523
        %v2553 = vsel %vm2542, %v2519, %v2521
        %v2554 = vsel %vm2542, %v2517, %v2519
        %v2555 = vsel %vm2542, %v2515, %v2517
        %v2556 = vsel %vm2542, %v2513, %v2515
        %v2557 = vsel %vm2542, %v2511, %v2513
        %v2558 = vsel %vm2542, %v2541, %v2511
        %vm2559 = vmand %vm2187, %vm1631
        %vm2560 = vmand %vm2188, %vm1632
        %v2561 = vsel %vm2559, 1, 0
        %v2562 = vsel %vm2560, 1, 0
        %v2563 = vlaneseq
        %v2564 = vshrl.u32 %v2563, 7
        %v2565 = vsub.s32 0, %v2564
        %v2566 = vrot.slane %v2561, %v2565
        %v2567 = vlaneseq
        %v2568 = vshrl.u32 %v2567, 7
        %v2569 = vsub.s32 1, %v2568
        %v2570 = vrot.slane %v2561, %v2569
        %v2571 = vlaneseq
        %v2572 = vshrl.u32 %v2571, 7
        %v2573 = vsub.s32 2, %v2572
        %v2574 = vrot.slane %v2561, %v2573
        %v2575 = vlaneseq
        %v2576 = vshrl.u32 %v2575, 7
        %v2577 = vsub.s32 3, %v2576
        %v2578 = vrot.slane %v2561, %v2577
        %v2579 = vlaneseq
        %v2580 = vshrl.u32 %v2579, 7
        %v2581 = vsub.s32 4, %v2580
        %v2582 = vrot.slane %v2561, %v2581
        %v2583 = vlaneseq
        %v2584 = vshrl.u32 %v2583, 7
        %v2585 = vsub.s32 5, %v2584
        %v2586 = vrot.slane %v2561, %v2585
        %v2587 = vlaneseq
        %v2588 = vshrl.u32 %v2587, 7
        %v2589 = vsub.s32 6, %v2588
        %v2590 = vrot.slane %v2561, %v2589
        %v2591 = vlaneseq
        %v2592 = vshrl.u32 %v2591, 7
        %v2593 = vsub.s32 7, %v2592
        %v2594 = vrot.slane %v2561, %v2593
        %v2595 = vlaneseq
        %v2596 = vshrl.u32 %v2595, 7
        %v2597 = vsub.s32 0, %v2596
        %v2598 = vrot.slane %v2562, %v2597
        %v2599 = vlaneseq
        %v2600 = vshrl.u32 %v2599, 7
        %v2601 = vsub.s32 1, %v2600
        %v2602 = vrot.slane %v2562, %v2601
        %v2603 = vlaneseq
        %v2604 = vshrl.u32 %v2603, 7
        %v2605 = vsub.s32 2, %v2604
        %v2606 = vrot.slane %v2562, %v2605
        %v2607 = vlaneseq
        %v2608 = vshrl.u32 %v2607, 7
        %v2609 = vsub.s32 3, %v2608
        %v2610 = vrot.slane %v2562, %v2609
        %v2611 = vlaneseq
        %v2612 = vshrl.u32 %v2611, 7
        %v2613 = vsub.s32 4, %v2612
        %v2614 = vrot.slane %v2562, %v2613
        %v2615 = vlaneseq
        %v2616 = vshrl.u32 %v2615, 7
        %v2617 = vsub.s32 5, %v2616
        %v2618 = vrot.slane %v2562, %v2617
        %v2619 = vlaneseq
        %v2620 = vshrl.u32 %v2619, 7
        %v2621 = vsub.s32 6, %v2620
        %v2622 = vrot.slane %v2562, %v2621
        %v2623 = vlaneseq
        %v2624 = vshrl.u32 %v2623, 7
        %v2625 = vsub.s32 7, %v2624
        %v2626 = vrot.slane %v2562, %v2625
        %vm2627 = vcmp.eq.s32.totalorder %v2566, 1
        %vm2628 = vcmp.eq.s32.totalorder %v2570, 1
        %vm2629 = vcmp.eq.s32.totalorder %v2574, 1
        %vm2630 = vcmp.eq.s32.totalorder %v2578, 1
        %vm2631 = vcmp.eq.s32.totalorder %v2582, 1
        %vm2632 = vcmp.eq.s32.totalorder %v2586, 1
        %vm2633 = vcmp.eq.s32.totalorder %v2590, 1
        %vm2634 = vcmp.eq.s32.totalorder %v2594, 1
        %vm2635 = vcmp.eq.s32.totalorder %v2598, 1
        %vm2636 = vcmp.eq.s32.totalorder %v2602, 1
        %vm2637 = vcmp.eq.s32.totalorder %v2606, 1
        %vm2638 = vcmp.eq.s32.totalorder %v2610, 1
        %vm2639 = vcmp.eq.s32.totalorder %v2614, 1
        %vm2640 = vcmp.eq.s32.totalorder %v2618, 1
        %vm2641 = vcmp.eq.s32.totalorder %v2622, 1
        %vm2642 = vcmp.eq.s32.totalorder %v2626, 1
        %v2643 = vsel %vm2627, %v2557, 0.0
        %v2644 = vsel %vm2628, %v2556, 0.0
        %v2645 = vsel %vm2629, %v2555, 0.0
        %v2646 = vsel %vm2630, %v2554, 0.0
        %v2647 = vsel %vm2631, %v2553, 0.0
        %v2648 = vsel %vm2632, %v2552, 0.0
        %v2649 = vsel %vm2633, %v2551, 0.0
        %v2650 = vsel %vm2634, %v2550, 0.0
        %v2651 = vsel %vm2635, %v2549, 0.0
        %v2652 = vsel %vm2636, %v2548, 0.0
        %v2653 = vsel %vm2637, %v2547, 0.0
        %v2654 = vsel %vm2638, %v2546, 0.0
        %v2655 = vsel %vm2639, %v2545, 0.0
        %v2656 = vsel %vm2640, %v2544, 0.0
        %v2657 = vsel %vm2641, %v2543, 0.0
        %v2658 = vsel %vm2642, %v2558, 0.0
        %2660 = vset.pattern.permute.xlu0 0
        %2661 = vperm.xlu0 %2660, %v1184
        %v2662 = vpop.permute.xlu0 %2661
        %v2664 = vmul.f32 %v2643, %v2662
        %v2665 = vmul.f32 %v2644, %v2662
        %v2666 = vmul.f32 %v2645, %v2662
        %v2667 = vmul.f32 %v2646, %v2662
        %v2668 = vmul.f32 %v2647, %v2662
        %v2669 = vmul.f32 %v2648, %v2662
        %v2670 = vmul.f32 %v2649, %v2662
        %v2671 = vmul.f32 %v2650, %v2662
        %v2672 = vmul.f32 %v2651, %v2662
        %v2673 = vmul.f32 %v2652, %v2662
        %v2674 = vmul.f32 %v2653, %v2662
        %v2675 = vmul.f32 %v2654, %v2662
        %v2676 = vmul.f32 %v2655, %v2662
        %v2677 = vmul.f32 %v2656, %v2662
        %v2678 = vmul.f32 %v2657, %v2662
        %v2679 = vmul.f32 %v2658, %v2662
        %v2680 = vadd.f32 %v2494, %v2664
        %v2681 = vadd.f32 %v2495, %v2665
        %v2682 = vadd.f32 %v2496, %v2666
        %v2683 = vadd.f32 %v2497, %v2667
        %v2684 = vadd.f32 %v2498, %v2668
        %v2685 = vadd.f32 %v2499, %v2669
        %v2686 = vadd.f32 %v2500, %v2670
        %v2687 = vadd.f32 %v2501, %v2671
        %v2688 = vadd.f32 %v2502, %v2672
        %v2689 = vadd.f32 %v2503, %v2673
        %v2690 = vadd.f32 %v2504, %v2674
        %v2691 = vadd.f32 %v2505, %v2675
        %v2692 = vadd.f32 %v2506, %v2676
        %v2693 = vadd.f32 %v2507, %v2677
        %v2694 = vadd.f32 %v2508, %v2678
        %v2695 = vadd.f32 %v2509, %v2679
        %v2696 = vld [vmem:[%s7] sm:$0xff]
        %2698 = vset.pattern.permute.xlu0 0
        %2699 = vperm.xlu0 %2698, %v2696
        %v2700 = vpop.permute.xlu0 %2699
        %v2702 = vmul.f32 %v2680, %v2700
        %v2703 = vmul.f32 %v2681, %v2700
        %v2704 = vmul.f32 %v2682, %v2700
        %v2705 = vmul.f32 %v2683, %v2700
        %v2706 = vmul.f32 %v2684, %v2700
        %v2707 = vmul.f32 %v2685, %v2700
        %v2708 = vmul.f32 %v2686, %v2700
        %v2709 = vmul.f32 %v2687, %v2700
        %v2710 = vmul.f32 %v2688, %v2700
        %v2711 = vmul.f32 %v2689, %v2700
        %v2712 = vmul.f32 %v2690, %v2700
        %v2713 = vmul.f32 %v2691, %v2700
        %v2714 = vmul.f32 %v2692, %v2700
        %v2715 = vmul.f32 %v2693, %v2700
        %v2716 = vmul.f32 %v2694, %v2700
        %v2717 = vmul.f32 %v2695, %v2700
        %v2718 = vld [vmem:[%s8] sm:$0xff]
        %2720 = vset.pattern.permute.xlu0 0
        %2721 = vperm.xlu0 %2720, %v2718
        %v2722 = vpop.permute.xlu0 %2721
        %v2724 = vadd.f32 %v2702, %v2722
        %v2725 = vadd.f32 %v2703, %v2722
        %v2726 = vadd.f32 %v2704, %v2722
        %v2727 = vadd.f32 %v2705, %v2722
        %v2728 = vadd.f32 %v2706, %v2722
        %v2729 = vadd.f32 %v2707, %v2722
        %v2730 = vadd.f32 %v2708, %v2722
        %v2731 = vadd.f32 %v2709, %v2722
        %v2732 = vadd.f32 %v2710, %v2722
        %v2733 = vadd.f32 %v2711, %v2722
        %v2734 = vadd.f32 %v2712, %v2722
        %v2735 = vadd.f32 %v2713, %v2722
        %v2736 = vadd.f32 %v2714, %v2722
        %v2737 = vadd.f32 %v2715, %v2722
        %v2738 = vadd.f32 %v2716, %v2722
        %v2739 = vadd.f32 %v2717, %v2722
        %v2740 = vld [vmem:[%s9] sm:$0xff]
        %v2741 = vmax.f32 %v2724, 0.0
        %v2742 = vmax.f32 %v2725, 0.0
        %v2743 = vmax.f32 %v2726, 0.0
        %v2744 = vmax.f32 %v2727, 0.0
        %v2745 = vmax.f32 %v2728, 0.0
        %v2746 = vmax.f32 %v2729, 0.0
        %v2747 = vmax.f32 %v2730, 0.0
        %v2748 = vmax.f32 %v2731, 0.0
        %v2749 = vmax.f32 %v2732, 0.0
        %v2750 = vmax.f32 %v2733, 0.0
        %v2751 = vmax.f32 %v2734, 0.0
        %v2752 = vmax.f32 %v2735, 0.0
        %v2753 = vmax.f32 %v2736, 0.0
        %v2754 = vmax.f32 %v2737, 0.0
        %v2755 = vmax.f32 %v2738, 0.0
        %v2756 = vmax.f32 %v2739, 0.0
        %v2757 = vmin.f32 %v2724, 0.0
        %v2758 = vmin.f32 %v2725, 0.0
        %v2759 = vmin.f32 %v2726, 0.0
        %v2760 = vmin.f32 %v2727, 0.0
        %v2761 = vmin.f32 %v2728, 0.0
        %v2762 = vmin.f32 %v2729, 0.0
        %v2763 = vmin.f32 %v2730, 0.0
        %v2764 = vmin.f32 %v2731, 0.0
        %v2765 = vmin.f32 %v2732, 0.0
        %v2766 = vmin.f32 %v2733, 0.0
        %v2767 = vmin.f32 %v2734, 0.0
        %v2768 = vmin.f32 %v2735, 0.0
        %v2769 = vmin.f32 %v2736, 0.0
        %v2770 = vmin.f32 %v2737, 0.0
        %v2771 = vmin.f32 %v2738, 0.0
        %v2772 = vmin.f32 %v2739, 0.0
        %2774 = vset.pattern.permute.xlu0 0
        %2775 = vperm.xlu0 %2774, %v2740
        %v2776 = vpop.permute.xlu0 %2775
        %v2778 = vmul.f32 %v2776, %v2757
        %v2779 = vmul.f32 %v2776, %v2758
        %v2780 = vmul.f32 %v2776, %v2759
        %v2781 = vmul.f32 %v2776, %v2760
        %v2782 = vmul.f32 %v2776, %v2761
        %v2783 = vmul.f32 %v2776, %v2762
        %v2784 = vmul.f32 %v2776, %v2763
        %v2785 = vmul.f32 %v2776, %v2764
        %v2786 = vmul.f32 %v2776, %v2765
        %v2787 = vmul.f32 %v2776, %v2766
        %v2788 = vmul.f32 %v2776, %v2767
        %v2789 = vmul.f32 %v2776, %v2768
        %v2790 = vmul.f32 %v2776, %v2769
        %v2791 = vmul.f32 %v2776, %v2770
        %v2792 = vmul.f32 %v2776, %v2771
        %v2793 = vmul.f32 %v2776, %v2772
        %v2794 = vadd.f32 %v2741, %v2778
        %v2795 = vadd.f32 %v2742, %v2779
        %v2796 = vadd.f32 %v2743, %v2780
        %v2797 = vadd.f32 %v2744, %v2781
        %v2798 = vadd.f32 %v2745, %v2782
        %v2799 = vadd.f32 %v2746, %v2783
        %v2800 = vadd.f32 %v2747, %v2784
        %v2801 = vadd.f32 %v2748, %v2785
        %v2802 = vadd.f32 %v2749, %v2786
        %v2803 = vadd.f32 %v2750, %v2787
        %v2804 = vadd.f32 %v2751, %v2788
        %v2805 = vadd.f32 %v2752, %v2789
        %v2806 = vadd.f32 %v2753, %v2790
        %v2807 = vadd.f32 %v2754, %v2791
        %v2808 = vadd.f32 %v2755, %v2792
        %v2809 = vadd.f32 %v2756, %v2793
        %2810 = vst [vmem:[#allocation2] sm:$0xff] %v2794
        %2811 = vst [vmem:[#allocation2 + $0x8] sm:$0xff] %v2795
        %2812 = vst [vmem:[#allocation2 + $0x10] sm:$0xff] %v2796
        %2813 = vst [vmem:[#allocation2 + $0x18] sm:$0xff] %v2797
        %2814 = vst [vmem:[#allocation2 + $0x20] sm:$0xff] %v2798
        %2815 = vst [vmem:[#allocation2 + $0x28] sm:$0xff] %v2799
        %2816 = vst [vmem:[#allocation2 + $0x30] sm:$0xff] %v2800
        %2817 = vst [vmem:[#allocation2 + $0x38] sm:$0xff] %v2801
        %2818 = vst [vmem:[#allocation2 + $0x40] sm:$0xff] %v2802
        %2819 = vst [vmem:[#allocation2 + $0x48] sm:$0xff] %v2803
        %2820 = vst [vmem:[#allocation2 + $0x50] sm:$0xff] %v2804
        %2821 = vst [vmem:[#allocation2 + $0x58] sm:$0xff] %v2805
        %2822 = vst [vmem:[#allocation2 + $0x60] sm:$0xff] %v2806
        %2823 = vst [vmem:[#allocation2 + $0x68] sm:$0xff] %v2807
        %2824 = vst [vmem:[#allocation2 + $0x70] sm:$0xff] %v2808
        %2825 = vst [vmem:[#allocation2 + $0x78] sm:$0xff] %v2809
        %s2826 = scalar_lea.vmem %s6, 72
        %v2827 = vld [vmem:[%s2826] sm:$0xff]
        %v2828 = vld [vmem:[%s2826 + $0x8] sm:$0xff]
        %v2829 = vld [vmem:[%s2826 + $0x10] sm:$0xff]
        %v2830 = vld [vmem:[%s2826 + $0x18] sm:$0xff]
        %v2831 = vld [vmem:[%s2826 + $0x20] sm:$0xff]
        %v2832 = vld [vmem:[%s2826 + $0x28] sm:$0xff]
        %v2833 = vld [vmem:[%s2826 + $0x30] sm:$0xff]
        %v2834 = vld [vmem:[%s2826 + $0x38] sm:$0xff]
        %v2835 = vld [vmem:[%s2826 + $0x40] sm:$0xff]
        %2837 = vset.pattern.permute.xlu0 0
        %2838 = vperm.xlu0 %2837, %v2831
        %v2839 = vpop.permute.xlu0 %2838
        %v2841 = vmul.f32 %v1156, %v2839
        %v2842 = vmul.f32 %v1157, %v2839
        %v2843 = vmul.f32 %v1158, %v2839
        %v2844 = vmul.f32 %v1159, %v2839
        %v2845 = vmul.f32 %v1160, %v2839
        %v2846 = vmul.f32 %v1161, %v2839
        %v2847 = vmul.f32 %v1162, %v2839
        %v2848 = vmul.f32 %v1163, %v2839
        %v2849 = vmul.f32 %v1164, %v2839
        %v2850 = vmul.f32 %v1165, %v2839
        %v2851 = vmul.f32 %v1166, %v2839
        %v2852 = vmul.f32 %v1167, %v2839
        %v2853 = vmul.f32 %v1168, %v2839
        %v2854 = vmul.f32 %v1169, %v2839
        %v2855 = vmul.f32 %v1170, %v2839
        %v2856 = vmul.f32 %v1171, %v2839
        %2858 = vset.pattern.permute.xlu0 0
        %2859 = vperm.xlu0 %2858, %v2827
        %v2860 = vpop.permute.xlu0 %2859
        %v2862 = vmul.f32 %v1345, %v2860
        %v2863 = vmul.f32 %v1346, %v2860
        %v2864 = vmul.f32 %v1347, %v2860
        %v2865 = vmul.f32 %v1348, %v2860
        %v2866 = vmul.f32 %v1349, %v2860
        %v2867 = vmul.f32 %v1350, %v2860
        %v2868 = vmul.f32 %v1351, %v2860
        %v2869 = vmul.f32 %v1352, %v2860
        %v2870 = vmul.f32 %v1353, %v2860
        %v2871 = vmul.f32 %v1354, %v2860
        %v2872 = vmul.f32 %v1355, %v2860
        %v2873 = vmul.f32 %v1356, %v2860
        %v2874 = vmul.f32 %v1357, %v2860
        %v2875 = vmul.f32 %v1358, %v2860
        %v2876 = vmul.f32 %v1359, %v2860
        %v2877 = vmul.f32 %v1360, %v2860
        %v2878 = vadd.f32 %v2841, %v2862
        %v2879 = vadd.f32 %v2842, %v2863
        %v2880 = vadd.f32 %v2843, %v2864
        %v2881 = vadd.f32 %v2844, %v2865
        %v2882 = vadd.f32 %v2845, %v2866
        %v2883 = vadd.f32 %v2846, %v2867
        %v2884 = vadd.f32 %v2847, %v2868
        %v2885 = vadd.f32 %v2848, %v2869
        %v2886 = vadd.f32 %v2849, %v2870
        %v2887 = vadd.f32 %v2850, %v2871
        %v2888 = vadd.f32 %v2851, %v2872
        %v2889 = vadd.f32 %v2852, %v2873
        %v2890 = vadd.f32 %v2853, %v2874
        %v2891 = vadd.f32 %v2854, %v2875
        %v2892 = vadd.f32 %v2855, %v2876
        %v2893 = vadd.f32 %v2856, %v2877
        %2895 = vset.pattern.permute.xlu0 0
        %2896 = vperm.xlu0 %2895, %v2828
        %v2897 = vpop.permute.xlu0 %2896
        %v2899 = vmul.f32 %v1529, %v2897
        %v2900 = vmul.f32 %v1530, %v2897
        %v2901 = vmul.f32 %v1531, %v2897
        %v2902 = vmul.f32 %v1532, %v2897
        %v2903 = vmul.f32 %v1533, %v2897
        %v2904 = vmul.f32 %v1534, %v2897
        %v2905 = vmul.f32 %v1535, %v2897
        %v2906 = vmul.f32 %v1536, %v2897
        %v2907 = vmul.f32 %v1537, %v2897
        %v2908 = vmul.f32 %v1538, %v2897
        %v2909 = vmul.f32 %v1539, %v2897
        %v2910 = vmul.f32 %v1540, %v2897
        %v2911 = vmul.f32 %v1541, %v2897
        %v2912 = vmul.f32 %v1542, %v2897
        %v2913 = vmul.f32 %v1543, %v2897
        %v2914 = vmul.f32 %v1544, %v2897
        %v2915 = vadd.f32 %v2878, %v2899
        %v2916 = vadd.f32 %v2879, %v2900
        %v2917 = vadd.f32 %v2880, %v2901
        %v2918 = vadd.f32 %v2881, %v2902
        %v2919 = vadd.f32 %v2882, %v2903
        %v2920 = vadd.f32 %v2883, %v2904
        %v2921 = vadd.f32 %v2884, %v2905
        %v2922 = vadd.f32 %v2885, %v2906
        %v2923 = vadd.f32 %v2886, %v2907
        %v2924 = vadd.f32 %v2887, %v2908
        %v2925 = vadd.f32 %v2888, %v2909
        %v2926 = vadd.f32 %v2889, %v2910
        %v2927 = vadd.f32 %v2890, %v2911
        %v2928 = vadd.f32 %v2891, %v2912
        %v2929 = vadd.f32 %v2892, %v2913
        %v2930 = vadd.f32 %v2893, %v2914
        %2932 = vset.pattern.permute.xlu0 0
        %2933 = vperm.xlu0 %2932, %v2829
        %v2934 = vpop.permute.xlu0 %2933
        %v2936 = vmul.f32 %v1717, %v2934
        %v2937 = vmul.f32 %v1718, %v2934
        %v2938 = vmul.f32 %v1719, %v2934
        %v2939 = vmul.f32 %v1720, %v2934
        %v2940 = vmul.f32 %v1721, %v2934
        %v2941 = vmul.f32 %v1722, %v2934
        %v2942 = vmul.f32 %v1723, %v2934
        %v2943 = vmul.f32 %v1724, %v2934
        %v2944 = vmul.f32 %v1725, %v2934
        %v2945 = vmul.f32 %v1726, %v2934
        %v2946 = vmul.f32 %v1727, %v2934
        %v2947 = vmul.f32 %v1728, %v2934
        %v2948 = vmul.f32 %v1729, %v2934
        %v2949 = vmul.f32 %v1730, %v2934
        %v2950 = vmul.f32 %v1731, %v2934
        %v2951 = vmul.f32 %v1732, %v2934
        %v2952 = vadd.f32 %v2915, %v2936
        %v2953 = vadd.f32 %v2916, %v2937
        %v2954 = vadd.f32 %v2917, %v2938
        %v2955 = vadd.f32 %v2918, %v2939
        %v2956 = vadd.f32 %v2919, %v2940
        %v2957 = vadd.f32 %v2920, %v2941
        %v2958 = vadd.f32 %v2921, %v2942
        %v2959 = vadd.f32 %v2922, %v2943
        %v2960 = vadd.f32 %v2923, %v2944
        %v2961 = vadd.f32 %v2924, %v2945
        %v2962 = vadd.f32 %v2925, %v2946
        %v2963 = vadd.f32 %v2926, %v2947
        %v2964 = vadd.f32 %v2927, %v2948
        %v2965 = vadd.f32 %v2928, %v2949
        %v2966 = vadd.f32 %v2929, %v2950
        %v2967 = vadd.f32 %v2930, %v2951
        %2969 = vset.pattern.permute.xlu0 0
        %2970 = vperm.xlu0 %2969, %v2830
        %v2971 = vpop.permute.xlu0 %2970
        %v2973 = vmul.f32 %v1901, %v2971
        %v2974 = vmul.f32 %v1902, %v2971
        %v2975 = vmul.f32 %v1903, %v2971
        %v2976 = vmul.f32 %v1904, %v2971
        %v2977 = vmul.f32 %v1905, %v2971
        %v2978 = vmul.f32 %v1906, %v2971
        %v2979 = vmul.f32 %v1907, %v2971
        %v2980 = vmul.f32 %v1908, %v2971
        %v2981 = vmul.f32 %v1909, %v2971
        %v2982 = vmul.f32 %v1910, %v2971
        %v2983 = vmul.f32 %v1911, %v2971
        %v2984 = vmul.f32 %v1912, %v2971
        %v2985 = vmul.f32 %v1913, %v2971
        %v2986 = vmul.f32 %v1914, %v2971
        %v2987 = vmul.f32 %v1915, %v2971
        %v2988 = vmul.f32 %v1916, %v2971
        %v2989 = vadd.f32 %v2952, %v2973
        %v2990 = vadd.f32 %v2953, %v2974
        %v2991 = vadd.f32 %v2954, %v2975
        %v2992 = vadd.f32 %v2955, %v2976
        %v2993 = vadd.f32 %v2956, %v2977
        %v2994 = vadd.f32 %v2957, %v2978
        %v2995 = vadd.f32 %v2958, %v2979
        %v2996 = vadd.f32 %v2959, %v2980
        %v2997 = vadd.f32 %v2960, %v2981
        %v2998 = vadd.f32 %v2961, %v2982
        %v2999 = vadd.f32 %v2962, %v2983
        %v3000 = vadd.f32 %v2963, %v2984
        %v3001 = vadd.f32 %v2964, %v2985
        %v3002 = vadd.f32 %v2965, %v2986
        %v3003 = vadd.f32 %v2966, %v2987
        %v3004 = vadd.f32 %v2967, %v2988
        %3006 = vset.pattern.permute.xlu0 0
        %3007 = vperm.xlu0 %3006, %v2832
        %v3008 = vpop.permute.xlu0 %3007
        %v3010 = vmul.f32 %v2085, %v3008
        %v3011 = vmul.f32 %v2086, %v3008
        %v3012 = vmul.f32 %v2087, %v3008
        %v3013 = vmul.f32 %v2088, %v3008
        %v3014 = vmul.f32 %v2089, %v3008
        %v3015 = vmul.f32 %v2090, %v3008
        %v3016 = vmul.f32 %v2091, %v3008
        %v3017 = vmul.f32 %v2092, %v3008
        %v3018 = vmul.f32 %v2093, %v3008
        %v3019 = vmul.f32 %v2094, %v3008
        %v3020 = vmul.f32 %v2095, %v3008
        %v3021 = vmul.f32 %v2096, %v3008
        %v3022 = vmul.f32 %v2097, %v3008
        %v3023 = vmul.f32 %v2098, %v3008
        %v3024 = vmul.f32 %v2099, %v3008
        %v3025 = vmul.f32 %v2100, %v3008
        %v3026 = vadd.f32 %v2989, %v3010
        %v3027 = vadd.f32 %v2990, %v3011
        %v3028 = vadd.f32 %v2991, %v3012
        %v3029 = vadd.f32 %v2992, %v3013
        %v3030 = vadd.f32 %v2993, %v3014
        %v3031 = vadd.f32 %v2994, %v3015
        %v3032 = vadd.f32 %v2995, %v3016
        %v3033 = vadd.f32 %v2996, %v3017
        %v3034 = vadd.f32 %v2997, %v3018
        %v3035 = vadd.f32 %v2998, %v3019
        %v3036 = vadd.f32 %v2999, %v3020
        %v3037 = vadd.f32 %v3000, %v3021
        %v3038 = vadd.f32 %v3001, %v3022
        %v3039 = vadd.f32 %v3002, %v3023
        %v3040 = vadd.f32 %v3003, %v3024
        %v3041 = vadd.f32 %v3004, %v3025
        %3043 = vset.pattern.permute.xlu0 0
        %3044 = vperm.xlu0 %3043, %v2833
        %v3045 = vpop.permute.xlu0 %3044
        %v3047 = vmul.f32 %v2273, %v3045
        %v3048 = vmul.f32 %v2274, %v3045
        %v3049 = vmul.f32 %v2275, %v3045
        %v3050 = vmul.f32 %v2276, %v3045
        %v3051 = vmul.f32 %v2277, %v3045
        %v3052 = vmul.f32 %v2278, %v3045
        %v3053 = vmul.f32 %v2279, %v3045
        %v3054 = vmul.f32 %v2280, %v3045
        %v3055 = vmul.f32 %v2281, %v3045
        %v3056 = vmul.f32 %v2282, %v3045
        %v3057 = vmul.f32 %v2283, %v3045
        %v3058 = vmul.f32 %v2284, %v3045
        %v3059 = vmul.f32 %v2285, %v3045
        %v3060 = vmul.f32 %v2286, %v3045
        %v3061 = vmul.f32 %v2287, %v3045
        %v3062 = vmul.f32 %v2288, %v3045
        %v3063 = vadd.f32 %v3026, %v3047
        %v3064 = vadd.f32 %v3027, %v3048
        %v3065 = vadd.f32 %v3028, %v3049
        %v3066 = vadd.f32 %v3029, %v3050
        %v3067 = vadd.f32 %v3030, %v3051
        %v3068 = vadd.f32 %v3031, %v3052
        %v3069 = vadd.f32 %v3032, %v3053
        %v3070 = vadd.f32 %v3033, %v3054
        %v3071 = vadd.f32 %v3034, %v3055
        %v3072 = vadd.f32 %v3035, %v3056
        %v3073 = vadd.f32 %v3036, %v3057
        %v3074 = vadd.f32 %v3037, %v3058
        %v3075 = vadd.f32 %v3038, %v3059
        %v3076 = vadd.f32 %v3039, %v3060
        %v3077 = vadd.f32 %v3040, %v3061
        %v3078 = vadd.f32 %v3041, %v3062
        %3080 = vset.pattern.permute.xlu0 0
        %3081 = vperm.xlu0 %3080, %v2834
        %v3082 = vpop.permute.xlu0 %3081
        %v3084 = vmul.f32 %v2457, %v3082
        %v3085 = vmul.f32 %v2458, %v3082
        %v3086 = vmul.f32 %v2459, %v3082
        %v3087 = vmul.f32 %v2460, %v3082
        %v3088 = vmul.f32 %v2461, %v3082
        %v3089 = vmul.f32 %v2462, %v3082
        %v3090 = vmul.f32 %v2463, %v3082
        %v3091 = vmul.f32 %v2464, %v3082
        %v3092 = vmul.f32 %v2465, %v3082
        %v3093 = vmul.f32 %v2466, %v3082
        %v3094 = vmul.f32 %v2467, %v3082
        %v3095 = vmul.f32 %v2468, %v3082
        %v3096 = vmul.f32 %v2469, %v3082
        %v3097 = vmul.f32 %v2470, %v3082
        %v3098 = vmul.f32 %v2471, %v3082
        %v3099 = vmul.f32 %v2472, %v3082
        %v3100 = vadd.f32 %v3063, %v3084
        %v3101 = vadd.f32 %v3064, %v3085
        %v3102 = vadd.f32 %v3065, %v3086
        %v3103 = vadd.f32 %v3066, %v3087
        %v3104 = vadd.f32 %v3067, %v3088
        %v3105 = vadd.f32 %v3068, %v3089
        %v3106 = vadd.f32 %v3069, %v3090
        %v3107 = vadd.f32 %v3070, %v3091
        %v3108 = vadd.f32 %v3071, %v3092
        %v3109 = vadd.f32 %v3072, %v3093
        %v3110 = vadd.f32 %v3073, %v3094
        %v3111 = vadd.f32 %v3074, %v3095
        %v3112 = vadd.f32 %v3075, %v3096
        %v3113 = vadd.f32 %v3076, %v3097
        %v3114 = vadd.f32 %v3077, %v3098
        %v3115 = vadd.f32 %v3078, %v3099
        %3117 = vset.pattern.permute.xlu0 0
        %3118 = vperm.xlu0 %3117, %v2835
        %v3119 = vpop.permute.xlu0 %3118
        %v3121 = vmul.f32 %v2643, %v3119
        %v3122 = vmul.f32 %v2644, %v3119
        %v3123 = vmul.f32 %v2645, %v3119
        %v3124 = vmul.f32 %v2646, %v3119
        %v3125 = vmul.f32 %v2647, %v3119
        %v3126 = vmul.f32 %v2648, %v3119
        %v3127 = vmul.f32 %v2649, %v3119
        %v3128 = vmul.f32 %v2650, %v3119
        %v3129 = vmul.f32 %v2651, %v3119
        %v3130 = vmul.f32 %v2652, %v3119
        %v3131 = vmul.f32 %v2653, %v3119
        %v3132 = vmul.f32 %v2654, %v3119
        %v3133 = vmul.f32 %v2655, %v3119
        %v3134 = vmul.f32 %v2656, %v3119
        %v3135 = vmul.f32 %v2657, %v3119
        %v3136 = vmul.f32 %v2658, %v3119
        %v3137 = vadd.f32 %v3100, %v3121
        %v3138 = vadd.f32 %v3101, %v3122
        %v3139 = vadd.f32 %v3102, %v3123
        %v3140 = vadd.f32 %v3103, %v3124
        %v3141 = vadd.f32 %v3104, %v3125
        %v3142 = vadd.f32 %v3105, %v3126
        %v3143 = vadd.f32 %v3106, %v3127
        %v3144 = vadd.f32 %v3107, %v3128
        %v3145 = vadd.f32 %v3108, %v3129
        %v3146 = vadd.f32 %v3109, %v3130
        %v3147 = vadd.f32 %v3110, %v3131
        %v3148 = vadd.f32 %v3111, %v3132
        %v3149 = vadd.f32 %v3112, %v3133
        %v3150 = vadd.f32 %v3113, %v3134
        %v3151 = vadd.f32 %v3114, %v3135
        %v3152 = vadd.f32 %v3115, %v3136
        %v3153 = vadd.f32 %v3137, %v2680
        %v3154 = vadd.f32 %v3138, %v2681
        %v3155 = vadd.f32 %v3139, %v2682
        %v3156 = vadd.f32 %v3140, %v2683
        %v3157 = vadd.f32 %v3141, %v2684
        %v3158 = vadd.f32 %v3142, %v2685
        %v3159 = vadd.f32 %v3143, %v2686
        %v3160 = vadd.f32 %v3144, %v2687
        %v3161 = vadd.f32 %v3145, %v2688
        %v3162 = vadd.f32 %v3146, %v2689
        %v3163 = vadd.f32 %v3147, %v2690
        %v3164 = vadd.f32 %v3148, %v2691
        %v3165 = vadd.f32 %v3149, %v2692
        %v3166 = vadd.f32 %v3150, %v2693
        %v3167 = vadd.f32 %v3151, %v2694
        %v3168 = vadd.f32 %v3152, %v2695
        %v3169 = vld [vmem:[%s7 + $0x8] sm:$0xff]
        %3171 = vset.pattern.permute.xlu0 0
        %3172 = vperm.xlu0 %3171, %v3169
        %v3173 = vpop.permute.xlu0 %3172
        %v3175 = vmul.f32 %v3153, %v3173
        %v3176 = vmul.f32 %v3154, %v3173
        %v3177 = vmul.f32 %v3155, %v3173
        %v3178 = vmul.f32 %v3156, %v3173
        %v3179 = vmul.f32 %v3157, %v3173
        %v3180 = vmul.f32 %v3158, %v3173
        %v3181 = vmul.f32 %v3159, %v3173
        %v3182 = vmul.f32 %v3160, %v3173
        %v3183 = vmul.f32 %v3161, %v3173
        %v3184 = vmul.f32 %v3162, %v3173
        %v3185 = vmul.f32 %v3163, %v3173
        %v3186 = vmul.f32 %v3164, %v3173
        %v3187 = vmul.f32 %v3165, %v3173
        %v3188 = vmul.f32 %v3166, %v3173
        %v3189 = vmul.f32 %v3167, %v3173
        %v3190 = vmul.f32 %v3168, %v3173
        %v3191 = vld [vmem:[%s8 + $0x8] sm:$0xff]
        %3193 = vset.pattern.permute.xlu0 0
        %3194 = vperm.xlu0 %3193, %v3191
        %v3195 = vpop.permute.xlu0 %3194
        %v3197 = vadd.f32 %v3175, %v3195
        %v3198 = vadd.f32 %v3176, %v3195
        %v3199 = vadd.f32 %v3177, %v3195
        %v3200 = vadd.f32 %v3178, %v3195
        %v3201 = vadd.f32 %v3179, %v3195
        %v3202 = vadd.f32 %v3180, %v3195
        %v3203 = vadd.f32 %v3181, %v3195
        %v3204 = vadd.f32 %v3182, %v3195
        %v3205 = vadd.f32 %v3183, %v3195
        %v3206 = vadd.f32 %v3184, %v3195
        %v3207 = vadd.f32 %v3185, %v3195
        %v3208 = vadd.f32 %v3186, %v3195
        %v3209 = vadd.f32 %v3187, %v3195
        %v3210 = vadd.f32 %v3188, %v3195
        %v3211 = vadd.f32 %v3189, %v3195
        %v3212 = vadd.f32 %v3190, %v3195
        %v3213 = vld [vmem:[%s9 + $0x8] sm:$0xff]
        %v3214 = vmax.f32 %v3197, 0.0
        %v3215 = vmax.f32 %v3198, 0.0
        %v3216 = vmax.f32 %v3199, 0.0
        %v3217 = vmax.f32 %v3200, 0.0
        %v3218 = vmax.f32 %v3201, 0.0
        %v3219 = vmax.f32 %v3202, 0.0
        %v3220 = vmax.f32 %v3203, 0.0
        %v3221 = vmax.f32 %v3204, 0.0
        %v3222 = vmax.f32 %v3205, 0.0
        %v3223 = vmax.f32 %v3206, 0.0
        %v3224 = vmax.f32 %v3207, 0.0
        %v3225 = vmax.f32 %v3208, 0.0
        %v3226 = vmax.f32 %v3209, 0.0
        %v3227 = vmax.f32 %v3210, 0.0
        %v3228 = vmax.f32 %v3211, 0.0
        %v3229 = vmax.f32 %v3212, 0.0
        %v3230 = vmin.f32 %v3197, 0.0
        %v3231 = vmin.f32 %v3198, 0.0
        %v3232 = vmin.f32 %v3199, 0.0
        %v3233 = vmin.f32 %v3200, 0.0
        %v3234 = vmin.f32 %v3201, 0.0
        %v3235 = vmin.f32 %v3202, 0.0
        %v3236 = vmin.f32 %v3203, 0.0
        %v3237 = vmin.f32 %v3204, 0.0
        %v3238 = vmin.f32 %v3205, 0.0
        %v3239 = vmin.f32 %v3206, 0.0
        %v3240 = vmin.f32 %v3207, 0.0
        %v3241 = vmin.f32 %v3208, 0.0
        %v3242 = vmin.f32 %v3209, 0.0
        %v3243 = vmin.f32 %v3210, 0.0
        %v3244 = vmin.f32 %v3211, 0.0
        %v3245 = vmin.f32 %v3212, 0.0
        %3247 = vset.pattern.permute.xlu0 0
        %3248 = vperm.xlu0 %3247, %v3213
        %v3249 = vpop.permute.xlu0 %3248
        %v3251 = vmul.f32 %v3249, %v3230
        %v3252 = vmul.f32 %v3249, %v3231
        %v3253 = vmul.f32 %v3249, %v3232
        %v3254 = vmul.f32 %v3249, %v3233
        %v3255 = vmul.f32 %v3249, %v3234
        %v3256 = vmul.f32 %v3249, %v3235
        %v3257 = vmul.f32 %v3249, %v3236
        %v3258 = vmul.f32 %v3249, %v3237
        %v3259 = vmul.f32 %v3249, %v3238
        %v3260 = vmul.f32 %v3249, %v3239
        %v3261 = vmul.f32 %v3249, %v3240
        %v3262 = vmul.f32 %v3249, %v3241
        %v3263 = vmul.f32 %v3249, %v3242
        %v3264 = vmul.f32 %v3249, %v3243
        %v3265 = vmul.f32 %v3249, %v3244
        %v3266 = vmul.f32 %v3249, %v3245
        %v3267 = vadd.f32 %v3214, %v3251
        %v3268 = vadd.f32 %v3215, %v3252
        %v3269 = vadd.f32 %v3216, %v3253
        %v3270 = vadd.f32 %v3217, %v3254
        %v3271 = vadd.f32 %v3218, %v3255
        %v3272 = vadd.f32 %v3219, %v3256
        %v3273 = vadd.f32 %v3220, %v3257
        %v3274 = vadd.f32 %v3221, %v3258
        %v3275 = vadd.f32 %v3222, %v3259
        %v3276 = vadd.f32 %v3223, %v3260
        %v3277 = vadd.f32 %v3224, %v3261
        %v3278 = vadd.f32 %v3225, %v3262
        %v3279 = vadd.f32 %v3226, %v3263
        %v3280 = vadd.f32 %v3227, %v3264
        %v3281 = vadd.f32 %v3228, %v3265
        %v3282 = vadd.f32 %v3229, %v3266
        %3283 = vst [vmem:[#allocation2 + $0x80] sm:$0xff] %v3267
        %3284 = vst [vmem:[#allocation2 + $0x88] sm:$0xff] %v3268
        %3285 = vst [vmem:[#allocation2 + $0x90] sm:$0xff] %v3269
        %3286 = vst [vmem:[#allocation2 + $0x98] sm:$0xff] %v3270
        %3287 = vst [vmem:[#allocation2 + $0xa0] sm:$0xff] %v3271
        %3288 = vst [vmem:[#allocation2 + $0xa8] sm:$0xff] %v3272
        %3289 = vst [vmem:[#allocation2 + $0xb0] sm:$0xff] %v3273
        %3290 = vst [vmem:[#allocation2 + $0xb8] sm:$0xff] %v3274
        %3291 = vst [vmem:[#allocation2 + $0xc0] sm:$0xff] %v3275
        %3292 = vst [vmem:[#allocation2 + $0xc8] sm:$0xff] %v3276
        %3293 = vst [vmem:[#allocation2 + $0xd0] sm:$0xff] %v3277
        %3294 = vst [vmem:[#allocation2 + $0xd8] sm:$0xff] %v3278
        %3295 = vst [vmem:[#allocation2 + $0xe0] sm:$0xff] %v3279
        %3296 = vst [vmem:[#allocation2 + $0xe8] sm:$0xff] %v3280
        %3297 = vst [vmem:[#allocation2 + $0xf0] sm:$0xff] %v3281
        %3298 = vst [vmem:[#allocation2 + $0xf8] sm:$0xff] %v3282
        %s3299 = scalar_lea.vmem %s6, 144
        %v3300 = vld [vmem:[%s3299] sm:$0xff]
        %v3301 = vld [vmem:[%s3299 + $0x8] sm:$0xff]
        %v3302 = vld [vmem:[%s3299 + $0x10] sm:$0xff]
        %v3303 = vld [vmem:[%s3299 + $0x18] sm:$0xff]
        %v3304 = vld [vmem:[%s3299 + $0x20] sm:$0xff]
        %v3305 = vld [vmem:[%s3299 + $0x28] sm:$0xff]
        %v3306 = vld [vmem:[%s3299 + $0x30] sm:$0xff]
        %v3307 = vld [vmem:[%s3299 + $0x38] sm:$0xff]
        %v3308 = vld [vmem:[%s3299 + $0x40] sm:$0xff]
        %3310 = vset.pattern.permute.xlu0 0
        %3311 = vperm.xlu0 %3310, %v3304
        %v3312 = vpop.permute.xlu0 %3311
        %v3314 = vmul.f32 %v1156, %v3312
        %v3315 = vmul.f32 %v1157, %v3312
        %v3316 = vmul.f32 %v1158, %v3312
        %v3317 = vmul.f32 %v1159, %v3312
        %v3318 = vmul.f32 %v1160, %v3312
        %v3319 = vmul.f32 %v1161, %v3312
        %v3320 = vmul.f32 %v1162, %v3312
        %v3321 = vmul.f32 %v1163, %v3312
        %v3322 = vmul.f32 %v1164, %v3312
        %v3323 = vmul.f32 %v1165, %v3312
        %v3324 = vmul.f32 %v1166, %v3312
        %v3325 = vmul.f32 %v1167, %v3312
        %v3326 = vmul.f32 %v1168, %v3312
        %v3327 = vmul.f32 %v1169, %v3312
        %v3328 = vmul.f32 %v1170, %v3312
        %v3329 = vmul.f32 %v1171, %v3312
        %3330 = vrot.lane.b32.xlu0 %v1156, 34
        %v3331 = vpop.permute.xlu0 %3330
        %3332 = vrot.lane.b32.xlu0 %v1157, 34
        %v3333 = vpop.permute.xlu0 %3332
        %3334 = vrot.lane.b32.xlu0 %v1158, 34
        %v3335 = vpop.permute.xlu0 %3334
        %3336 = vrot.lane.b32.xlu0 %v1159, 34
        %v3337 = vpop.permute.xlu0 %3336
        %3338 = vrot.lane.b32.xlu0 %v1160, 34
        %v3339 = vpop.permute.xlu0 %3338
        %3340 = vrot.lane.b32.xlu0 %v1161, 34
        %v3341 = vpop.permute.xlu0 %3340
        %3342 = vrot.lane.b32.xlu0 %v1162, 34
        %v3343 = vpop.permute.xlu0 %3342
        %3344 = vrot.lane.b32.xlu0 %v1163, 34
        %v3345 = vpop.permute.xlu0 %3344
        %3346 = vrot.lane.b32.xlu0 %v1164, 34
        %v3347 = vpop.permute.xlu0 %3346
        %3348 = vrot.lane.b32.xlu0 %v1165, 34
        %v3349 = vpop.permute.xlu0 %3348
        %3350 = vrot.lane.b32.xlu0 %v1166, 34
        %v3351 = vpop.permute.xlu0 %3350
        %3352 = vrot.lane.b32.xlu0 %v1167, 34
        %v3353 = vpop.permute.xlu0 %3352
        %3354 = vrot.lane.b32.xlu0 %v1168, 34
        %v3355 = vpop.permute.xlu0 %3354
        %3356 = vrot.lane.b32.xlu0 %v1169, 34
        %v3357 = vpop.permute.xlu0 %3356
        %3358 = vrot.lane.b32.xlu0 %v1170, 34
        %v3359 = vpop.permute.xlu0 %3358
        %3360 = vrot.lane.b32.xlu0 %v1171, 34
        %v3361 = vpop.permute.xlu0 %3360
        %vm3362 = vcmp.lt.s32.totalorder %v1239, 34
        %v3363 = vsel %vm3362, %v3359, %v3361
        %v3364 = vsel %vm3362, %v3357, %v3359
        %v3365 = vsel %vm3362, %v3355, %v3357
        %v3366 = vsel %vm3362, %v3353, %v3355
        %v3367 = vsel %vm3362, %v3351, %v3353
        %v3368 = vsel %vm3362, %v3349, %v3351
        %v3369 = vsel %vm3362, %v3347, %v3349
        %v3370 = vsel %vm3362, %v3345, %v3347
        %v3371 = vsel %vm3362, %v3343, %v3345
        %v3372 = vsel %vm3362, %v3341, %v3343
        %v3373 = vsel %vm3362, %v3339, %v3341
        %v3374 = vsel %vm3362, %v3337, %v3339
        %v3375 = vsel %vm3362, %v3335, %v3337
        %v3376 = vsel %vm3362, %v3333, %v3335
        %v3377 = vsel %vm3362, %v3331, %v3333
        %v3378 = vsel %vm3362, %v3361, %v3331
        %vm3379 = vcmp.ge.s32.totalorder %v1172, 2
        %vm3380 = vcmp.ge.s32.totalorder %v1173, 2
        %vm3381 = vcmp.ge.s32.totalorder %v1174, 2
        %vm3382 = vcmp.ge.s32.totalorder %v1175, 2
        %vm3383 = vmand %vm3379, %vm3381
        %vm3384 = vmand %vm3380, %vm3382
        %v3385 = vsel %vm3383, 1, 0
        %v3386 = vsel %vm3384, 1, 0
        %v3387 = vlaneseq
        %v3388 = vshrl.u32 %v3387, 7
        %v3389 = vsub.s32 0, %v3388
        %v3390 = vrot.slane %v3385, %v3389
        %v3391 = vlaneseq
        %v3392 = vshrl.u32 %v3391, 7
        %v3393 = vsub.s32 1, %v3392
        %v3394 = vrot.slane %v3385, %v3393
        %v3395 = vlaneseq
        %v3396 = vshrl.u32 %v3395, 7
        %v3397 = vsub.s32 2, %v3396
        %v3398 = vrot.slane %v3385, %v3397
        %v3399 = vlaneseq
        %v3400 = vshrl.u32 %v3399, 7
        %v3401 = vsub.s32 3, %v3400
        %v3402 = vrot.slane %v3385, %v3401
        %v3403 = vlaneseq
        %v3404 = vshrl.u32 %v3403, 7
        %v3405 = vsub.s32 4, %v3404
        %v3406 = vrot.slane %v3385, %v3405
        %v3407 = vlaneseq
        %v3408 = vshrl.u32 %v3407, 7
        %v3409 = vsub.s32 5, %v3408
        %v3410 = vrot.slane %v3385, %v3409
        %v3411 = vlaneseq
        %v3412 = vshrl.u32 %v3411, 7
        %v3413 = vsub.s32 6, %v3412
        %v3414 = vrot.slane %v3385, %v3413
        %v3415 = vlaneseq
        %v3416 = vshrl.u32 %v3415, 7
        %v3417 = vsub.s32 7, %v3416
        %v3418 = vrot.slane %v3385, %v3417
        %v3419 = vlaneseq
        %v3420 = vshrl.u32 %v3419, 7
        %v3421 = vsub.s32 0, %v3420
        %v3422 = vrot.slane %v3386, %v3421
        %v3423 = vlaneseq
        %v3424 = vshrl.u32 %v3423, 7
        %v3425 = vsub.s32 1, %v3424
        %v3426 = vrot.slane %v3386, %v3425
        %v3427 = vlaneseq
        %v3428 = vshrl.u32 %v3427, 7
        %v3429 = vsub.s32 2, %v3428
        %v3430 = vrot.slane %v3386, %v3429
        %v3431 = vlaneseq
        %v3432 = vshrl.u32 %v3431, 7
        %v3433 = vsub.s32 3, %v3432
        %v3434 = vrot.slane %v3386, %v3433
        %v3435 = vlaneseq
        %v3436 = vshrl.u32 %v3435, 7
        %v3437 = vsub.s32 4, %v3436
        %v3438 = vrot.slane %v3386, %v3437
        %v3439 = vlaneseq
        %v3440 = vshrl.u32 %v3439, 7
        %v3441 = vsub.s32 5, %v3440
        %v3442 = vrot.slane %v3386, %v3441
        %v3443 = vlaneseq
        %v3444 = vshrl.u32 %v3443, 7
        %v3445 = vsub.s32 6, %v3444
        %v3446 = vrot.slane %v3386, %v3445
        %v3447 = vlaneseq
        %v3448 = vshrl.u32 %v3447, 7
        %v3449 = vsub.s32 7, %v3448
        %v3450 = vrot.slane %v3386, %v3449
        %vm3451 = vcmp.eq.s32.totalorder %v3390, 1
        %vm3452 = vcmp.eq.s32.totalorder %v3394, 1
        %vm3453 = vcmp.eq.s32.totalorder %v3398, 1
        %vm3454 = vcmp.eq.s32.totalorder %v3402, 1
        %vm3455 = vcmp.eq.s32.totalorder %v3406, 1
        %vm3456 = vcmp.eq.s32.totalorder %v3410, 1
        %vm3457 = vcmp.eq.s32.totalorder %v3414, 1
        %vm3458 = vcmp.eq.s32.totalorder %v3418, 1
        %vm3459 = vcmp.eq.s32.totalorder %v3422, 1
        %vm3460 = vcmp.eq.s32.totalorder %v3426, 1
        %vm3461 = vcmp.eq.s32.totalorder %v3430, 1
        %vm3462 = vcmp.eq.s32.totalorder %v3434, 1
        %vm3463 = vcmp.eq.s32.totalorder %v3438, 1
        %vm3464 = vcmp.eq.s32.totalorder %v3442, 1
        %vm3465 = vcmp.eq.s32.totalorder %v3446, 1
        %vm3466 = vcmp.eq.s32.totalorder %v3450, 1
        %v3467 = vsel %vm3451, %v3378, 0.0
        %v3468 = vsel %vm3452, %v3377, 0.0
        %v3469 = vsel %vm3453, %v3376, 0.0
        %v3470 = vsel %vm3454, %v3375, 0.0
        %v3471 = vsel %vm3455, %v3374, 0.0
        %v3472 = vsel %vm3456, %v3373, 0.0
        %v3473 = vsel %vm3457, %v3372, 0.0
        %v3474 = vsel %vm3458, %v3371, 0.0
        %v3475 = vsel %vm3459, %v3370, 0.0
        %v3476 = vsel %vm3460, %v3369, 0.0
        %v3477 = vsel %vm3461, %v3368, 0.0
        %v3478 = vsel %vm3462, %v3367, 0.0
        %v3479 = vsel %vm3463, %v3366, 0.0
        %v3480 = vsel %vm3464, %v3365, 0.0
        %v3481 = vsel %vm3465, %v3364, 0.0
        %v3482 = vsel %vm3466, %v3363, 0.0
        %3484 = vset.pattern.permute.xlu0 0
        %3485 = vperm.xlu0 %3484, %v3300
        %v3486 = vpop.permute.xlu0 %3485
        %v3488 = vmul.f32 %v3467, %v3486
        %v3489 = vmul.f32 %v3468, %v3486
        %v3490 = vmul.f32 %v3469, %v3486
        %v3491 = vmul.f32 %v3470, %v3486
        %v3492 = vmul.f32 %v3471, %v3486
        %v3493 = vmul.f32 %v3472, %v3486
        %v3494 = vmul.f32 %v3473, %v3486
        %v3495 = vmul.f32 %v3474, %v3486
        %v3496 = vmul.f32 %v3475, %v3486
        %v3497 = vmul.f32 %v3476, %v3486
        %v3498 = vmul.f32 %v3477, %v3486
        %v3499 = vmul.f32 %v3478, %v3486
        %v3500 = vmul.f32 %v3479, %v3486
        %v3501 = vmul.f32 %v3480, %v3486
        %v3502 = vmul.f32 %v3481, %v3486
        %v3503 = vmul.f32 %v3482, %v3486
        %v3504 = vadd.f32 %v3314, %v3488
        %v3505 = vadd.f32 %v3315, %v3489
        %v3506 = vadd.f32 %v3316, %v3490
        %v3507 = vadd.f32 %v3317, %v3491
        %v3508 = vadd.f32 %v3318, %v3492
        %v3509 = vadd.f32 %v3319, %v3493
        %v3510 = vadd.f32 %v3320, %v3494
        %v3511 = vadd.f32 %v3321, %v3495
        %v3512 = vadd.f32 %v3322, %v3496
        %v3513 = vadd.f32 %v3323, %v3497
        %v3514 = vadd.f32 %v3324, %v3498
        %v3515 = vadd.f32 %v3325, %v3499
        %v3516 = vadd.f32 %v3326, %v3500
        %v3517 = vadd.f32 %v3327, %v3501
        %v3518 = vadd.f32 %v3328, %v3502
        %v3519 = vadd.f32 %v3329, %v3503
        %3520 = vrot.lane.b32.xlu0 %v1156, 32
        %v3521 = vpop.permute.xlu0 %3520
        %3522 = vrot.lane.b32.xlu0 %v1157, 32
        %v3523 = vpop.permute.xlu0 %3522
        %3524 = vrot.lane.b32.xlu0 %v1158, 32
        %v3525 = vpop.permute.xlu0 %3524
        %3526 = vrot.lane.b32.xlu0 %v1159, 32
        %v3527 = vpop.permute.xlu0 %3526
        %3528 = vrot.lane.b32.xlu0 %v1160, 32
        %v3529 = vpop.permute.xlu0 %3528
        %3530 = vrot.lane.b32.xlu0 %v1161, 32
        %v3531 = vpop.permute.xlu0 %3530
        %3532 = vrot.lane.b32.xlu0 %v1162, 32
        %v3533 = vpop.permute.xlu0 %3532
        %3534 = vrot.lane.b32.xlu0 %v1163, 32
        %v3535 = vpop.permute.xlu0 %3534
        %3536 = vrot.lane.b32.xlu0 %v1164, 32
        %v3537 = vpop.permute.xlu0 %3536
        %3538 = vrot.lane.b32.xlu0 %v1165, 32
        %v3539 = vpop.permute.xlu0 %3538
        %3540 = vrot.lane.b32.xlu0 %v1166, 32
        %v3541 = vpop.permute.xlu0 %3540
        %3542 = vrot.lane.b32.xlu0 %v1167, 32
        %v3543 = vpop.permute.xlu0 %3542
        %3544 = vrot.lane.b32.xlu0 %v1168, 32
        %v3545 = vpop.permute.xlu0 %3544
        %3546 = vrot.lane.b32.xlu0 %v1169, 32
        %v3547 = vpop.permute.xlu0 %3546
        %3548 = vrot.lane.b32.xlu0 %v1170, 32
        %v3549 = vpop.permute.xlu0 %3548
        %3550 = vrot.lane.b32.xlu0 %v1171, 32
        %v3551 = vpop.permute.xlu0 %3550
        %vm3552 = vcmp.lt.s32.totalorder %v1239, 32
        %v3553 = vsel %vm3552, %v3549, %v3551
        %v3554 = vsel %vm3552, %v3547, %v3549
        %v3555 = vsel %vm3552, %v3545, %v3547
        %v3556 = vsel %vm3552, %v3543, %v3545
        %v3557 = vsel %vm3552, %v3541, %v3543
        %v3558 = vsel %vm3552, %v3539, %v3541
        %v3559 = vsel %vm3552, %v3537, %v3539
        %v3560 = vsel %vm3552, %v3535, %v3537
        %v3561 = vsel %vm3552, %v3533, %v3535
        %v3562 = vsel %vm3552, %v3531, %v3533
        %v3563 = vsel %vm3552, %v3529, %v3531
        %v3564 = vsel %vm3552, %v3527, %v3529
        %v3565 = vsel %vm3552, %v3525, %v3527
        %v3566 = vsel %vm3552, %v3523, %v3525
        %v3567 = vsel %vm3552, %v3521, %v3523
        %v3568 = vsel %vm3552, %v3551, %v3521
        %v3569 = vsel %vm3379, 1, 0
        %v3570 = vsel %vm3380, 1, 0
        %v3571 = vlaneseq
        %v3572 = vshrl.u32 %v3571, 7
        %v3573 = vsub.s32 0, %v3572
        %v3574 = vrot.slane %v3569, %v3573
        %v3575 = vlaneseq
        %v3576 = vshrl.u32 %v3575, 7
        %v3577 = vsub.s32 1, %v3576
        %v3578 = vrot.slane %v3569, %v3577
        %v3579 = vlaneseq
        %v3580 = vshrl.u32 %v3579, 7
        %v3581 = vsub.s32 2, %v3580
        %v3582 = vrot.slane %v3569, %v3581
        %v3583 = vlaneseq
        %v3584 = vshrl.u32 %v3583, 7
        %v3585 = vsub.s32 3, %v3584
        %v3586 = vrot.slane %v3569, %v3585
        %v3587 = vlaneseq
        %v3588 = vshrl.u32 %v3587, 7
        %v3589 = vsub.s32 4, %v3588
        %v3590 = vrot.slane %v3569, %v3589
        %v3591 = vlaneseq
        %v3592 = vshrl.u32 %v3591, 7
        %v3593 = vsub.s32 5, %v3592
        %v3594 = vrot.slane %v3569, %v3593
        %v3595 = vlaneseq
        %v3596 = vshrl.u32 %v3595, 7
        %v3597 = vsub.s32 6, %v3596
        %v3598 = vrot.slane %v3569, %v3597
        %v3599 = vlaneseq
        %v3600 = vshrl.u32 %v3599, 7
        %v3601 = vsub.s32 7, %v3600
        %v3602 = vrot.slane %v3569, %v3601
        %v3603 = vlaneseq
        %v3604 = vshrl.u32 %v3603, 7
        %v3605 = vsub.s32 0, %v3604
        %v3606 = vrot.slane %v3570, %v3605
        %v3607 = vlaneseq
        %v3608 = vshrl.u32 %v3607, 7
        %v3609 = vsub.s32 1, %v3608
        %v3610 = vrot.slane %v3570, %v3609
        %v3611 = vlaneseq
        %v3612 = vshrl.u32 %v3611, 7
        %v3613 = vsub.s32 2, %v3612
        %v3614 = vrot.slane %v3570, %v3613
        %v3615 = vlaneseq
        %v3616 = vshrl.u32 %v3615, 7
        %v3617 = vsub.s32 3, %v3616
        %v3618 = vrot.slane %v3570, %v3617
        %v3619 = vlaneseq
        %v3620 = vshrl.u32 %v3619, 7
        %v3621 = vsub.s32 4, %v3620
        %v3622 = vrot.slane %v3570, %v3621
        %v3623 = vlaneseq
        %v3624 = vshrl.u32 %v3623, 7
        %v3625 = vsub.s32 5, %v3624
        %v3626 = vrot.slane %v3570, %v3625
        %v3627 = vlaneseq
        %v3628 = vshrl.u32 %v3627, 7
        %v3629 = vsub.s32 6, %v3628
        %v3630 = vrot.slane %v3570, %v3629
        %v3631 = vlaneseq
        %v3632 = vshrl.u32 %v3631, 7
        %v3633 = vsub.s32 7, %v3632
        %v3634 = vrot.slane %v3570, %v3633
        %vm3635 = vcmp.eq.s32.totalorder %v3574, 1
        %vm3636 = vcmp.eq.s32.totalorder %v3578, 1
        %vm3637 = vcmp.eq.s32.totalorder %v3582, 1
        %vm3638 = vcmp.eq.s32.totalorder %v3586, 1
        %vm3639 = vcmp.eq.s32.totalorder %v3590, 1
        %vm3640 = vcmp.eq.s32.totalorder %v3594, 1
        %vm3641 = vcmp.eq.s32.totalorder %v3598, 1
        %vm3642 = vcmp.eq.s32.totalorder %v3602, 1
        %vm3643 = vcmp.eq.s32.totalorder %v3606, 1
        %vm3644 = vcmp.eq.s32.totalorder %v3610, 1
        %vm3645 = vcmp.eq.s32.totalorder %v3614, 1
        %vm3646 = vcmp.eq.s32.totalorder %v3618, 1
        %vm3647 = vcmp.eq.s32.totalorder %v3622, 1
        %vm3648 = vcmp.eq.s32.totalorder %v3626, 1
        %vm3649 = vcmp.eq.s32.totalorder %v3630, 1
        %vm3650 = vcmp.eq.s32.totalorder %v3634, 1
        %v3651 = vsel %vm3635, %v3568, 0.0
        %v3652 = vsel %vm3636, %v3567, 0.0
        %v3653 = vsel %vm3637, %v3566, 0.0
        %v3654 = vsel %vm3638, %v3565, 0.0
        %v3655 = vsel %vm3639, %v3564, 0.0
        %v3656 = vsel %vm3640, %v3563, 0.0
        %v3657 = vsel %vm3641, %v3562, 0.0
        %v3658 = vsel %vm3642, %v3561, 0.0
        %v3659 = vsel %vm3643, %v3560, 0.0
        %v3660 = vsel %vm3644, %v3559, 0.0
        %v3661 = vsel %vm3645, %v3558, 0.0
        %v3662 = vsel %vm3646, %v3557, 0.0
        %v3663 = vsel %vm3647, %v3556, 0.0
        %v3664 = vsel %vm3648, %v3555, 0.0
        %v3665 = vsel %vm3649, %v3554, 0.0
        %v3666 = vsel %vm3650, %v3553, 0.0
        %3668 = vset.pattern.permute.xlu0 0
        %3669 = vperm.xlu0 %3668, %v3301
        %v3670 = vpop.permute.xlu0 %3669
        %v3672 = vmul.f32 %v3651, %v3670
        %v3673 = vmul.f32 %v3652, %v3670
        %v3674 = vmul.f32 %v3653, %v3670
        %v3675 = vmul.f32 %v3654, %v3670
        %v3676 = vmul.f32 %v3655, %v3670
        %v3677 = vmul.f32 %v3656, %v3670
        %v3678 = vmul.f32 %v3657, %v3670
        %v3679 = vmul.f32 %v3658, %v3670
        %v3680 = vmul.f32 %v3659, %v3670
        %v3681 = vmul.f32 %v3660, %v3670
        %v3682 = vmul.f32 %v3661, %v3670
        %v3683 = vmul.f32 %v3662, %v3670
        %v3684 = vmul.f32 %v3663, %v3670
        %v3685 = vmul.f32 %v3664, %v3670
        %v3686 = vmul.f32 %v3665, %v3670
        %v3687 = vmul.f32 %v3666, %v3670
        %v3688 = vadd.f32 %v3504, %v3672
        %v3689 = vadd.f32 %v3505, %v3673
        %v3690 = vadd.f32 %v3506, %v3674
        %v3691 = vadd.f32 %v3507, %v3675
        %v3692 = vadd.f32 %v3508, %v3676
        %v3693 = vadd.f32 %v3509, %v3677
        %v3694 = vadd.f32 %v3510, %v3678
        %v3695 = vadd.f32 %v3511, %v3679
        %v3696 = vadd.f32 %v3512, %v3680
        %v3697 = vadd.f32 %v3513, %v3681
        %v3698 = vadd.f32 %v3514, %v3682
        %v3699 = vadd.f32 %v3515, %v3683
        %v3700 = vadd.f32 %v3516, %v3684
        %v3701 = vadd.f32 %v3517, %v3685
        %v3702 = vadd.f32 %v3518, %v3686
        %v3703 = vadd.f32 %v3519, %v3687
        %3704 = vrot.lane.b32.xlu0 %v1156, 30
        %v3705 = vpop.permute.xlu0 %3704
        %3706 = vrot.lane.b32.xlu0 %v1157, 30
        %v3707 = vpop.permute.xlu0 %3706
        %3708 = vrot.lane.b32.xlu0 %v1158, 30
        %v3709 = vpop.permute.xlu0 %3708
        %3710 = vrot.lane.b32.xlu0 %v1159, 30
        %v3711 = vpop.permute.xlu0 %3710
        %3712 = vrot.lane.b32.xlu0 %v1160, 30
        %v3713 = vpop.permute.xlu0 %3712
        %3714 = vrot.lane.b32.xlu0 %v1161, 30
        %v3715 = vpop.permute.xlu0 %3714
        %3716 = vrot.lane.b32.xlu0 %v1162, 30
        %v3717 = vpop.permute.xlu0 %3716
        %3718 = vrot.lane.b32.xlu0 %v1163, 30
        %v3719 = vpop.permute.xlu0 %3718
        %3720 = vrot.lane.b32.xlu0 %v1164, 30
        %v3721 = vpop.permute.xlu0 %3720
        %3722 = vrot.lane.b32.xlu0 %v1165, 30
        %v3723 = vpop.permute.xlu0 %3722
        %3724 = vrot.lane.b32.xlu0 %v1166, 30
        %v3725 = vpop.permute.xlu0 %3724
        %3726 = vrot.lane.b32.xlu0 %v1167, 30
        %v3727 = vpop.permute.xlu0 %3726
        %3728 = vrot.lane.b32.xlu0 %v1168, 30
        %v3729 = vpop.permute.xlu0 %3728
        %3730 = vrot.lane.b32.xlu0 %v1169, 30
        %v3731 = vpop.permute.xlu0 %3730
        %3732 = vrot.lane.b32.xlu0 %v1170, 30
        %v3733 = vpop.permute.xlu0 %3732
        %3734 = vrot.lane.b32.xlu0 %v1171, 30
        %v3735 = vpop.permute.xlu0 %3734
        %vm3736 = vcmp.lt.s32.totalorder %v1239, 30
        %v3737 = vsel %vm3736, %v3733, %v3735
        %v3738 = vsel %vm3736, %v3731, %v3733
        %v3739 = vsel %vm3736, %v3729, %v3731
        %v3740 = vsel %vm3736, %v3727, %v3729
        %v3741 = vsel %vm3736, %v3725, %v3727
        %v3742 = vsel %vm3736, %v3723, %v3725
        %v3743 = vsel %vm3736, %v3721, %v3723
        %v3744 = vsel %vm3736, %v3719, %v3721
        %v3745 = vsel %vm3736, %v3717, %v3719
        %v3746 = vsel %vm3736, %v3715, %v3717
        %v3747 = vsel %vm3736, %v3713, %v3715
        %v3748 = vsel %vm3736, %v3711, %v3713
        %v3749 = vsel %vm3736, %v3709, %v3711
        %v3750 = vsel %vm3736, %v3707, %v3709
        %v3751 = vsel %vm3736, %v3705, %v3707
        %v3752 = vsel %vm3736, %v3735, %v3705
        %vm3753 = vcmp.lt.s32.totalorder %v1174, 14
        %vm3754 = vcmp.lt.s32.totalorder %v1175, 14
        %vm3755 = vmand %vm3379, %vm3753
        %vm3756 = vmand %vm3380, %vm3754
        %v3757 = vsel %vm3755, 1, 0
        %v3758 = vsel %vm3756, 1, 0
        %v3759 = vlaneseq
        %v3760 = vshrl.u32 %v3759, 7
        %v3761 = vsub.s32 0, %v3760
        %v3762 = vrot.slane %v3757, %v3761
        %v3763 = vlaneseq
        %v3764 = vshrl.u32 %v3763, 7
        %v3765 = vsub.s32 1, %v3764
        %v3766 = vrot.slane %v3757, %v3765
        %v3767 = vlaneseq
        %v3768 = vshrl.u32 %v3767, 7
        %v3769 = vsub.s32 2, %v3768
        %v3770 = vrot.slane %v3757, %v3769
        %v3771 = vlaneseq
        %v3772 = vshrl.u32 %v3771, 7
        %v3773 = vsub.s32 3, %v3772
        %v3774 = vrot.slane %v3757, %v3773
        %v3775 = vlaneseq
        %v3776 = vshrl.u32 %v3775, 7
        %v3777 = vsub.s32 4, %v3776
        %v3778 = vrot.slane %v3757, %v3777
        %v3779 = vlaneseq
        %v3780 = vshrl.u32 %v3779, 7
        %v3781 = vsub.s32 5, %v3780
        %v3782 = vrot.slane %v3757, %v3781
        %v3783 = vlaneseq
        %v3784 = vshrl.u32 %v3783, 7
        %v3785 = vsub.s32 6, %v3784
        %v3786 = vrot.slane %v3757, %v3785
        %v3787 = vlaneseq
        %v3788 = vshrl.u32 %v3787, 7
        %v3789 = vsub.s32 7, %v3788
        %v3790 = vrot.slane %v3757, %v3789
        %v3791 = vlaneseq
        %v3792 = vshrl.u32 %v3791, 7
        %v3793 = vsub.s32 0, %v3792
        %v3794 = vrot.slane %v3758, %v3793
        %v3795 = vlaneseq
        %v3796 = vshrl.u32 %v3795, 7
        %v3797 = vsub.s32 1, %v3796
        %v3798 = vrot.slane %v3758, %v3797
        %v3799 = vlaneseq
        %v3800 = vshrl.u32 %v3799, 7
        %v3801 = vsub.s32 2, %v3800
        %v3802 = vrot.slane %v3758, %v3801
        %v3803 = vlaneseq
        %v3804 = vshrl.u32 %v3803, 7
        %v3805 = vsub.s32 3, %v3804
        %v3806 = vrot.slane %v3758, %v3805
        %v3807 = vlaneseq
        %v3808 = vshrl.u32 %v3807, 7
        %v3809 = vsub.s32 4, %v3808
        %v3810 = vrot.slane %v3758, %v3809
        %v3811 = vlaneseq
        %v3812 = vshrl.u32 %v3811, 7
        %v3813 = vsub.s32 5, %v3812
        %v3814 = vrot.slane %v3758, %v3813
        %v3815 = vlaneseq
        %v3816 = vshrl.u32 %v3815, 7
        %v3817 = vsub.s32 6, %v3816
        %v3818 = vrot.slane %v3758, %v3817
        %v3819 = vlaneseq
        %v3820 = vshrl.u32 %v3819, 7
        %v3821 = vsub.s32 7, %v3820
        %v3822 = vrot.slane %v3758, %v3821
        %vm3823 = vcmp.eq.s32.totalorder %v3762, 1
        %vm3824 = vcmp.eq.s32.totalorder %v3766, 1
        %vm3825 = vcmp.eq.s32.totalorder %v3770, 1
        %vm3826 = vcmp.eq.s32.totalorder %v3774, 1
        %vm3827 = vcmp.eq.s32.totalorder %v3778, 1
        %vm3828 = vcmp.eq.s32.totalorder %v3782, 1
        %vm3829 = vcmp.eq.s32.totalorder %v3786, 1
        %vm3830 = vcmp.eq.s32.totalorder %v3790, 1
        %vm3831 = vcmp.eq.s32.totalorder %v3794, 1
        %vm3832 = vcmp.eq.s32.totalorder %v3798, 1
        %vm3833 = vcmp.eq.s32.totalorder %v3802, 1
        %vm3834 = vcmp.eq.s32.totalorder %v3806, 1
        %vm3835 = vcmp.eq.s32.totalorder %v3810, 1
        %vm3836 = vcmp.eq.s32.totalorder %v3814, 1
        %vm3837 = vcmp.eq.s32.totalorder %v3818, 1
        %vm3838 = vcmp.eq.s32.totalorder %v3822, 1
        %v3839 = vsel %vm3823, %v3752, 0.0
        %v3840 = vsel %vm3824, %v3751, 0.0
        %v3841 = vsel %vm3825, %v3750, 0.0
        %v3842 = vsel %vm3826, %v3749, 0.0
        %v3843 = vsel %vm3827, %v3748, 0.0
        %v3844 = vsel %vm3828, %v3747, 0.0
        %v3845 = vsel %vm3829, %v3746, 0.0
        %v3846 = vsel %vm3830, %v3745, 0.0
        %v3847 = vsel %vm3831, %v3744, 0.0
        %v3848 = vsel %vm3832, %v3743, 0.0
        %v3849 = vsel %vm3833, %v3742, 0.0
        %v3850 = vsel %vm3834, %v3741, 0.0
        %v3851 = vsel %vm3835, %v3740, 0.0
        %v3852 = vsel %vm3836, %v3739, 0.0
        %v3853 = vsel %vm3837, %v3738, 0.0
        %v3854 = vsel %vm3838, %v3737, 0.0
        %3856 = vset.pattern.permute.xlu0 0
        %3857 = vperm.xlu0 %3856, %v3302
        %v3858 = vpop.permute.xlu0 %3857
        %v3860 = vmul.f32 %v3839, %v3858
        %v3861 = vmul.f32 %v3840, %v3858
        %v3862 = vmul.f32 %v3841, %v3858
        %v3863 = vmul.f32 %v3842, %v3858
        %v3864 = vmul.f32 %v3843, %v3858
        %v3865 = vmul.f32 %v3844, %v3858
        %v3866 = vmul.f32 %v3845, %v3858
        %v3867 = vmul.f32 %v3846, %v3858
        %v3868 = vmul.f32 %v3847, %v3858
        %v3869 = vmul.f32 %v3848, %v3858
        %v3870 = vmul.f32 %v3849, %v3858
        %v3871 = vmul.f32 %v3850, %v3858
        %v3872 = vmul.f32 %v3851, %v3858
        %v3873 = vmul.f32 %v3852, %v3858
        %v3874 = vmul.f32 %v3853, %v3858
        %v3875 = vmul.f32 %v3854, %v3858
        %v3876 = vadd.f32 %v3688, %v3860
        %v3877 = vadd.f32 %v3689, %v3861
        %v3878 = vadd.f32 %v3690, %v3862
        %v3879 = vadd.f32 %v3691, %v3863
        %v3880 = vadd.f32 %v3692, %v3864
        %v3881 = vadd.f32 %v3693, %v3865
        %v3882 = vadd.f32 %v3694, %v3866
        %v3883 = vadd.f32 %v3695, %v3867
        %v3884 = vadd.f32 %v3696, %v3868
        %v3885 = vadd.f32 %v3697, %v3869
        %v3886 = vadd.f32 %v3698, %v3870
        %v3887 = vadd.f32 %v3699, %v3871
        %v3888 = vadd.f32 %v3700, %v3872
        %v3889 = vadd.f32 %v3701, %v3873
        %v3890 = vadd.f32 %v3702, %v3874
        %v3891 = vadd.f32 %v3703, %v3875
        %3892 = vrot.lane.b32.xlu0 %v1156, 2
        %v3893 = vpop.permute.xlu0 %3892
        %3894 = vrot.lane.b32.xlu0 %v1157, 2
        %v3895 = vpop.permute.xlu0 %3894
        %3896 = vrot.lane.b32.xlu0 %v1158, 2
        %v3897 = vpop.permute.xlu0 %3896
        %3898 = vrot.lane.b32.xlu0 %v1159, 2
        %v3899 = vpop.permute.xlu0 %3898
        %3900 = vrot.lane.b32.xlu0 %v1160, 2
        %v3901 = vpop.permute.xlu0 %3900
        %3902 = vrot.lane.b32.xlu0 %v1161, 2
        %v3903 = vpop.permute.xlu0 %3902
        %3904 = vrot.lane.b32.xlu0 %v1162, 2
        %v3905 = vpop.permute.xlu0 %3904
        %3906 = vrot.lane.b32.xlu0 %v1163, 2
        %v3907 = vpop.permute.xlu0 %3906
        %3908 = vrot.lane.b32.xlu0 %v1164, 2
        %v3909 = vpop.permute.xlu0 %3908
        %3910 = vrot.lane.b32.xlu0 %v1165, 2
        %v3911 = vpop.permute.xlu0 %3910
        %3912 = vrot.lane.b32.xlu0 %v1166, 2
        %v3913 = vpop.permute.xlu0 %3912
        %3914 = vrot.lane.b32.xlu0 %v1167, 2
        %v3915 = vpop.permute.xlu0 %3914
        %3916 = vrot.lane.b32.xlu0 %v1168, 2
        %v3917 = vpop.permute.xlu0 %3916
        %3918 = vrot.lane.b32.xlu0 %v1169, 2
        %v3919 = vpop.permute.xlu0 %3918
        %3920 = vrot.lane.b32.xlu0 %v1170, 2
        %v3921 = vpop.permute.xlu0 %3920
        %3922 = vrot.lane.b32.xlu0 %v1171, 2
        %v3923 = vpop.permute.xlu0 %3922
        %vm3924 = vcmp.lt.s32.totalorder %v1239, 2
        %v3925 = vsel %vm3924, %v3921, %v3923
        %v3926 = vsel %vm3924, %v3919, %v3921
        %v3927 = vsel %vm3924, %v3917, %v3919
        %v3928 = vsel %vm3924, %v3915, %v3917
        %v3929 = vsel %vm3924, %v3913, %v3915
        %v3930 = vsel %vm3924, %v3911, %v3913
        %v3931 = vsel %vm3924, %v3909, %v3911
        %v3932 = vsel %vm3924, %v3907, %v3909
        %v3933 = vsel %vm3924, %v3905, %v3907
        %v3934 = vsel %vm3924, %v3903, %v3905
        %v3935 = vsel %vm3924, %v3901, %v3903
        %v3936 = vsel %vm3924, %v3899, %v3901
        %v3937 = vsel %vm3924, %v3897, %v3899
        %v3938 = vsel %vm3924, %v3895, %v3897
        %v3939 = vsel %vm3924, %v3893, %v3895
        %v3940 = vsel %vm3924, %v3923, %v3893
        %v3941 = vsel %vm3381, 1, 0
        %v3942 = vsel %vm3382, 1, 0
        %v3943 = vlaneseq
        %v3944 = vshrl.u32 %v3943, 7
        %v3945 = vsub.s32 0, %v3944
        %v3946 = vrot.slane %v3941, %v3945
        %v3947 = vlaneseq
        %v3948 = vshrl.u32 %v3947, 7
        %v3949 = vsub.s32 1, %v3948
        %v3950 = vrot.slane %v3941, %v3949
        %v3951 = vlaneseq
        %v3952 = vshrl.u32 %v3951, 7
        %v3953 = vsub.s32 2, %v3952
        %v3954 = vrot.slane %v3941, %v3953
        %v3955 = vlaneseq
        %v3956 = vshrl.u32 %v3955, 7
        %v3957 = vsub.s32 3, %v3956
        %v3958 = vrot.slane %v3941, %v3957
        %v3959 = vlaneseq
        %v3960 = vshrl.u32 %v3959, 7
        %v3961 = vsub.s32 4, %v3960
        %v3962 = vrot.slane %v3941, %v3961
        %v3963 = vlaneseq
        %v3964 = vshrl.u32 %v3963, 7
        %v3965 = vsub.s32 5, %v3964
        %v3966 = vrot.slane %v3941, %v3965
        %v3967 = vlaneseq
        %v3968 = vshrl.u32 %v3967, 7
        %v3969 = vsub.s32 6, %v3968
        %v3970 = vrot.slane %v3941, %v3969
        %v3971 = vlaneseq
        %v3972 = vshrl.u32 %v3971, 7
        %v3973 = vsub.s32 7, %v3972
        %v3974 = vrot.slane %v3941, %v3973
        %v3975 = vlaneseq
        %v3976 = vshrl.u32 %v3975, 7
        %v3977 = vsub.s32 0, %v3976
        %v3978 = vrot.slane %v3942, %v3977
        %v3979 = vlaneseq
        %v3980 = vshrl.u32 %v3979, 7
        %v3981 = vsub.s32 1, %v3980
        %v3982 = vrot.slane %v3942, %v3981
        %v3983 = vlaneseq
        %v3984 = vshrl.u32 %v3983, 7
        %v3985 = vsub.s32 2, %v3984
        %v3986 = vrot.slane %v3942, %v3985
        %v3987 = vlaneseq
        %v3988 = vshrl.u32 %v3987, 7
        %v3989 = vsub.s32 3, %v3988
        %v3990 = vrot.slane %v3942, %v3989
        %v3991 = vlaneseq
        %v3992 = vshrl.u32 %v3991, 7
        %v3993 = vsub.s32 4, %v3992
        %v3994 = vrot.slane %v3942, %v3993
        %v3995 = vlaneseq
        %v3996 = vshrl.u32 %v3995, 7
        %v3997 = vsub.s32 5, %v3996
        %v3998 = vrot.slane %v3942, %v3997
        %v3999 = vlaneseq
        %v4000 = vshrl.u32 %v3999, 7
        %v4001 = vsub.s32 6, %v4000
        %v4002 = vrot.slane %v3942, %v4001
        %v4003 = vlaneseq
        %v4004 = vshrl.u32 %v4003, 7
        %v4005 = vsub.s32 7, %v4004
        %v4006 = vrot.slane %v3942, %v4005
        %vm4007 = vcmp.eq.s32.totalorder %v3946, 1
        %vm4008 = vcmp.eq.s32.totalorder %v3950, 1
        %vm4009 = vcmp.eq.s32.totalorder %v3954, 1
        %vm4010 = vcmp.eq.s32.totalorder %v3958, 1
        %vm4011 = vcmp.eq.s32.totalorder %v3962, 1
        %vm4012 = vcmp.eq.s32.totalorder %v3966, 1
        %vm4013 = vcmp.eq.s32.totalorder %v3970, 1
        %vm4014 = vcmp.eq.s32.totalorder %v3974, 1
        %vm4015 = vcmp.eq.s32.totalorder %v3978, 1
        %vm4016 = vcmp.eq.s32.totalorder %v3982, 1
        %vm4017 = vcmp.eq.s32.totalorder %v3986, 1
        %vm4018 = vcmp.eq.s32.totalorder %v3990, 1
        %vm4019 = vcmp.eq.s32.totalorder %v3994, 1
        %vm4020 = vcmp.eq.s32.totalorder %v3998, 1
        %vm4021 = vcmp.eq.s32.totalorder %v4002, 1
        %vm4022 = vcmp.eq.s32.totalorder %v4006, 1
        %v4023 = vsel %vm4007, %v3940, 0.0
        %v4024 = vsel %vm4008, %v3939, 0.0
        %v4025 = vsel %vm4009, %v3938, 0.0
        %v4026 = vsel %vm4010, %v3937, 0.0
        %v4027 = vsel %vm4011, %v3936, 0.0
        %v4028 = vsel %vm4012, %v3935, 0.0
        %v4029 = vsel %vm4013, %v3934, 0.0
        %v4030 = vsel %vm4014, %v3933, 0.0
        %v4031 = vsel %vm4015, %v3932, 0.0
        %v4032 = vsel %vm4016, %v3931, 0.0
        %v4033 = vsel %vm4017, %v3930, 0.0
        %v4034 = vsel %vm4018, %v3929, 0.0
        %v4035 = vsel %vm4019, %v3928, 0.0
        %v4036 = vsel %vm4020, %v3927, 0.0
        %v4037 = vsel %vm4021, %v3926, 0.0
        %v4038 = vsel %vm4022, %v3925, 0.0
        %4040 = vset.pattern.permute.xlu0 0
        %4041 = vperm.xlu0 %4040, %v3303
        %v4042 = vpop.permute.xlu0 %4041
        %v4044 = vmul.f32 %v4023, %v4042
        %v4045 = vmul.f32 %v4024, %v4042
        %v4046 = vmul.f32 %v4025, %v4042
        %v4047 = vmul.f32 %v4026, %v4042
        %v4048 = vmul.f32 %v4027, %v4042
        %v4049 = vmul.f32 %v4028, %v4042
        %v4050 = vmul.f32 %v4029, %v4042
        %v4051 = vmul.f32 %v4030, %v4042
        %v4052 = vmul.f32 %v4031, %v4042
        %v4053 = vmul.f32 %v4032, %v4042
        %v4054 = vmul.f32 %v4033, %v4042
        %v4055 = vmul.f32 %v4034, %v4042
        %v4056 = vmul.f32 %v4035, %v4042
        %v4057 = vmul.f32 %v4036, %v4042
        %v4058 = vmul.f32 %v4037, %v4042
        %v4059 = vmul.f32 %v4038, %v4042
        %v4060 = vadd.f32 %v3876, %v4044
        %v4061 = vadd.f32 %v3877, %v4045
        %v4062 = vadd.f32 %v3878, %v4046
        %v4063 = vadd.f32 %v3879, %v4047
        %v4064 = vadd.f32 %v3880, %v4048
        %v4065 = vadd.f32 %v3881, %v4049
        %v4066 = vadd.f32 %v3882, %v4050
        %v4067 = vadd.f32 %v3883, %v4051
        %v4068 = vadd.f32 %v3884, %v4052
        %v4069 = vadd.f32 %v3885, %v4053
        %v4070 = vadd.f32 %v3886, %v4054
        %v4071 = vadd.f32 %v3887, %v4055
        %v4072 = vadd.f32 %v3888, %v4056
        %v4073 = vadd.f32 %v3889, %v4057
        %v4074 = vadd.f32 %v3890, %v4058
        %v4075 = vadd.f32 %v3891, %v4059
        %4076 = vrot.lane.b32.xlu0 %v1156, 126
        %v4077 = vpop.permute.xlu0 %4076
        %4078 = vrot.lane.b32.xlu0 %v1157, 126
        %v4079 = vpop.permute.xlu0 %4078
        %4080 = vrot.lane.b32.xlu0 %v1158, 126
        %v4081 = vpop.permute.xlu0 %4080
        %4082 = vrot.lane.b32.xlu0 %v1159, 126
        %v4083 = vpop.permute.xlu0 %4082
        %4084 = vrot.lane.b32.xlu0 %v1160, 126
        %v4085 = vpop.permute.xlu0 %4084
        %4086 = vrot.lane.b32.xlu0 %v1161, 126
        %v4087 = vpop.permute.xlu0 %4086
        %4088 = vrot.lane.b32.xlu0 %v1162, 126
        %v4089 = vpop.permute.xlu0 %4088
        %4090 = vrot.lane.b32.xlu0 %v1163, 126
        %v4091 = vpop.permute.xlu0 %4090
        %4092 = vrot.lane.b32.xlu0 %v1164, 126
        %v4093 = vpop.permute.xlu0 %4092
        %4094 = vrot.lane.b32.xlu0 %v1165, 126
        %v4095 = vpop.permute.xlu0 %4094
        %4096 = vrot.lane.b32.xlu0 %v1166, 126
        %v4097 = vpop.permute.xlu0 %4096
        %4098 = vrot.lane.b32.xlu0 %v1167, 126
        %v4099 = vpop.permute.xlu0 %4098
        %4100 = vrot.lane.b32.xlu0 %v1168, 126
        %v4101 = vpop.permute.xlu0 %4100
        %4102 = vrot.lane.b32.xlu0 %v1169, 126
        %v4103 = vpop.permute.xlu0 %4102
        %4104 = vrot.lane.b32.xlu0 %v1170, 126
        %v4105 = vpop.permute.xlu0 %4104
        %4106 = vrot.lane.b32.xlu0 %v1171, 126
        %v4107 = vpop.permute.xlu0 %4106
        %vm4108 = vcmp.lt.s32.totalorder %v1239, 126
        %v4109 = vsel %vm4108, %v4105, %v4107
        %v4110 = vsel %vm4108, %v4103, %v4105
        %v4111 = vsel %vm4108, %v4101, %v4103
        %v4112 = vsel %vm4108, %v4099, %v4101
        %v4113 = vsel %vm4108, %v4097, %v4099
        %v4114 = vsel %vm4108, %v4095, %v4097
        %v4115 = vsel %vm4108, %v4093, %v4095
        %v4116 = vsel %vm4108, %v4091, %v4093
        %v4117 = vsel %vm4108, %v4089, %v4091
        %v4118 = vsel %vm4108, %v4087, %v4089
        %v4119 = vsel %vm4108, %v4085, %v4087
        %v4120 = vsel %vm4108, %v4083, %v4085
        %v4121 = vsel %vm4108, %v4081, %v4083
        %v4122 = vsel %vm4108, %v4079, %v4081
        %v4123 = vsel %vm4108, %v4077, %v4079
        %v4124 = vsel %vm4108, %v4107, %v4077
        %v4125 = vsel %vm3753, 1, 0
        %v4126 = vsel %vm3754, 1, 0
        %v4127 = vlaneseq
        %v4128 = vshrl.u32 %v4127, 7
        %v4129 = vsub.s32 0, %v4128
        %v4130 = vrot.slane %v4125, %v4129
        %v4131 = vlaneseq
        %v4132 = vshrl.u32 %v4131, 7
        %v4133 = vsub.s32 1, %v4132
        %v4134 = vrot.slane %v4125, %v4133
        %v4135 = vlaneseq
        %v4136 = vshrl.u32 %v4135, 7
        %v4137 = vsub.s32 2, %v4136
        %v4138 = vrot.slane %v4125, %v4137
        %v4139 = vlaneseq
        %v4140 = vshrl.u32 %v4139, 7
        %v4141 = vsub.s32 3, %v4140
        %v4142 = vrot.slane %v4125, %v4141
        %v4143 = vlaneseq
        %v4144 = vshrl.u32 %v4143, 7
        %v4145 = vsub.s32 4, %v4144
        %v4146 = vrot.slane %v4125, %v4145
        %v4147 = vlaneseq
        %v4148 = vshrl.u32 %v4147, 7
        %v4149 = vsub.s32 5, %v4148
        %v4150 = vrot.slane %v4125, %v4149
        %v4151 = vlaneseq
        %v4152 = vshrl.u32 %v4151, 7
        %v4153 = vsub.s32 6, %v4152
        %v4154 = vrot.slane %v4125, %v4153
        %v4155 = vlaneseq
        %v4156 = vshrl.u32 %v4155, 7
        %v4157 = vsub.s32 7, %v4156
        %v4158 = vrot.slane %v4125, %v4157
        %v4159 = vlaneseq
        %v4160 = vshrl.u32 %v4159, 7
        %v4161 = vsub.s32 0, %v4160
        %v4162 = vrot.slane %v4126, %v4161
        %v4163 = vlaneseq
        %v4164 = vshrl.u32 %v4163, 7
        %v4165 = vsub.s32 1, %v4164
        %v4166 = vrot.slane %v4126, %v4165
        %v4167 = vlaneseq
        %v4168 = vshrl.u32 %v4167, 7
        %v4169 = vsub.s32 2, %v4168
        %v4170 = vrot.slane %v4126, %v4169
        %v4171 = vlaneseq
        %v4172 = vshrl.u32 %v4171, 7
        %v4173 = vsub.s32 3, %v4172
        %v4174 = vrot.slane %v4126, %v4173
        %v4175 = vlaneseq
        %v4176 = vshrl.u32 %v4175, 7
        %v4177 = vsub.s32 4, %v4176
        %v4178 = vrot.slane %v4126, %v4177
        %v4179 = vlaneseq
        %v4180 = vshrl.u32 %v4179, 7
        %v4181 = vsub.s32 5, %v4180
        %v4182 = vrot.slane %v4126, %v4181
        %v4183 = vlaneseq
        %v4184 = vshrl.u32 %v4183, 7
        %v4185 = vsub.s32 6, %v4184
        %v4186 = vrot.slane %v4126, %v4185
        %v4187 = vlaneseq
        %v4188 = vshrl.u32 %v4187, 7
        %v4189 = vsub.s32 7, %v4188
        %v4190 = vrot.slane %v4126, %v4189
        %vm4191 = vcmp.eq.s32.totalorder %v4130, 1
        %vm4192 = vcmp.eq.s32.totalorder %v4134, 1
        %vm4193 = vcmp.eq.s32.totalorder %v4138, 1
        %vm4194 = vcmp.eq.s32.totalorder %v4142, 1
        %vm4195 = vcmp.eq.s32.totalorder %v4146, 1
        %vm4196 = vcmp.eq.s32.totalorder %v4150, 1
        %vm4197 = vcmp.eq.s32.totalorder %v4154, 1
        %vm4198 = vcmp.eq.s32.totalorder %v4158, 1
        %vm4199 = vcmp.eq.s32.totalorder %v4162, 1
        %vm4200 = vcmp.eq.s32.totalorder %v4166, 1
        %vm4201 = vcmp.eq.s32.totalorder %v4170, 1
        %vm4202 = vcmp.eq.s32.totalorder %v4174, 1
        %vm4203 = vcmp.eq.s32.totalorder %v4178, 1
        %vm4204 = vcmp.eq.s32.totalorder %v4182, 1
        %vm4205 = vcmp.eq.s32.totalorder %v4186, 1
        %vm4206 = vcmp.eq.s32.totalorder %v4190, 1
        %v4207 = vsel %vm4191, %v4123, 0.0
        %v4208 = vsel %vm4192, %v4122, 0.0
        %v4209 = vsel %vm4193, %v4121, 0.0
        %v4210 = vsel %vm4194, %v4120, 0.0
        %v4211 = vsel %vm4195, %v4119, 0.0
        %v4212 = vsel %vm4196, %v4118, 0.0
        %v4213 = vsel %vm4197, %v4117, 0.0
        %v4214 = vsel %vm4198, %v4116, 0.0
        %v4215 = vsel %vm4199, %v4115, 0.0
        %v4216 = vsel %vm4200, %v4114, 0.0
        %v4217 = vsel %vm4201, %v4113, 0.0
        %v4218 = vsel %vm4202, %v4112, 0.0
        %v4219 = vsel %vm4203, %v4111, 0.0
        %v4220 = vsel %vm4204, %v4110, 0.0
        %v4221 = vsel %vm4205, %v4109, 0.0
        %v4222 = vsel %vm4206, %v4124, 0.0
        %4224 = vset.pattern.permute.xlu0 0
        %4225 = vperm.xlu0 %4224, %v3305
        %v4226 = vpop.permute.xlu0 %4225
        %v4228 = vmul.f32 %v4207, %v4226
        %v4229 = vmul.f32 %v4208, %v4226
        %v4230 = vmul.f32 %v4209, %v4226
        %v4231 = vmul.f32 %v4210, %v4226
        %v4232 = vmul.f32 %v4211, %v4226
        %v4233 = vmul.f32 %v4212, %v4226
        %v4234 = vmul.f32 %v4213, %v4226
        %v4235 = vmul.f32 %v4214, %v4226
        %v4236 = vmul.f32 %v4215, %v4226
        %v4237 = vmul.f32 %v4216, %v4226
        %v4238 = vmul.f32 %v4217, %v4226
        %v4239 = vmul.f32 %v4218, %v4226
        %v4240 = vmul.f32 %v4219, %v4226
        %v4241 = vmul.f32 %v4220, %v4226
        %v4242 = vmul.f32 %v4221, %v4226
        %v4243 = vmul.f32 %v4222, %v4226
        %v4244 = vadd.f32 %v4060, %v4228
        %v4245 = vadd.f32 %v4061, %v4229
        %v4246 = vadd.f32 %v4062, %v4230
        %v4247 = vadd.f32 %v4063, %v4231
        %v4248 = vadd.f32 %v4064, %v4232
        %v4249 = vadd.f32 %v4065, %v4233
        %v4250 = vadd.f32 %v4066, %v4234
        %v4251 = vadd.f32 %v4067, %v4235
        %v4252 = vadd.f32 %v4068, %v4236
        %v4253 = vadd.f32 %v4069, %v4237
        %v4254 = vadd.f32 %v4070, %v4238
        %v4255 = vadd.f32 %v4071, %v4239
        %v4256 = vadd.f32 %v4072, %v4240
        %v4257 = vadd.f32 %v4073, %v4241
        %v4258 = vadd.f32 %v4074, %v4242
        %v4259 = vadd.f32 %v4075, %v4243
        %4260 = vrot.lane.b32.xlu0 %v1156, 98
        %v4261 = vpop.permute.xlu0 %4260
        %4262 = vrot.lane.b32.xlu0 %v1157, 98
        %v4263 = vpop.permute.xlu0 %4262
        %4264 = vrot.lane.b32.xlu0 %v1158, 98
        %v4265 = vpop.permute.xlu0 %4264
        %4266 = vrot.lane.b32.xlu0 %v1159, 98
        %v4267 = vpop.permute.xlu0 %4266
        %4268 = vrot.lane.b32.xlu0 %v1160, 98
        %v4269 = vpop.permute.xlu0 %4268
        %4270 = vrot.lane.b32.xlu0 %v1161, 98
        %v4271 = vpop.permute.xlu0 %4270
        %4272 = vrot.lane.b32.xlu0 %v1162, 98
        %v4273 = vpop.permute.xlu0 %4272
        %4274 = vrot.lane.b32.xlu0 %v1163, 98
        %v4275 = vpop.permute.xlu0 %4274
        %4276 = vrot.lane.b32.xlu0 %v1164, 98
        %v4277 = vpop.permute.xlu0 %4276
        %4278 = vrot.lane.b32.xlu0 %v1165, 98
        %v4279 = vpop.permute.xlu0 %4278
        %4280 = vrot.lane.b32.xlu0 %v1166, 98
        %v4281 = vpop.permute.xlu0 %4280
        %4282 = vrot.lane.b32.xlu0 %v1167, 98
        %v4283 = vpop.permute.xlu0 %4282
        %4284 = vrot.lane.b32.xlu0 %v1168, 98
        %v4285 = vpop.permute.xlu0 %4284
        %4286 = vrot.lane.b32.xlu0 %v1169, 98
        %v4287 = vpop.permute.xlu0 %4286
        %4288 = vrot.lane.b32.xlu0 %v1170, 98
        %v4289 = vpop.permute.xlu0 %4288
        %4290 = vrot.lane.b32.xlu0 %v1171, 98
        %v4291 = vpop.permute.xlu0 %4290
        %vm4292 = vcmp.lt.s32.totalorder %v1239, 98
        %v4293 = vsel %vm4292, %v4289, %v4291
        %v4294 = vsel %vm4292, %v4287, %v4289
        %v4295 = vsel %vm4292, %v4285, %v4287
        %v4296 = vsel %vm4292, %v4283, %v4285
        %v4297 = vsel %vm4292, %v4281, %v4283
        %v4298 = vsel %vm4292, %v4279, %v4281
        %v4299 = vsel %vm4292, %v4277, %v4279
        %v4300 = vsel %vm4292, %v4275, %v4277
        %v4301 = vsel %vm4292, %v4273, %v4275
        %v4302 = vsel %vm4292, %v4271, %v4273
        %v4303 = vsel %vm4292, %v4269, %v4271
        %v4304 = vsel %vm4292, %v4267, %v4269
        %v4305 = vsel %vm4292, %v4265, %v4267
        %v4306 = vsel %vm4292, %v4263, %v4265
        %v4307 = vsel %vm4292, %v4261, %v4263
        %v4308 = vsel %vm4292, %v4291, %v4261
        %vm4309 = vcmp.lt.s32.totalorder %v1172, 14
        %vm4310 = vcmp.lt.s32.totalorder %v1173, 14
        %vm4311 = vmand %vm4309, %vm3381
        %vm4312 = vmand %vm4310, %vm3382
        %v4313 = vsel %vm4311, 1, 0
        %v4314 = vsel %vm4312, 1, 0
        %v4315 = vlaneseq
        %v4316 = vshrl.u32 %v4315, 7
        %v4317 = vsub.s32 0, %v4316
        %v4318 = vrot.slane %v4313, %v4317
        %v4319 = vlaneseq
        %v4320 = vshrl.u32 %v4319, 7
        %v4321 = vsub.s32 1, %v4320
        %v4322 = vrot.slane %v4313, %v4321
        %v4323 = vlaneseq
        %v4324 = vshrl.u32 %v4323, 7
        %v4325 = vsub.s32 2, %v4324
        %v4326 = vrot.slane %v4313, %v4325
        %v4327 = vlaneseq
        %v4328 = vshrl.u32 %v4327, 7
        %v4329 = vsub.s32 3, %v4328
        %v4330 = vrot.slane %v4313, %v4329
        %v4331 = vlaneseq
        %v4332 = vshrl.u32 %v4331, 7
        %v4333 = vsub.s32 4, %v4332
        %v4334 = vrot.slane %v4313, %v4333
        %v4335 = vlaneseq
        %v4336 = vshrl.u32 %v4335, 7
        %v4337 = vsub.s32 5, %v4336
        %v4338 = vrot.slane %v4313, %v4337
        %v4339 = vlaneseq
        %v4340 = vshrl.u32 %v4339, 7
        %v4341 = vsub.s32 6, %v4340
        %v4342 = vrot.slane %v4313, %v4341
        %v4343 = vlaneseq
        %v4344 = vshrl.u32 %v4343, 7
        %v4345 = vsub.s32 7, %v4344
        %v4346 = vrot.slane %v4313, %v4345
        %v4347 = vlaneseq
        %v4348 = vshrl.u32 %v4347, 7
        %v4349 = vsub.s32 0, %v4348
        %v4350 = vrot.slane %v4314, %v4349
        %v4351 = vlaneseq
        %v4352 = vshrl.u32 %v4351, 7
        %v4353 = vsub.s32 1, %v4352
        %v4354 = vrot.slane %v4314, %v4353
        %v4355 = vlaneseq
        %v4356 = vshrl.u32 %v4355, 7
        %v4357 = vsub.s32 2, %v4356
        %v4358 = vrot.slane %v4314, %v4357
        %v4359 = vlaneseq
        %v4360 = vshrl.u32 %v4359, 7
        %v4361 = vsub.s32 3, %v4360
        %v4362 = vrot.slane %v4314, %v4361
        %v4363 = vlaneseq
        %v4364 = vshrl.u32 %v4363, 7
        %v4365 = vsub.s32 4, %v4364
        %v4366 = vrot.slane %v4314, %v4365
        %v4367 = vlaneseq
        %v4368 = vshrl.u32 %v4367, 7
        %v4369 = vsub.s32 5, %v4368
        %v4370 = vrot.slane %v4314, %v4369
        %v4371 = vlaneseq
        %v4372 = vshrl.u32 %v4371, 7
        %v4373 = vsub.s32 6, %v4372
        %v4374 = vrot.slane %v4314, %v4373
        %v4375 = vlaneseq
        %v4376 = vshrl.u32 %v4375, 7
        %v4377 = vsub.s32 7, %v4376
        %v4378 = vrot.slane %v4314, %v4377
        %vm4379 = vcmp.eq.s32.totalorder %v4318, 1
        %vm4380 = vcmp.eq.s32.totalorder %v4322, 1
        %vm4381 = vcmp.eq.s32.totalorder %v4326, 1
        %vm4382 = vcmp.eq.s32.totalorder %v4330, 1
        %vm4383 = vcmp.eq.s32.totalorder %v4334, 1
        %vm4384 = vcmp.eq.s32.totalorder %v4338, 1
        %vm4385 = vcmp.eq.s32.totalorder %v4342, 1
        %vm4386 = vcmp.eq.s32.totalorder %v4346, 1
        %vm4387 = vcmp.eq.s32.totalorder %v4350, 1
        %vm4388 = vcmp.eq.s32.totalorder %v4354, 1
        %vm4389 = vcmp.eq.s32.totalorder %v4358, 1
        %vm4390 = vcmp.eq.s32.totalorder %v4362, 1
        %vm4391 = vcmp.eq.s32.totalorder %v4366, 1
        %vm4392 = vcmp.eq.s32.totalorder %v4370, 1
        %vm4393 = vcmp.eq.s32.totalorder %v4374, 1
        %vm4394 = vcmp.eq.s32.totalorder %v4378, 1
        %v4395 = vsel %vm4379, %v4307, 0.0
        %v4396 = vsel %vm4380, %v4306, 0.0
        %v4397 = vsel %vm4381, %v4305, 0.0
        %v4398 = vsel %vm4382, %v4304, 0.0
        %v4399 = vsel %vm4383, %v4303, 0.0
        %v4400 = vsel %vm4384, %v4302, 0.0
        %v4401 = vsel %vm4385, %v4301, 0.0
        %v4402 = vsel %vm4386, %v4300, 0.0
        %v4403 = vsel %vm4387, %v4299, 0.0
        %v4404 = vsel %vm4388, %v4298, 0.0
        %v4405 = vsel %vm4389, %v4297, 0.0
        %v4406 = vsel %vm4390, %v4296, 0.0
        %v4407 = vsel %vm4391, %v4295, 0.0
        %v4408 = vsel %vm4392, %v4294, 0.0
        %v4409 = vsel %vm4393, %v4293, 0.0
        %v4410 = vsel %vm4394, %v4308, 0.0
        %4412 = vset.pattern.permute.xlu0 0
        %4413 = vperm.xlu0 %4412, %v3306
        %v4414 = vpop.permute.xlu0 %4413
        %v4416 = vmul.f32 %v4395, %v4414
        %v4417 = vmul.f32 %v4396, %v4414
        %v4418 = vmul.f32 %v4397, %v4414
        %v4419 = vmul.f32 %v4398, %v4414
        %v4420 = vmul.f32 %v4399, %v4414
        %v4421 = vmul.f32 %v4400, %v4414
        %v4422 = vmul.f32 %v4401, %v4414
        %v4423 = vmul.f32 %v4402, %v4414
        %v4424 = vmul.f32 %v4403, %v4414
        %v4425 = vmul.f32 %v4404, %v4414
        %v4426 = vmul.f32 %v4405, %v4414
        %v4427 = vmul.f32 %v4406, %v4414
        %v4428 = vmul.f32 %v4407, %v4414
        %v4429 = vmul.f32 %v4408, %v4414
        %v4430 = vmul.f32 %v4409, %v4414
        %v4431 = vmul.f32 %v4410, %v4414
        %v4432 = vadd.f32 %v4244, %v4416
        %v4433 = vadd.f32 %v4245, %v4417
        %v4434 = vadd.f32 %v4246, %v4418
        %v4435 = vadd.f32 %v4247, %v4419
        %v4436 = vadd.f32 %v4248, %v4420
        %v4437 = vadd.f32 %v4249, %v4421
        %v4438 = vadd.f32 %v4250, %v4422
        %v4439 = vadd.f32 %v4251, %v4423
        %v4440 = vadd.f32 %v4252, %v4424
        %v4441 = vadd.f32 %v4253, %v4425
        %v4442 = vadd.f32 %v4254, %v4426
        %v4443 = vadd.f32 %v4255, %v4427
        %v4444 = vadd.f32 %v4256, %v4428
        %v4445 = vadd.f32 %v4257, %v4429
        %v4446 = vadd.f32 %v4258, %v4430
        %v4447 = vadd.f32 %v4259, %v4431
        %4448 = vrot.lane.b32.xlu0 %v1156, 96
        %v4449 = vpop.permute.xlu0 %4448
        %4450 = vrot.lane.b32.xlu0 %v1157, 96
        %v4451 = vpop.permute.xlu0 %4450
        %4452 = vrot.lane.b32.xlu0 %v1158, 96
        %v4453 = vpop.permute.xlu0 %4452
        %4454 = vrot.lane.b32.xlu0 %v1159, 96
        %v4455 = vpop.permute.xlu0 %4454
        %4456 = vrot.lane.b32.xlu0 %v1160, 96
        %v4457 = vpop.permute.xlu0 %4456
        %4458 = vrot.lane.b32.xlu0 %v1161, 96
        %v4459 = vpop.permute.xlu0 %4458
        %4460 = vrot.lane.b32.xlu0 %v1162, 96
        %v4461 = vpop.permute.xlu0 %4460
        %4462 = vrot.lane.b32.xlu0 %v1163, 96
        %v4463 = vpop.permute.xlu0 %4462
        %4464 = vrot.lane.b32.xlu0 %v1164, 96
        %v4465 = vpop.permute.xlu0 %4464
        %4466 = vrot.lane.b32.xlu0 %v1165, 96
        %v4467 = vpop.permute.xlu0 %4466
        %4468 = vrot.lane.b32.xlu0 %v1166, 96
        %v4469 = vpop.permute.xlu0 %4468
        %4470 = vrot.lane.b32.xlu0 %v1167, 96
        %v4471 = vpop.permute.xlu0 %4470
        %4472 = vrot.lane.b32.xlu0 %v1168, 96
        %v4473 = vpop.permute.xlu0 %4472
        %4474 = vrot.lane.b32.xlu0 %v1169, 96
        %v4475 = vpop.permute.xlu0 %4474
        %4476 = vrot.lane.b32.xlu0 %v1170, 96
        %v4477 = vpop.permute.xlu0 %4476
        %4478 = vrot.lane.b32.xlu0 %v1171, 96
        %v4479 = vpop.permute.xlu0 %4478
        %vm4480 = vcmp.lt.s32.totalorder %v1239, 96
        %v4481 = vsel %vm4480, %v4477, %v4479
        %v4482 = vsel %vm4480, %v4475, %v4477
        %v4483 = vsel %vm4480, %v4473, %v4475
        %v4484 = vsel %vm4480, %v4471, %v4473
        %v4485 = vsel %vm4480, %v4469, %v4471
        %v4486 = vsel %vm4480, %v4467, %v4469
        %v4487 = vsel %vm4480, %v4465, %v4467
        %v4488 = vsel %vm4480, %v4463, %v4465
        %v4489 = vsel %vm4480, %v4461, %v4463
        %v4490 = vsel %vm4480, %v4459, %v4461
        %v4491 = vsel %vm4480, %v4457, %v4459
        %v4492 = vsel %vm4480, %v4455, %v4457
        %v4493 = vsel %vm4480, %v4453, %v4455
        %v4494 = vsel %vm4480, %v4451, %v4453
        %v4495 = vsel %vm4480, %v4449, %v4451
        %v4496 = vsel %vm4480, %v4479, %v4449
        %v4497 = vsel %vm4309, 1, 0
        %v4498 = vsel %vm4310, 1, 0
        %v4499 = vlaneseq
        %v4500 = vshrl.u32 %v4499, 7
        %v4501 = vsub.s32 0, %v4500
        %v4502 = vrot.slane %v4497, %v4501
        %v4503 = vlaneseq
        %v4504 = vshrl.u32 %v4503, 7
        %v4505 = vsub.s32 1, %v4504
        %v4506 = vrot.slane %v4497, %v4505
        %v4507 = vlaneseq
        %v4508 = vshrl.u32 %v4507, 7
        %v4509 = vsub.s32 2, %v4508
        %v4510 = vrot.slane %v4497, %v4509
        %v4511 = vlaneseq
        %v4512 = vshrl.u32 %v4511, 7
        %v4513 = vsub.s32 3, %v4512
        %v4514 = vrot.slane %v4497, %v4513
        %v4515 = vlaneseq
        %v4516 = vshrl.u32 %v4515, 7
        %v4517 = vsub.s32 4, %v4516
        %v4518 = vrot.slane %v4497, %v4517
        %v4519 = vlaneseq
        %v4520 = vshrl.u32 %v4519, 7
        %v4521 = vsub.s32 5, %v4520
        %v4522 = vrot.slane %v4497, %v4521
        %v4523 = vlaneseq
        %v4524 = vshrl.u32 %v4523, 7
        %v4525 = vsub.s32 6, %v4524
        %v4526 = vrot.slane %v4497, %v4525
        %v4527 = vlaneseq
        %v4528 = vshrl.u32 %v4527, 7
        %v4529 = vsub.s32 7, %v4528
        %v4530 = vrot.slane %v4497, %v4529
        %v4531 = vlaneseq
        %v4532 = vshrl.u32 %v4531, 7
        %v4533 = vsub.s32 0, %v4532
        %v4534 = vrot.slane %v4498, %v4533
        %v4535 = vlaneseq
        %v4536 = vshrl.u32 %v4535, 7
        %v4537 = vsub.s32 1, %v4536
        %v4538 = vrot.slane %v4498, %v4537
        %v4539 = vlaneseq
        %v4540 = vshrl.u32 %v4539, 7
        %v4541 = vsub.s32 2, %v4540
        %v4542 = vrot.slane %v4498, %v4541
        %v4543 = vlaneseq
        %v4544 = vshrl.u32 %v4543, 7
        %v4545 = vsub.s32 3, %v4544
        %v4546 = vrot.slane %v4498, %v4545
        %v4547 = vlaneseq
        %v4548 = vshrl.u32 %v4547, 7
        %v4549 = vsub.s32 4, %v4548
        %v4550 = vrot.slane %v4498, %v4549
        %v4551 = vlaneseq
        %v4552 = vshrl.u32 %v4551, 7
        %v4553 = vsub.s32 5, %v4552
        %v4554 = vrot.slane %v4498, %v4553
        %v4555 = vlaneseq
        %v4556 = vshrl.u32 %v4555, 7
        %v4557 = vsub.s32 6, %v4556
        %v4558 = vrot.slane %v4498, %v4557
        %v4559 = vlaneseq
        %v4560 = vshrl.u32 %v4559, 7
        %v4561 = vsub.s32 7, %v4560
        %v4562 = vrot.slane %v4498, %v4561
        %vm4563 = vcmp.eq.s32.totalorder %v4502, 1
        %vm4564 = vcmp.eq.s32.totalorder %v4506, 1
        %vm4565 = vcmp.eq.s32.totalorder %v4510, 1
        %vm4566 = vcmp.eq.s32.totalorder %v4514, 1
        %vm4567 = vcmp.eq.s32.totalorder %v4518, 1
        %vm4568 = vcmp.eq.s32.totalorder %v4522, 1
        %vm4569 = vcmp.eq.s32.totalorder %v4526, 1
        %vm4570 = vcmp.eq.s32.totalorder %v4530, 1
        %vm4571 = vcmp.eq.s32.totalorder %v4534, 1
        %vm4572 = vcmp.eq.s32.totalorder %v4538, 1
        %vm4573 = vcmp.eq.s32.totalorder %v4542, 1
        %vm4574 = vcmp.eq.s32.totalorder %v4546, 1
        %vm4575 = vcmp.eq.s32.totalorder %v4550, 1
        %vm4576 = vcmp.eq.s32.totalorder %v4554, 1
        %vm4577 = vcmp.eq.s32.totalorder %v4558, 1
        %vm4578 = vcmp.eq.s32.totalorder %v4562, 1
        %v4579 = vsel %vm4563, %v4495, 0.0
        %v4580 = vsel %vm4564, %v4494, 0.0
        %v4581 = vsel %vm4565, %v4493, 0.0
        %v4582 = vsel %vm4566, %v4492, 0.0
        %v4583 = vsel %vm4567, %v4491, 0.0
        %v4584 = vsel %vm4568, %v4490, 0.0
        %v4585 = vsel %vm4569, %v4489, 0.0
        %v4586 = vsel %vm4570, %v4488, 0.0
        %v4587 = vsel %vm4571, %v4487, 0.0
        %v4588 = vsel %vm4572, %v4486, 0.0
        %v4589 = vsel %vm4573, %v4485, 0.0
        %v4590 = vsel %vm4574, %v4484, 0.0
        %v4591 = vsel %vm4575, %v4483, 0.0
        %v4592 = vsel %vm4576, %v4482, 0.0
        %v4593 = vsel %vm4577, %v4481, 0.0
        %v4594 = vsel %vm4578, %v4496, 0.0
        %4596 = vset.pattern.permute.xlu0 0
        %4597 = vperm.xlu0 %4596, %v3307
        %v4598 = vpop.permute.xlu0 %4597
        %v4600 = vmul.f32 %v4579, %v4598
        %v4601 = vmul.f32 %v4580, %v4598
        %v4602 = vmul.f32 %v4581, %v4598
        %v4603 = vmul.f32 %v4582, %v4598
        %v4604 = vmul.f32 %v4583, %v4598
        %v4605 = vmul.f32 %v4584, %v4598
        %v4606 = vmul.f32 %v4585, %v4598
        %v4607 = vmul.f32 %v4586, %v4598
        %v4608 = vmul.f32 %v4587, %v4598
        %v4609 = vmul.f32 %v4588, %v4598
        %v4610 = vmul.f32 %v4589, %v4598
        %v4611 = vmul.f32 %v4590, %v4598
        %v4612 = vmul.f32 %v4591, %v4598
        %v4613 = vmul.f32 %v4592, %v4598
        %v4614 = vmul.f32 %v4593, %v4598
        %v4615 = vmul.f32 %v4594, %v4598
        %v4616 = vadd.f32 %v4432, %v4600
        %v4617 = vadd.f32 %v4433, %v4601
        %v4618 = vadd.f32 %v4434, %v4602
        %v4619 = vadd.f32 %v4435, %v4603
        %v4620 = vadd.f32 %v4436, %v4604
        %v4621 = vadd.f32 %v4437, %v4605
        %v4622 = vadd.f32 %v4438, %v4606
        %v4623 = vadd.f32 %v4439, %v4607
        %v4624 = vadd.f32 %v4440, %v4608
        %v4625 = vadd.f32 %v4441, %v4609
        %v4626 = vadd.f32 %v4442, %v4610
        %v4627 = vadd.f32 %v4443, %v4611
        %v4628 = vadd.f32 %v4444, %v4612
        %v4629 = vadd.f32 %v4445, %v4613
        %v4630 = vadd.f32 %v4446, %v4614
        %v4631 = vadd.f32 %v4447, %v4615
        %4632 = vrot.lane.b32.xlu0 %v1156, 94
        %v4633 = vpop.permute.xlu0 %4632
        %4634 = vrot.lane.b32.xlu0 %v1157, 94
        %v4635 = vpop.permute.xlu0 %4634
        %4636 = vrot.lane.b32.xlu0 %v1158, 94
        %v4637 = vpop.permute.xlu0 %4636
        %4638 = vrot.lane.b32.xlu0 %v1159, 94
        %v4639 = vpop.permute.xlu0 %4638
        %4640 = vrot.lane.b32.xlu0 %v1160, 94
        %v4641 = vpop.permute.xlu0 %4640
        %4642 = vrot.lane.b32.xlu0 %v1161, 94
        %v4643 = vpop.permute.xlu0 %4642
        %4644 = vrot.lane.b32.xlu0 %v1162, 94
        %v4645 = vpop.permute.xlu0 %4644
        %4646 = vrot.lane.b32.xlu0 %v1163, 94
        %v4647 = vpop.permute.xlu0 %4646
        %4648 = vrot.lane.b32.xlu0 %v1164, 94
        %v4649 = vpop.permute.xlu0 %4648
        %4650 = vrot.lane.b32.xlu0 %v1165, 94
        %v4651 = vpop.permute.xlu0 %4650
        %4652 = vrot.lane.b32.xlu0 %v1166, 94
        %v4653 = vpop.permute.xlu0 %4652
        %4654 = vrot.lane.b32.xlu0 %v1167, 94
        %v4655 = vpop.permute.xlu0 %4654
        %4656 = vrot.lane.b32.xlu0 %v1168, 94
        %v4657 = vpop.permute.xlu0 %4656
        %4658 = vrot.lane.b32.xlu0 %v1169, 94
        %v4659 = vpop.permute.xlu0 %4658
        %4660 = vrot.lane.b32.xlu0 %v1170, 94
        %v4661 = vpop.permute.xlu0 %4660
        %4662 = vrot.lane.b32.xlu0 %v1171, 94
        %v4663 = vpop.permute.xlu0 %4662
        %vm4664 = vcmp.lt.s32.totalorder %v1239, 94
        %v4665 = vsel %vm4664, %v4661, %v4663
        %v4666 = vsel %vm4664, %v4659, %v4661
        %v4667 = vsel %vm4664, %v4657, %v4659
        %v4668 = vsel %vm4664, %v4655, %v4657
        %v4669 = vsel %vm4664, %v4653, %v4655
        %v4670 = vsel %vm4664, %v4651, %v4653
        %v4671 = vsel %vm4664, %v4649, %v4651
        %v4672 = vsel %vm4664, %v4647, %v4649
        %v4673 = vsel %vm4664, %v4645, %v4647
        %v4674 = vsel %vm4664, %v4643, %v4645
        %v4675 = vsel %vm4664, %v4641, %v4643
        %v4676 = vsel %vm4664, %v4639, %v4641
        %v4677 = vsel %vm4664, %v4637, %v4639
        %v4678 = vsel %vm4664, %v4635, %v4637
        %v4679 = vsel %vm4664, %v4633, %v4635
        %v4680 = vsel %vm4664, %v4663, %v4633
        %vm4681 = vmand %vm4309, %vm3753
        %vm4682 = vmand %vm4310, %vm3754
        %v4683 = vsel %vm4681, 1, 0
        %v4684 = vsel %vm4682, 1, 0
        %v4685 = vlaneseq
        %v4686 = vshrl.u32 %v4685, 7
        %v4687 = vsub.s32 0, %v4686
        %v4688 = vrot.slane %v4683, %v4687
        %v4689 = vlaneseq
        %v4690 = vshrl.u32 %v4689, 7
        %v4691 = vsub.s32 1, %v4690
        %v4692 = vrot.slane %v4683, %v4691
        %v4693 = vlaneseq
        %v4694 = vshrl.u32 %v4693, 7
        %v4695 = vsub.s32 2, %v4694
        %v4696 = vrot.slane %v4683, %v4695
        %v4697 = vlaneseq
        %v4698 = vshrl.u32 %v4697, 7
        %v4699 = vsub.s32 3, %v4698
        %v4700 = vrot.slane %v4683, %v4699
        %v4701 = vlaneseq
        %v4702 = vshrl.u32 %v4701, 7
        %v4703 = vsub.s32 4, %v4702
        %v4704 = vrot.slane %v4683, %v4703
        %v4705 = vlaneseq
        %v4706 = vshrl.u32 %v4705, 7
        %v4707 = vsub.s32 5, %v4706
        %v4708 = vrot.slane %v4683, %v4707
        %v4709 = vlaneseq
        %v4710 = vshrl.u32 %v4709, 7
        %v4711 = vsub.s32 6, %v4710
        %v4712 = vrot.slane %v4683, %v4711
        %v4713 = vlaneseq
        %v4714 = vshrl.u32 %v4713, 7
        %v4715 = vsub.s32 7, %v4714
        %v4716 = vrot.slane %v4683, %v4715
        %v4717 = vlaneseq
        %v4718 = vshrl.u32 %v4717, 7
        %v4719 = vsub.s32 0, %v4718
        %v4720 = vrot.slane %v4684, %v4719
        %v4721 = vlaneseq
        %v4722 = vshrl.u32 %v4721, 7
        %v4723 = vsub.s32 1, %v4722
        %v4724 = vrot.slane %v4684, %v4723
        %v4725 = vlaneseq
        %v4726 = vshrl.u32 %v4725, 7
        %v4727 = vsub.s32 2, %v4726
        %v4728 = vrot.slane %v4684, %v4727
        %v4729 = vlaneseq
        %v4730 = vshrl.u32 %v4729, 7
        %v4731 = vsub.s32 3, %v4730
        %v4732 = vrot.slane %v4684, %v4731
        %v4733 = vlaneseq
        %v4734 = vshrl.u32 %v4733, 7
        %v4735 = vsub.s32 4, %v4734
        %v4736 = vrot.slane %v4684, %v4735
        %v4737 = vlaneseq
        %v4738 = vshrl.u32 %v4737, 7
        %v4739 = vsub.s32 5, %v4738
        %v4740 = vrot.slane %v4684, %v4739
        %v4741 = vlaneseq
        %v4742 = vshrl.u32 %v4741, 7
        %v4743 = vsub.s32 6, %v4742
        %v4744 = vrot.slane %v4684, %v4743
        %v4745 = vlaneseq
        %v4746 = vshrl.u32 %v4745, 7
        %v4747 = vsub.s32 7, %v4746
        %v4748 = vrot.slane %v4684, %v4747
        %vm4749 = vcmp.eq.s32.totalorder %v4688, 1
        %vm4750 = vcmp.eq.s32.totalorder %v4692, 1
        %vm4751 = vcmp.eq.s32.totalorder %v4696, 1
        %vm4752 = vcmp.eq.s32.totalorder %v4700, 1
        %vm4753 = vcmp.eq.s32.totalorder %v4704, 1
        %vm4754 = vcmp.eq.s32.totalorder %v4708, 1
        %vm4755 = vcmp.eq.s32.totalorder %v4712, 1
        %vm4756 = vcmp.eq.s32.totalorder %v4716, 1
        %vm4757 = vcmp.eq.s32.totalorder %v4720, 1
        %vm4758 = vcmp.eq.s32.totalorder %v4724, 1
        %vm4759 = vcmp.eq.s32.totalorder %v4728, 1
        %vm4760 = vcmp.eq.s32.totalorder %v4732, 1
        %vm4761 = vcmp.eq.s32.totalorder %v4736, 1
        %vm4762 = vcmp.eq.s32.totalorder %v4740, 1
        %vm4763 = vcmp.eq.s32.totalorder %v4744, 1
        %vm4764 = vcmp.eq.s32.totalorder %v4748, 1
        %v4765 = vsel %vm4749, %v4679, 0.0
        %v4766 = vsel %vm4750, %v4678, 0.0
        %v4767 = vsel %vm4751, %v4677, 0.0
        %v4768 = vsel %vm4752, %v4676, 0.0
        %v4769 = vsel %vm4753, %v4675, 0.0
        %v4770 = vsel %vm4754, %v4674, 0.0
        %v4771 = vsel %vm4755, %v4673, 0.0
        %v4772 = vsel %vm4756, %v4672, 0.0
        %v4773 = vsel %vm4757, %v4671, 0.0
        %v4774 = vsel %vm4758, %v4670, 0.0
        %v4775 = vsel %vm4759, %v4669, 0.0
        %v4776 = vsel %vm4760, %v4668, 0.0
        %v4777 = vsel %vm4761, %v4667, 0.0
        %v4778 = vsel %vm4762, %v4666, 0.0
        %v4779 = vsel %vm4763, %v4665, 0.0
        %v4780 = vsel %vm4764, %v4680, 0.0
        %4782 = vset.pattern.permute.xlu0 0
        %4783 = vperm.xlu0 %4782, %v3308
        %v4784 = vpop.permute.xlu0 %4783
        %v4786 = vmul.f32 %v4765, %v4784
        %v4787 = vmul.f32 %v4766, %v4784
        %v4788 = vmul.f32 %v4767, %v4784
        %v4789 = vmul.f32 %v4768, %v4784
        %v4790 = vmul.f32 %v4769, %v4784
        %v4791 = vmul.f32 %v4770, %v4784
        %v4792 = vmul.f32 %v4771, %v4784
        %v4793 = vmul.f32 %v4772, %v4784
        %v4794 = vmul.f32 %v4773, %v4784
        %v4795 = vmul.f32 %v4774, %v4784
        %v4796 = vmul.f32 %v4775, %v4784
        %v4797 = vmul.f32 %v4776, %v4784
        %v4798 = vmul.f32 %v4777, %v4784
        %v4799 = vmul.f32 %v4778, %v4784
        %v4800 = vmul.f32 %v4779, %v4784
        %v4801 = vmul.f32 %v4780, %v4784
        %v4802 = vadd.f32 %v4616, %v4786
        %v4803 = vadd.f32 %v4617, %v4787
        %v4804 = vadd.f32 %v4618, %v4788
        %v4805 = vadd.f32 %v4619, %v4789
        %v4806 = vadd.f32 %v4620, %v4790
        %v4807 = vadd.f32 %v4621, %v4791
        %v4808 = vadd.f32 %v4622, %v4792
        %v4809 = vadd.f32 %v4623, %v4793
        %v4810 = vadd.f32 %v4624, %v4794
        %v4811 = vadd.f32 %v4625, %v4795
        %v4812 = vadd.f32 %v4626, %v4796
        %v4813 = vadd.f32 %v4627, %v4797
        %v4814 = vadd.f32 %v4628, %v4798
        %v4815 = vadd.f32 %v4629, %v4799
        %v4816 = vadd.f32 %v4630, %v4800
        %v4817 = vadd.f32 %v4631, %v4801
        %v4818 = vadd.f32 %v4802, %v3153
        %v4819 = vadd.f32 %v4803, %v3154
        %v4820 = vadd.f32 %v4804, %v3155
        %v4821 = vadd.f32 %v4805, %v3156
        %v4822 = vadd.f32 %v4806, %v3157
        %v4823 = vadd.f32 %v4807, %v3158
        %v4824 = vadd.f32 %v4808, %v3159
        %v4825 = vadd.f32 %v4809, %v3160
        %v4826 = vadd.f32 %v4810, %v3161
        %v4827 = vadd.f32 %v4811, %v3162
        %v4828 = vadd.f32 %v4812, %v3163
        %v4829 = vadd.f32 %v4813, %v3164
        %v4830 = vadd.f32 %v4814, %v3165
        %v4831 = vadd.f32 %v4815, %v3166
        %v4832 = vadd.f32 %v4816, %v3167
        %v4833 = vadd.f32 %v4817, %v3168
        %v4834 = vld [vmem:[%s7 + $0x10] sm:$0xff]
        %4836 = vset.pattern.permute.xlu0 0
        %4837 = vperm.xlu0 %4836, %v4834
        %v4838 = vpop.permute.xlu0 %4837
        %v4840 = vmul.f32 %v4818, %v4838
        %v4841 = vmul.f32 %v4819, %v4838
        %v4842 = vmul.f32 %v4820, %v4838
        %v4843 = vmul.f32 %v4821, %v4838
        %v4844 = vmul.f32 %v4822, %v4838
        %v4845 = vmul.f32 %v4823, %v4838
        %v4846 = vmul.f32 %v4824, %v4838
        %v4847 = vmul.f32 %v4825, %v4838
        %v4848 = vmul.f32 %v4826, %v4838
        %v4849 = vmul.f32 %v4827, %v4838
        %v4850 = vmul.f32 %v4828, %v4838
        %v4851 = vmul.f32 %v4829, %v4838
        %v4852 = vmul.f32 %v4830, %v4838
        %v4853 = vmul.f32 %v4831, %v4838
        %v4854 = vmul.f32 %v4832, %v4838
        %v4855 = vmul.f32 %v4833, %v4838
        %v4856 = vld [vmem:[%s8 + $0x10] sm:$0xff]
        %4858 = vset.pattern.permute.xlu0 0
        %4859 = vperm.xlu0 %4858, %v4856
        %v4860 = vpop.permute.xlu0 %4859
        %v4862 = vadd.f32 %v4840, %v4860
        %v4863 = vadd.f32 %v4841, %v4860
        %v4864 = vadd.f32 %v4842, %v4860
        %v4865 = vadd.f32 %v4843, %v4860
        %v4866 = vadd.f32 %v4844, %v4860
        %v4867 = vadd.f32 %v4845, %v4860
        %v4868 = vadd.f32 %v4846, %v4860
        %v4869 = vadd.f32 %v4847, %v4860
        %v4870 = vadd.f32 %v4848, %v4860
        %v4871 = vadd.f32 %v4849, %v4860
        %v4872 = vadd.f32 %v4850, %v4860
        %v4873 = vadd.f32 %v4851, %v4860
        %v4874 = vadd.f32 %v4852, %v4860
        %v4875 = vadd.f32 %v4853, %v4860
        %v4876 = vadd.f32 %v4854, %v4860
        %v4877 = vadd.f32 %v4855, %v4860
        %v4878 = vld [vmem:[%s9 + $0x10] sm:$0xff]
        %v4879 = vmax.f32 %v4862, 0.0
        %v4880 = vmax.f32 %v4863, 0.0
        %v4881 = vmax.f32 %v4864, 0.0
        %v4882 = vmax.f32 %v4865, 0.0
        %v4883 = vmax.f32 %v4866, 0.0
        %v4884 = vmax.f32 %v4867, 0.0
        %v4885 = vmax.f32 %v4868, 0.0
        %v4886 = vmax.f32 %v4869, 0.0
        %v4887 = vmax.f32 %v4870, 0.0
        %v4888 = vmax.f32 %v4871, 0.0
        %v4889 = vmax.f32 %v4872, 0.0
        %v4890 = vmax.f32 %v4873, 0.0
        %v4891 = vmax.f32 %v4874, 0.0
        %v4892 = vmax.f32 %v4875, 0.0
        %v4893 = vmax.f32 %v4876, 0.0
        %v4894 = vmax.f32 %v4877, 0.0
        %v4895 = vmin.f32 %v4862, 0.0
        %v4896 = vmin.f32 %v4863, 0.0
        %v4897 = vmin.f32 %v4864, 0.0
        %v4898 = vmin.f32 %v4865, 0.0
        %v4899 = vmin.f32 %v4866, 0.0
        %v4900 = vmin.f32 %v4867, 0.0
        %v4901 = vmin.f32 %v4868, 0.0
        %v4902 = vmin.f32 %v4869, 0.0
        %v4903 = vmin.f32 %v4870, 0.0
        %v4904 = vmin.f32 %v4871, 0.0
        %v4905 = vmin.f32 %v4872, 0.0
        %v4906 = vmin.f32 %v4873, 0.0
        %v4907 = vmin.f32 %v4874, 0.0
        %v4908 = vmin.f32 %v4875, 0.0
        %v4909 = vmin.f32 %v4876, 0.0
        %v4910 = vmin.f32 %v4877, 0.0
        %4912 = vset.pattern.permute.xlu0 0
        %4913 = vperm.xlu0 %4912, %v4878
        %v4914 = vpop.permute.xlu0 %4913
        %v4916 = vmul.f32 %v4914, %v4895
        %v4917 = vmul.f32 %v4914, %v4896
        %v4918 = vmul.f32 %v4914, %v4897
        %v4919 = vmul.f32 %v4914, %v4898
        %v4920 = vmul.f32 %v4914, %v4899
        %v4921 = vmul.f32 %v4914, %v4900
        %v4922 = vmul.f32 %v4914, %v4901
        %v4923 = vmul.f32 %v4914, %v4902
        %v4924 = vmul.f32 %v4914, %v4903
        %v4925 = vmul.f32 %v4914, %v4904
        %v4926 = vmul.f32 %v4914, %v4905
        %v4927 = vmul.f32 %v4914, %v4906
        %v4928 = vmul.f32 %v4914, %v4907
        %v4929 = vmul.f32 %v4914, %v4908
        %v4930 = vmul.f32 %v4914, %v4909
        %v4931 = vmul.f32 %v4914, %v4910
        %v4932 = vadd.f32 %v4879, %v4916
        %v4933 = vadd.f32 %v4880, %v4917
        %v4934 = vadd.f32 %v4881, %v4918
        %v4935 = vadd.f32 %v4882, %v4919
        %v4936 = vadd.f32 %v4883, %v4920
        %v4937 = vadd.f32 %v4884, %v4921
        %v4938 = vadd.f32 %v4885, %v4922
        %v4939 = vadd.f32 %v4886, %v4923
        %v4940 = vadd.f32 %v4887, %v4924
        %v4941 = vadd.f32 %v4888, %v4925
        %v4942 = vadd.f32 %v4889, %v4926
        %v4943 = vadd.f32 %v4890, %v4927
        %v4944 = vadd.f32 %v4891, %v4928
        %v4945 = vadd.f32 %v4892, %v4929
        %v4946 = vadd.f32 %v4893, %v4930
        %v4947 = vadd.f32 %v4894, %v4931
        %4948 = vst [vmem:[#allocation2 + $0x100] sm:$0xff] %v4932
        %4949 = vst [vmem:[#allocation2 + $0x108] sm:$0xff] %v4933
        %4950 = vst [vmem:[#allocation2 + $0x110] sm:$0xff] %v4934
        %4951 = vst [vmem:[#allocation2 + $0x118] sm:$0xff] %v4935
        %4952 = vst [vmem:[#allocation2 + $0x120] sm:$0xff] %v4936
        %4953 = vst [vmem:[#allocation2 + $0x128] sm:$0xff] %v4937
        %4954 = vst [vmem:[#allocation2 + $0x130] sm:$0xff] %v4938
        %4955 = vst [vmem:[#allocation2 + $0x138] sm:$0xff] %v4939
        %4956 = vst [vmem:[#allocation2 + $0x140] sm:$0xff] %v4940
        %4957 = vst [vmem:[#allocation2 + $0x148] sm:$0xff] %v4941
        %4958 = vst [vmem:[#allocation2 + $0x150] sm:$0xff] %v4942
        %4959 = vst [vmem:[#allocation2 + $0x158] sm:$0xff] %v4943
        %4960 = vst [vmem:[#allocation2 + $0x160] sm:$0xff] %v4944
        %4961 = vst [vmem:[#allocation2 + $0x168] sm:$0xff] %v4945
        %4962 = vst [vmem:[#allocation2 + $0x170] sm:$0xff] %v4946
        %4963 = vst [vmem:[#allocation2 + $0x178] sm:$0xff] %v4947
        %s4964 = scalar_lea.vmem %s6, 216
        %v4965 = vld [vmem:[%s4964] sm:$0xff]
        %v4966 = vld [vmem:[%s4964 + $0x8] sm:$0xff]
        %v4967 = vld [vmem:[%s4964 + $0x10] sm:$0xff]
        %v4968 = vld [vmem:[%s4964 + $0x18] sm:$0xff]
        %v4969 = vld [vmem:[%s4964 + $0x20] sm:$0xff]
        %v4970 = vld [vmem:[%s4964 + $0x28] sm:$0xff]
        %v4971 = vld [vmem:[%s4964 + $0x30] sm:$0xff]
        %v4972 = vld [vmem:[%s4964 + $0x38] sm:$0xff]
        %v4973 = vld [vmem:[%s4964 + $0x40] sm:$0xff]
        %4975 = vset.pattern.permute.xlu0 0
        %4976 = vperm.xlu0 %4975, %v4969
        %v4977 = vpop.permute.xlu0 %4976
        %v4979 = vmul.f32 %v1156, %v4977
        %v4980 = vmul.f32 %v1157, %v4977
        %v4981 = vmul.f32 %v1158, %v4977
        %v4982 = vmul.f32 %v1159, %v4977
        %v4983 = vmul.f32 %v1160, %v4977
        %v4984 = vmul.f32 %v1161, %v4977
        %v4985 = vmul.f32 %v1162, %v4977
        %v4986 = vmul.f32 %v1163, %v4977
        %v4987 = vmul.f32 %v1164, %v4977
        %v4988 = vmul.f32 %v1165, %v4977
        %v4989 = vmul.f32 %v1166, %v4977
        %v4990 = vmul.f32 %v1167, %v4977
        %v4991 = vmul.f32 %v1168, %v4977
        %v4992 = vmul.f32 %v1169, %v4977
        %v4993 = vmul.f32 %v1170, %v4977
        %v4994 = vmul.f32 %v1171, %v4977
        %4995 = vrot.lane.b32.xlu0 %v1156, 51
        %v4996 = vpop.permute.xlu0 %4995
        %4997 = vrot.lane.b32.xlu0 %v1157, 51
        %v4998 = vpop.permute.xlu0 %4997
        %4999 = vrot.lane.b32.xlu0 %v1158, 51
        %v5000 = vpop.permute.xlu0 %4999
        %5001 = vrot.lane.b32.xlu0 %v1159, 51
        %v5002 = vpop.permute.xlu0 %5001
        %5003 = vrot.lane.b32.xlu0 %v1160, 51
        %v5004 = vpop.permute.xlu0 %5003
        %5005 = vrot.lane.b32.xlu0 %v1161, 51
        %v5006 = vpop.permute.xlu0 %5005
        %5007 = vrot.lane.b32.xlu0 %v1162, 51
        %v5008 = vpop.permute.xlu0 %5007
        %5009 = vrot.lane.b32.xlu0 %v1163, 51
        %v5010 = vpop.permute.xlu0 %5009
        %5011 = vrot.lane.b32.xlu0 %v1164, 51
        %v5012 = vpop.permute.xlu0 %5011
        %5013 = vrot.lane.b32.xlu0 %v1165, 51
        %v5014 = vpop.permute.xlu0 %5013
        %5015 = vrot.lane.b32.xlu0 %v1166, 51
        %v5016 = vpop.permute.xlu0 %5015
        %5017 = vrot.lane.b32.xlu0 %v1167, 51
        %v5018 = vpop.permute.xlu0 %5017
        %5019 = vrot.lane.b32.xlu0 %v1168, 51
        %v5020 = vpop.permute.xlu0 %5019
        %5021 = vrot.lane.b32.xlu0 %v1169, 51
        %v5022 = vpop.permute.xlu0 %5021
        %5023 = vrot.lane.b32.xlu0 %v1170, 51
        %v5024 = vpop.permute.xlu0 %5023
        %5025 = vrot.lane.b32.xlu0 %v1171, 51
        %v5026 = vpop.permute.xlu0 %5025
        %vm5027 = vcmp.lt.s32.totalorder %v1239, 51
        %v5028 = vsel %vm5027, %v5024, %v5026
        %v5029 = vsel %vm5027, %v5022, %v5024
        %v5030 = vsel %vm5027, %v5020, %v5022
        %v5031 = vsel %vm5027, %v5018, %v5020
        %v5032 = vsel %vm5027, %v5016, %v5018
        %v5033 = vsel %vm5027, %v5014, %v5016
        %v5034 = vsel %vm5027, %v5012, %v5014
        %v5035 = vsel %vm5027, %v5010, %v5012
        %v5036 = vsel %vm5027, %v5008, %v5010
        %v5037 = vsel %vm5027, %v5006, %v5008
        %v5038 = vsel %vm5027, %v5004, %v5006
        %v5039 = vsel %vm5027, %v5002, %v5004
        %v5040 = vsel %vm5027, %v5000, %v5002
        %v5041 = vsel %vm5027, %v4998, %v5000
        %v5042 = vsel %vm5027, %v4996, %v4998
        %v5043 = vsel %vm5027, %v5026, %v4996
        %vm5044 = vcmp.ge.s32.totalorder %v1172, 3
        %vm5045 = vcmp.ge.s32.totalorder %v1173, 3
        %vm5046 = vcmp.ge.s32.totalorder %v1174, 3
        %vm5047 = vcmp.ge.s32.totalorder %v1175, 3
        %vm5048 = vmand %vm5044, %vm5046
        %vm5049 = vmand %vm5045, %vm5047
        %v5050 = vsel %vm5048, 1, 0
        %v5051 = vsel %vm5049, 1, 0
        %v5052 = vlaneseq
        %v5053 = vshrl.u32 %v5052, 7
        %v5054 = vsub.s32 0, %v5053
        %v5055 = vrot.slane %v5050, %v5054
        %v5056 = vlaneseq
        %v5057 = vshrl.u32 %v5056, 7
        %v5058 = vsub.s32 1, %v5057
        %v5059 = vrot.slane %v5050, %v5058
        %v5060 = vlaneseq
        %v5061 = vshrl.u32 %v5060, 7
        %v5062 = vsub.s32 2, %v5061
        %v5063 = vrot.slane %v5050, %v5062
        %v5064 = vlaneseq
        %v5065 = vshrl.u32 %v5064, 7
        %v5066 = vsub.s32 3, %v5065
        %v5067 = vrot.slane %v5050, %v5066
        %v5068 = vlaneseq
        %v5069 = vshrl.u32 %v5068, 7
        %v5070 = vsub.s32 4, %v5069
        %v5071 = vrot.slane %v5050, %v5070
        %v5072 = vlaneseq
        %v5073 = vshrl.u32 %v5072, 7
        %v5074 = vsub.s32 5, %v5073
        %v5075 = vrot.slane %v5050, %v5074
        %v5076 = vlaneseq
        %v5077 = vshrl.u32 %v5076, 7
        %v5078 = vsub.s32 6, %v5077
        %v5079 = vrot.slane %v5050, %v5078
        %v5080 = vlaneseq
        %v5081 = vshrl.u32 %v5080, 7
        %v5082 = vsub.s32 7, %v5081
        %v5083 = vrot.slane %v5050, %v5082
        %v5084 = vlaneseq
        %v5085 = vshrl.u32 %v5084, 7
        %v5086 = vsub.s32 0, %v5085
        %v5087 = vrot.slane %v5051, %v5086
        %v5088 = vlaneseq
        %v5089 = vshrl.u32 %v5088, 7
        %v5090 = vsub.s32 1, %v5089
        %v5091 = vrot.slane %v5051, %v5090
        %v5092 = vlaneseq
        %v5093 = vshrl.u32 %v5092, 7
        %v5094 = vsub.s32 2, %v5093
        %v5095 = vrot.slane %v5051, %v5094
        %v5096 = vlaneseq
        %v5097 = vshrl.u32 %v5096, 7
        %v5098 = vsub.s32 3, %v5097
        %v5099 = vrot.slane %v5051, %v5098
        %v5100 = vlaneseq
        %v5101 = vshrl.u32 %v5100, 7
        %v5102 = vsub.s32 4, %v5101
        %v5103 = vrot.slane %v5051, %v5102
        %v5104 = vlaneseq
        %v5105 = vshrl.u32 %v5104, 7
        %v5106 = vsub.s32 5, %v5105
        %v5107 = vrot.slane %v5051, %v5106
        %v5108 = vlaneseq
        %v5109 = vshrl.u32 %v5108, 7
        %v5110 = vsub.s32 6, %v5109
        %v5111 = vrot.slane %v5051, %v5110
        %v5112 = vlaneseq
        %v5113 = vshrl.u32 %v5112, 7
        %v5114 = vsub.s32 7, %v5113
        %v5115 = vrot.slane %v5051, %v5114
        %vm5116 = vcmp.eq.s32.totalorder %v5055, 1
        %vm5117 = vcmp.eq.s32.totalorder %v5059, 1
        %vm5118 = vcmp.eq.s32.totalorder %v5063, 1
        %vm5119 = vcmp.eq.s32.totalorder %v5067, 1
        %vm5120 = vcmp.eq.s32.totalorder %v5071, 1
        %vm5121 = vcmp.eq.s32.totalorder %v5075, 1
        %vm5122 = vcmp.eq.s32.totalorder %v5079, 1
        %vm5123 = vcmp.eq.s32.totalorder %v5083, 1
        %vm5124 = vcmp.eq.s32.totalorder %v5087, 1
        %vm5125 = vcmp.eq.s32.totalorder %v5091, 1
        %vm5126 = vcmp.eq.s32.totalorder %v5095, 1
        %vm5127 = vcmp.eq.s32.totalorder %v5099, 1
        %vm5128 = vcmp.eq.s32.totalorder %v5103, 1
        %vm5129 = vcmp.eq.s32.totalorder %v5107, 1
        %vm5130 = vcmp.eq.s32.totalorder %v5111, 1
        %vm5131 = vcmp.eq.s32.totalorder %v5115, 1
        %v5132 = vsel %vm5116, %v5043, 0.0
        %v5133 = vsel %vm5117, %v5042, 0.0
        %v5134 = vsel %vm5118, %v5041, 0.0
        %v5135 = vsel %vm5119, %v5040, 0.0
        %v5136 = vsel %vm5120, %v5039, 0.0
        %v5137 = vsel %vm5121, %v5038, 0.0
        %v5138 = vsel %vm5122, %v5037, 0.0
        %v5139 = vsel %vm5123, %v5036, 0.0
        %v5140 = vsel %vm5124, %v5035, 0.0
        %v5141 = vsel %vm5125, %v5034, 0.0
        %v5142 = vsel %vm5126, %v5033, 0.0
        %v5143 = vsel %vm5127, %v5032, 0.0
        %v5144 = vsel %vm5128, %v5031, 0.0
        %v5145 = vsel %vm5129, %v5030, 0.0
        %v5146 = vsel %vm5130, %v5029, 0.0
        %v5147 = vsel %vm5131, %v5028, 0.0
        %5149 = vset.pattern.permute.xlu0 0
        %5150 = vperm.xlu0 %5149, %v4965
        %v5151 = vpop.permute.xlu0 %5150
        %v5153 = vmul.f32 %v5132, %v5151
        %v5154 = vmul.f32 %v5133, %v5151
        %v5155 = vmul.f32 %v5134, %v5151
        %v5156 = vmul.f32 %v5135, %v5151
        %v5157 = vmul.f32 %v5136, %v5151
        %v5158 = vmul.f32 %v5137, %v5151
        %v5159 = vmul.f32 %v5138, %v5151
        %v5160 = vmul.f32 %v5139, %v5151
        %v5161 = vmul.f32 %v5140, %v5151
        %v5162 = vmul.f32 %v5141, %v5151
        %v5163 = vmul.f32 %v5142, %v5151
        %v5164 = vmul.f32 %v5143, %v5151
        %v5165 = vmul.f32 %v5144, %v5151
        %v5166 = vmul.f32 %v5145, %v5151
        %v5167 = vmul.f32 %v5146, %v5151
        %v5168 = vmul.f32 %v5147, %v5151
        %v5169 = vadd.f32 %v4979, %v5153
        %v5170 = vadd.f32 %v4980, %v5154
        %v5171 = vadd.f32 %v4981, %v5155
        %v5172 = vadd.f32 %v4982, %v5156
        %v5173 = vadd.f32 %v4983, %v5157
        %v5174 = vadd.f32 %v4984, %v5158
        %v5175 = vadd.f32 %v4985, %v5159
        %v5176 = vadd.f32 %v4986, %v5160
        %v5177 = vadd.f32 %v4987, %v5161
        %v5178 = vadd.f32 %v4988, %v5162
        %v5179 = vadd.f32 %v4989, %v5163
        %v5180 = vadd.f32 %v4990, %v5164
        %v5181 = vadd.f32 %v4991, %v5165
        %v5182 = vadd.f32 %v4992, %v5166
        %v5183 = vadd.f32 %v4993, %v5167
        %v5184 = vadd.f32 %v4994, %v5168
        %5185 = vrot.lane.b32.xlu0 %v1156, 48
        %v5186 = vpop.permute.xlu0 %5185
        %5187 = vrot.lane.b32.xlu0 %v1157, 48
        %v5188 = vpop.permute.xlu0 %5187
        %5189 = vrot.lane.b32.xlu0 %v1158, 48
        %v5190 = vpop.permute.xlu0 %5189
        %5191 = vrot.lane.b32.xlu0 %v1159, 48
        %v5192 = vpop.permute.xlu0 %5191
        %5193 = vrot.lane.b32.xlu0 %v1160, 48
        %v5194 = vpop.permute.xlu0 %5193
        %5195 = vrot.lane.b32.xlu0 %v1161, 48
        %v5196 = vpop.permute.xlu0 %5195
        %5197 = vrot.lane.b32.xlu0 %v1162, 48
        %v5198 = vpop.permute.xlu0 %5197
        %5199 = vrot.lane.b32.xlu0 %v1163, 48
        %v5200 = vpop.permute.xlu0 %5199
        %5201 = vrot.lane.b32.xlu0 %v1164, 48
        %v5202 = vpop.permute.xlu0 %5201
        %5203 = vrot.lane.b32.xlu0 %v1165, 48
        %v5204 = vpop.permute.xlu0 %5203
        %5205 = vrot.lane.b32.xlu0 %v1166, 48
        %v5206 = vpop.permute.xlu0 %5205
        %5207 = vrot.lane.b32.xlu0 %v1167, 48
        %v5208 = vpop.permute.xlu0 %5207
        %5209 = vrot.lane.b32.xlu0 %v1168, 48
        %v5210 = vpop.permute.xlu0 %5209
        %5211 = vrot.lane.b32.xlu0 %v1169, 48
        %v5212 = vpop.permute.xlu0 %5211
        %5213 = vrot.lane.b32.xlu0 %v1170, 48
        %v5214 = vpop.permute.xlu0 %5213
        %5215 = vrot.lane.b32.xlu0 %v1171, 48
        %v5216 = vpop.permute.xlu0 %5215
        %vm5217 = vcmp.lt.s32.totalorder %v1239, 48
        %v5218 = vsel %vm5217, %v5214, %v5216
        %v5219 = vsel %vm5217, %v5212, %v5214
        %v5220 = vsel %vm5217, %v5210, %v5212
        %v5221 = vsel %vm5217, %v5208, %v5210
        %v5222 = vsel %vm5217, %v5206, %v5208
        %v5223 = vsel %vm5217, %v5204, %v5206
        %v5224 = vsel %vm5217, %v5202, %v5204
        %v5225 = vsel %vm5217, %v5200, %v5202
        %v5226 = vsel %vm5217, %v5198, %v5200
        %v5227 = vsel %vm5217, %v5196, %v5198
        %v5228 = vsel %vm5217, %v5194, %v5196
        %v5229 = vsel %vm5217, %v5192, %v5194
        %v5230 = vsel %vm5217, %v5190, %v5192
        %v5231 = vsel %vm5217, %v5188, %v5190
        %v5232 = vsel %vm5217, %v5186, %v5188
        %v5233 = vsel %vm5217, %v5216, %v5186
        %v5234 = vsel %vm5044, 1, 0
        %v5235 = vsel %vm5045, 1, 0
        %v5236 = vlaneseq
        %v5237 = vshrl.u32 %v5236, 7
        %v5238 = vsub.s32 0, %v5237
        %v5239 = vrot.slane %v5234, %v5238
        %v5240 = vlaneseq
        %v5241 = vshrl.u32 %v5240, 7
        %v5242 = vsub.s32 1, %v5241
        %v5243 = vrot.slane %v5234, %v5242
        %v5244 = vlaneseq
        %v5245 = vshrl.u32 %v5244, 7
        %v5246 = vsub.s32 2, %v5245
        %v5247 = vrot.slane %v5234, %v5246
        %v5248 = vlaneseq
        %v5249 = vshrl.u32 %v5248, 7
        %v5250 = vsub.s32 3, %v5249
        %v5251 = vrot.slane %v5234, %v5250
        %v5252 = vlaneseq
        %v5253 = vshrl.u32 %v5252, 7
        %v5254 = vsub.s32 4, %v5253
        %v5255 = vrot.slane %v5234, %v5254
        %v5256 = vlaneseq
        %v5257 = vshrl.u32 %v5256, 7
        %v5258 = vsub.s32 5, %v5257
        %v5259 = vrot.slane %v5234, %v5258
        %v5260 = vlaneseq
        %v5261 = vshrl.u32 %v5260, 7
        %v5262 = vsub.s32 6, %v5261
        %v5263 = vrot.slane %v5234, %v5262
        %v5264 = vlaneseq
        %v5265 = vshrl.u32 %v5264, 7
        %v5266 = vsub.s32 7, %v5265
        %v5267 = vrot.slane %v5234, %v5266
        %v5268 = vlaneseq
        %v5269 = vshrl.u32 %v5268, 7
        %v5270 = vsub.s32 0, %v5269
        %v5271 = vrot.slane %v5235, %v5270
        %v5272 = vlaneseq
        %v5273 = vshrl.u32 %v5272, 7
        %v5274 = vsub.s32 1, %v5273
        %v5275 = vrot.slane %v5235, %v5274
        %v5276 = vlaneseq
        %v5277 = vshrl.u32 %v5276, 7
        %v5278 = vsub.s32 2, %v5277
        %v5279 = vrot.slane %v5235, %v5278
        %v5280 = vlaneseq
        %v5281 = vshrl.u32 %v5280, 7
        %v5282 = vsub.s32 3, %v5281
        %v5283 = vrot.slane %v5235, %v5282
        %v5284 = vlaneseq
        %v5285 = vshrl.u32 %v5284, 7
        %v5286 = vsub.s32 4, %v5285
        %v5287 = vrot.slane %v5235, %v5286
        %v5288 = vlaneseq
        %v5289 = vshrl.u32 %v5288, 7
        %v5290 = vsub.s32 5, %v5289
        %v5291 = vrot.slane %v5235, %v5290
        %v5292 = vlaneseq
        %v5293 = vshrl.u32 %v5292, 7
        %v5294 = vsub.s32 6, %v5293
        %v5295 = vrot.slane %v5235, %v5294
        %v5296 = vlaneseq
        %v5297 = vshrl.u32 %v5296, 7
        %v5298 = vsub.s32 7, %v5297
        %v5299 = vrot.slane %v5235, %v5298
        %vm5300 = vcmp.eq.s32.totalorder %v5239, 1
        %vm5301 = vcmp.eq.s32.totalorder %v5243, 1
        %vm5302 = vcmp.eq.s32.totalorder %v5247, 1
        %vm5303 = vcmp.eq.s32.totalorder %v5251, 1
        %vm5304 = vcmp.eq.s32.totalorder %v5255, 1
        %vm5305 = vcmp.eq.s32.totalorder %v5259, 1
        %vm5306 = vcmp.eq.s32.totalorder %v5263, 1
        %vm5307 = vcmp.eq.s32.totalorder %v5267, 1
        %vm5308 = vcmp.eq.s32.totalorder %v5271, 1
        %vm5309 = vcmp.eq.s32.totalorder %v5275, 1
        %vm5310 = vcmp.eq.s32.totalorder %v5279, 1
        %vm5311 = vcmp.eq.s32.totalorder %v5283, 1
        %vm5312 = vcmp.eq.s32.totalorder %v5287, 1
        %vm5313 = vcmp.eq.s32.totalorder %v5291, 1
        %vm5314 = vcmp.eq.s32.totalorder %v5295, 1
        %vm5315 = vcmp.eq.s32.totalorder %v5299, 1
        %v5316 = vsel %vm5300, %v5233, 0.0
        %v5317 = vsel %vm5301, %v5232, 0.0
        %v5318 = vsel %vm5302, %v5231, 0.0
        %v5319 = vsel %vm5303, %v5230, 0.0
        %v5320 = vsel %vm5304, %v5229, 0.0
        %v5321 = vsel %vm5305, %v5228, 0.0
        %v5322 = vsel %vm5306, %v5227, 0.0
        %v5323 = vsel %vm5307, %v5226, 0.0
        %v5324 = vsel %vm5308, %v5225, 0.0
        %v5325 = vsel %vm5309, %v5224, 0.0
        %v5326 = vsel %vm5310, %v5223, 0.0
        %v5327 = vsel %vm5311, %v5222, 0.0
        %v5328 = vsel %vm5312, %v5221, 0.0
        %v5329 = vsel %vm5313, %v5220, 0.0
        %v5330 = vsel %vm5314, %v5219, 0.0
        %v5331 = vsel %vm5315, %v5218, 0.0
        %5333 = vset.pattern.permute.xlu0 0
        %5334 = vperm.xlu0 %5333, %v4966
        %v5335 = vpop.permute.xlu0 %5334
        %v5337 = vmul.f32 %v5316, %v5335
        %v5338 = vmul.f32 %v5317, %v5335
        %v5339 = vmul.f32 %v5318, %v5335
        %v5340 = vmul.f32 %v5319, %v5335
        %v5341 = vmul.f32 %v5320, %v5335
        %v5342 = vmul.f32 %v5321, %v5335
        %v5343 = vmul.f32 %v5322, %v5335
        %v5344 = vmul.f32 %v5323, %v5335
        %v5345 = vmul.f32 %v5324, %v5335
        %v5346 = vmul.f32 %v5325, %v5335
        %v5347 = vmul.f32 %v5326, %v5335
        %v5348 = vmul.f32 %v5327, %v5335
        %v5349 = vmul.f32 %v5328, %v5335
        %v5350 = vmul.f32 %v5329, %v5335
        %v5351 = vmul.f32 %v5330, %v5335
        %v5352 = vmul.f32 %v5331, %v5335
        %v5353 = vadd.f32 %v5169, %v5337
        %v5354 = vadd.f32 %v5170, %v5338
        %v5355 = vadd.f32 %v5171, %v5339
        %v5356 = vadd.f32 %v5172, %v5340
        %v5357 = vadd.f32 %v5173, %v5341
        %v5358 = vadd.f32 %v5174, %v5342
        %v5359 = vadd.f32 %v5175, %v5343
        %v5360 = vadd.f32 %v5176, %v5344
        %v5361 = vadd.f32 %v5177, %v5345
        %v5362 = vadd.f32 %v5178, %v5346
        %v5363 = vadd.f32 %v5179, %v5347
        %v5364 = vadd.f32 %v5180, %v5348
        %v5365 = vadd.f32 %v5181, %v5349
        %v5366 = vadd.f32 %v5182, %v5350
        %v5367 = vadd.f32 %v5183, %v5351
        %v5368 = vadd.f32 %v5184, %v5352
        %5369 = vrot.lane.b32.xlu0 %v1156, 45
        %v5370 = vpop.permute.xlu0 %5369
        %5371 = vrot.lane.b32.xlu0 %v1157, 45
        %v5372 = vpop.permute.xlu0 %5371
        %5373 = vrot.lane.b32.xlu0 %v1158, 45
        %v5374 = vpop.permute.xlu0 %5373
        %5375 = vrot.lane.b32.xlu0 %v1159, 45
        %v5376 = vpop.permute.xlu0 %5375
        %5377 = vrot.lane.b32.xlu0 %v1160, 45
        %v5378 = vpop.permute.xlu0 %5377
        %5379 = vrot.lane.b32.xlu0 %v1161, 45
        %v5380 = vpop.permute.xlu0 %5379
        %5381 = vrot.lane.b32.xlu0 %v1162, 45
        %v5382 = vpop.permute.xlu0 %5381
        %5383 = vrot.lane.b32.xlu0 %v1163, 45
        %v5384 = vpop.permute.xlu0 %5383
        %5385 = vrot.lane.b32.xlu0 %v1164, 45
        %v5386 = vpop.permute.xlu0 %5385
        %5387 = vrot.lane.b32.xlu0 %v1165, 45
        %v5388 = vpop.permute.xlu0 %5387
        %5389 = vrot.lane.b32.xlu0 %v1166, 45
        %v5390 = vpop.permute.xlu0 %5389
        %5391 = vrot.lane.b32.xlu0 %v1167, 45
        %v5392 = vpop.permute.xlu0 %5391
        %5393 = vrot.lane.b32.xlu0 %v1168, 45
        %v5394 = vpop.permute.xlu0 %5393
        %5395 = vrot.lane.b32.xlu0 %v1169, 45
        %v5396 = vpop.permute.xlu0 %5395
        %5397 = vrot.lane.b32.xlu0 %v1170, 45
        %v5398 = vpop.permute.xlu0 %5397
        %5399 = vrot.lane.b32.xlu0 %v1171, 45
        %v5400 = vpop.permute.xlu0 %5399
        %vm5401 = vcmp.lt.s32.totalorder %v1239, 45
        %v5402 = vsel %vm5401, %v5398, %v5400
        %v5403 = vsel %vm5401, %v5396, %v5398
        %v5404 = vsel %vm5401, %v5394, %v5396
        %v5405 = vsel %vm5401, %v5392, %v5394
        %v5406 = vsel %vm5401, %v5390, %v5392
        %v5407 = vsel %vm5401, %v5388, %v5390
        %v5408 = vsel %vm5401, %v5386, %v5388
        %v5409 = vsel %vm5401, %v5384, %v5386
        %v5410 = vsel %vm5401, %v5382, %v5384
        %v5411 = vsel %vm5401, %v5380, %v5382
        %v5412 = vsel %vm5401, %v5378, %v5380
        %v5413 = vsel %vm5401, %v5376, %v5378
        %v5414 = vsel %vm5401, %v5374, %v5376
        %v5415 = vsel %vm5401, %v5372, %v5374
        %v5416 = vsel %vm5401, %v5370, %v5372
        %v5417 = vsel %vm5401, %v5400, %v5370
        %vm5418 = vcmp.lt.s32.totalorder %v1174, 13
        %vm5419 = vcmp.lt.s32.totalorder %v1175, 13
        %vm5420 = vmand %vm5044, %vm5418
        %vm5421 = vmand %vm5045, %vm5419
        %v5422 = vsel %vm5420, 1, 0
        %v5423 = vsel %vm5421, 1, 0
        %v5424 = vlaneseq
        %v5425 = vshrl.u32 %v5424, 7
        %v5426 = vsub.s32 0, %v5425
        %v5427 = vrot.slane %v5422, %v5426
        %v5428 = vlaneseq
        %v5429 = vshrl.u32 %v5428, 7
        %v5430 = vsub.s32 1, %v5429
        %v5431 = vrot.slane %v5422, %v5430
        %v5432 = vlaneseq
        %v5433 = vshrl.u32 %v5432, 7
        %v5434 = vsub.s32 2, %v5433
        %v5435 = vrot.slane %v5422, %v5434
        %v5436 = vlaneseq
        %v5437 = vshrl.u32 %v5436, 7
        %v5438 = vsub.s32 3, %v5437
        %v5439 = vrot.slane %v5422, %v5438
        %v5440 = vlaneseq
        %v5441 = vshrl.u32 %v5440, 7
        %v5442 = vsub.s32 4, %v5441
        %v5443 = vrot.slane %v5422, %v5442
        %v5444 = vlaneseq
        %v5445 = vshrl.u32 %v5444, 7
        %v5446 = vsub.s32 5, %v5445
        %v5447 = vrot.slane %v5422, %v5446
        %v5448 = vlaneseq
        %v5449 = vshrl.u32 %v5448, 7
        %v5450 = vsub.s32 6, %v5449
        %v5451 = vrot.slane %v5422, %v5450
        %v5452 = vlaneseq
        %v5453 = vshrl.u32 %v5452, 7
        %v5454 = vsub.s32 7, %v5453
        %v5455 = vrot.slane %v5422, %v5454
        %v5456 = vlaneseq
        %v5457 = vshrl.u32 %v5456, 7
        %v5458 = vsub.s32 0, %v5457
        %v5459 = vrot.slane %v5423, %v5458
        %v5460 = vlaneseq
        %v5461 = vshrl.u32 %v5460, 7
        %v5462 = vsub.s32 1, %v5461
        %v5463 = vrot.slane %v5423, %v5462
        %v5464 = vlaneseq
        %v5465 = vshrl.u32 %v5464, 7
        %v5466 = vsub.s32 2, %v5465
        %v5467 = vrot.slane %v5423, %v5466
        %v5468 = vlaneseq
        %v5469 = vshrl.u32 %v5468, 7
        %v5470 = vsub.s32 3, %v5469
        %v5471 = vrot.slane %v5423, %v5470
        %v5472 = vlaneseq
        %v5473 = vshrl.u32 %v5472, 7
        %v5474 = vsub.s32 4, %v5473
        %v5475 = vrot.slane %v5423, %v5474
        %v5476 = vlaneseq
        %v5477 = vshrl.u32 %v5476, 7
        %v5478 = vsub.s32 5, %v5477
        %v5479 = vrot.slane %v5423, %v5478
        %v5480 = vlaneseq
        %v5481 = vshrl.u32 %v5480, 7
        %v5482 = vsub.s32 6, %v5481
        %v5483 = vrot.slane %v5423, %v5482
        %v5484 = vlaneseq
        %v5485 = vshrl.u32 %v5484, 7
        %v5486 = vsub.s32 7, %v5485
        %v5487 = vrot.slane %v5423, %v5486
        %vm5488 = vcmp.eq.s32.totalorder %v5427, 1
        %vm5489 = vcmp.eq.s32.totalorder %v5431, 1
        %vm5490 = vcmp.eq.s32.totalorder %v5435, 1
        %vm5491 = vcmp.eq.s32.totalorder %v5439, 1
        %vm5492 = vcmp.eq.s32.totalorder %v5443, 1
        %vm5493 = vcmp.eq.s32.totalorder %v5447, 1
        %vm5494 = vcmp.eq.s32.totalorder %v5451, 1
        %vm5495 = vcmp.eq.s32.totalorder %v5455, 1
        %vm5496 = vcmp.eq.s32.totalorder %v5459, 1
        %vm5497 = vcmp.eq.s32.totalorder %v5463, 1
        %vm5498 = vcmp.eq.s32.totalorder %v5467, 1
        %vm5499 = vcmp.eq.s32.totalorder %v5471, 1
        %vm5500 = vcmp.eq.s32.totalorder %v5475, 1
        %vm5501 = vcmp.eq.s32.totalorder %v5479, 1
        %vm5502 = vcmp.eq.s32.totalorder %v5483, 1
        %vm5503 = vcmp.eq.s32.totalorder %v5487, 1
        %v5504 = vsel %vm5488, %v5417, 0.0
        %v5505 = vsel %vm5489, %v5416, 0.0
        %v5506 = vsel %vm5490, %v5415, 0.0
        %v5507 = vsel %vm5491, %v5414, 0.0
        %v5508 = vsel %vm5492, %v5413, 0.0
        %v5509 = vsel %vm5493, %v5412, 0.0
        %v5510 = vsel %vm5494, %v5411, 0.0
        %v5511 = vsel %vm5495, %v5410, 0.0
        %v5512 = vsel %vm5496, %v5409, 0.0
        %v5513 = vsel %vm5497, %v5408, 0.0
        %v5514 = vsel %vm5498, %v5407, 0.0
        %v5515 = vsel %vm5499, %v5406, 0.0
        %v5516 = vsel %vm5500, %v5405, 0.0
        %v5517 = vsel %vm5501, %v5404, 0.0
        %v5518 = vsel %vm5502, %v5403, 0.0
        %v5519 = vsel %vm5503, %v5402, 0.0
        %5521 = vset.pattern.permute.xlu0 0
        %5522 = vperm.xlu0 %5521, %v4967
        %v5523 = vpop.permute.xlu0 %5522
        %v5525 = vmul.f32 %v5504, %v5523
        %v5526 = vmul.f32 %v5505, %v5523
        %v5527 = vmul.f32 %v5506, %v5523
        %v5528 = vmul.f32 %v5507, %v5523
        %v5529 = vmul.f32 %v5508, %v5523
        %v5530 = vmul.f32 %v5509, %v5523
        %v5531 = vmul.f32 %v5510, %v5523
        %v5532 = vmul.f32 %v5511, %v5523
        %v5533 = vmul.f32 %v5512, %v5523
        %v5534 = vmul.f32 %v5513, %v5523
        %v5535 = vmul.f32 %v5514, %v5523
        %v5536 = vmul.f32 %v5515, %v5523
        %v5537 = vmul.f32 %v5516, %v5523
        %v5538 = vmul.f32 %v5517, %v5523
        %v5539 = vmul.f32 %v5518, %v5523
        %v5540 = vmul.f32 %v5519, %v5523
        %v5541 = vadd.f32 %v5353, %v5525
        %v5542 = vadd.f32 %v5354, %v5526
        %v5543 = vadd.f32 %v5355, %v5527
        %v5544 = vadd.f32 %v5356, %v5528
        %v5545 = vadd.f32 %v5357, %v5529
        %v5546 = vadd.f32 %v5358, %v5530
        %v5547 = vadd.f32 %v5359, %v5531
        %v5548 = vadd.f32 %v5360, %v5532
        %v5549 = vadd.f32 %v5361, %v5533
        %v5550 = vadd.f32 %v5362, %v5534
        %v5551 = vadd.f32 %v5363, %v5535
        %v5552 = vadd.f32 %v5364, %v5536
        %v5553 = vadd.f32 %v5365, %v5537
        %v5554 = vadd.f32 %v5366, %v5538
        %v5555 = vadd.f32 %v5367, %v5539
        %v5556 = vadd.f32 %v5368, %v5540
        %5557 = vrot.lane.b32.xlu0 %v1156, 3
        %v5558 = vpop.permute.xlu0 %5557
        %5559 = vrot.lane.b32.xlu0 %v1157, 3
        %v5560 = vpop.permute.xlu0 %5559
        %5561 = vrot.lane.b32.xlu0 %v1158, 3
        %v5562 = vpop.permute.xlu0 %5561
        %5563 = vrot.lane.b32.xlu0 %v1159, 3
        %v5564 = vpop.permute.xlu0 %5563
        %5565 = vrot.lane.b32.xlu0 %v1160, 3
        %v5566 = vpop.permute.xlu0 %5565
        %5567 = vrot.lane.b32.xlu0 %v1161, 3
        %v5568 = vpop.permute.xlu0 %5567
        %5569 = vrot.lane.b32.xlu0 %v1162, 3
        %v5570 = vpop.permute.xlu0 %5569
        %5571 = vrot.lane.b32.xlu0 %v1163, 3
        %v5572 = vpop.permute.xlu0 %5571
        %5573 = vrot.lane.b32.xlu0 %v1164, 3
        %v5574 = vpop.permute.xlu0 %5573
        %5575 = vrot.lane.b32.xlu0 %v1165, 3
        %v5576 = vpop.permute.xlu0 %5575
        %5577 = vrot.lane.b32.xlu0 %v1166, 3
        %v5578 = vpop.permute.xlu0 %5577
        %5579 = vrot.lane.b32.xlu0 %v1167, 3
        %v5580 = vpop.permute.xlu0 %5579
        %5581 = vrot.lane.b32.xlu0 %v1168, 3
        %v5582 = vpop.permute.xlu0 %5581
        %5583 = vrot.lane.b32.xlu0 %v1169, 3
        %v5584 = vpop.permute.xlu0 %5583
        %5585 = vrot.lane.b32.xlu0 %v1170, 3
        %v5586 = vpop.permute.xlu0 %5585
        %5587 = vrot.lane.b32.xlu0 %v1171, 3
        %v5588 = vpop.permute.xlu0 %5587
        %vm5589 = vcmp.lt.s32.totalorder %v1239, 3
        %v5590 = vsel %vm5589, %v5586, %v5588
        %v5591 = vsel %vm5589, %v5584, %v5586
        %v5592 = vsel %vm5589, %v5582, %v5584
        %v5593 = vsel %vm5589, %v5580, %v5582
        %v5594 = vsel %vm5589, %v5578, %v5580
        %v5595 = vsel %vm5589, %v5576, %v5578
        %v5596 = vsel %vm5589, %v5574, %v5576
        %v5597 = vsel %vm5589, %v5572, %v5574
        %v5598 = vsel %vm5589, %v5570, %v5572
        %v5599 = vsel %vm5589, %v5568, %v5570
        %v5600 = vsel %vm5589, %v5566, %v5568
        %v5601 = vsel %vm5589, %v5564, %v5566
        %v5602 = vsel %vm5589, %v5562, %v5564
        %v5603 = vsel %vm5589, %v5560, %v5562
        %v5604 = vsel %vm5589, %v5558, %v5560
        %v5605 = vsel %vm5589, %v5588, %v5558
        %v5606 = vsel %vm5046, 1, 0
        %v5607 = vsel %vm5047, 1, 0
        %v5608 = vlaneseq
        %v5609 = vshrl.u32 %v5608, 7
        %v5610 = vsub.s32 0, %v5609
        %v5611 = vrot.slane %v5606, %v5610
        %v5612 = vlaneseq
        %v5613 = vshrl.u32 %v5612, 7
        %v5614 = vsub.s32 1, %v5613
        %v5615 = vrot.slane %v5606, %v5614
        %v5616 = vlaneseq
        %v5617 = vshrl.u32 %v5616, 7
        %v5618 = vsub.s32 2, %v5617
        %v5619 = vrot.slane %v5606, %v5618
        %v5620 = vlaneseq
        %v5621 = vshrl.u32 %v5620, 7
        %v5622 = vsub.s32 3, %v5621
        %v5623 = vrot.slane %v5606, %v5622
        %v5624 = vlaneseq
        %v5625 = vshrl.u32 %v5624, 7
        %v5626 = vsub.s32 4, %v5625
        %v5627 = vrot.slane %v5606, %v5626
        %v5628 = vlaneseq
        %v5629 = vshrl.u32 %v5628, 7
        %v5630 = vsub.s32 5, %v5629
        %v5631 = vrot.slane %v5606, %v5630
        %v5632 = vlaneseq
        %v5633 = vshrl.u32 %v5632, 7
        %v5634 = vsub.s32 6, %v5633
        %v5635 = vrot.slane %v5606, %v5634
        %v5636 = vlaneseq
        %v5637 = vshrl.u32 %v5636, 7
        %v5638 = vsub.s32 7, %v5637
        %v5639 = vrot.slane %v5606, %v5638
        %v5640 = vlaneseq
        %v5641 = vshrl.u32 %v5640, 7
        %v5642 = vsub.s32 0, %v5641
        %v5643 = vrot.slane %v5607, %v5642
        %v5644 = vlaneseq
        %v5645 = vshrl.u32 %v5644, 7
        %v5646 = vsub.s32 1, %v5645
        %v5647 = vrot.slane %v5607, %v5646
        %v5648 = vlaneseq
        %v5649 = vshrl.u32 %v5648, 7
        %v5650 = vsub.s32 2, %v5649
        %v5651 = vrot.slane %v5607, %v5650
        %v5652 = vlaneseq
        %v5653 = vshrl.u32 %v5652, 7
        %v5654 = vsub.s32 3, %v5653
        %v5655 = vrot.slane %v5607, %v5654
        %v5656 = vlaneseq
        %v5657 = vshrl.u32 %v5656, 7
        %v5658 = vsub.s32 4, %v5657
        %v5659 = vrot.slane %v5607, %v5658
        %v5660 = vlaneseq
        %v5661 = vshrl.u32 %v5660, 7
        %v5662 = vsub.s32 5, %v5661
        %v5663 = vrot.slane %v5607, %v5662
        %v5664 = vlaneseq
        %v5665 = vshrl.u32 %v5664, 7
        %v5666 = vsub.s32 6, %v5665
        %v5667 = vrot.slane %v5607, %v5666
        %v5668 = vlaneseq
        %v5669 = vshrl.u32 %v5668, 7
        %v5670 = vsub.s32 7, %v5669
        %v5671 = vrot.slane %v5607, %v5670
        %vm5672 = vcmp.eq.s32.totalorder %v5611, 1
        %vm5673 = vcmp.eq.s32.totalorder %v5615, 1
        %vm5674 = vcmp.eq.s32.totalorder %v5619, 1
        %vm5675 = vcmp.eq.s32.totalorder %v5623, 1
        %vm5676 = vcmp.eq.s32.totalorder %v5627, 1
        %vm5677 = vcmp.eq.s32.totalorder %v5631, 1
        %vm5678 = vcmp.eq.s32.totalorder %v5635, 1
        %vm5679 = vcmp.eq.s32.totalorder %v5639, 1
        %vm5680 = vcmp.eq.s32.totalorder %v5643, 1
        %vm5681 = vcmp.eq.s32.totalorder %v5647, 1
        %vm5682 = vcmp.eq.s32.totalorder %v5651, 1
        %vm5683 = vcmp.eq.s32.totalorder %v5655, 1
        %vm5684 = vcmp.eq.s32.totalorder %v5659, 1
        %vm5685 = vcmp.eq.s32.totalorder %v5663, 1
        %vm5686 = vcmp.eq.s32.totalorder %v5667, 1
        %vm5687 = vcmp.eq.s32.totalorder %v5671, 1
        %v5688 = vsel %vm5672, %v5605, 0.0
        %v5689 = vsel %vm5673, %v5604, 0.0
        %v5690 = vsel %vm5674, %v5603, 0.0
        %v5691 = vsel %vm5675, %v5602, 0.0
        %v5692 = vsel %vm5676, %v5601, 0.0
        %v5693 = vsel %vm5677, %v5600, 0.0
        %v5694 = vsel %vm5678, %v5599, 0.0
        %v5695 = vsel %vm5679, %v5598, 0.0
        %v5696 = vsel %vm5680, %v5597, 0.0
        %v5697 = vsel %vm5681, %v5596, 0.0
        %v5698 = vsel %vm5682, %v5595, 0.0
        %v5699 = vsel %vm5683, %v5594, 0.0
        %v5700 = vsel %vm5684, %v5593, 0.0
        %v5701 = vsel %vm5685, %v5592, 0.0
        %v5702 = vsel %vm5686, %v5591, 0.0
        %v5703 = vsel %vm5687, %v5590, 0.0
        %5705 = vset.pattern.permute.xlu0 0
        %5706 = vperm.xlu0 %5705, %v4968
        %v5707 = vpop.permute.xlu0 %5706
        %v5709 = vmul.f32 %v5688, %v5707
        %v5710 = vmul.f32 %v5689, %v5707
        %v5711 = vmul.f32 %v5690, %v5707
        %v5712 = vmul.f32 %v5691, %v5707
        %v5713 = vmul.f32 %v5692, %v5707
        %v5714 = vmul.f32 %v5693, %v5707
        %v5715 = vmul.f32 %v5694, %v5707
        %v5716 = vmul.f32 %v5695, %v5707
        %v5717 = vmul.f32 %v5696, %v5707
        %v5718 = vmul.f32 %v5697, %v5707
        %v5719 = vmul.f32 %v5698, %v5707
        %v5720 = vmul.f32 %v5699, %v5707
        %v5721 = vmul.f32 %v5700, %v5707
        %v5722 = vmul.f32 %v5701, %v5707
        %v5723 = vmul.f32 %v5702, %v5707
        %v5724 = vmul.f32 %v5703, %v5707
        %v5725 = vadd.f32 %v5541, %v5709
        %v5726 = vadd.f32 %v5542, %v5710
        %v5727 = vadd.f32 %v5543, %v5711
        %v5728 = vadd.f32 %v5544, %v5712
        %v5729 = vadd.f32 %v5545, %v5713
        %v5730 = vadd.f32 %v5546, %v5714
        %v5731 = vadd.f32 %v5547, %v5715
        %v5732 = vadd.f32 %v5548, %v5716
        %v5733 = vadd.f32 %v5549, %v5717
        %v5734 = vadd.f32 %v5550, %v5718
        %v5735 = vadd.f32 %v5551, %v5719
        %v5736 = vadd.f32 %v5552, %v5720
        %v5737 = vadd.f32 %v5553, %v5721
        %v5738 = vadd.f32 %v5554, %v5722
        %v5739 = vadd.f32 %v5555, %v5723
        %v5740 = vadd.f32 %v5556, %v5724
        %5741 = vrot.lane.b32.xlu0 %v1156, 125
        %v5742 = vpop.permute.xlu0 %5741
        %5743 = vrot.lane.b32.xlu0 %v1157, 125
        %v5744 = vpop.permute.xlu0 %5743
        %5745 = vrot.lane.b32.xlu0 %v1158, 125
        %v5746 = vpop.permute.xlu0 %5745
        %5747 = vrot.lane.b32.xlu0 %v1159, 125
        %v5748 = vpop.permute.xlu0 %5747
        %5749 = vrot.lane.b32.xlu0 %v1160, 125
        %v5750 = vpop.permute.xlu0 %5749
        %5751 = vrot.lane.b32.xlu0 %v1161, 125
        %v5752 = vpop.permute.xlu0 %5751
        %5753 = vrot.lane.b32.xlu0 %v1162, 125
        %v5754 = vpop.permute.xlu0 %5753
        %5755 = vrot.lane.b32.xlu0 %v1163, 125
        %v5756 = vpop.permute.xlu0 %5755
        %5757 = vrot.lane.b32.xlu0 %v1164, 125
        %v5758 = vpop.permute.xlu0 %5757
        %5759 = vrot.lane.b32.xlu0 %v1165, 125
        %v5760 = vpop.permute.xlu0 %5759
        %5761 = vrot.lane.b32.xlu0 %v1166, 125
        %v5762 = vpop.permute.xlu0 %5761
        %5763 = vrot.lane.b32.xlu0 %v1167, 125
        %v5764 = vpop.permute.xlu0 %5763
        %5765 = vrot.lane.b32.xlu0 %v1168, 125
        %v5766 = vpop.permute.xlu0 %5765
        %5767 = vrot.lane.b32.xlu0 %v1169, 125
        %v5768 = vpop.permute.xlu0 %5767
        %5769 = vrot.lane.b32.xlu0 %v1170, 125
        %v5770 = vpop.permute.xlu0 %5769
        %5771 = vrot.lane.b32.xlu0 %v1171, 125
        %v5772 = vpop.permute.xlu0 %5771
        %vm5773 = vcmp.lt.s32.totalorder %v1239, 125
        %v5774 = vsel %vm5773, %v5770, %v5772
        %v5775 = vsel %vm5773, %v5768, %v5770
        %v5776 = vsel %vm5773, %v5766, %v5768
        %v5777 = vsel %vm5773, %v5764, %v5766
        %v5778 = vsel %vm5773, %v5762, %v5764
        %v5779 = vsel %vm5773, %v5760, %v5762
        %v5780 = vsel %vm5773, %v5758, %v5760
        %v5781 = vsel %vm5773, %v5756, %v5758
        %v5782 = vsel %vm5773, %v5754, %v5756
        %v5783 = vsel %vm5773, %v5752, %v5754
        %v5784 = vsel %vm5773, %v5750, %v5752
        %v5785 = vsel %vm5773, %v5748, %v5750
        %v5786 = vsel %vm5773, %v5746, %v5748
        %v5787 = vsel %vm5773, %v5744, %v5746
        %v5788 = vsel %vm5773, %v5742, %v5744
        %v5789 = vsel %vm5773, %v5772, %v5742
        %v5790 = vsel %vm5418, 1, 0
        %v5791 = vsel %vm5419, 1, 0
        %v5792 = vlaneseq
        %v5793 = vshrl.u32 %v5792, 7
        %v5794 = vsub.s32 0, %v5793
        %v5795 = vrot.slane %v5790, %v5794
        %v5796 = vlaneseq
        %v5797 = vshrl.u32 %v5796, 7
        %v5798 = vsub.s32 1, %v5797
        %v5799 = vrot.slane %v5790, %v5798
        %v5800 = vlaneseq
        %v5801 = vshrl.u32 %v5800, 7
        %v5802 = vsub.s32 2, %v5801
        %v5803 = vrot.slane %v5790, %v5802
        %v5804 = vlaneseq
        %v5805 = vshrl.u32 %v5804, 7
        %v5806 = vsub.s32 3, %v5805
        %v5807 = vrot.slane %v5790, %v5806
        %v5808 = vlaneseq
        %v5809 = vshrl.u32 %v5808, 7
        %v5810 = vsub.s32 4, %v5809
        %v5811 = vrot.slane %v5790, %v5810
        %v5812 = vlaneseq
        %v5813 = vshrl.u32 %v5812, 7
        %v5814 = vsub.s32 5, %v5813
        %v5815 = vrot.slane %v5790, %v5814
        %v5816 = vlaneseq
        %v5817 = vshrl.u32 %v5816, 7
        %v5818 = vsub.s32 6, %v5817
        %v5819 = vrot.slane %v5790, %v5818
        %v5820 = vlaneseq
        %v5821 = vshrl.u32 %v5820, 7
        %v5822 = vsub.s32 7, %v5821
        %v5823 = vrot.slane %v5790, %v5822
        %v5824 = vlaneseq
        %v5825 = vshrl.u32 %v5824, 7
        %v5826 = vsub.s32 0, %v5825
        %v5827 = vrot.slane %v5791, %v5826
        %v5828 = vlaneseq
        %v5829 = vshrl.u32 %v5828, 7
        %v5830 = vsub.s32 1, %v5829
        %v5831 = vrot.slane %v5791, %v5830
        %v5832 = vlaneseq
        %v5833 = vshrl.u32 %v5832, 7
        %v5834 = vsub.s32 2, %v5833
        %v5835 = vrot.slane %v5791, %v5834
        %v5836 = vlaneseq
        %v5837 = vshrl.u32 %v5836, 7
        %v5838 = vsub.s32 3, %v5837
        %v5839 = vrot.slane %v5791, %v5838
        %v5840 = vlaneseq
        %v5841 = vshrl.u32 %v5840, 7
        %v5842 = vsub.s32 4, %v5841
        %v5843 = vrot.slane %v5791, %v5842
        %v5844 = vlaneseq
        %v5845 = vshrl.u32 %v5844, 7
        %v5846 = vsub.s32 5, %v5845
        %v5847 = vrot.slane %v5791, %v5846
        %v5848 = vlaneseq
        %v5849 = vshrl.u32 %v5848, 7
        %v5850 = vsub.s32 6, %v5849
        %v5851 = vrot.slane %v5791, %v5850
        %v5852 = vlaneseq
        %v5853 = vshrl.u32 %v5852, 7
        %v5854 = vsub.s32 7, %v5853
        %v5855 = vrot.slane %v5791, %v5854
        %vm5856 = vcmp.eq.s32.totalorder %v5795, 1
        %vm5857 = vcmp.eq.s32.totalorder %v5799, 1
        %vm5858 = vcmp.eq.s32.totalorder %v5803, 1
        %vm5859 = vcmp.eq.s32.totalorder %v5807, 1
        %vm5860 = vcmp.eq.s32.totalorder %v5811, 1
        %vm5861 = vcmp.eq.s32.totalorder %v5815, 1
        %vm5862 = vcmp.eq.s32.totalorder %v5819, 1
        %vm5863 = vcmp.eq.s32.totalorder %v5823, 1
        %vm5864 = vcmp.eq.s32.totalorder %v5827, 1
        %vm5865 = vcmp.eq.s32.totalorder %v5831, 1
        %vm5866 = vcmp.eq.s32.totalorder %v5835, 1
        %vm5867 = vcmp.eq.s32.totalorder %v5839, 1
        %vm5868 = vcmp.eq.s32.totalorder %v5843, 1
        %vm5869 = vcmp.eq.s32.totalorder %v5847, 1
        %vm5870 = vcmp.eq.s32.totalorder %v5851, 1
        %vm5871 = vcmp.eq.s32.totalorder %v5855, 1
        %v5872 = vsel %vm5856, %v5788, 0.0
        %v5873 = vsel %vm5857, %v5787, 0.0
        %v5874 = vsel %vm5858, %v5786, 0.0
        %v5875 = vsel %vm5859, %v5785, 0.0
        %v5876 = vsel %vm5860, %v5784, 0.0
        %v5877 = vsel %vm5861, %v5783, 0.0
        %v5878 = vsel %vm5862, %v5782, 0.0
        %v5879 = vsel %vm5863, %v5781, 0.0
        %v5880 = vsel %vm5864, %v5780, 0.0
        %v5881 = vsel %vm5865, %v5779, 0.0
        %v5882 = vsel %vm5866, %v5778, 0.0
        %v5883 = vsel %vm5867, %v5777, 0.0
        %v5884 = vsel %vm5868, %v5776, 0.0
        %v5885 = vsel %vm5869, %v5775, 0.0
        %v5886 = vsel %vm5870, %v5774, 0.0
        %v5887 = vsel %vm5871, %v5789, 0.0
        %5889 = vset.pattern.permute.xlu0 0
        %5890 = vperm.xlu0 %5889, %v4970
        %v5891 = vpop.permute.xlu0 %5890
        %v5893 = vmul.f32 %v5872, %v5891
        %v5894 = vmul.f32 %v5873, %v5891
        %v5895 = vmul.f32 %v5874, %v5891
        %v5896 = vmul.f32 %v5875, %v5891
        %v5897 = vmul.f32 %v5876, %v5891
        %v5898 = vmul.f32 %v5877, %v5891
        %v5899 = vmul.f32 %v5878, %v5891
        %v5900 = vmul.f32 %v5879, %v5891
        %v5901 = vmul.f32 %v5880, %v5891
        %v5902 = vmul.f32 %v5881, %v5891
        %v5903 = vmul.f32 %v5882, %v5891
        %v5904 = vmul.f32 %v5883, %v5891
        %v5905 = vmul.f32 %v5884, %v5891
        %v5906 = vmul.f32 %v5885, %v5891
        %v5907 = vmul.f32 %v5886, %v5891
        %v5908 = vmul.f32 %v5887, %v5891
        %v5909 = vadd.f32 %v5725, %v5893
        %v5910 = vadd.f32 %v5726, %v5894
        %v5911 = vadd.f32 %v5727, %v5895
        %v5912 = vadd.f32 %v5728, %v5896
        %v5913 = vadd.f32 %v5729, %v5897
        %v5914 = vadd.f32 %v5730, %v5898
        %v5915 = vadd.f32 %v5731, %v5899
        %v5916 = vadd.f32 %v5732, %v5900
        %v5917 = vadd.f32 %v5733, %v5901
        %v5918 = vadd.f32 %v5734, %v5902
        %v5919 = vadd.f32 %v5735, %v5903
        %v5920 = vadd.f32 %v5736, %v5904
        %v5921 = vadd.f32 %v5737, %v5905
        %v5922 = vadd.f32 %v5738, %v5906
        %v5923 = vadd.f32 %v5739, %v5907
        %v5924 = vadd.f32 %v5740, %v5908
        %5925 = vrot.lane.b32.xlu0 %v1156, 83
        %v5926 = vpop.permute.xlu0 %5925
        %5927 = vrot.lane.b32.xlu0 %v1157, 83
        %v5928 = vpop.permute.xlu0 %5927
        %5929 = vrot.lane.b32.xlu0 %v1158, 83
        %v5930 = vpop.permute.xlu0 %5929
        %5931 = vrot.lane.b32.xlu0 %v1159, 83
        %v5932 = vpop.permute.xlu0 %5931
        %5933 = vrot.lane.b32.xlu0 %v1160, 83
        %v5934 = vpop.permute.xlu0 %5933
        %5935 = vrot.lane.b32.xlu0 %v1161, 83
        %v5936 = vpop.permute.xlu0 %5935
        %5937 = vrot.lane.b32.xlu0 %v1162, 83
        %v5938 = vpop.permute.xlu0 %5937
        %5939 = vrot.lane.b32.xlu0 %v1163, 83
        %v5940 = vpop.permute.xlu0 %5939
        %5941 = vrot.lane.b32.xlu0 %v1164, 83
        %v5942 = vpop.permute.xlu0 %5941
        %5943 = vrot.lane.b32.xlu0 %v1165, 83
        %v5944 = vpop.permute.xlu0 %5943
        %5945 = vrot.lane.b32.xlu0 %v1166, 83
        %v5946 = vpop.permute.xlu0 %5945
        %5947 = vrot.lane.b32.xlu0 %v1167, 83
        %v5948 = vpop.permute.xlu0 %5947
        %5949 = vrot.lane.b32.xlu0 %v1168, 83
        %v5950 = vpop.permute.xlu0 %5949
        %5951 = vrot.lane.b32.xlu0 %v1169, 83
        %v5952 = vpop.permute.xlu0 %5951
        %5953 = vrot.lane.b32.xlu0 %v1170, 83
        %v5954 = vpop.permute.xlu0 %5953
        %5955 = vrot.lane.b32.xlu0 %v1171, 83
        %v5956 = vpop.permute.xlu0 %5955
        %vm5957 = vcmp.lt.s32.totalorder %v1239, 83
        %v5958 = vsel %vm5957, %v5954, %v5956
        %v5959 = vsel %vm5957, %v5952, %v5954
        %v5960 = vsel %vm5957, %v5950, %v5952
        %v5961 = vsel %vm5957, %v5948, %v5950
        %v5962 = vsel %vm5957, %v5946, %v5948
        %v5963 = vsel %vm5957, %v5944, %v5946
        %v5964 = vsel %vm5957, %v5942, %v5944
        %v5965 = vsel %vm5957, %v5940, %v5942
        %v5966 = vsel %vm5957, %v5938, %v5940
        %v5967 = vsel %vm5957, %v5936, %v5938
        %v5968 = vsel %vm5957, %v5934, %v5936
        %v5969 = vsel %vm5957, %v5932, %v5934
        %v5970 = vsel %vm5957, %v5930, %v5932
        %v5971 = vsel %vm5957, %v5928, %v5930
        %v5972 = vsel %vm5957, %v5926, %v5928
        %v5973 = vsel %vm5957, %v5956, %v5926
        %vm5974 = vcmp.lt.s32.totalorder %v1172, 13
        %vm5975 = vcmp.lt.s32.totalorder %v1173, 13
        %vm5976 = vmand %vm5974, %vm5046
        %vm5977 = vmand %vm5975, %vm5047
        %v5978 = vsel %vm5976, 1, 0
        %v5979 = vsel %vm5977, 1, 0
        %v5980 = vlaneseq
        %v5981 = vshrl.u32 %v5980, 7
        %v5982 = vsub.s32 0, %v5981
        %v5983 = vrot.slane %v5978, %v5982
        %v5984 = vlaneseq
        %v5985 = vshrl.u32 %v5984, 7
        %v5986 = vsub.s32 1, %v5985
        %v5987 = vrot.slane %v5978, %v5986
        %v5988 = vlaneseq
        %v5989 = vshrl.u32 %v5988, 7
        %v5990 = vsub.s32 2, %v5989
        %v5991 = vrot.slane %v5978, %v5990
        %v5992 = vlaneseq
        %v5993 = vshrl.u32 %v5992, 7
        %v5994 = vsub.s32 3, %v5993
        %v5995 = vrot.slane %v5978, %v5994
        %v5996 = vlaneseq
        %v5997 = vshrl.u32 %v5996, 7
        %v5998 = vsub.s32 4, %v5997
        %v5999 = vrot.slane %v5978, %v5998
        %v6000 = vlaneseq
        %v6001 = vshrl.u32 %v6000, 7
        %v6002 = vsub.s32 5, %v6001
        %v6003 = vrot.slane %v5978, %v6002
        %v6004 = vlaneseq
        %v6005 = vshrl.u32 %v6004, 7
        %v6006 = vsub.s32 6, %v6005
        %v6007 = vrot.slane %v5978, %v6006
        %v6008 = vlaneseq
        %v6009 = vshrl.u32 %v6008, 7
        %v6010 = vsub.s32 7, %v6009
        %v6011 = vrot.slane %v5978, %v6010
        %v6012 = vlaneseq
        %v6013 = vshrl.u32 %v6012, 7
        %v6014 = vsub.s32 0, %v6013
        %v6015 = vrot.slane %v5979, %v6014
        %v6016 = vlaneseq
        %v6017 = vshrl.u32 %v6016, 7
        %v6018 = vsub.s32 1, %v6017
        %v6019 = vrot.slane %v5979, %v6018
        %v6020 = vlaneseq
        %v6021 = vshrl.u32 %v6020, 7
        %v6022 = vsub.s32 2, %v6021
        %v6023 = vrot.slane %v5979, %v6022
        %v6024 = vlaneseq
        %v6025 = vshrl.u32 %v6024, 7
        %v6026 = vsub.s32 3, %v6025
        %v6027 = vrot.slane %v5979, %v6026
        %v6028 = vlaneseq
        %v6029 = vshrl.u32 %v6028, 7
        %v6030 = vsub.s32 4, %v6029
        %v6031 = vrot.slane %v5979, %v6030
        %v6032 = vlaneseq
        %v6033 = vshrl.u32 %v6032, 7
        %v6034 = vsub.s32 5, %v6033
        %v6035 = vrot.slane %v5979, %v6034
        %v6036 = vlaneseq
        %v6037 = vshrl.u32 %v6036, 7
        %v6038 = vsub.s32 6, %v6037
        %v6039 = vrot.slane %v5979, %v6038
        %v6040 = vlaneseq
        %v6041 = vshrl.u32 %v6040, 7
        %v6042 = vsub.s32 7, %v6041
        %v6043 = vrot.slane %v5979, %v6042
        %vm6044 = vcmp.eq.s32.totalorder %v5983, 1
        %vm6045 = vcmp.eq.s32.totalorder %v5987, 1
        %vm6046 = vcmp.eq.s32.totalorder %v5991, 1
        %vm6047 = vcmp.eq.s32.totalorder %v5995, 1
        %vm6048 = vcmp.eq.s32.totalorder %v5999, 1
        %vm6049 = vcmp.eq.s32.totalorder %v6003, 1
        %vm6050 = vcmp.eq.s32.totalorder %v6007, 1
        %vm6051 = vcmp.eq.s32.totalorder %v6011, 1
        %vm6052 = vcmp.eq.s32.totalorder %v6015, 1
        %vm6053 = vcmp.eq.s32.totalorder %v6019, 1
        %vm6054 = vcmp.eq.s32.totalorder %v6023, 1
        %vm6055 = vcmp.eq.s32.totalorder %v6027, 1
        %vm6056 = vcmp.eq.s32.totalorder %v6031, 1
        %vm6057 = vcmp.eq.s32.totalorder %v6035, 1
        %vm6058 = vcmp.eq.s32.totalorder %v6039, 1
        %vm6059 = vcmp.eq.s32.totalorder %v6043, 1
        %v6060 = vsel %vm6044, %v5972, 0.0
        %v6061 = vsel %vm6045, %v5971, 0.0
        %v6062 = vsel %vm6046, %v5970, 0.0
        %v6063 = vsel %vm6047, %v5969, 0.0
        %v6064 = vsel %vm6048, %v5968, 0.0
        %v6065 = vsel %vm6049, %v5967, 0.0
        %v6066 = vsel %vm6050, %v5966, 0.0
        %v6067 = vsel %vm6051, %v5965, 0.0
        %v6068 = vsel %vm6052, %v5964, 0.0
        %v6069 = vsel %vm6053, %v5963, 0.0
        %v6070 = vsel %vm6054, %v5962, 0.0
        %v6071 = vsel %vm6055, %v5961, 0.0
        %v6072 = vsel %vm6056, %v5960, 0.0
        %v6073 = vsel %vm6057, %v5959, 0.0
        %v6074 = vsel %vm6058, %v5958, 0.0
        %v6075 = vsel %vm6059, %v5973, 0.0
        %6077 = vset.pattern.permute.xlu0 0
        %6078 = vperm.xlu0 %6077, %v4971
        %v6079 = vpop.permute.xlu0 %6078
        %v6081 = vmul.f32 %v6060, %v6079
        %v6082 = vmul.f32 %v6061, %v6079
        %v6083 = vmul.f32 %v6062, %v6079
        %v6084 = vmul.f32 %v6063, %v6079
        %v6085 = vmul.f32 %v6064, %v6079
        %v6086 = vmul.f32 %v6065, %v6079
        %v6087 = vmul.f32 %v6066, %v6079
        %v6088 = vmul.f32 %v6067, %v6079
        %v6089 = vmul.f32 %v6068, %v6079
        %v6090 = vmul.f32 %v6069, %v6079
        %v6091 = vmul.f32 %v6070, %v6079
        %v6092 = vmul.f32 %v6071, %v6079
        %v6093 = vmul.f32 %v6072, %v6079
        %v6094 = vmul.f32 %v6073, %v6079
        %v6095 = vmul.f32 %v6074, %v6079
        %v6096 = vmul.f32 %v6075, %v6079
        %v6097 = vadd.f32 %v5909, %v6081
        %v6098 = vadd.f32 %v5910, %v6082
        %v6099 = vadd.f32 %v5911, %v6083
        %v6100 = vadd.f32 %v5912, %v6084
        %v6101 = vadd.f32 %v5913, %v6085
        %v6102 = vadd.f32 %v5914, %v6086
        %v6103 = vadd.f32 %v5915, %v6087
        %v6104 = vadd.f32 %v5916, %v6088
        %v6105 = vadd.f32 %v5917, %v6089
        %v6106 = vadd.f32 %v5918, %v6090
        %v6107 = vadd.f32 %v5919, %v6091
        %v6108 = vadd.f32 %v5920, %v6092
        %v6109 = vadd.f32 %v5921, %v6093
        %v6110 = vadd.f32 %v5922, %v6094
        %v6111 = vadd.f32 %v5923, %v6095
        %v6112 = vadd.f32 %v5924, %v6096
        %6113 = vrot.lane.b32.xlu0 %v1156, 80
        %v6114 = vpop.permute.xlu0 %6113
        %6115 = vrot.lane.b32.xlu0 %v1157, 80
        %v6116 = vpop.permute.xlu0 %6115
        %6117 = vrot.lane.b32.xlu0 %v1158, 80
        %v6118 = vpop.permute.xlu0 %6117
        %6119 = vrot.lane.b32.xlu0 %v1159, 80
        %v6120 = vpop.permute.xlu0 %6119
        %6121 = vrot.lane.b32.xlu0 %v1160, 80
        %v6122 = vpop.permute.xlu0 %6121
        %6123 = vrot.lane.b32.xlu0 %v1161, 80
        %v6124 = vpop.permute.xlu0 %6123
        %6125 = vrot.lane.b32.xlu0 %v1162, 80
        %v6126 = vpop.permute.xlu0 %6125
        %6127 = vrot.lane.b32.xlu0 %v1163, 80
        %v6128 = vpop.permute.xlu0 %6127
        %6129 = vrot.lane.b32.xlu0 %v1164, 80
        %v6130 = vpop.permute.xlu0 %6129
        %6131 = vrot.lane.b32.xlu0 %v1165, 80
        %v6132 = vpop.permute.xlu0 %6131
        %6133 = vrot.lane.b32.xlu0 %v1166, 80
        %v6134 = vpop.permute.xlu0 %6133
        %6135 = vrot.lane.b32.xlu0 %v1167, 80
        %v6136 = vpop.permute.xlu0 %6135
        %6137 = vrot.lane.b32.xlu0 %v1168, 80
        %v6138 = vpop.permute.xlu0 %6137
        %6139 = vrot.lane.b32.xlu0 %v1169, 80
        %v6140 = vpop.permute.xlu0 %6139
        %6141 = vrot.lane.b32.xlu0 %v1170, 80
        %v6142 = vpop.permute.xlu0 %6141
        %6143 = vrot.lane.b32.xlu0 %v1171, 80
        %v6144 = vpop.permute.xlu0 %6143
        %vm6145 = vcmp.lt.s32.totalorder %v1239, 80
        %v6146 = vsel %vm6145, %v6142, %v6144
        %v6147 = vsel %vm6145, %v6140, %v6142
        %v6148 = vsel %vm6145, %v6138, %v6140
        %v6149 = vsel %vm6145, %v6136, %v6138
        %v6150 = vsel %vm6145, %v6134, %v6136
        %v6151 = vsel %vm6145, %v6132, %v6134
        %v6152 = vsel %vm6145, %v6130, %v6132
        %v6153 = vsel %vm6145, %v6128, %v6130
        %v6154 = vsel %vm6145, %v6126, %v6128
        %v6155 = vsel %vm6145, %v6124, %v6126
        %v6156 = vsel %vm6145, %v6122, %v6124
        %v6157 = vsel %vm6145, %v6120, %v6122
        %v6158 = vsel %vm6145, %v6118, %v6120
        %v6159 = vsel %vm6145, %v6116, %v6118
        %v6160 = vsel %vm6145, %v6114, %v6116
        %v6161 = vsel %vm6145, %v6144, %v6114
        %v6162 = vsel %vm5974, 1, 0
        %v6163 = vsel %vm5975, 1, 0
        %v6164 = vlaneseq
        %v6165 = vshrl.u32 %v6164, 7
        %v6166 = vsub.s32 0, %v6165
        %v6167 = vrot.slane %v6162, %v6166
        %v6168 = vlaneseq
        %v6169 = vshrl.u32 %v6168, 7
        %v6170 = vsub.s32 1, %v6169
        %v6171 = vrot.slane %v6162, %v6170
        %v6172 = vlaneseq
        %v6173 = vshrl.u32 %v6172, 7
        %v6174 = vsub.s32 2, %v6173
        %v6175 = vrot.slane %v6162, %v6174
        %v6176 = vlaneseq
        %v6177 = vshrl.u32 %v6176, 7
        %v6178 = vsub.s32 3, %v6177
        %v6179 = vrot.slane %v6162, %v6178
        %v6180 = vlaneseq
        %v6181 = vshrl.u32 %v6180, 7
        %v6182 = vsub.s32 4, %v6181
        %v6183 = vrot.slane %v6162, %v6182
        %v6184 = vlaneseq
        %v6185 = vshrl.u32 %v6184, 7
        %v6186 = vsub.s32 5, %v6185
        %v6187 = vrot.slane %v6162, %v6186
        %v6188 = vlaneseq
        %v6189 = vshrl.u32 %v6188, 7
        %v6190 = vsub.s32 6, %v6189
        %v6191 = vrot.slane %v6162, %v6190
        %v6192 = vlaneseq
        %v6193 = vshrl.u32 %v6192, 7
        %v6194 = vsub.s32 7, %v6193
        %v6195 = vrot.slane %v6162, %v6194
        %v6196 = vlaneseq
        %v6197 = vshrl.u32 %v6196, 7
        %v6198 = vsub.s32 0, %v6197
        %v6199 = vrot.slane %v6163, %v6198
        %v6200 = vlaneseq
        %v6201 = vshrl.u32 %v6200, 7
        %v6202 = vsub.s32 1, %v6201
        %v6203 = vrot.slane %v6163, %v6202
        %v6204 = vlaneseq
        %v6205 = vshrl.u32 %v6204, 7
        %v6206 = vsub.s32 2, %v6205
        %v6207 = vrot.slane %v6163, %v6206
        %v6208 = vlaneseq
        %v6209 = vshrl.u32 %v6208, 7
        %v6210 = vsub.s32 3, %v6209
        %v6211 = vrot.slane %v6163, %v6210
        %v6212 = vlaneseq
        %v6213 = vshrl.u32 %v6212, 7
        %v6214 = vsub.s32 4, %v6213
        %v6215 = vrot.slane %v6163, %v6214
        %v6216 = vlaneseq
        %v6217 = vshrl.u32 %v6216, 7
        %v6218 = vsub.s32 5, %v6217
        %v6219 = vrot.slane %v6163, %v6218
        %v6220 = vlaneseq
        %v6221 = vshrl.u32 %v6220, 7
        %v6222 = vsub.s32 6, %v6221
        %v6223 = vrot.slane %v6163, %v6222
        %v6224 = vlaneseq
        %v6225 = vshrl.u32 %v6224, 7
        %v6226 = vsub.s32 7, %v6225
        %v6227 = vrot.slane %v6163, %v6226
        %vm6228 = vcmp.eq.s32.totalorder %v6167, 1
        %vm6229 = vcmp.eq.s32.totalorder %v6171, 1
        %vm6230 = vcmp.eq.s32.totalorder %v6175, 1
        %vm6231 = vcmp.eq.s32.totalorder %v6179, 1
        %vm6232 = vcmp.eq.s32.totalorder %v6183, 1
        %vm6233 = vcmp.eq.s32.totalorder %v6187, 1
        %vm6234 = vcmp.eq.s32.totalorder %v6191, 1
        %vm6235 = vcmp.eq.s32.totalorder %v6195, 1
        %vm6236 = vcmp.eq.s32.totalorder %v6199, 1
        %vm6237 = vcmp.eq.s32.totalorder %v6203, 1
        %vm6238 = vcmp.eq.s32.totalorder %v6207, 1
        %vm6239 = vcmp.eq.s32.totalorder %v6211, 1
        %vm6240 = vcmp.eq.s32.totalorder %v6215, 1
        %vm6241 = vcmp.eq.s32.totalorder %v6219, 1
        %vm6242 = vcmp.eq.s32.totalorder %v6223, 1
        %vm6243 = vcmp.eq.s32.totalorder %v6227, 1
        %v6244 = vsel %vm6228, %v6160, 0.0
        %v6245 = vsel %vm6229, %v6159, 0.0
        %v6246 = vsel %vm6230, %v6158, 0.0
        %v6247 = vsel %vm6231, %v6157, 0.0
        %v6248 = vsel %vm6232, %v6156, 0.0
        %v6249 = vsel %vm6233, %v6155, 0.0
        %v6250 = vsel %vm6234, %v6154, 0.0
        %v6251 = vsel %vm6235, %v6153, 0.0
        %v6252 = vsel %vm6236, %v6152, 0.0
        %v6253 = vsel %vm6237, %v6151, 0.0
        %v6254 = vsel %vm6238, %v6150, 0.0
        %v6255 = vsel %vm6239, %v6149, 0.0
        %v6256 = vsel %vm6240, %v6148, 0.0
        %v6257 = vsel %vm6241, %v6147, 0.0
        %v6258 = vsel %vm6242, %v6146, 0.0
        %v6259 = vsel %vm6243, %v6161, 0.0
        %6261 = vset.pattern.permute.xlu0 0
        %6262 = vperm.xlu0 %6261, %v4972
        %v6263 = vpop.permute.xlu0 %6262
        %v6265 = vmul.f32 %v6244, %v6263
        %v6266 = vmul.f32 %v6245, %v6263
        %v6267 = vmul.f32 %v6246, %v6263
        %v6268 = vmul.f32 %v6247, %v6263
        %v6269 = vmul.f32 %v6248, %v6263
        %v6270 = vmul.f32 %v6249, %v6263
        %v6271 = vmul.f32 %v6250, %v6263
        %v6272 = vmul.f32 %v6251, %v6263
        %v6273 = vmul.f32 %v6252, %v6263
        %v6274 = vmul.f32 %v6253, %v6263
        %v6275 = vmul.f32 %v6254, %v6263
        %v6276 = vmul.f32 %v6255, %v6263
        %v6277 = vmul.f32 %v6256, %v6263
        %v6278 = vmul.f32 %v6257, %v6263
        %v6279 = vmul.f32 %v6258, %v6263
        %v6280 = vmul.f32 %v6259, %v6263
        %v6281 = vadd.f32 %v6097, %v6265
        %v6282 = vadd.f32 %v6098, %v6266
        %v6283 = vadd.f32 %v6099, %v6267
        %v6284 = vadd.f32 %v6100, %v6268
        %v6285 = vadd.f32 %v6101, %v6269
        %v6286 = vadd.f32 %v6102, %v6270
        %v6287 = vadd.f32 %v6103, %v6271
        %v6288 = vadd.f32 %v6104, %v6272
        %v6289 = vadd.f32 %v6105, %v6273
        %v6290 = vadd.f32 %v6106, %v6274
        %v6291 = vadd.f32 %v6107, %v6275
        %v6292 = vadd.f32 %v6108, %v6276
        %v6293 = vadd.f32 %v6109, %v6277
        %v6294 = vadd.f32 %v6110, %v6278
        %v6295 = vadd.f32 %v6111, %v6279
        %v6296 = vadd.f32 %v6112, %v6280
        %6297 = vrot.lane.b32.xlu0 %v1156, 77
        %v6298 = vpop.permute.xlu0 %6297
        %6299 = vrot.lane.b32.xlu0 %v1157, 77
        %v6300 = vpop.permute.xlu0 %6299
        %6301 = vrot.lane.b32.xlu0 %v1158, 77
        %v6302 = vpop.permute.xlu0 %6301
        %6303 = vrot.lane.b32.xlu0 %v1159, 77
        %v6304 = vpop.permute.xlu0 %6303
        %6305 = vrot.lane.b32.xlu0 %v1160, 77
        %v6306 = vpop.permute.xlu0 %6305
        %6307 = vrot.lane.b32.xlu0 %v1161, 77
        %v6308 = vpop.permute.xlu0 %6307
        %6309 = vrot.lane.b32.xlu0 %v1162, 77
        %v6310 = vpop.permute.xlu0 %6309
        %6311 = vrot.lane.b32.xlu0 %v1163, 77
        %v6312 = vpop.permute.xlu0 %6311
        %6313 = vrot.lane.b32.xlu0 %v1164, 77
        %v6314 = vpop.permute.xlu0 %6313
        %6315 = vrot.lane.b32.xlu0 %v1165, 77
        %v6316 = vpop.permute.xlu0 %6315
        %6317 = vrot.lane.b32.xlu0 %v1166, 77
        %v6318 = vpop.permute.xlu0 %6317
        %6319 = vrot.lane.b32.xlu0 %v1167, 77
        %v6320 = vpop.permute.xlu0 %6319
        %6321 = vrot.lane.b32.xlu0 %v1168, 77
        %v6322 = vpop.permute.xlu0 %6321
        %6323 = vrot.lane.b32.xlu0 %v1169, 77
        %v6324 = vpop.permute.xlu0 %6323
        %6325 = vrot.lane.b32.xlu0 %v1170, 77
        %v6326 = vpop.permute.xlu0 %6325
        %6327 = vrot.lane.b32.xlu0 %v1171, 77
        %v6328 = vpop.permute.xlu0 %6327
        %vm6329 = vcmp.lt.s32.totalorder %v1239, 77
        %v6330 = vsel %vm6329, %v6326, %v6328
        %v6331 = vsel %vm6329, %v6324, %v6326
        %v6332 = vsel %vm6329, %v6322, %v6324
        %v6333 = vsel %vm6329, %v6320, %v6322
        %v6334 = vsel %vm6329, %v6318, %v6320
        %v6335 = vsel %vm6329, %v6316, %v6318
        %v6336 = vsel %vm6329, %v6314, %v6316
        %v6337 = vsel %vm6329, %v6312, %v6314
        %v6338 = vsel %vm6329, %v6310, %v6312
        %v6339 = vsel %vm6329, %v6308, %v6310
        %v6340 = vsel %vm6329, %v6306, %v6308
        %v6341 = vsel %vm6329, %v6304, %v6306
        %v6342 = vsel %vm6329, %v6302, %v6304
        %v6343 = vsel %vm6329, %v6300, %v6302
        %v6344 = vsel %vm6329, %v6298, %v6300
        %v6345 = vsel %vm6329, %v6328, %v6298
        %vm6346 = vmand %vm5974, %vm5418
        %vm6347 = vmand %vm5975, %vm5419
        %v6348 = vsel %vm6346, 1, 0
        %v6349 = vsel %vm6347, 1, 0
        %v6350 = vlaneseq
        %v6351 = vshrl.u32 %v6350, 7
        %v6352 = vsub.s32 0, %v6351
        %v6353 = vrot.slane %v6348, %v6352
        %v6354 = vlaneseq
        %v6355 = vshrl.u32 %v6354, 7
        %v6356 = vsub.s32 1, %v6355
        %v6357 = vrot.slane %v6348, %v6356
        %v6358 = vlaneseq
        %v6359 = vshrl.u32 %v6358, 7
        %v6360 = vsub.s32 2, %v6359
        %v6361 = vrot.slane %v6348, %v6360
        %v6362 = vlaneseq
        %v6363 = vshrl.u32 %v6362, 7
        %v6364 = vsub.s32 3, %v6363
        %v6365 = vrot.slane %v6348, %v6364
        %v6366 = vlaneseq
        %v6367 = vshrl.u32 %v6366, 7
        %v6368 = vsub.s32 4, %v6367
        %v6369 = vrot.slane %v6348, %v6368
        %v6370 = vlaneseq
        %v6371 = vshrl.u32 %v6370, 7
        %v6372 = vsub.s32 5, %v6371
        %v6373 = vrot.slane %v6348, %v6372
        %v6374 = vlaneseq
        %v6375 = vshrl.u32 %v6374, 7
        %v6376 = vsub.s32 6, %v6375
        %v6377 = vrot.slane %v6348, %v6376
        %v6378 = vlaneseq
        %v6379 = vshrl.u32 %v6378, 7
        %v6380 = vsub.s32 7, %v6379
        %v6381 = vrot.slane %v6348, %v6380
        %v6382 = vlaneseq
        %v6383 = vshrl.u32 %v6382, 7
        %v6384 = vsub.s32 0, %v6383
        %v6385 = vrot.slane %v6349, %v6384
        %v6386 = vlaneseq
        %v6387 = vshrl.u32 %v6386, 7
        %v6388 = vsub.s32 1, %v6387
        %v6389 = vrot.slane %v6349, %v6388
        %v6390 = vlaneseq
        %v6391 = vshrl.u32 %v6390, 7
        %v6392 = vsub.s32 2, %v6391
        %v6393 = vrot.slane %v6349, %v6392
        %v6394 = vlaneseq
        %v6395 = vshrl.u32 %v6394, 7
        %v6396 = vsub.s32 3, %v6395
        %v6397 = vrot.slane %v6349, %v6396
        %v6398 = vlaneseq
        %v6399 = vshrl.u32 %v6398, 7
        %v6400 = vsub.s32 4, %v6399
        %v6401 = vrot.slane %v6349, %v6400
        %v6402 = vlaneseq
        %v6403 = vshrl.u32 %v6402, 7
        %v6404 = vsub.s32 5, %v6403
        %v6405 = vrot.slane %v6349, %v6404
        %v6406 = vlaneseq
        %v6407 = vshrl.u32 %v6406, 7
        %v6408 = vsub.s32 6, %v6407
        %v6409 = vrot.slane %v6349, %v6408
        %v6410 = vlaneseq
        %v6411 = vshrl.u32 %v6410, 7
        %v6412 = vsub.s32 7, %v6411
        %v6413 = vrot.slane %v6349, %v6412
        %vm6414 = vcmp.eq.s32.totalorder %v6353, 1
        %vm6415 = vcmp.eq.s32.totalorder %v6357, 1
        %vm6416 = vcmp.eq.s32.totalorder %v6361, 1
        %vm6417 = vcmp.eq.s32.totalorder %v6365, 1
        %vm6418 = vcmp.eq.s32.totalorder %v6369, 1
        %vm6419 = vcmp.eq.s32.totalorder %v6373, 1
        %vm6420 = vcmp.eq.s32.totalorder %v6377, 1
        %vm6421 = vcmp.eq.s32.totalorder %v6381, 1
        %vm6422 = vcmp.eq.s32.totalorder %v6385, 1
        %vm6423 = vcmp.eq.s32.totalorder %v6389, 1
        %vm6424 = vcmp.eq.s32.totalorder %v6393, 1
        %vm6425 = vcmp.eq.s32.totalorder %v6397, 1
        %vm6426 = vcmp.eq.s32.totalorder %v6401, 1
        %vm6427 = vcmp.eq.s32.totalorder %v6405, 1
        %vm6428 = vcmp.eq.s32.totalorder %v6409, 1
        %vm6429 = vcmp.eq.s32.totalorder %v6413, 1
        %v6430 = vsel %vm6414, %v6344, 0.0
        %v6431 = vsel %vm6415, %v6343, 0.0
        %v6432 = vsel %vm6416, %v6342, 0.0
        %v6433 = vsel %vm6417, %v6341, 0.0
        %v6434 = vsel %vm6418, %v6340, 0.0
        %v6435 = vsel %vm6419, %v6339, 0.0
        %v6436 = vsel %vm6420, %v6338, 0.0
        %v6437 = vsel %vm6421, %v6337, 0.0
        %v6438 = vsel %vm6422, %v6336, 0.0
        %v6439 = vsel %vm6423, %v6335, 0.0
        %v6440 = vsel %vm6424, %v6334, 0.0
        %v6441 = vsel %vm6425, %v6333, 0.0
        %v6442 = vsel %vm6426, %v6332, 0.0
        %v6443 = vsel %vm6427, %v6331, 0.0
        %v6444 = vsel %vm6428, %v6330, 0.0
        %v6445 = vsel %vm6429, %v6345, 0.0
        %6447 = vset.pattern.permute.xlu0 0
        %6448 = vperm.xlu0 %6447, %v4973
        %v6449 = vpop.permute.xlu0 %6448
        %v6451 = vmul.f32 %v6430, %v6449
        %v6452 = vmul.f32 %v6431, %v6449
        %v6453 = vmul.f32 %v6432, %v6449
        %v6454 = vmul.f32 %v6433, %v6449
        %v6455 = vmul.f32 %v6434, %v6449
        %v6456 = vmul.f32 %v6435, %v6449
        %v6457 = vmul.f32 %v6436, %v6449
        %v6458 = vmul.f32 %v6437, %v6449
        %v6459 = vmul.f32 %v6438, %v6449
        %v6460 = vmul.f32 %v6439, %v6449
        %v6461 = vmul.f32 %v6440, %v6449
        %v6462 = vmul.f32 %v6441, %v6449
        %v6463 = vmul.f32 %v6442, %v6449
        %v6464 = vmul.f32 %v6443, %v6449
        %v6465 = vmul.f32 %v6444, %v6449
        %v6466 = vmul.f32 %v6445, %v6449
        %v6467 = vadd.f32 %v6281, %v6451
        %v6468 = vadd.f32 %v6282, %v6452
        %v6469 = vadd.f32 %v6283, %v6453
        %v6470 = vadd.f32 %v6284, %v6454
        %v6471 = vadd.f32 %v6285, %v6455
        %v6472 = vadd.f32 %v6286, %v6456
        %v6473 = vadd.f32 %v6287, %v6457
        %v6474 = vadd.f32 %v6288, %v6458
        %v6475 = vadd.f32 %v6289, %v6459
        %v6476 = vadd.f32 %v6290, %v6460
        %v6477 = vadd.f32 %v6291, %v6461
        %v6478 = vadd.f32 %v6292, %v6462
        %v6479 = vadd.f32 %v6293, %v6463
        %v6480 = vadd.f32 %v6294, %v6464
        %v6481 = vadd.f32 %v6295, %v6465
        %v6482 = vadd.f32 %v6296, %v6466
        %v6483 = vadd.f32 %v6467, %v4818
        %v6484 = vadd.f32 %v6468, %v4819
        %v6485 = vadd.f32 %v6469, %v4820
        %v6486 = vadd.f32 %v6470, %v4821
        %v6487 = vadd.f32 %v6471, %v4822
        %v6488 = vadd.f32 %v6472, %v4823
        %v6489 = vadd.f32 %v6473, %v4824
        %v6490 = vadd.f32 %v6474, %v4825
        %v6491 = vadd.f32 %v6475, %v4826
        %v6492 = vadd.f32 %v6476, %v4827
        %v6493 = vadd.f32 %v6477, %v4828
        %v6494 = vadd.f32 %v6478, %v4829
        %v6495 = vadd.f32 %v6479, %v4830
        %v6496 = vadd.f32 %v6480, %v4831
        %v6497 = vadd.f32 %v6481, %v4832
        %v6498 = vadd.f32 %v6482, %v4833
        %v6499 = vld [vmem:[%s7 + $0x18] sm:$0xff]
        %6501 = vset.pattern.permute.xlu0 0
        %6502 = vperm.xlu0 %6501, %v6499
        %v6503 = vpop.permute.xlu0 %6502
        %v6505 = vmul.f32 %v6483, %v6503
        %v6506 = vmul.f32 %v6484, %v6503
        %v6507 = vmul.f32 %v6485, %v6503
        %v6508 = vmul.f32 %v6486, %v6503
        %v6509 = vmul.f32 %v6487, %v6503
        %v6510 = vmul.f32 %v6488, %v6503
        %v6511 = vmul.f32 %v6489, %v6503
        %v6512 = vmul.f32 %v6490, %v6503
        %v6513 = vmul.f32 %v6491, %v6503
        %v6514 = vmul.f32 %v6492, %v6503
        %v6515 = vmul.f32 %v6493, %v6503
        %v6516 = vmul.f32 %v6494, %v6503
        %v6517 = vmul.f32 %v6495, %v6503
        %v6518 = vmul.f32 %v6496, %v6503
        %v6519 = vmul.f32 %v6497, %v6503
        %v6520 = vmul.f32 %v6498, %v6503
        %v6521 = vld [vmem:[%s8 + $0x18] sm:$0xff]
        %6523 = vset.pattern.permute.xlu0 0
        %6524 = vperm.xlu0 %6523, %v6521
        %v6525 = vpop.permute.xlu0 %6524
        %v6527 = vadd.f32 %v6505, %v6525
        %v6528 = vadd.f32 %v6506, %v6525
        %v6529 = vadd.f32 %v6507, %v6525
        %v6530 = vadd.f32 %v6508, %v6525
        %v6531 = vadd.f32 %v6509, %v6525
        %v6532 = vadd.f32 %v6510, %v6525
        %v6533 = vadd.f32 %v6511, %v6525
        %v6534 = vadd.f32 %v6512, %v6525
        %v6535 = vadd.f32 %v6513, %v6525
        %v6536 = vadd.f32 %v6514, %v6525
        %v6537 = vadd.f32 %v6515, %v6525
        %v6538 = vadd.f32 %v6516, %v6525
        %v6539 = vadd.f32 %v6517, %v6525
        %v6540 = vadd.f32 %v6518, %v6525
        %v6541 = vadd.f32 %v6519, %v6525
        %v6542 = vadd.f32 %v6520, %v6525
        %v6543 = vld [vmem:[%s9 + $0x18] sm:$0xff]
        %v6544 = vmax.f32 %v6527, 0.0
        %v6545 = vmax.f32 %v6528, 0.0
        %v6546 = vmax.f32 %v6529, 0.0
        %v6547 = vmax.f32 %v6530, 0.0
        %v6548 = vmax.f32 %v6531, 0.0
        %v6549 = vmax.f32 %v6532, 0.0
        %v6550 = vmax.f32 %v6533, 0.0
        %v6551 = vmax.f32 %v6534, 0.0
        %v6552 = vmax.f32 %v6535, 0.0
        %v6553 = vmax.f32 %v6536, 0.0
        %v6554 = vmax.f32 %v6537, 0.0
        %v6555 = vmax.f32 %v6538, 0.0
        %v6556 = vmax.f32 %v6539, 0.0
        %v6557 = vmax.f32 %v6540, 0.0
        %v6558 = vmax.f32 %v6541, 0.0
        %v6559 = vmax.f32 %v6542, 0.0
        %v6560 = vmin.f32 %v6527, 0.0
        %v6561 = vmin.f32 %v6528, 0.0
        %v6562 = vmin.f32 %v6529, 0.0
        %v6563 = vmin.f32 %v6530, 0.0
        %v6564 = vmin.f32 %v6531, 0.0
        %v6565 = vmin.f32 %v6532, 0.0
        %v6566 = vmin.f32 %v6533, 0.0
        %v6567 = vmin.f32 %v6534, 0.0
        %v6568 = vmin.f32 %v6535, 0.0
        %v6569 = vmin.f32 %v6536, 0.0
        %v6570 = vmin.f32 %v6537, 0.0
        %v6571 = vmin.f32 %v6538, 0.0
        %v6572 = vmin.f32 %v6539, 0.0
        %v6573 = vmin.f32 %v6540, 0.0
        %v6574 = vmin.f32 %v6541, 0.0
        %v6575 = vmin.f32 %v6542, 0.0
        %6577 = vset.pattern.permute.xlu0 0
        %6578 = vperm.xlu0 %6577, %v6543
        %v6579 = vpop.permute.xlu0 %6578
        %v6581 = vmul.f32 %v6579, %v6560
        %v6582 = vmul.f32 %v6579, %v6561
        %v6583 = vmul.f32 %v6579, %v6562
        %v6584 = vmul.f32 %v6579, %v6563
        %v6585 = vmul.f32 %v6579, %v6564
        %v6586 = vmul.f32 %v6579, %v6565
        %v6587 = vmul.f32 %v6579, %v6566
        %v6588 = vmul.f32 %v6579, %v6567
        %v6589 = vmul.f32 %v6579, %v6568
        %v6590 = vmul.f32 %v6579, %v6569
        %v6591 = vmul.f32 %v6579, %v6570
        %v6592 = vmul.f32 %v6579, %v6571
        %v6593 = vmul.f32 %v6579, %v6572
        %v6594 = vmul.f32 %v6579, %v6573
        %v6595 = vmul.f32 %v6579, %v6574
        %v6596 = vmul.f32 %v6579, %v6575
        %v6597 = vadd.f32 %v6544, %v6581
        %v6598 = vadd.f32 %v6545, %v6582
        %v6599 = vadd.f32 %v6546, %v6583
        %v6600 = vadd.f32 %v6547, %v6584
        %v6601 = vadd.f32 %v6548, %v6585
        %v6602 = vadd.f32 %v6549, %v6586
        %v6603 = vadd.f32 %v6550, %v6587
        %v6604 = vadd.f32 %v6551, %v6588
        %v6605 = vadd.f32 %v6552, %v6589
        %v6606 = vadd.f32 %v6553, %v6590
        %v6607 = vadd.f32 %v6554, %v6591
        %v6608 = vadd.f32 %v6555, %v6592
        %v6609 = vadd.f32 %v6556, %v6593
        %v6610 = vadd.f32 %v6557, %v6594
        %v6611 = vadd.f32 %v6558, %v6595
        %v6612 = vadd.f32 %v6559, %v6596
        %6613 = vst [vmem:[#allocation2 + $0x180] sm:$0xff] %v6597
        %6614 = vst [vmem:[#allocation2 + $0x188] sm:$0xff] %v6598
        %6615 = vst [vmem:[#allocation2 + $0x190] sm:$0xff] %v6599
        %6616 = vst [vmem:[#allocation2 + $0x198] sm:$0xff] %v6600
        %6617 = vst [vmem:[#allocation2 + $0x1a0] sm:$0xff] %v6601
        %6618 = vst [vmem:[#allocation2 + $0x1a8] sm:$0xff] %v6602
        %6619 = vst [vmem:[#allocation2 + $0x1b0] sm:$0xff] %v6603
        %6620 = vst [vmem:[#allocation2 + $0x1b8] sm:$0xff] %v6604
        %6621 = vst [vmem:[#allocation2 + $0x1c0] sm:$0xff] %v6605
        %6622 = vst [vmem:[#allocation2 + $0x1c8] sm:$0xff] %v6606
        %6623 = vst [vmem:[#allocation2 + $0x1d0] sm:$0xff] %v6607
        %6624 = vst [vmem:[#allocation2 + $0x1d8] sm:$0xff] %v6608
        %6625 = vst [vmem:[#allocation2 + $0x1e0] sm:$0xff] %v6609
        %6626 = vst [vmem:[#allocation2 + $0x1e8] sm:$0xff] %v6610
        %6627 = vst [vmem:[#allocation2 + $0x1f0] sm:$0xff] %v6611
        %6628 = vst [vmem:[#allocation2 + $0x1f8] sm:$0xff] %v6612
        %v6629 = vld [vmem:[#allocation2] sm:$0xff]
        %v6630 = vld [vmem:[#allocation2 + $0x8] sm:$0xff]
        %v6631 = vld [vmem:[#allocation2 + $0x10] sm:$0xff]
        %v6632 = vld [vmem:[#allocation2 + $0x18] sm:$0xff]
        %v6633 = vld [vmem:[#allocation2 + $0x20] sm:$0xff]
        %v6634 = vld [vmem:[#allocation2 + $0x28] sm:$0xff]
        %v6635 = vld [vmem:[#allocation2 + $0x30] sm:$0xff]
        %v6636 = vld [vmem:[#allocation2 + $0x38] sm:$0xff]
        %v6637 = vld [vmem:[#allocation2 + $0x40] sm:$0xff]
        %v6638 = vld [vmem:[#allocation2 + $0x48] sm:$0xff]
        %v6639 = vld [vmem:[#allocation2 + $0x50] sm:$0xff]
        %v6640 = vld [vmem:[#allocation2 + $0x58] sm:$0xff]
        %v6641 = vld [vmem:[#allocation2 + $0x60] sm:$0xff]
        %v6642 = vld [vmem:[#allocation2 + $0x68] sm:$0xff]
        %v6643 = vld [vmem:[#allocation2 + $0x70] sm:$0xff]
        %v6644 = vld [vmem:[#allocation2 + $0x78] sm:$0xff]
        %v6645 = vld [vmem:[#allocation2 + $0x80] sm:$0xff]
        %v6646 = vld [vmem:[#allocation2 + $0x88] sm:$0xff]
        %v6647 = vld [vmem:[#allocation2 + $0x90] sm:$0xff]
        %v6648 = vld [vmem:[#allocation2 + $0x98] sm:$0xff]
        %v6649 = vld [vmem:[#allocation2 + $0xa0] sm:$0xff]
        %v6650 = vld [vmem:[#allocation2 + $0xa8] sm:$0xff]
        %v6651 = vld [vmem:[#allocation2 + $0xb0] sm:$0xff]
        %v6652 = vld [vmem:[#allocation2 + $0xb8] sm:$0xff]
        %v6653 = vld [vmem:[#allocation2 + $0xc0] sm:$0xff]
        %v6654 = vld [vmem:[#allocation2 + $0xc8] sm:$0xff]
        %v6655 = vld [vmem:[#allocation2 + $0xd0] sm:$0xff]
        %v6656 = vld [vmem:[#allocation2 + $0xd8] sm:$0xff]
        %v6657 = vld [vmem:[#allocation2 + $0xe0] sm:$0xff]
        %v6658 = vld [vmem:[#allocation2 + $0xe8] sm:$0xff]
        %v6659 = vld [vmem:[#allocation2 + $0xf0] sm:$0xff]
        %v6660 = vld [vmem:[#allocation2 + $0xf8] sm:$0xff]
        %v6661 = vld [vmem:[#allocation2 + $0x100] sm:$0xff]
        %v6662 = vld [vmem:[#allocation2 + $0x108] sm:$0xff]
        %v6663 = vld [vmem:[#allocation2 + $0x110] sm:$0xff]
        %v6664 = vld [vmem:[#allocation2 + $0x118] sm:$0xff]
        %v6665 = vld [vmem:[#allocation2 + $0x120] sm:$0xff]
        %v6666 = vld [vmem:[#allocation2 + $0x128] sm:$0xff]
        %v6667 = vld [vmem:[#allocation2 + $0x130] sm:$0xff]
        %v6668 = vld [vmem:[#allocation2 + $0x138] sm:$0xff]
        %v6669 = vld [vmem:[#allocation2 + $0x140] sm:$0xff]
        %v6670 = vld [vmem:[#allocation2 + $0x148] sm:$0xff]
        %v6671 = vld [vmem:[#allocation2 + $0x150] sm:$0xff]
        %v6672 = vld [vmem:[#allocation2 + $0x158] sm:$0xff]
        %v6673 = vld [vmem:[#allocation2 + $0x160] sm:$0xff]
        %v6674 = vld [vmem:[#allocation2 + $0x168] sm:$0xff]
        %v6675 = vld [vmem:[#allocation2 + $0x170] sm:$0xff]
        %v6676 = vld [vmem:[#allocation2 + $0x178] sm:$0xff]
        %v6677 = vld [vmem:[#allocation2 + $0x180] sm:$0xff]
        %v6678 = vld [vmem:[#allocation2 + $0x188] sm:$0xff]
        %v6679 = vld [vmem:[#allocation2 + $0x190] sm:$0xff]
        %v6680 = vld [vmem:[#allocation2 + $0x198] sm:$0xff]
        %v6681 = vld [vmem:[#allocation2 + $0x1a0] sm:$0xff]
        %v6682 = vld [vmem:[#allocation2 + $0x1a8] sm:$0xff]
        %v6683 = vld [vmem:[#allocation2 + $0x1b0] sm:$0xff]
        %v6684 = vld [vmem:[#allocation2 + $0x1b8] sm:$0xff]
        %v6685 = vld [vmem:[#allocation2 + $0x1c0] sm:$0xff]
        %v6686 = vld [vmem:[#allocation2 + $0x1c8] sm:$0xff]
        %v6687 = vld [vmem:[#allocation2 + $0x1d0] sm:$0xff]
        %v6688 = vld [vmem:[#allocation2 + $0x1d8] sm:$0xff]
        %v6689 = vld [vmem:[#allocation2 + $0x1e0] sm:$0xff]
        %v6690 = vld [vmem:[#allocation2 + $0x1e8] sm:$0xff]
        %v6691 = vld [vmem:[#allocation2 + $0x1f0] sm:$0xff]
        %v6692 = vld [vmem:[#allocation2 + $0x1f8] sm:$0xff]
        %v6693 = vld [vmem:[%s10] sm:$0xff]
        %v6694 = vld [vmem:[%s10 + $0x8] sm:$0xff]
        %v6695 = vld [vmem:[%s10 + $0x10] sm:$0xff]
        %v6696 = vld [vmem:[%s10 + $0x18] sm:$0xff]
        %v6697 = vld [vmem:[%s11] sm:$0xff]
        %v6698 = vld [vmem:[%s11 + $0x8] sm:$0xff]
        %v6699 = vld [vmem:[%s11 + $0x10] sm:$0xff]
        %v6700 = vld [vmem:[%s11 + $0x18] sm:$0xff]
        %6702 = vset.pattern.permute.xlu0 0
        %6703 = vperm.xlu0 %6702, %v6697
        %v6704 = vpop.permute.xlu0 %6703
        %6707 = vset.pattern.permute.xlu0 0
        %6708 = vperm.xlu0 %6707, %v6698
        %v6709 = vpop.permute.xlu0 %6708
        %6712 = vset.pattern.permute.xlu0 0
        %6713 = vperm.xlu0 %6712, %v6699
        %v6714 = vpop.permute.xlu0 %6713
        %6717 = vset.pattern.permute.xlu0 0
        %6718 = vperm.xlu0 %6717, %v6700
        %v6719 = vpop.permute.xlu0 %6718
        %v6722 = vsel %vm530, %v6693, 0
        %v6725 = vsel %vm530, %v6694, 0
        %v6728 = vsel %vm530, %v6695, 0
        %v6731 = vsel %vm530, %v6696, 0
        %6733 = vmatprep.subr.mxu0 0.0
        %6734 = vmatpush1.msra.mxu0 0.0
        %6735 = vmatprep.subr.mxu0 0.0
        %6736 = vmatpush1.msra.mxu0 0.0
        %6737 = vmatprep.subr.mxu0 0.0
        %6738 = vmatpush1.msra.mxu0 0.0
        %6739 = vmatprep.subr.mxu0 0.0
        %6740 = vmatpush1.msra.mxu0 0.0
        %6741 = vmatprep.subr.mxu0 0.0
        %6742 = vmatpush1.msra.mxu0 0.0
        %6743 = vmatprep.subr.mxu0 0.0
        %6744 = vmatpush1.msra.mxu0 0.0
        %6745 = vmatprep.subr.mxu0 0.0
        %6746 = vmatpush1.msra.mxu0 0.0
        %6747 = vmatprep.subr.mxu0 0.0
        %6748 = vmatpush1.msra.mxu0 0.0
        %6749 = vmatprep.subr.mxu0 0.0
        %6750 = vmatpush1.msra.mxu0 0.0
        %6751 = vmatprep.subr.mxu0 0.0
        %6752 = vmatpush1.msra.mxu0 0.0
        %6753 = vmatprep.subr.mxu0 0.0
        %6754 = vmatpush1.msra.mxu0 0.0
        %6755 = vmatprep.subr.mxu0 0.0
        %6756 = vmatpush1.msra.mxu0 0.0
        %6757 = vmatprep.subr.mxu0 %v6678
        %6758 = vmatpush1.msra.mxu0 %v6677
        %6759 = vmatprep.subr.mxu0 %v6662
        %6760 = vmatpush1.msra.mxu0 %v6661
        %6761 = vmatprep.subr.mxu0 %v6646
        %6762 = vmatpush1.msra.mxu0 %v6645
        %6763 = vmatprep.subr.mxu0 %v6630
        %6764 = vmatpush1.msra.mxu0 %v6629
        %6765 = vmatprep.subr.mxu0 0.0
        %6766 = vmatpush2.msra.mxu0 0.0
        %6767 = vmatprep.subr.mxu0 0.0
        %6768 = vmatpush2.msra.mxu0 0.0
        %6769 = vmatprep.subr.mxu0 0.0
        %6770 = vmatpush2.msra.mxu0 0.0
        %6771 = vmatprep.subr.mxu0 0.0
        %6772 = vmatpush2.msra.mxu0 0.0
        %6773 = vmatprep.subr.mxu0 0.0
        %6774 = vmatpush2.msra.mxu0 0.0
        %6775 = vmatprep.subr.mxu0 0.0
        %6776 = vmatpush2.msra.mxu0 0.0
        %6777 = vmatprep.subr.mxu0 0.0
        %6778 = vmatpush2.msra.mxu0 0.0
        %6779 = vmatprep.subr.mxu0 0.0
        %6780 = vmatpush2.msra.mxu0 0.0
        %6781 = vmatprep.subr.mxu0 0.0
        %6782 = vmatpush2.msra.mxu0 0.0
        %6783 = vmatprep.subr.mxu0 0.0
        %6784 = vmatpush2.msra.mxu0 0.0
        %6785 = vmatprep.subr.mxu0 0.0
        %6786 = vmatpush2.msra.mxu0 0.0
        %6787 = vmatprep.subr.mxu0 0.0
        %6788 = vmatpush2.msra.mxu0 0.0
        %6789 = vmatprep.subr.mxu0 0.0
        %6790 = vmatpush2.msra.mxu0 0.0
        %6791 = vmatprep.subr.mxu0 0.0
        %6792 = vmatpush2.msra.mxu0 0.0
        %6793 = vmatprep.subr.mxu0 0.0
        %6794 = vmatpush2.msra.mxu0 0.0
        %6795 = vmatprep.subr.mxu0 0.0
        %6796 = vmatpush2.msra.mxu0 0.0
        %6797 = vmatprep.mubr.f32.mxu0 0.0
        %6798 = vmatmul.mubr.f32.gmra.mxu0 %v6722
        %v6799 = vpop.f32.mrf.mxu0
        %v6800 = vadd.f32 %v6704, %v6799
        %v6801 = vpop.f32.mrf.mxu0
        %v6802 = vadd.f32 %v6704, %v6801
        %6803 = vmatprep.mubr.f32.mxu0 0.0
        %6804 = vmatmul.mubr.f32.gmra.mxu0 %v6725
        %v6805 = vpop.f32.mrf.mxu0
        %v6806 = vadd.f32 %v6709, %v6805
        %v6807 = vpop.f32.mrf.mxu0
        %v6808 = vadd.f32 %v6709, %v6807
        %6809 = vmatprep.mubr.f32.mxu0 0.0
        %6810 = vmatmul.mubr.f32.gmra.mxu0 %v6728
        %v6811 = vpop.f32.mrf.mxu0
        %v6812 = vadd.f32 %v6714, %v6811
        %v6813 = vpop.f32.mrf.mxu0
        %v6814 = vadd.f32 %v6714, %v6813
        %6815 = vmatprep.mubr.f32.mxu0 0.0
        %6816 = vmatmul.mubr.f32.gmra.mxu0 %v6731
        %v6817 = vpop.f32.mrf.mxu0
        %v6818 = vadd.f32 %v6719, %v6817
        %v6819 = vpop.f32.mrf.mxu0
        %v6820 = vadd.f32 %v6719, %v6819
        %6821 = vdwg.mxu0
        %6822 = vmatprep.subr.mxu0 0.0
        %6823 = vmatpush1.msra.mxu0 0.0
        %6824 = vmatprep.subr.mxu0 0.0
        %6825 = vmatpush1.msra.mxu0 0.0
        %6826 = vmatprep.subr.mxu0 0.0
        %6827 = vmatpush1.msra.mxu0 0.0
        %6828 = vmatprep.subr.mxu0 0.0
        %6829 = vmatpush1.msra.mxu0 0.0
        %6830 = vmatprep.subr.mxu0 0.0
        %6831 = vmatpush1.msra.mxu0 0.0
        %6832 = vmatprep.subr.mxu0 0.0
        %6833 = vmatpush1.msra.mxu0 0.0
        %6834 = vmatprep.subr.mxu0 0.0
        %6835 = vmatpush1.msra.mxu0 0.0
        %6836 = vmatprep.subr.mxu0 0.0
        %6837 = vmatpush1.msra.mxu0 0.0
        %6838 = vmatprep.subr.mxu0 0.0
        %6839 = vmatpush1.msra.mxu0 0.0
        %6840 = vmatprep.subr.mxu0 0.0
        %6841 = vmatpush1.msra.mxu0 0.0
        %6842 = vmatprep.subr.mxu0 0.0
        %6843 = vmatpush1.msra.mxu0 0.0
        %6844 = vmatprep.subr.mxu0 0.0
        %6845 = vmatpush1.msra.mxu0 0.0
        %6846 = vmatprep.subr.mxu0 %v6680
        %6847 = vmatpush1.msra.mxu0 %v6679
        %6848 = vmatprep.subr.mxu0 %v6664
        %6849 = vmatpush1.msra.mxu0 %v6663
        %6850 = vmatprep.subr.mxu0 %v6648
        %6851 = vmatpush1.msra.mxu0 %v6647
        %6852 = vmatprep.subr.mxu0 %v6632
        %6853 = vmatpush1.msra.mxu0 %v6631
        %6854 = vmatprep.subr.mxu0 0.0
        %6855 = vmatpush2.msra.mxu0 0.0
        %6856 = vmatprep.subr.mxu0 0.0
        %6857 = vmatpush2.msra.mxu0 0.0
        %6858 = vmatprep.subr.mxu0 0.0
        %6859 = vmatpush2.msra.mxu0 0.0
        %6860 = vmatprep.subr.mxu0 0.0
        %6861 = vmatpush2.msra.mxu0 0.0
        %6862 = vmatprep.subr.mxu0 0.0
        %6863 = vmatpush2.msra.mxu0 0.0
        %6864 = vmatprep.subr.mxu0 0.0
        %6865 = vmatpush2.msra.mxu0 0.0
        %6866 = vmatprep.subr.mxu0 0.0
        %6867 = vmatpush2.msra.mxu0 0.0
        %6868 = vmatprep.subr.mxu0 0.0
        %6869 = vmatpush2.msra.mxu0 0.0
        %6870 = vmatprep.subr.mxu0 0.0
        %6871 = vmatpush2.msra.mxu0 0.0
        %6872 = vmatprep.subr.mxu0 0.0
        %6873 = vmatpush2.msra.mxu0 0.0
        %6874 = vmatprep.subr.mxu0 0.0
        %6875 = vmatpush2.msra.mxu0 0.0
        %6876 = vmatprep.subr.mxu0 0.0
        %6877 = vmatpush2.msra.mxu0 0.0
        %6878 = vmatprep.subr.mxu0 0.0
        %6879 = vmatpush2.msra.mxu0 0.0
        %6880 = vmatprep.subr.mxu0 0.0
        %6881 = vmatpush2.msra.mxu0 0.0
        %6882 = vmatprep.subr.mxu0 0.0
        %6883 = vmatpush2.msra.mxu0 0.0
        %6884 = vmatprep.subr.mxu0 0.0
        %6885 = vmatpush2.msra.mxu0 0.0
        %6886 = vmatprep.mubr.f32.mxu0 0.0
        %6887 = vmatmul.mubr.f32.gmra.mxu0 %v6722
        %v6888 = vpop.f32.mrf.mxu0
        %v6889 = vadd.f32 %v6704, %v6888
        %v6890 = vpop.f32.mrf.mxu0
        %v6891 = vadd.f32 %v6704, %v6890
        %6892 = vmatprep.mubr.f32.mxu0 0.0
        %6893 = vmatmul.mubr.f32.gmra.mxu0 %v6725
        %v6894 = vpop.f32.mrf.mxu0
        %v6895 = vadd.f32 %v6709, %v6894
        %v6896 = vpop.f32.mrf.mxu0
        %v6897 = vadd.f32 %v6709, %v6896
        %6898 = vmatprep.mubr.f32.mxu0 0.0
        %6899 = vmatmul.mubr.f32.gmra.mxu0 %v6728
        %v6900 = vpop.f32.mrf.mxu0
        %v6901 = vadd.f32 %v6714, %v6900
        %v6902 = vpop.f32.mrf.mxu0
        %v6903 = vadd.f32 %v6714, %v6902
        %6904 = vmatprep.mubr.f32.mxu0 0.0
        %6905 = vmatmul.mubr.f32.gmra.mxu0 %v6731
        %v6906 = vpop.f32.mrf.mxu0
        %v6907 = vadd.f32 %v6719, %v6906
        %v6908 = vpop.f32.mrf.mxu0
        %v6909 = vadd.f32 %v6719, %v6908
        %6910 = vdwg.mxu0
        %6911 = vmatprep.subr.mxu0 0.0
        %6912 = vmatpush1.msra.mxu0 0.0
        %6913 = vmatprep.subr.mxu0 0.0
        %6914 = vmatpush1.msra.mxu0 0.0
        %6915 = vmatprep.subr.mxu0 0.0
        %6916 = vmatpush1.msra.mxu0 0.0
        %6917 = vmatprep.subr.mxu0 0.0
        %6918 = vmatpush1.msra.mxu0 0.0
        %6919 = vmatprep.subr.mxu0 0.0
        %6920 = vmatpush1.msra.mxu0 0.0
        %6921 = vmatprep.subr.mxu0 0.0
        %6922 = vmatpush1.msra.mxu0 0.0
        %6923 = vmatprep.subr.mxu0 0.0
        %6924 = vmatpush1.msra.mxu0 0.0
        %6925 = vmatprep.subr.mxu0 0.0
        %6926 = vmatpush1.msra.mxu0 0.0
        %6927 = vmatprep.subr.mxu0 0.0
        %6928 = vmatpush1.msra.mxu0 0.0
        %6929 = vmatprep.subr.mxu0 0.0
        %6930 = vmatpush1.msra.mxu0 0.0
        %6931 = vmatprep.subr.mxu0 0.0
        %6932 = vmatpush1.msra.mxu0 0.0
        %6933 = vmatprep.subr.mxu0 0.0
        %6934 = vmatpush1.msra.mxu0 0.0
        %6935 = vmatprep.subr.mxu0 %v6682
        %6936 = vmatpush1.msra.mxu0 %v6681
        %6937 = vmatprep.subr.mxu0 %v6666
        %6938 = vmatpush1.msra.mxu0 %v6665
        %6939 = vmatprep.subr.mxu0 %v6650
        %6940 = vmatpush1.msra.mxu0 %v6649
        %6941 = vmatprep.subr.mxu0 %v6634
        %6942 = vmatpush1.msra.mxu0 %v6633
        %6943 = vmatprep.subr.mxu0 0.0
        %6944 = vmatpush2.msra.mxu0 0.0
        %6945 = vmatprep.subr.mxu0 0.0
        %6946 = vmatpush2.msra.mxu0 0.0
        %6947 = vmatprep.subr.mxu0 0.0
        %6948 = vmatpush2.msra.mxu0 0.0
        %6949 = vmatprep.subr.mxu0 0.0
        %6950 = vmatpush2.msra.mxu0 0.0
        %6951 = vmatprep.subr.mxu0 0.0
        %6952 = vmatpush2.msra.mxu0 0.0
        %6953 = vmatprep.subr.mxu0 0.0
        %6954 = vmatpush2.msra.mxu0 0.0
        %6955 = vmatprep.subr.mxu0 0.0
        %6956 = vmatpush2.msra.mxu0 0.0
        %6957 = vmatprep.subr.mxu0 0.0
        %6958 = vmatpush2.msra.mxu0 0.0
        %6959 = vmatprep.subr.mxu0 0.0
        %6960 = vmatpush2.msra.mxu0 0.0
        %6961 = vmatprep.subr.mxu0 0.0
        %6962 = vmatpush2.msra.mxu0 0.0
        %6963 = vmatprep.subr.mxu0 0.0
        %6964 = vmatpush2.msra.mxu0 0.0
        %6965 = vmatprep.subr.mxu0 0.0
        %6966 = vmatpush2.msra.mxu0 0.0
        %6967 = vmatprep.subr.mxu0 0.0
        %6968 = vmatpush2.msra.mxu0 0.0
        %6969 = vmatprep.subr.mxu0 0.0
        %6970 = vmatpush2.msra.mxu0 0.0
        %6971 = vmatprep.subr.mxu0 0.0
        %6972 = vmatpush2.msra.mxu0 0.0
        %6973 = vmatprep.subr.mxu0 0.0
        %6974 = vmatpush2.msra.mxu0 0.0
        %6975 = vmatprep.mubr.f32.mxu0 0.0
        %6976 = vmatmul.mubr.f32.gmra.mxu0 %v6722
        %v6977 = vpop.f32.mrf.mxu0
        %v6978 = vadd.f32 %v6704, %v6977
        %v6979 = vpop.f32.mrf.mxu0
        %v6980 = vadd.f32 %v6704, %v6979
        %6981 = vmatprep.mubr.f32.mxu0 0.0
        %6982 = vmatmul.mubr.f32.gmra.mxu0 %v6725
        %v6983 = vpop.f32.mrf.mxu0
        %v6984 = vadd.f32 %v6709, %v6983
        %v6985 = vpop.f32.mrf.mxu0
        %v6986 = vadd.f32 %v6709, %v6985
        %6987 = vmatprep.mubr.f32.mxu0 0.0
        %6988 = vmatmul.mubr.f32.gmra.mxu0 %v6728
        %v6989 = vpop.f32.mrf.mxu0
        %v6990 = vadd.f32 %v6714, %v6989
        %v6991 = vpop.f32.mrf.mxu0
        %v6992 = vadd.f32 %v6714, %v6991
        %6993 = vmatprep.mubr.f32.mxu0 0.0
        %6994 = vmatmul.mubr.f32.gmra.mxu0 %v6731
        %v6995 = vpop.f32.mrf.mxu0
        %v6996 = vadd.f32 %v6719, %v6995
        %v6997 = vpop.f32.mrf.mxu0
        %v6998 = vadd.f32 %v6719, %v6997
        %6999 = vdwg.mxu0
        %7000 = vmatprep.subr.mxu0 0.0
        %7001 = vmatpush1.msra.mxu0 0.0
        %7002 = vmatprep.subr.mxu0 0.0
        %7003 = vmatpush1.msra.mxu0 0.0
        %7004 = vmatprep.subr.mxu0 0.0
        %7005 = vmatpush1.msra.mxu0 0.0
        %7006 = vmatprep.subr.mxu0 0.0
        %7007 = vmatpush1.msra.mxu0 0.0
        %7008 = vmatprep.subr.mxu0 0.0
        %7009 = vmatpush1.msra.mxu0 0.0
        %7010 = vmatprep.subr.mxu0 0.0
        %7011 = vmatpush1.msra.mxu0 0.0
        %7012 = vmatprep.subr.mxu0 0.0
        %7013 = vmatpush1.msra.mxu0 0.0
        %7014 = vmatprep.subr.mxu0 0.0
        %7015 = vmatpush1.msra.mxu0 0.0
        %7016 = vmatprep.subr.mxu0 0.0
        %7017 = vmatpush1.msra.mxu0 0.0
        %7018 = vmatprep.subr.mxu0 0.0
        %7019 = vmatpush1.msra.mxu0 0.0
        %7020 = vmatprep.subr.mxu0 0.0
        %7021 = vmatpush1.msra.mxu0 0.0
        %7022 = vmatprep.subr.mxu0 0.0
        %7023 = vmatpush1.msra.mxu0 0.0
        %7024 = vmatprep.subr.mxu0 %v6684
        %7025 = vmatpush1.msra.mxu0 %v6683
        %7026 = vmatprep.subr.mxu0 %v6668
        %7027 = vmatpush1.msra.mxu0 %v6667
        %7028 = vmatprep.subr.mxu0 %v6652
        %7029 = vmatpush1.msra.mxu0 %v6651
        %7030 = vmatprep.subr.mxu0 %v6636
        %7031 = vmatpush1.msra.mxu0 %v6635
        %7032 = vmatprep.subr.mxu0 0.0
        %7033 = vmatpush2.msra.mxu0 0.0
        %7034 = vmatprep.subr.mxu0 0.0
        %7035 = vmatpush2.msra.mxu0 0.0
        %7036 = vmatprep.subr.mxu0 0.0
        %7037 = vmatpush2.msra.mxu0 0.0
        %7038 = vmatprep.subr.mxu0 0.0
        %7039 = vmatpush2.msra.mxu0 0.0
        %7040 = vmatprep.subr.mxu0 0.0
        %7041 = vmatpush2.msra.mxu0 0.0
        %7042 = vmatprep.subr.mxu0 0.0
        %7043 = vmatpush2.msra.mxu0 0.0
        %7044 = vmatprep.subr.mxu0 0.0
        %7045 = vmatpush2.msra.mxu0 0.0
        %7046 = vmatprep.subr.mxu0 0.0
        %7047 = vmatpush2.msra.mxu0 0.0
        %7048 = vmatprep.subr.mxu0 0.0
        %7049 = vmatpush2.msra.mxu0 0.0
        %7050 = vmatprep.subr.mxu0 0.0
        %7051 = vmatpush2.msra.mxu0 0.0
        %7052 = vmatprep.subr.mxu0 0.0
        %7053 = vmatpush2.msra.mxu0 0.0
        %7054 = vmatprep.subr.mxu0 0.0
        %7055 = vmatpush2.msra.mxu0 0.0
        %7056 = vmatprep.subr.mxu0 0.0
        %7057 = vmatpush2.msra.mxu0 0.0
        %7058 = vmatprep.subr.mxu0 0.0
        %7059 = vmatpush2.msra.mxu0 0.0
        %7060 = vmatprep.subr.mxu0 0.0
        %7061 = vmatpush2.msra.mxu0 0.0
        %7062 = vmatprep.subr.mxu0 0.0
        %7063 = vmatpush2.msra.mxu0 0.0
        %7064 = vmatprep.mubr.f32.mxu0 0.0
        %7065 = vmatmul.mubr.f32.gmra.mxu0 %v6722
        %v7066 = vpop.f32.mrf.mxu0
        %v7067 = vadd.f32 %v6704, %v7066
        %v7068 = vpop.f32.mrf.mxu0
        %v7069 = vadd.f32 %v6704, %v7068
        %7070 = vmatprep.mubr.f32.mxu0 0.0
        %7071 = vmatmul.mubr.f32.gmra.mxu0 %v6725
        %v7072 = vpop.f32.mrf.mxu0
        %v7073 = vadd.f32 %v6709, %v7072
        %v7074 = vpop.f32.mrf.mxu0
        %v7075 = vadd.f32 %v6709, %v7074
        %7076 = vmatprep.mubr.f32.mxu0 0.0
        %7077 = vmatmul.mubr.f32.gmra.mxu0 %v6728
        %v7078 = vpop.f32.mrf.mxu0
        %v7079 = vadd.f32 %v6714, %v7078
        %v7080 = vpop.f32.mrf.mxu0
        %v7081 = vadd.f32 %v6714, %v7080
        %7082 = vmatprep.mubr.f32.mxu0 0.0
        %7083 = vmatmul.mubr.f32.gmra.mxu0 %v6731
        %v7084 = vpop.f32.mrf.mxu0
        %v7085 = vadd.f32 %v6719, %v7084
        %v7086 = vpop.f32.mrf.mxu0
        %v7087 = vadd.f32 %v6719, %v7086
        %7088 = vdwg.mxu0
        %7089 = vmatprep.subr.mxu0 0.0
        %7090 = vmatpush1.msra.mxu0 0.0
        %7091 = vmatprep.subr.mxu0 0.0
        %7092 = vmatpush1.msra.mxu0 0.0
        %7093 = vmatprep.subr.mxu0 0.0
        %7094 = vmatpush1.msra.mxu0 0.0
        %7095 = vmatprep.subr.mxu0 0.0
        %7096 = vmatpush1.msra.mxu0 0.0
        %7097 = vmatprep.subr.mxu0 0.0
        %7098 = vmatpush1.msra.mxu0 0.0
        %7099 = vmatprep.subr.mxu0 0.0
        %7100 = vmatpush1.msra.mxu0 0.0
        %7101 = vmatprep.subr.mxu0 0.0
        %7102 = vmatpush1.msra.mxu0 0.0
        %7103 = vmatprep.subr.mxu0 0.0
        %7104 = vmatpush1.msra.mxu0 0.0
        %7105 = vmatprep.subr.mxu0 0.0
        %7106 = vmatpush1.msra.mxu0 0.0
        %7107 = vmatprep.subr.mxu0 0.0
        %7108 = vmatpush1.msra.mxu0 0.0
        %7109 = vmatprep.subr.mxu0 0.0
        %7110 = vmatpush1.msra.mxu0 0.0
        %7111 = vmatprep.subr.mxu0 0.0
        %7112 = vmatpush1.msra.mxu0 0.0
        %7113 = vmatprep.subr.mxu0 %v6686
        %7114 = vmatpush1.msra.mxu0 %v6685
        %7115 = vmatprep.subr.mxu0 %v6670
        %7116 = vmatpush1.msra.mxu0 %v6669
        %7117 = vmatprep.subr.mxu0 %v6654
        %7118 = vmatpush1.msra.mxu0 %v6653
        %7119 = vmatprep.subr.mxu0 %v6638
        %7120 = vmatpush1.msra.mxu0 %v6637
        %7121 = vmatprep.subr.mxu0 0.0
        %7122 = vmatpush2.msra.mxu0 0.0
        %7123 = vmatprep.subr.mxu0 0.0
        %7124 = vmatpush2.msra.mxu0 0.0
        %7125 = vmatprep.subr.mxu0 0.0
        %7126 = vmatpush2.msra.mxu0 0.0
        %7127 = vmatprep.subr.mxu0 0.0
        %7128 = vmatpush2.msra.mxu0 0.0
        %7129 = vmatprep.subr.mxu0 0.0
        %7130 = vmatpush2.msra.mxu0 0.0
        %7131 = vmatprep.subr.mxu0 0.0
        %7132 = vmatpush2.msra.mxu0 0.0
        %7133 = vmatprep.subr.mxu0 0.0
        %7134 = vmatpush2.msra.mxu0 0.0
        %7135 = vmatprep.subr.mxu0 0.0
        %7136 = vmatpush2.msra.mxu0 0.0
        %7137 = vmatprep.subr.mxu0 0.0
        %7138 = vmatpush2.msra.mxu0 0.0
        %7139 = vmatprep.subr.mxu0 0.0
        %7140 = vmatpush2.msra.mxu0 0.0
        %7141 = vmatprep.subr.mxu0 0.0
        %7142 = vmatpush2.msra.mxu0 0.0
        %7143 = vmatprep.subr.mxu0 0.0
        %7144 = vmatpush2.msra.mxu0 0.0
        %7145 = vmatprep.subr.mxu0 0.0
        %7146 = vmatpush2.msra.mxu0 0.0
        %7147 = vmatprep.subr.mxu0 0.0
        %7148 = vmatpush2.msra.mxu0 0.0
        %7149 = vmatprep.subr.mxu0 0.0
        %7150 = vmatpush2.msra.mxu0 0.0
        %7151 = vmatprep.subr.mxu0 0.0
        %7152 = vmatpush2.msra.mxu0 0.0
        %7153 = vmatprep.mubr.f32.mxu0 0.0
        %7154 = vmatmul.mubr.f32.gmra.mxu0 %v6722
        %v7155 = vpop.f32.mrf.mxu0
        %v7156 = vadd.f32 %v6704, %v7155
        %v7157 = vpop.f32.mrf.mxu0
        %v7158 = vadd.f32 %v6704, %v7157
        %7159 = vmatprep.mubr.f32.mxu0 0.0
        %7160 = vmatmul.mubr.f32.gmra.mxu0 %v6725
        %v7161 = vpop.f32.mrf.mxu0
        %v7162 = vadd.f32 %v6709, %v7161
        %v7163 = vpop.f32.mrf.mxu0
        %v7164 = vadd.f32 %v6709, %v7163
        %7165 = vmatprep.mubr.f32.mxu0 0.0
        %7166 = vmatmul.mubr.f32.gmra.mxu0 %v6728
        %v7167 = vpop.f32.mrf.mxu0
        %v7168 = vadd.f32 %v6714, %v7167
        %v7169 = vpop.f32.mrf.mxu0
        %v7170 = vadd.f32 %v6714, %v7169
        %7171 = vmatprep.mubr.f32.mxu0 0.0
        %7172 = vmatmul.mubr.f32.gmra.mxu0 %v6731
        %v7173 = vpop.f32.mrf.mxu0
        %v7174 = vadd.f32 %v6719, %v7173
        %v7175 = vpop.f32.mrf.mxu0
        %v7176 = vadd.f32 %v6719, %v7175
        %7177 = vdwg.mxu0
        %7178 = vmatprep.subr.mxu0 0.0
        %7179 = vmatpush1.msra.mxu0 0.0
        %7180 = vmatprep.subr.mxu0 0.0
        %7181 = vmatpush1.msra.mxu0 0.0
        %7182 = vmatprep.subr.mxu0 0.0
        %7183 = vmatpush1.msra.mxu0 0.0
        %7184 = vmatprep.subr.mxu0 0.0
        %7185 = vmatpush1.msra.mxu0 0.0
        %7186 = vmatprep.subr.mxu0 0.0
        %7187 = vmatpush1.msra.mxu0 0.0
        %7188 = vmatprep.subr.mxu0 0.0
        %7189 = vmatpush1.msra.mxu0 0.0
        %7190 = vmatprep.subr.mxu0 0.0
        %7191 = vmatpush1.msra.mxu0 0.0
        %7192 = vmatprep.subr.mxu0 0.0
        %7193 = vmatpush1.msra.mxu0 0.0
        %7194 = vmatprep.subr.mxu0 0.0
        %7195 = vmatpush1.msra.mxu0 0.0
        %7196 = vmatprep.subr.mxu0 0.0
        %7197 = vmatpush1.msra.mxu0 0.0
        %7198 = vmatprep.subr.mxu0 0.0
        %7199 = vmatpush1.msra.mxu0 0.0
        %7200 = vmatprep.subr.mxu0 0.0
        %7201 = vmatpush1.msra.mxu0 0.0
        %7202 = vmatprep.subr.mxu0 %v6688
        %7203 = vmatpush1.msra.mxu0 %v6687
        %7204 = vmatprep.subr.mxu0 %v6672
        %7205 = vmatpush1.msra.mxu0 %v6671
        %7206 = vmatprep.subr.mxu0 %v6656
        %7207 = vmatpush1.msra.mxu0 %v6655
        %7208 = vmatprep.subr.mxu0 %v6640
        %7209 = vmatpush1.msra.mxu0 %v6639
        %7210 = vmatprep.subr.mxu0 0.0
        %7211 = vmatpush2.msra.mxu0 0.0
        %7212 = vmatprep.subr.mxu0 0.0
        %7213 = vmatpush2.msra.mxu0 0.0
        %7214 = vmatprep.subr.mxu0 0.0
        %7215 = vmatpush2.msra.mxu0 0.0
        %7216 = vmatprep.subr.mxu0 0.0
        %7217 = vmatpush2.msra.mxu0 0.0
        %7218 = vmatprep.subr.mxu0 0.0
        %7219 = vmatpush2.msra.mxu0 0.0
        %7220 = vmatprep.subr.mxu0 0.0
        %7221 = vmatpush2.msra.mxu0 0.0
        %7222 = vmatprep.subr.mxu0 0.0
        %7223 = vmatpush2.msra.mxu0 0.0
        %7224 = vmatprep.subr.mxu0 0.0
        %7225 = vmatpush2.msra.mxu0 0.0
        %7226 = vmatprep.subr.mxu0 0.0
        %7227 = vmatpush2.msra.mxu0 0.0
        %7228 = vmatprep.subr.mxu0 0.0
        %7229 = vmatpush2.msra.mxu0 0.0
        %7230 = vmatprep.subr.mxu0 0.0
        %7231 = vmatpush2.msra.mxu0 0.0
        %7232 = vmatprep.subr.mxu0 0.0
        %7233 = vmatpush2.msra.mxu0 0.0
        %7234 = vmatprep.subr.mxu0 0.0
        %7235 = vmatpush2.msra.mxu0 0.0
        %7236 = vmatprep.subr.mxu0 0.0
        %7237 = vmatpush2.msra.mxu0 0.0
        %7238 = vmatprep.subr.mxu0 0.0
        %7239 = vmatpush2.msra.mxu0 0.0
        %7240 = vmatprep.subr.mxu0 0.0
        %7241 = vmatpush2.msra.mxu0 0.0
        %7242 = vmatprep.mubr.f32.mxu0 0.0
        %7243 = vmatmul.mubr.f32.gmra.mxu0 %v6722
        %v7244 = vpop.f32.mrf.mxu0
        %v7245 = vadd.f32 %v6704, %v7244
        %v7246 = vpop.f32.mrf.mxu0
        %v7247 = vadd.f32 %v6704, %v7246
        %7248 = vmatprep.mubr.f32.mxu0 0.0
        %7249 = vmatmul.mubr.f32.gmra.mxu0 %v6725
        %v7250 = vpop.f32.mrf.mxu0
        %v7251 = vadd.f32 %v6709, %v7250
        %v7252 = vpop.f32.mrf.mxu0
        %v7253 = vadd.f32 %v6709, %v7252
        %7254 = vmatprep.mubr.f32.mxu0 0.0
        %7255 = vmatmul.mubr.f32.gmra.mxu0 %v6728
        %v7256 = vpop.f32.mrf.mxu0
        %v7257 = vadd.f32 %v6714, %v7256
        %v7258 = vpop.f32.mrf.mxu0
        %v7259 = vadd.f32 %v6714, %v7258
        %7260 = vmatprep.mubr.f32.mxu0 0.0
        %7261 = vmatmul.mubr.f32.gmra.mxu0 %v6731
        %v7262 = vpop.f32.mrf.mxu0
        %v7263 = vadd.f32 %v6719, %v7262
        %v7264 = vpop.f32.mrf.mxu0
        %v7265 = vadd.f32 %v6719, %v7264
        %7266 = vdwg.mxu0
        %7267 = vmatprep.subr.mxu0 0.0
        %7268 = vmatpush1.msra.mxu0 0.0
        %7269 = vmatprep.subr.mxu0 0.0
        %7270 = vmatpush1.msra.mxu0 0.0
        %7271 = vmatprep.subr.mxu0 0.0
        %7272 = vmatpush1.msra.mxu0 0.0
        %7273 = vmatprep.subr.mxu0 0.0
        %7274 = vmatpush1.msra.mxu0 0.0
        %7275 = vmatprep.subr.mxu0 0.0
        %7276 = vmatpush1.msra.mxu0 0.0
        %7277 = vmatprep.subr.mxu0 0.0
        %7278 = vmatpush1.msra.mxu0 0.0
        %7279 = vmatprep.subr.mxu0 0.0
        %7280 = vmatpush1.msra.mxu0 0.0
        %7281 = vmatprep.subr.mxu0 0.0
        %7282 = vmatpush1.msra.mxu0 0.0
        %7283 = vmatprep.subr.mxu0 0.0
        %7284 = vmatpush1.msra.mxu0 0.0
        %7285 = vmatprep.subr.mxu0 0.0
        %7286 = vmatpush1.msra.mxu0 0.0
        %7287 = vmatprep.subr.mxu0 0.0
        %7288 = vmatpush1.msra.mxu0 0.0
        %7289 = vmatprep.subr.mxu0 0.0
        %7290 = vmatpush1.msra.mxu0 0.0
        %7291 = vmatprep.subr.mxu0 %v6690
        %7292 = vmatpush1.msra.mxu0 %v6689
        %7293 = vmatprep.subr.mxu0 %v6674
        %7294 = vmatpush1.msra.mxu0 %v6673
        %7295 = vmatprep.subr.mxu0 %v6658
        %7296 = vmatpush1.msra.mxu0 %v6657
        %7297 = vmatprep.subr.mxu0 %v6642
        %7298 = vmatpush1.msra.mxu0 %v6641
        %7299 = vmatprep.subr.mxu0 0.0
        %7300 = vmatpush2.msra.mxu0 0.0
        %7301 = vmatprep.subr.mxu0 0.0
        %7302 = vmatpush2.msra.mxu0 0.0
        %7303 = vmatprep.subr.mxu0 0.0
        %7304 = vmatpush2.msra.mxu0 0.0
        %7305 = vmatprep.subr.mxu0 0.0
        %7306 = vmatpush2.msra.mxu0 0.0
        %7307 = vmatprep.subr.mxu0 0.0
        %7308 = vmatpush2.msra.mxu0 0.0
        %7309 = vmatprep.subr.mxu0 0.0
        %7310 = vmatpush2.msra.mxu0 0.0
        %7311 = vmatprep.subr.mxu0 0.0
        %7312 = vmatpush2.msra.mxu0 0.0
        %7313 = vmatprep.subr.mxu0 0.0
        %7314 = vmatpush2.msra.mxu0 0.0
        %7315 = vmatprep.subr.mxu0 0.0
        %7316 = vmatpush2.msra.mxu0 0.0
        %7317 = vmatprep.subr.mxu0 0.0
        %7318 = vmatpush2.msra.mxu0 0.0
        %7319 = vmatprep.subr.mxu0 0.0
        %7320 = vmatpush2.msra.mxu0 0.0
        %7321 = vmatprep.subr.mxu0 0.0
        %7322 = vmatpush2.msra.mxu0 0.0
        %7323 = vmatprep.subr.mxu0 0.0
        %7324 = vmatpush2.msra.mxu0 0.0
        %7325 = vmatprep.subr.mxu0 0.0
        %7326 = vmatpush2.msra.mxu0 0.0
        %7327 = vmatprep.subr.mxu0 0.0
        %7328 = vmatpush2.msra.mxu0 0.0
        %7329 = vmatprep.subr.mxu0 0.0
        %7330 = vmatpush2.msra.mxu0 0.0
        %7331 = vmatprep.mubr.f32.mxu0 0.0
        %7332 = vmatmul.mubr.f32.gmra.mxu0 %v6722
        %v7333 = vpop.f32.mrf.mxu0
        %v7334 = vadd.f32 %v6704, %v7333
        %v7335 = vpop.f32.mrf.mxu0
        %v7336 = vadd.f32 %v6704, %v7335
        %7337 = vmatprep.mubr.f32.mxu0 0.0
        %7338 = vmatmul.mubr.f32.gmra.mxu0 %v6725
        %v7339 = vpop.f32.mrf.mxu0
        %v7340 = vadd.f32 %v6709, %v7339
        %v7341 = vpop.f32.mrf.mxu0
        %v7342 = vadd.f32 %v6709, %v7341
        %7343 = vmatprep.mubr.f32.mxu0 0.0
        %7344 = vmatmul.mubr.f32.gmra.mxu0 %v6728
        %v7345 = vpop.f32.mrf.mxu0
        %v7346 = vadd.f32 %v6714, %v7345
        %v7347 = vpop.f32.mrf.mxu0
        %v7348 = vadd.f32 %v6714, %v7347
        %7349 = vmatprep.mubr.f32.mxu0 0.0
        %7350 = vmatmul.mubr.f32.gmra.mxu0 %v6731
        %v7351 = vpop.f32.mrf.mxu0
        %v7352 = vadd.f32 %v6719, %v7351
        %v7353 = vpop.f32.mrf.mxu0
        %v7354 = vadd.f32 %v6719, %v7353
        %7355 = vdwg.mxu0
        %7356 = vmatprep.subr.mxu0 0.0
        %7357 = vmatpush1.msra.mxu0 0.0
        %7358 = vmatprep.subr.mxu0 0.0
        %7359 = vmatpush1.msra.mxu0 0.0
        %7360 = vmatprep.subr.mxu0 0.0
        %7361 = vmatpush1.msra.mxu0 0.0
        %7362 = vmatprep.subr.mxu0 0.0
        %7363 = vmatpush1.msra.mxu0 0.0
        %7364 = vmatprep.subr.mxu0 0.0
        %7365 = vmatpush1.msra.mxu0 0.0
        %7366 = vmatprep.subr.mxu0 0.0
        %7367 = vmatpush1.msra.mxu0 0.0
        %7368 = vmatprep.subr.mxu0 0.0
        %7369 = vmatpush1.msra.mxu0 0.0
        %7370 = vmatprep.subr.mxu0 0.0
        %7371 = vmatpush1.msra.mxu0 0.0
        %7372 = vmatprep.subr.mxu0 0.0
        %7373 = vmatpush1.msra.mxu0 0.0
        %7374 = vmatprep.subr.mxu0 0.0
        %7375 = vmatpush1.msra.mxu0 0.0
        %7376 = vmatprep.subr.mxu0 0.0
        %7377 = vmatpush1.msra.mxu0 0.0
        %7378 = vmatprep.subr.mxu0 0.0
        %7379 = vmatpush1.msra.mxu0 0.0
        %7380 = vmatprep.subr.mxu0 %v6692
        %7381 = vmatpush1.msra.mxu0 %v6691
        %7382 = vmatprep.subr.mxu0 %v6676
        %7383 = vmatpush1.msra.mxu0 %v6675
        %7384 = vmatprep.subr.mxu0 %v6660
        %7385 = vmatpush1.msra.mxu0 %v6659
        %7386 = vmatprep.subr.mxu0 %v6644
        %7387 = vmatpush1.msra.mxu0 %v6643
        %7388 = vmatprep.subr.mxu0 0.0
        %7389 = vmatpush2.msra.mxu0 0.0
        %7390 = vmatprep.subr.mxu0 0.0
        %7391 = vmatpush2.msra.mxu0 0.0
        %7392 = vmatprep.subr.mxu0 0.0
        %7393 = vmatpush2.msra.mxu0 0.0
        %7394 = vmatprep.subr.mxu0 0.0
        %7395 = vmatpush2.msra.mxu0 0.0
        %7396 = vmatprep.subr.mxu0 0.0
        %7397 = vmatpush2.msra.mxu0 0.0
        %7398 = vmatprep.subr.mxu0 0.0
        %7399 = vmatpush2.msra.mxu0 0.0
        %7400 = vmatprep.subr.mxu0 0.0
        %7401 = vmatpush2.msra.mxu0 0.0
        %7402 = vmatprep.subr.mxu0 0.0
        %7403 = vmatpush2.msra.mxu0 0.0
        %7404 = vmatprep.subr.mxu0 0.0
        %7405 = vmatpush2.msra.mxu0 0.0
        %7406 = vmatprep.subr.mxu0 0.0
        %7407 = vmatpush2.msra.mxu0 0.0
        %7408 = vmatprep.subr.mxu0 0.0
        %7409 = vmatpush2.msra.mxu0 0.0
        %7410 = vmatprep.subr.mxu0 0.0
        %7411 = vmatpush2.msra.mxu0 0.0
        %7412 = vmatprep.subr.mxu0 0.0
        %7413 = vmatpush2.msra.mxu0 0.0
        %7414 = vmatprep.subr.mxu0 0.0
        %7415 = vmatpush2.msra.mxu0 0.0
        %7416 = vmatprep.subr.mxu0 0.0
        %7417 = vmatpush2.msra.mxu0 0.0
        %7418 = vmatprep.subr.mxu0 0.0
        %7419 = vmatpush2.msra.mxu0 0.0
        %7420 = vmatprep.mubr.f32.mxu0 0.0
        %7421 = vmatmul.mubr.f32.gmra.mxu0 %v6722
        %v7422 = vpop.f32.mrf.mxu0
        %v7423 = vadd.f32 %v6704, %v7422
        %v7424 = vpop.f32.mrf.mxu0
        %v7425 = vadd.f32 %v6704, %v7424
        %7426 = vmatprep.mubr.f32.mxu0 0.0
        %7427 = vmatmul.mubr.f32.gmra.mxu0 %v6725
        %v7428 = vpop.f32.mrf.mxu0
        %v7429 = vadd.f32 %v6709, %v7428
        %v7430 = vpop.f32.mrf.mxu0
        %v7431 = vadd.f32 %v6709, %v7430
        %7432 = vmatprep.mubr.f32.mxu0 0.0
        %7433 = vmatmul.mubr.f32.gmra.mxu0 %v6728
        %v7434 = vpop.f32.mrf.mxu0
        %v7435 = vadd.f32 %v6714, %v7434
        %v7436 = vpop.f32.mrf.mxu0
        %v7437 = vadd.f32 %v6714, %v7436
        %7438 = vmatprep.mubr.f32.mxu0 0.0
        %7439 = vmatmul.mubr.f32.gmra.mxu0 %v6731
        %v7440 = vpop.f32.mrf.mxu0
        %v7441 = vadd.f32 %v6719, %v7440
        %v7442 = vpop.f32.mrf.mxu0
        %v7443 = vadd.f32 %v6719, %v7442
        %7444 = vdwg.mxu0
        %v7445 = vadd.f32 %v6800, %v459
        %v7446 = vadd.f32 %v6802, %v460
        %v7447 = vadd.f32 %v6889, %v461
        %v7448 = vadd.f32 %v6891, %v462
        %v7449 = vadd.f32 %v6978, %v463
        %v7450 = vadd.f32 %v6980, %v464
        %v7451 = vadd.f32 %v7067, %v465
        %v7452 = vadd.f32 %v7069, %v466
        %v7453 = vadd.f32 %v7156, %v467
        %v7454 = vadd.f32 %v7158, %v468
        %v7455 = vadd.f32 %v7245, %v469
        %v7456 = vadd.f32 %v7247, %v470
        %v7457 = vadd.f32 %v7334, %v471
        %v7458 = vadd.f32 %v7336, %v472
        %v7459 = vadd.f32 %v7423, %v473
        %v7460 = vadd.f32 %v7425, %v474
        %v7461 = vadd.f32 %v6806, %v475
        %v7462 = vadd.f32 %v6808, %v476
        %v7463 = vadd.f32 %v6895, %v477
        %v7464 = vadd.f32 %v6897, %v478
        %v7465 = vadd.f32 %v6984, %v479
        %v7466 = vadd.f32 %v6986, %v480
        %v7467 = vadd.f32 %v7073, %v481
        %v7468 = vadd.f32 %v7075, %v482
        %v7469 = vadd.f32 %v7162, %v483
        %v7470 = vadd.f32 %v7164, %v484
        %v7471 = vadd.f32 %v7251, %v485
        %v7472 = vadd.f32 %v7253, %v486
        %v7473 = vadd.f32 %v7340, %v487
        %v7474 = vadd.f32 %v7342, %v488
        %v7475 = vadd.f32 %v7429, %v489
        %v7476 = vadd.f32 %v7431, %v490
        %v7477 = vadd.f32 %v6812, %v491
        %v7478 = vadd.f32 %v6814, %v492
        %v7479 = vadd.f32 %v6901, %v493
        %v7480 = vadd.f32 %v6903, %v494
        %v7481 = vadd.f32 %v6990, %v495
        %v7482 = vadd.f32 %v6992, %v496
        %v7483 = vadd.f32 %v7079, %v497
        %v7484 = vadd.f32 %v7081, %v498
        %v7485 = vadd.f32 %v7168, %v499
        %v7486 = vadd.f32 %v7170, %v500
        %v7487 = vadd.f32 %v7257, %v501
        %v7488 = vadd.f32 %v7259, %v502
        %v7489 = vadd.f32 %v7346, %v503
        %v7490 = vadd.f32 %v7348, %v504
        %v7491 = vadd.f32 %v7435, %v505
        %v7492 = vadd.f32 %v7437, %v506
        %v7493 = vadd.f32 %v6818, %v507
        %v7494 = vadd.f32 %v6820, %v508
        %v7495 = vadd.f32 %v6907, %v509
        %v7496 = vadd.f32 %v6909, %v510
        %v7497 = vadd.f32 %v6996, %v511
        %v7498 = vadd.f32 %v6998, %v512
        %v7499 = vadd.f32 %v7085, %v513
        %v7500 = vadd.f32 %v7087, %v514
        %v7501 = vadd.f32 %v7174, %v515
        %v7502 = vadd.f32 %v7176, %v516
        %v7503 = vadd.f32 %v7263, %v517
        %v7504 = vadd.f32 %v7265, %v518
        %v7505 = vadd.f32 %v7352, %v519
        %v7506 = vadd.f32 %v7354, %v520
        %v7507 = vadd.f32 %v7441, %v521
        %v7508 = vadd.f32 %v7443, %v522
        %v7509 = vld [vmem:[%s12] sm:$0xff]
        %v7510 = vld [vmem:[%s12 + $0x8] sm:$0xff]
        %v7511 = vld [vmem:[%s12 + $0x10] sm:$0xff]
        %v7512 = vld [vmem:[%s12 + $0x18] sm:$0xff]
        %v7513 = vmax.f32 %v7445, 0.0
        %v7514 = vmax.f32 %v7446, 0.0
        %v7515 = vmax.f32 %v7447, 0.0
        %v7516 = vmax.f32 %v7448, 0.0
        %v7517 = vmax.f32 %v7449, 0.0
        %v7518 = vmax.f32 %v7450, 0.0
        %v7519 = vmax.f32 %v7451, 0.0
        %v7520 = vmax.f32 %v7452, 0.0
        %v7521 = vmax.f32 %v7453, 0.0
        %v7522 = vmax.f32 %v7454, 0.0
        %v7523 = vmax.f32 %v7455, 0.0
        %v7524 = vmax.f32 %v7456, 0.0
        %v7525 = vmax.f32 %v7457, 0.0
        %v7526 = vmax.f32 %v7458, 0.0
        %v7527 = vmax.f32 %v7459, 0.0
        %v7528 = vmax.f32 %v7460, 0.0
        %v7529 = vmax.f32 %v7461, 0.0
        %v7530 = vmax.f32 %v7462, 0.0
        %v7531 = vmax.f32 %v7463, 0.0
        %v7532 = vmax.f32 %v7464, 0.0
        %v7533 = vmax.f32 %v7465, 0.0
        %v7534 = vmax.f32 %v7466, 0.0
        %v7535 = vmax.f32 %v7467, 0.0
        %v7536 = vmax.f32 %v7468, 0.0
        %v7537 = vmax.f32 %v7469, 0.0
        %v7538 = vmax.f32 %v7470, 0.0
        %v7539 = vmax.f32 %v7471, 0.0
        %v7540 = vmax.f32 %v7472, 0.0
        %v7541 = vmax.f32 %v7473, 0.0
        %v7542 = vmax.f32 %v7474, 0.0
        %v7543 = vmax.f32 %v7475, 0.0
        %v7544 = vmax.f32 %v7476, 0.0
        %v7545 = vmax.f32 %v7477, 0.0
        %v7546 = vmax.f32 %v7478, 0.0
        %v7547 = vmax.f32 %v7479, 0.0
        %v7548 = vmax.f32 %v7480, 0.0
        %v7549 = vmax.f32 %v7481, 0.0
        %v7550 = vmax.f32 %v7482, 0.0
        %v7551 = vmax.f32 %v7483, 0.0
        %v7552 = vmax.f32 %v7484, 0.0
        %v7553 = vmax.f32 %v7485, 0.0
        %v7554 = vmax.f32 %v7486, 0.0
        %v7555 = vmax.f32 %v7487, 0.0
        %v7556 = vmax.f32 %v7488, 0.0
        %v7557 = vmax.f32 %v7489, 0.0
        %v7558 = vmax.f32 %v7490, 0.0
        %v7559 = vmax.f32 %v7491, 0.0
        %v7560 = vmax.f32 %v7492, 0.0
        %v7561 = vmax.f32 %v7493, 0.0
        %v7562 = vmax.f32 %v7494, 0.0
        %v7563 = vmax.f32 %v7495, 0.0
        %v7564 = vmax.f32 %v7496, 0.0
        %v7565 = vmax.f32 %v7497, 0.0
        %v7566 = vmax.f32 %v7498, 0.0
        %v7567 = vmax.f32 %v7499, 0.0
        %v7568 = vmax.f32 %v7500, 0.0
        %v7569 = vmax.f32 %v7501, 0.0
        %v7570 = vmax.f32 %v7502, 0.0
        %v7571 = vmax.f32 %v7503, 0.0
        %v7572 = vmax.f32 %v7504, 0.0
        %v7573 = vmax.f32 %v7505, 0.0
        %v7574 = vmax.f32 %v7506, 0.0
        %v7575 = vmax.f32 %v7507, 0.0
        %v7576 = vmax.f32 %v7508, 0.0
        %v7577 = vmin.f32 %v7445, 0.0
        %v7578 = vmin.f32 %v7446, 0.0
        %v7579 = vmin.f32 %v7447, 0.0
        %v7580 = vmin.f32 %v7448, 0.0
        %v7581 = vmin.f32 %v7449, 0.0
        %v7582 = vmin.f32 %v7450, 0.0
        %v7583 = vmin.f32 %v7451, 0.0
        %v7584 = vmin.f32 %v7452, 0.0
        %v7585 = vmin.f32 %v7453, 0.0
        %v7586 = vmin.f32 %v7454, 0.0
        %v7587 = vmin.f32 %v7455, 0.0
        %v7588 = vmin.f32 %v7456, 0.0
        %v7589 = vmin.f32 %v7457, 0.0
        %v7590 = vmin.f32 %v7458, 0.0
        %v7591 = vmin.f32 %v7459, 0.0
        %v7592 = vmin.f32 %v7460, 0.0
        %v7593 = vmin.f32 %v7461, 0.0
        %v7594 = vmin.f32 %v7462, 0.0
        %v7595 = vmin.f32 %v7463, 0.0
        %v7596 = vmin.f32 %v7464, 0.0
        %v7597 = vmin.f32 %v7465, 0.0
        %v7598 = vmin.f32 %v7466, 0.0
        %v7599 = vmin.f32 %v7467, 0.0
        %v7600 = vmin.f32 %v7468, 0.0
        %v7601 = vmin.f32 %v7469, 0.0
        %v7602 = vmin.f32 %v7470, 0.0
        %v7603 = vmin.f32 %v7471, 0.0
        %v7604 = vmin.f32 %v7472, 0.0
        %v7605 = vmin.f32 %v7473, 0.0
        %v7606 = vmin.f32 %v7474, 0.0
        %v7607 = vmin.f32 %v7475, 0.0
        %v7608 = vmin.f32 %v7476, 0.0
        %v7609 = vmin.f32 %v7477, 0.0
        %v7610 = vmin.f32 %v7478, 0.0
        %v7611 = vmin.f32 %v7479, 0.0
        %v7612 = vmin.f32 %v7480, 0.0
        %v7613 = vmin.f32 %v7481, 0.0
        %v7614 = vmin.f32 %v7482, 0.0
        %v7615 = vmin.f32 %v7483, 0.0
        %v7616 = vmin.f32 %v7484, 0.0
        %v7617 = vmin.f32 %v7485, 0.0
        %v7618 = vmin.f32 %v7486, 0.0
        %v7619 = vmin.f32 %v7487, 0.0
        %v7620 = vmin.f32 %v7488, 0.0
        %v7621 = vmin.f32 %v7489, 0.0
        %v7622 = vmin.f32 %v7490, 0.0
        %v7623 = vmin.f32 %v7491, 0.0
        %v7624 = vmin.f32 %v7492, 0.0
        %v7625 = vmin.f32 %v7493, 0.0
        %v7626 = vmin.f32 %v7494, 0.0
        %v7627 = vmin.f32 %v7495, 0.0
        %v7628 = vmin.f32 %v7496, 0.0
        %v7629 = vmin.f32 %v7497, 0.0
        %v7630 = vmin.f32 %v7498, 0.0
        %v7631 = vmin.f32 %v7499, 0.0
        %v7632 = vmin.f32 %v7500, 0.0
        %v7633 = vmin.f32 %v7501, 0.0
        %v7634 = vmin.f32 %v7502, 0.0
        %v7635 = vmin.f32 %v7503, 0.0
        %v7636 = vmin.f32 %v7504, 0.0
        %v7637 = vmin.f32 %v7505, 0.0
        %v7638 = vmin.f32 %v7506, 0.0
        %v7639 = vmin.f32 %v7507, 0.0
        %v7640 = vmin.f32 %v7508, 0.0
        %7642 = vset.pattern.permute.xlu0 0
        %7643 = vperm.xlu0 %7642, %v7509
        %v7644 = vpop.permute.xlu0 %7643
        %7647 = vset.pattern.permute.xlu0 0
        %7648 = vperm.xlu0 %7647, %v7510
        %v7649 = vpop.permute.xlu0 %7648
        %7652 = vset.pattern.permute.xlu0 0
        %7653 = vperm.xlu0 %7652, %v7511
        %v7654 = vpop.permute.xlu0 %7653
        %7657 = vset.pattern.permute.xlu0 0
        %7658 = vperm.xlu0 %7657, %v7512
        %v7659 = vpop.permute.xlu0 %7658
        %v7661 = vmul.f32 %v7644, %v7577
        %v7662 = vmul.f32 %v7644, %v7578
        %v7663 = vmul.f32 %v7644, %v7579
        %v7664 = vmul.f32 %v7644, %v7580
        %v7665 = vmul.f32 %v7644, %v7581
        %v7666 = vmul.f32 %v7644, %v7582
        %v7667 = vmul.f32 %v7644, %v7583
        %v7668 = vmul.f32 %v7644, %v7584
        %v7669 = vmul.f32 %v7644, %v7585
        %v7670 = vmul.f32 %v7644, %v7586
        %v7671 = vmul.f32 %v7644, %v7587
        %v7672 = vmul.f32 %v7644, %v7588
        %v7673 = vmul.f32 %v7644, %v7589
        %v7674 = vmul.f32 %v7644, %v7590
        %v7675 = vmul.f32 %v7644, %v7591
        %v7676 = vmul.f32 %v7644, %v7592
        %v7677 = vmul.f32 %v7649, %v7593
        %v7678 = vmul.f32 %v7649, %v7594
        %v7679 = vmul.f32 %v7649, %v7595
        %v7680 = vmul.f32 %v7649, %v7596
        %v7681 = vmul.f32 %v7649, %v7597
        %v7682 = vmul.f32 %v7649, %v7598
        %v7683 = vmul.f32 %v7649, %v7599
        %v7684 = vmul.f32 %v7649, %v7600
        %v7685 = vmul.f32 %v7649, %v7601
        %v7686 = vmul.f32 %v7649, %v7602
        %v7687 = vmul.f32 %v7649, %v7603
        %v7688 = vmul.f32 %v7649, %v7604
        %v7689 = vmul.f32 %v7649, %v7605
        %v7690 = vmul.f32 %v7649, %v7606
        %v7691 = vmul.f32 %v7649, %v7607
        %v7692 = vmul.f32 %v7649, %v7608
        %v7693 = vmul.f32 %v7654, %v7609
        %v7694 = vmul.f32 %v7654, %v7610
        %v7695 = vmul.f32 %v7654, %v7611
        %v7696 = vmul.f32 %v7654, %v7612
        %v7697 = vmul.f32 %v7654, %v7613
        %v7698 = vmul.f32 %v7654, %v7614
        %v7699 = vmul.f32 %v7654, %v7615
        %v7700 = vmul.f32 %v7654, %v7616
        %v7701 = vmul.f32 %v7654, %v7617
        %v7702 = vmul.f32 %v7654, %v7618
        %v7703 = vmul.f32 %v7654, %v7619
        %v7704 = vmul.f32 %v7654, %v7620
        %v7705 = vmul.f32 %v7654, %v7621
        %v7706 = vmul.f32 %v7654, %v7622
        %v7707 = vmul.f32 %v7654, %v7623
        %v7708 = vmul.f32 %v7654, %v7624
        %v7709 = vmul.f32 %v7659, %v7625
        %v7710 = vmul.f32 %v7659, %v7626
        %v7711 = vmul.f32 %v7659, %v7627
        %v7712 = vmul.f32 %v7659, %v7628
        %v7713 = vmul.f32 %v7659, %v7629
        %v7714 = vmul.f32 %v7659, %v7630
        %v7715 = vmul.f32 %v7659, %v7631
        %v7716 = vmul.f32 %v7659, %v7632
        %v7717 = vmul.f32 %v7659, %v7633
        %v7718 = vmul.f32 %v7659, %v7634
        %v7719 = vmul.f32 %v7659, %v7635
        %v7720 = vmul.f32 %v7659, %v7636
        %v7721 = vmul.f32 %v7659, %v7637
        %v7722 = vmul.f32 %v7659, %v7638
        %v7723 = vmul.f32 %v7659, %v7639
        %v7724 = vmul.f32 %v7659, %v7640
        %v7725 = vadd.f32 %v7513, %v7661
        %v7726 = vadd.f32 %v7514, %v7662
        %v7727 = vadd.f32 %v7515, %v7663
        %v7728 = vadd.f32 %v7516, %v7664
        %v7729 = vadd.f32 %v7517, %v7665
        %v7730 = vadd.f32 %v7518, %v7666
        %v7731 = vadd.f32 %v7519, %v7667
        %v7732 = vadd.f32 %v7520, %v7668
        %v7733 = vadd.f32 %v7521, %v7669
        %v7734 = vadd.f32 %v7522, %v7670
        %v7735 = vadd.f32 %v7523, %v7671
        %v7736 = vadd.f32 %v7524, %v7672
        %v7737 = vadd.f32 %v7525, %v7673
        %v7738 = vadd.f32 %v7526, %v7674
        %v7739 = vadd.f32 %v7527, %v7675
        %v7740 = vadd.f32 %v7528, %v7676
        %v7741 = vadd.f32 %v7529, %v7677
        %v7742 = vadd.f32 %v7530, %v7678
        %v7743 = vadd.f32 %v7531, %v7679
        %v7744 = vadd.f32 %v7532, %v7680
        %v7745 = vadd.f32 %v7533, %v7681
        %v7746 = vadd.f32 %v7534, %v7682
        %v7747 = vadd.f32 %v7535, %v7683
        %v7748 = vadd.f32 %v7536, %v7684
        %v7749 = vadd.f32 %v7537, %v7685
        %v7750 = vadd.f32 %v7538, %v7686
        %v7751 = vadd.f32 %v7539, %v7687
        %v7752 = vadd.f32 %v7540, %v7688
        %v7753 = vadd.f32 %v7541, %v7689
        %v7754 = vadd.f32 %v7542, %v7690
        %v7755 = vadd.f32 %v7543, %v7691
        %v7756 = vadd.f32 %v7544, %v7692
        %v7757 = vadd.f32 %v7545, %v7693
        %v7758 = vadd.f32 %v7546, %v7694
        %v7759 = vadd.f32 %v7547, %v7695
        %v7760 = vadd.f32 %v7548, %v7696
        %v7761 = vadd.f32 %v7549, %v7697
        %v7762 = vadd.f32 %v7550, %v7698
        %v7763 = vadd.f32 %v7551, %v7699
        %v7764 = vadd.f32 %v7552, %v7700
        %v7765 = vadd.f32 %v7553, %v7701
        %v7766 = vadd.f32 %v7554, %v7702
        %v7767 = vadd.f32 %v7555, %v7703
        %v7768 = vadd.f32 %v7556, %v7704
        %v7769 = vadd.f32 %v7557, %v7705
        %v7770 = vadd.f32 %v7558, %v7706
        %v7771 = vadd.f32 %v7559, %v7707
        %v7772 = vadd.f32 %v7560, %v7708
        %v7773 = vadd.f32 %v7561, %v7709
        %v7774 = vadd.f32 %v7562, %v7710
        %v7775 = vadd.f32 %v7563, %v7711
        %v7776 = vadd.f32 %v7564, %v7712
        %v7777 = vadd.f32 %v7565, %v7713
        %v7778 = vadd.f32 %v7566, %v7714
        %v7779 = vadd.f32 %v7567, %v7715
        %v7780 = vadd.f32 %v7568, %v7716
        %v7781 = vadd.f32 %v7569, %v7717
        %v7782 = vadd.f32 %v7570, %v7718
        %v7783 = vadd.f32 %v7571, %v7719
        %v7784 = vadd.f32 %v7572, %v7720
        %v7785 = vadd.f32 %v7573, %v7721
        %v7786 = vadd.f32 %v7574, %v7722
        %v7787 = vadd.f32 %v7575, %v7723
        %v7788 = vadd.f32 %v7576, %v7724
        %7789 = vst [vmem:[%s458] sm:$0xff] %v7725
        %7790 = vst [vmem:[%s458 + $0x8] sm:$0xff] %v7726
        %7791 = vst [vmem:[%s458 + $0x10] sm:$0xff] %v7727
        %7792 = vst [vmem:[%s458 + $0x18] sm:$0xff] %v7728
        %7793 = vst [vmem:[%s458 + $0x20] sm:$0xff] %v7729
        %7794 = vst [vmem:[%s458 + $0x28] sm:$0xff] %v7730
        %7795 = vst [vmem:[%s458 + $0x30] sm:$0xff] %v7731
        %7796 = vst [vmem:[%s458 + $0x38] sm:$0xff] %v7732
        %7797 = vst [vmem:[%s458 + $0x40] sm:$0xff] %v7733
        %7798 = vst [vmem:[%s458 + $0x48] sm:$0xff] %v7734
        %7799 = vst [vmem:[%s458 + $0x50] sm:$0xff] %v7735
        %7800 = vst [vmem:[%s458 + $0x58] sm:$0xff] %v7736
        %7801 = vst [vmem:[%s458 + $0x60] sm:$0xff] %v7737
        %7802 = vst [vmem:[%s458 + $0x68] sm:$0xff] %v7738
        %7803 = vst [vmem:[%s458 + $0x70] sm:$0xff] %v7739
        %7804 = vst [vmem:[%s458 + $0x78] sm:$0xff] %v7740
        %7805 = vst [vmem:[%s458 + $0x80] sm:$0xff] %v7741
        %7806 = vst [vmem:[%s458 + $0x88] sm:$0xff] %v7742
        %7807 = vst [vmem:[%s458 + $0x90] sm:$0xff] %v7743
        %7808 = vst [vmem:[%s458 + $0x98] sm:$0xff] %v7744
        %7809 = vst [vmem:[%s458 + $0xa0] sm:$0xff] %v7745
        %7810 = vst [vmem:[%s458 + $0xa8] sm:$0xff] %v7746
        %7811 = vst [vmem:[%s458 + $0xb0] sm:$0xff] %v7747
        %7812 = vst [vmem:[%s458 + $0xb8] sm:$0xff] %v7748
        %7813 = vst [vmem:[%s458 + $0xc0] sm:$0xff] %v7749
        %7814 = vst [vmem:[%s458 + $0xc8] sm:$0xff] %v7750
        %7815 = vst [vmem:[%s458 + $0xd0] sm:$0xff] %v7751
        %7816 = vst [vmem:[%s458 + $0xd8] sm:$0xff] %v7752
        %7817 = vst [vmem:[%s458 + $0xe0] sm:$0xff] %v7753
        %7818 = vst [vmem:[%s458 + $0xe8] sm:$0xff] %v7754
        %7819 = vst [vmem:[%s458 + $0xf0] sm:$0xff] %v7755
        %7820 = vst [vmem:[%s458 + $0xf8] sm:$0xff] %v7756
        %7821 = vst [vmem:[%s458 + $0x100] sm:$0xff] %v7757
        %7822 = vst [vmem:[%s458 + $0x108] sm:$0xff] %v7758
        %7823 = vst [vmem:[%s458 + $0x110] sm:$0xff] %v7759
        %7824 = vst [vmem:[%s458 + $0x118] sm:$0xff] %v7760
        %7825 = vst [vmem:[%s458 + $0x120] sm:$0xff] %v7761
        %7826 = vst [vmem:[%s458 + $0x128] sm:$0xff] %v7762
        %7827 = vst [vmem:[%s458 + $0x130] sm:$0xff] %v7763
        %7828 = vst [vmem:[%s458 + $0x138] sm:$0xff] %v7764
        %7829 = vst [vmem:[%s458 + $0x140] sm:$0xff] %v7765
        %7830 = vst [vmem:[%s458 + $0x148] sm:$0xff] %v7766
        %7831 = vst [vmem:[%s458 + $0x150] sm:$0xff] %v7767
        %7832 = vst [vmem:[%s458 + $0x158] sm:$0xff] %v7768
        %7833 = vst [vmem:[%s458 + $0x160] sm:$0xff] %v7769
        %7834 = vst [vmem:[%s458 + $0x168] sm:$0xff] %v7770
        %7835 = vst [vmem:[%s458 + $0x170] sm:$0xff] %v7771
        %7836 = vst [vmem:[%s458 + $0x178] sm:$0xff] %v7772
        %7837 = vst [vmem:[%s458 + $0x180] sm:$0xff] %v7773
        %7838 = vst [vmem:[%s458 + $0x188] sm:$0xff] %v7774
        %7839 = vst [vmem:[%s458 + $0x190] sm:$0xff] %v7775
        %7840 = vst [vmem:[%s458 + $0x198] sm:$0xff] %v7776
        %7841 = vst [vmem:[%s458 + $0x1a0] sm:$0xff] %v7777
        %7842 = vst [vmem:[%s458 + $0x1a8] sm:$0xff] %v7778
        %7843 = vst [vmem:[%s458 + $0x1b0] sm:$0xff] %v7779
        %7844 = vst [vmem:[%s458 + $0x1b8] sm:$0xff] %v7780
        %7845 = vst [vmem:[%s458 + $0x1c0] sm:$0xff] %v7781
        %7846 = vst [vmem:[%s458 + $0x1c8] sm:$0xff] %v7782
        %7847 = vst [vmem:[%s458 + $0x1d0] sm:$0xff] %v7783
        %7848 = vst [vmem:[%s458 + $0x1d8] sm:$0xff] %v7784
        %7849 = vst [vmem:[%s458 + $0x1e0] sm:$0xff] %v7785
        %7850 = vst [vmem:[%s458 + $0x1e8] sm:$0xff] %v7786
        %7851 = vst [vmem:[%s458 + $0x1f0] sm:$0xff] %v7787
        %7852 = vst [vmem:[%s458 + $0x1f8] sm:$0xff] %v7788
        %s7853 = sand.u32 %s316, 1
        %s7854 = scalar_lea.sflag [#allocation5], %s7853
        %s7855 = sand.u32 %s316, 1
        %s7856 = smul.addr %s7855, 512
        %s7857 = scalar_lea.vmem [#allocation6], %s7856
        // Predicated region
        $region77: #{tpu_custom_call.1} parent=71 // pred_check
          %p7858 = pneg %p326
        $region78: #{tpu_custom_call.1} parent=71 // pred_check_branch
          %7860 = sbr.rel (%p7858) target = $region80
        $region79: #{tpu_custom_call.1} parent=71 // pred_region
          %s7862 = ssub.s32 8192, 8192
          %7863 = vsyncadd %s7854, %s7862
          %s7864 = smul.addr %s30, 64
          %s7865 = smul.addr %s7864, 128
          %s7866 = scalar_lea.hbm %s13, %s7865
          %s7867 = sshll.u32 %s7857, 4
          %s7868 = int_to_ptr.vmem [resolvable:$true] %s7867
          %7873 = dma.vmem_to_hbm [thread:$0]  %s7868, 8192, %s7866, %s7854, 2048, 2048, 128
        $region80: #{tpu_custom_call.1} parent=71 // pred_fallthru
          _
      $region72: #{tpu_custom_call.1} parent=5 // pred_fallthru
        _
      %p7874 = scmp.le.s32.totalorder 2, %s25
      // Predicated region
      $region81: #{tpu_custom_call.1} parent=5 // pred_check
        %p7875 = pneg %p7874
      $region82: #{tpu_custom_call.1} parent=5 // pred_check_branch
        %7877 = sbr.rel (%p7875) target = $region84
      $region83: #{tpu_custom_call.1} parent=5 // pred_region
        %s7878 = ssub.s32 %s25, 2
        // Predicated region
        $region85: #{tpu_custom_call.1} parent=83 // pred_check
          %p7879 = pneg %p332
        $region86: #{tpu_custom_call.1} parent=83 // pred_check_branch
          %7881 = sbr.rel (%p7879) target = $region88
        $region87: #{tpu_custom_call.1} parent=83 // pred_region
          %s7882 = sand.u32 %s317, 1
          %s7883 = scalar_lea.sflag [#allocation5], %s7882
          %s7884 = sand.u32 %s317, 1
          %s7885 = smul.addr %s7884, 512
          %s7886 = scalar_lea.vmem [#allocation6], %s7885
          %7887 = dma.done %s7883, 8192
        $region88: #{tpu_custom_call.1} parent=83 // pred_fallthru
          _
      $region84: #{tpu_custom_call.1} parent=5 // pred_fallthru
        _
    $region6: #{tpu_custom_call.1} parent=1 // loop_footer
      %s29 = sadd.s32 1, %s25
    $region7: #{tpu_custom_call.1} parent=1 // loop_footer_branch
      %24 = sbr.rel target = $region3
    $region8: #{tpu_custom_call.1} parent=1 // loop_exit
      _
    %7888 = vsyncpa [#allocation4], 1
    %s7889 = scalar_lea.sflag [#allocation4], 1
    %7890 = vsyncpa %s7889, 1
    %7891 = vsyncpa [#allocation5], 1
    %s7892 = scalar_lea.sflag [#allocation5], 1
    %7893 = vsyncpa %s7892, 1

</llo_original>
